<compile_context>
chip_gen: v7x
topology: tpu7x:2x2x1
jax: 0.10.0
libtpu: 0.0.40
codegen_flags: <defaults>
</compile_context>

<pallas_src>
import jax
import jax.numpy as jnp
from jax import lax
from jax.experimental import pallas as pl
from jax.experimental.pallas import tpu as pltpu

HIDDEN = 256
IN_DIM = 2
OUT_DIM = 2


def lstm_seq_kernel(gx1_ref, w_hh1_ref, w2_ref, b2_ref, h2_out_ref,
                    c1_s, c2_s, hh_s):
    # gx1_ref   : (Tc, Bp, 4H) f32   precomputed x @ W_ih1 + b1 for this chunk
    # w_hh1_ref : (H, 4H)      bf16  layer-1 recurrent weights
    # w2_ref    : (2H, 4H)     bf16  fused layer-2 weights [W_ih2; W_hh2]
    # b2_ref    : (1, 4H)      f32
    # h2_out_ref: (Tc, Bp, H)  f32   lane-dense output (head applied outside)
    # c1_s,c2_s : (Bp, H)      f32   cell states (persist across grid steps)
    # hh_s      : (Bp, 2H)     bf16  [h1, h2] MXU LHS (persists across steps)
    Tc, _, G4 = gx1_ref.shape
    H = G4 // 4

    @pl.when(pl.program_id(0) == 0)
    def _():
        c1_s[...] = jnp.zeros_like(c1_s)
        c2_s[...] = jnp.zeros_like(c2_s)
        hh_s[...] = jnp.zeros_like(hh_s)

    # Hoist all weight / bias loads out of the time loop.
    w_hh1 = w_hh1_ref[...]
    w2 = w2_ref[...]
    b2 = b2_ref[...]

    def sig(z):
        # sigmoid(z) == 0.5 * tanh(0.5 * z) + 0.5 : one EUP push instead of
        # exp + reciprocal.
        return 0.5 * jnp.tanh(0.5 * z) + 0.5

    def step(t, carry):
        c1, c2 = carry

        # ---- LSTMCell 1 (gate order i, f, g, o as in PyTorch) ----
        h1_prev = hh_s[:, :H]                              # bf16 LHS (h1_{t-1})
        g1 = gx1_ref[t] + jnp.dot(h1_prev, w_hh1,
                                  preferred_element_type=jnp.float32)
        i1 = sig(g1[:, 0:H])
        f1 = sig(g1[:, H:2 * H])
        u1 = jnp.tanh(g1[:, 2 * H:3 * H])
        o1 = sig(g1[:, 3 * H:4 * H])
        c1 = f1 * c1 + i1 * u1
        h1 = o1 * jnp.tanh(c1)
        hh_s[:, :H] = h1.astype(jnp.bfloat16)              # hh = [h1_t, h2_{t-1}]

        # ---- LSTMCell 2 (fused input+recurrent matmul, LHS read in place) ----
        g2 = jnp.dot(hh_s[...], w2,
                     preferred_element_type=jnp.float32) + b2
        i2 = sig(g2[:, 0:H])
        f2 = sig(g2[:, H:2 * H])
        u2 = jnp.tanh(g2[:, 2 * H:3 * H])
        o2 = sig(g2[:, 3 * H:4 * H])
        c2 = f2 * c2 + i2 * u2
        h2 = o2 * jnp.tanh(c2)
        hh_s[:, H:] = h2.astype(jnp.bfloat16)              # hh = [h1_t, h2_t]

        h2_out_ref[t] = h2                                 # lane-dense (Bp, 256) store
        return (c1, c2)

    c1f, c2f = lax.fori_loop(0, Tc, step, (c1_s[...], c2_s[...]),
                             unroll=min(Tc, 8))
    c1_s[...] = c1f
    c2_s[...] = c2f


def lstm_forward(x, params):
    """x: (B, T, 2) float32 -> (B, T, 2) float32."""
    B, T, _ = x.shape
    w_ih1, w_hh1, b1, w_ih2, w_hh2, b2, w_lin, b_lin = params

    # Pad batch to a full f32 sublane count (8) so gate math / stores are unmasked.
    Bp = max(8, ((B + 7) // 8) * 8)
    if Bp != B:
        x = jnp.pad(x, ((0, Bp - B), (0, 0), (0, 0)))
    x_tbd = jnp.transpose(x, (1, 0, 2))                     # (T, Bp, 2)

    # Chunk T on the grid; pad T up to a multiple of the chunk (extra trailing
    # steps only produce discarded rows and cannot affect earlier outputs).
    Tc = min(T, 32)
    Tp = ((T + Tc - 1) // Tc) * Tc
    if Tp != T:
        x_tbd = jnp.pad(x_tbd, ((0, Tp - T), (0, 0), (0, 0)))

    # Hoist the state-independent layer-1 input projection out of the recurrence.
    gx1 = jnp.einsum('tbi,ig->tbg', x_tbd, w_ih1) + b1      # (Tp, Bp, 4H) f32

    # bf16 weights for the MXU (f32 accumulation); fuse layer-2 input+recurrent.
    w_hh1_b = w_hh1.astype(jnp.bfloat16)                    # (256, 1024)
    w2_b = jnp.concatenate([w_ih2, w_hh2], axis=0).astype(jnp.bfloat16)  # (512, 1024)

    num_chunks = Tp // Tc

    h2_all = pl.pallas_call(
        lstm_seq_kernel,
        out_shape=jax.ShapeDtypeStruct((Tp, Bp, HIDDEN), jnp.float32),
        grid_spec=pltpu.PrefetchScalarGridSpec(
            num_scalar_prefetch=0,
            grid=(num_chunks,),
            in_specs=[
                pl.BlockSpec((Tc, Bp, 4 * HIDDEN), lambda i: (i, 0, 0)),
                pl.BlockSpec(w_hh1_b.shape, lambda i: (0, 0)),
                pl.BlockSpec(w2_b.shape, lambda i: (0, 0)),
                pl.BlockSpec(b2.shape, lambda i: (0, 0)),
            ],
            out_specs=pl.BlockSpec((Tc, Bp, HIDDEN), lambda i: (i, 0, 0)),
            scratch_shapes=[
                pltpu.VMEM((Bp, HIDDEN), jnp.float32),       # c1
                pltpu.VMEM((Bp, HIDDEN), jnp.float32),       # c2
                pltpu.VMEM((Bp, 2 * HIDDEN), jnp.bfloat16),  # hh = [h1, h2]
            ],
        ),
        compiler_params=pltpu.CompilerParams(
            dimension_semantics=("arbitrary",)),
    )(gx1, w_hh1_b, w2_b, b2)

    # Lane-thin linear head stays in XLA (kernel output is the lane-dense h2).
    out = jnp.einsum('tbh,ho->tbo', h2_all[:T], w_lin) + b_lin   # (T, Bp, 2)
    return jnp.transpose(out, (1, 0, 2))[:B]                     # (B, T, 2)


def init_params(key):
    """Deterministic init mimicking PyTorch's uniform(-1/sqrt(H), 1/sqrt(H))."""
    k = 1.0 / jnp.sqrt(jnp.float32(HIDDEN))
    keys = jax.random.split(key, 10)
    u = lambda kk, shape: jax.random.uniform(kk, shape, jnp.float32, -k, k)
    # PyTorch LSTMCell weights: weight_ih (4H, in), weight_hh (4H, H); transpose for x @ W.
    w_ih1 = u(keys[0], (4 * HIDDEN, IN_DIM)).T            # (2, 1024)
    w_hh1 = u(keys[1], (4 * HIDDEN, HIDDEN)).T            # (256, 1024)
    b1 = (u(keys[2], (4 * HIDDEN,)) + u(keys[3], (4 * HIDDEN,))).reshape(1, 4 * HIDDEN)
    w_ih2 = u(keys[4], (4 * HIDDEN, HIDDEN)).T            # (256, 1024)
    w_hh2 = u(keys[5], (4 * HIDDEN, HIDDEN)).T            # (256, 1024)
    b2 = (u(keys[6], (4 * HIDDEN,)) + u(keys[7], (4 * HIDDEN,))).reshape(1, 4 * HIDDEN)
    w_lin = u(keys[8], (OUT_DIM, HIDDEN)).T               # (256, 2)
    b_lin = u(keys[9], (OUT_DIM,)).reshape(1, OUT_DIM)    # (1, 2)
    return (w_ih1, w_hh1, b1, w_ih2, w_hh2, b2, w_lin, b_lin)


def reference_forward(x, params):
    """Pure-JAX f32 reference (lax.scan) for correctness check."""
    w_ih1, w_hh1, b1, w_ih2, w_hh2, b2, w_lin, b_lin = params
    B = x.shape[0]

    def cell(xt, h, c, w_ih, w_hh, b):
        gates = xt @ w_ih + h @ w_hh + b
        i, f, g, o = jnp.split(gates, 4, axis=-1)
        c_new = jax.nn.sigmoid(f) * c + jax.nn.sigmoid(i) * jnp.tanh(g)
        h_new = jax.nn.sigmoid(o) * jnp.tanh(c_new)
        return h_new, c_new

    def step(carry, xt):
        h1, c1, h2, c2 = carry
        h1, c1 = cell(xt, h1, c1, w_ih1, w_hh1, b1)
        h2, c2 = cell(h1, h2, c2, w_ih2, w_hh2, b2)
        out = h2 @ w_lin + b_lin
        return (h1, c1, h2, c2), out

    zeros = jnp.zeros((B, HIDDEN), jnp.float32)
    _, outs = lax.scan(step, (zeros, zeros, zeros, zeros),
                       jnp.transpose(x, (1, 0, 2)))
    return jnp.transpose(outs, (1, 0, 2))


if __name__ == "__main__":
    key = jax.random.PRNGKey(0)
    pkey, xkey = jax.random.split(key)
    params = init_params(pkey)

    B, T = 2, 8
    x = jax.random.normal(xkey, (B, T, IN_DIM), dtype=jnp.float32)

    out = lstm_forward(x, params)
    out = jax.block_until_ready(out)

    ref = reference_forward(x, params)
    assert out.shape == (B, T, OUT_DIM)
    # Tolerance loosened vs. the all-f32 version: recurrent weights and the h
    # states feeding the MXU are bf16 (f32 accumulation / gate math / cell state).
    assert jnp.allclose(out, ref, atol=2e-2, rtol=2e-2), "mismatch vs JAX reference"

    print("KERNEL_OK")
</pallas_src>

<mosaic_0001>
module attributes {stable_mosaic.version = 11 : i64} {
  func.func @lstm_seq_kernel(%arg0: i32, %arg1: memref<8x8x1024xf32, #tpu.memory_space<vmem>>, %arg2: memref<256x1024xbf16, #tpu.memory_space<vmem>>, %arg3: memref<512x1024xbf16, #tpu.memory_space<vmem>>, %arg4: memref<1x1024xf32, #tpu.memory_space<vmem>>, %arg5: memref<8x8x256xf32, #tpu.memory_space<vmem>>, %arg6: memref<8x256xf32, #tpu.memory_space<vmem>>, %arg7: memref<8x256xf32, #tpu.memory_space<vmem>>, %arg8: memref<8x512xbf16, #tpu.memory_space<vmem>>) attributes {dimension_semantics = [#tpu.dimension_semantics<arbitrary>], iteration_bounds = array<i64: 1>, scalar_prefetch = 0 : i64, scratch_operands = 3 : i64, tpu.core_type = #tpu.core_type<tc>, window_params = [{transform_indices = @transform_0, window_bounds = array<i64: 8, 8, 1024>}, {pipeline_mode = #tpu.pipeline_mode<synchronous>, transform_indices = @transform_1, window_bounds = array<i64: 256, 1024>}, {pipeline_mode = #tpu.pipeline_mode<synchronous>, transform_indices = @transform_2, window_bounds = array<i64: 512, 1024>}, {pipeline_mode = #tpu.pipeline_mode<synchronous>, transform_indices = @transform_3, window_bounds = array<i64: 1, 1024>}, {transform_indices = @transform_4, window_bounds = array<i64: 8, 8, 256>}]} {
    %c0_i32 = arith.constant 0 : i32
    %0 = arith.cmpi eq, %arg0, %c0_i32 : i32
    %1 = arith.extui %0 : i1 to i32
    %c0_i32_0 = arith.constant 0 : i32
    %2 = arith.cmpi ne, %1, %c0_i32_0 : i32
    scf.if %2 {
      %cst_269 = arith.constant 0.000000e+00 : f32
      %650 = vector.broadcast %cst_269 : f32 to vector<8x256xf32>
      %c0_270 = arith.constant 0 : index
      %c0_271 = arith.constant 0 : index
      %651 = vector.load %arg6[%c0_270, %c0_271] : memref<8x256xf32, #tpu.memory_space<vmem>>, vector<8x256xf32>
      tpu.vector_store %arg6[%c0_270, %c0_271], %650 {strides = array<i32>} : memref<8x256xf32, #tpu.memory_space<vmem>>, vector<8x256xf32>,
      %cst_272 = arith.constant 0.000000e+00 : f32
      %652 = vector.broadcast %cst_272 : f32 to vector<8x256xf32>
      %c0_273 = arith.constant 0 : index
      %c0_274 = arith.constant 0 : index
      %653 = vector.load %arg7[%c0_273, %c0_274] : memref<8x256xf32, #tpu.memory_space<vmem>>, vector<8x256xf32>
      tpu.vector_store %arg7[%c0_273, %c0_274], %652 {strides = array<i32>} : memref<8x256xf32, #tpu.memory_space<vmem>>, vector<8x256xf32>,
      %cst_275 = arith.constant 0.000000e+00 : bf16
      %654 = vector.broadcast %cst_275 : bf16 to vector<8x512xbf16>
      %c0_276 = arith.constant 0 : index
      %c0_277 = arith.constant 0 : index
      %655 = vector.load %arg8[%c0_276, %c0_277] : memref<8x512xbf16, #tpu.memory_space<vmem>>, vector<8x512xbf16>
      tpu.vector_store %arg8[%c0_276, %c0_277], %654 {strides = array<i32>} : memref<8x512xbf16, #tpu.memory_space<vmem>>, vector<8x512xbf16>,
    } else {
    }
    %c0 = arith.constant 0 : index
    %c0_1 = arith.constant 0 : index
    %3 = vector.load %arg2[%c0, %c0_1] : memref<256x1024xbf16, #tpu.memory_space<vmem>>, vector<256x1024xbf16>
    %c0_2 = arith.constant 0 : index
    %c0_3 = arith.constant 0 : index
    %4 = vector.load %arg3[%c0_2, %c0_3] : memref<512x1024xbf16, #tpu.memory_space<vmem>>, vector<512x1024xbf16>
    %c0_4 = arith.constant 0 : index
    %c0_5 = arith.constant 0 : index
    %5 = vector.load %arg4[%c0_4, %c0_5] : memref<1x1024xf32, #tpu.memory_space<vmem>>, vector<1x1024xf32>
    %c0_6 = arith.constant 0 : index
    %c0_7 = arith.constant 0 : index
    %6 = vector.load %arg6[%c0_6, %c0_7] : memref<8x256xf32, #tpu.memory_space<vmem>>, vector<8x256xf32>
    %c0_8 = arith.constant 0 : index
    %c0_9 = arith.constant 0 : index
    %7 = vector.load %arg7[%c0_8, %c0_9] : memref<8x256xf32, #tpu.memory_space<vmem>>, vector<8x256xf32>
    %c0_i32_10 = arith.constant 0 : i32
    %c0_11 = arith.constant 0 : index
    %c0_12 = arith.constant 0 : index
    %8 = vector.load %arg8[%c0_11, %c0_12] : memref<8x512xbf16, #tpu.memory_space<vmem>>, vector<8x256xbf16>
    %9 = arith.index_cast %c0_i32_10 : i32 to index
    %c0_13 = arith.constant 0 : index
    %c0_14 = arith.constant 0 : index
    %10 = vector.load %arg1[%9, %c0_13, %c0_14] : memref<8x8x1024xf32, #tpu.memory_space<vmem>>, vector<1x8x1024xf32>
    %11 = vector.shape_cast %10 : vector<1x8x1024xf32> to vector<8x1024xf32>
    %cst = arith.constant dense<0.000000e+00> : vector<8x1024xf32>
    %12 = tpu.matmul %8, %3, %cst {dimension_numbers = #tpu.dot_dimension_numbers<[1], [0], [0], [1], [0, 0, 1, 1], [], []>} : vector<8x256xbf16>, vector<256x1024xbf16>, vector<8x1024xf32> -> vector<8x1024xf32>
    %13 = arith.addf %11, %12 : vector<8x1024xf32>
    %14 = vector.extract_strided_slice %13 {offsets = [0, 0], sizes = [8, 256], strides = [1, 1]} : vector<8x1024xf32> to vector<8x256xf32>
    %cst_15 = arith.constant 5.000000e-01 : f32
    %15 = vector.broadcast %cst_15 : f32 to vector<8x256xf32>
    %16 = arith.mulf %15, %14 : vector<8x256xf32>
    %17 = math.tanh %16 : vector<8x256xf32>
    %cst_16 = arith.constant 5.000000e-01 : f32
    %18 = vector.broadcast %cst_16 : f32 to vector<8x256xf32>
    %19 = arith.mulf %18, %17 : vector<8x256xf32>
    %cst_17 = arith.constant 5.000000e-01 : f32
    %20 = vector.broadcast %cst_17 : f32 to vector<8x256xf32>
    %21 = arith.addf %19, %20 : vector<8x256xf32>
    %22 = vector.extract_strided_slice %13 {offsets = [0, 256], sizes = [8, 256], strides = [1, 1]} : vector<8x1024xf32> to vector<8x256xf32>
    %cst_18 = arith.constant 5.000000e-01 : f32
    %23 = vector.broadcast %cst_18 : f32 to vector<8x256xf32>
    %24 = arith.mulf %23, %22 : vector<8x256xf32>
    %25 = math.tanh %24 : vector<8x256xf32>
    %cst_19 = arith.constant 5.000000e-01 : f32
    %26 = vector.broadcast %cst_19 : f32 to vector<8x256xf32>
    %27 = arith.mulf %26, %25 : vector<8x256xf32>
    %cst_20 = arith.constant 5.000000e-01 : f32
    %28 = vector.broadcast %cst_20 : f32 to vector<8x256xf32>
    %29 = arith.addf %27, %28 : vector<8x256xf32>
    %30 = vector.extract_strided_slice %13 {offsets = [0, 512], sizes = [8, 256], strides = [1, 1]} : vector<8x1024xf32> to vector<8x256xf32>
    %31 = math.tanh %30 : vector<8x256xf32>
    %32 = vector.extract_strided_slice %13 {offsets = [0, 768], sizes = [8, 256], strides = [1, 1]} : vector<8x1024xf32> to vector<8x256xf32>
    %cst_21 = arith.constant 5.000000e-01 : f32
    %33 = vector.broadcast %cst_21 : f32 to vector<8x256xf32>
    %34 = arith.mulf %33, %32 : vector<8x256xf32>
    %35 = math.tanh %34 : vector<8x256xf32>
    %cst_22 = arith.constant 5.000000e-01 : f32
    %36 = vector.broadcast %cst_22 : f32 to vector<8x256xf32>
    %37 = arith.mulf %36, %35 : vector<8x256xf32>
    %cst_23 = arith.constant 5.000000e-01 : f32
    %38 = vector.broadcast %cst_23 : f32 to vector<8x256xf32>
    %39 = arith.addf %37, %38 : vector<8x256xf32>
    %40 = arith.mulf %29, %6 : vector<8x256xf32>
    %41 = arith.mulf %21, %31 : vector<8x256xf32>
    %42 = arith.addf %40, %41 : vector<8x256xf32>
    %43 = math.tanh %42 : vector<8x256xf32>
    %44 = arith.mulf %39, %43 : vector<8x256xf32>
    %45 = arith.truncf %44 : vector<8x256xf32> to vector<8x256xbf16>
    %c0_24 = arith.constant 0 : index
    %c0_25 = arith.constant 0 : index
    %46 = vector.load %arg8[%c0_24, %c0_25] : memref<8x512xbf16, #tpu.memory_space<vmem>>, vector<8x256xbf16>
    tpu.vector_store %arg8[%c0_24, %c0_25], %45 {strides = array<i32>} : memref<8x512xbf16, #tpu.memory_space<vmem>>, vector<8x256xbf16>,
    %c0_26 = arith.constant 0 : index
    %c0_27 = arith.constant 0 : index
    %47 = vector.load %arg8[%c0_26, %c0_27] : memref<8x512xbf16, #tpu.memory_space<vmem>>, vector<8x512xbf16>
    %cst_28 = arith.constant dense<0.000000e+00> : vector<8x1024xf32>
    %48 = tpu.matmul %47, %4, %cst_28 {dimension_numbers = #tpu.dot_dimension_numbers<[1], [0], [0], [1], [0, 0, 1, 1], [], []>} : vector<8x512xbf16>, vector<512x1024xbf16>, vector<8x1024xf32> -> vector<8x1024xf32>
    %49 = vector.broadcast %5 : vector<1x1024xf32> to vector<8x1024xf32>
    %50 = arith.addf %48, %49 : vector<8x1024xf32>
    %51 = vector.extract_strided_slice %50 {offsets = [0, 0], sizes = [8, 256], strides = [1, 1]} : vector<8x1024xf32> to vector<8x256xf32>
    %cst_29 = arith.constant 5.000000e-01 : f32
    %52 = vector.broadcast %cst_29 : f32 to vector<8x256xf32>
    %53 = arith.mulf %52, %51 : vector<8x256xf32>
    %54 = math.tanh %53 : vector<8x256xf32>
    %cst_30 = arith.constant 5.000000e-01 : f32
    %55 = vector.broadcast %cst_30 : f32 to vector<8x256xf32>
    %56 = arith.mulf %55, %54 : vector<8x256xf32>
    %cst_31 = arith.constant 5.000000e-01 : f32
    %57 = vector.broadcast %cst_31 : f32 to vector<8x256xf32>
    %58 = arith.addf %56, %57 : vector<8x256xf32>
    %59 = vector.extract_strided_slice %50 {offsets = [0, 256], sizes = [8, 256], strides = [1, 1]} : vector<8x1024xf32> to vector<8x256xf32>
    %cst_32 = arith.constant 5.000000e-01 : f32
    %60 = vector.broadcast %cst_32 : f32 to vector<8x256xf32>
    %61 = arith.mulf %60, %59 : vector<8x256xf32>
    %62 = math.tanh %61 : vector<8x256xf32>
    %cst_33 = arith.constant 5.000000e-01 : f32
    %63 = vector.broadcast %cst_33 : f32 to vector<8x256xf32>
    %64 = arith.mulf %63, %62 : vector<8x256xf32>
    %cst_34 = arith.constant 5.000000e-01 : f32
    %65 = vector.broadcast %cst_34 : f32 to vector<8x256xf32>
    %66 = arith.addf %64, %65 : vector<8x256xf32>
    %67 = vector.extract_strided_slice %50 {offsets = [0, 512], sizes = [8, 256], strides = [1, 1]} : vector<8x1024xf32> to vector<8x256xf32>
    %68 = math.tanh %67 : vector<8x256xf32>
    %69 = vector.extract_strided_slice %50 {offsets = [0, 768], sizes = [8, 256], strides = [1, 1]} : vector<8x1024xf32> to vector<8x256xf32>
    %cst_35 = arith.constant 5.000000e-01 : f32
    %70 = vector.broadcast %cst_35 : f32 to vector<8x256xf32>
    %71 = arith.mulf %70, %69 : vector<8x256xf32>
    %72 = math.tanh %71 : vector<8x256xf32>
    %cst_36 = arith.constant 5.000000e-01 : f32
    %73 = vector.broadcast %cst_36 : f32 to vector<8x256xf32>
    %74 = arith.mulf %73, %72 : vector<8x256xf32>
    %cst_37 = arith.constant 5.000000e-01 : f32
    %75 = vector.broadcast %cst_37 : f32 to vector<8x256xf32>
    %76 = arith.addf %74, %75 : vector<8x256xf32>
    %77 = arith.mulf %66, %7 : vector<8x256xf32>
    %78 = arith.mulf %58, %68 : vector<8x256xf32>
    %79 = arith.addf %77, %78 : vector<8x256xf32>
    %80 = math.tanh %79 : vector<8x256xf32>
    %81 = arith.mulf %76, %80 : vector<8x256xf32>
    %82 = arith.truncf %81 : vector<8x256xf32> to vector<8x256xbf16>
    %c0_38 = arith.constant 0 : index
    %c256 = arith.constant 256 : index
    %83 = vector.load %arg8[%c0_38, %c256] : memref<8x512xbf16, #tpu.memory_space<vmem>>, vector<8x256xbf16>
    tpu.vector_store %arg8[%c0_38, %c256], %82 {strides = array<i32>} : memref<8x512xbf16, #tpu.memory_space<vmem>>, vector<8x256xbf16>,
    %84 = arith.index_cast %c0_i32_10 : i32 to index
    %c0_39 = arith.constant 0 : index
    %c0_40 = arith.constant 0 : index
    %85 = vector.load %arg5[%84, %c0_39, %c0_40] : memref<8x8x256xf32, #tpu.memory_space<vmem>>, vector<1x8x256xf32>
    %86 = vector.shape_cast %85 : vector<1x8x256xf32> to vector<8x256xf32>
    %87 = vector.shape_cast %81 : vector<8x256xf32> to vector<1x8x256xf32>
    tpu.vector_store %arg5[%84, %c0_39, %c0_40], %87 {strides = array<i32>} : memref<8x8x256xf32, #tpu.memory_space<vmem>>, vector<1x8x256xf32>,
    %c1_i32 = arith.constant 1 : i32
    %c0_41 = arith.constant 0 : index
    %c0_42 = arith.constant 0 : index
    %88 = vector.load %arg8[%c0_41, %c0_42] : memref<8x512xbf16, #tpu.memory_space<vmem>>, vector<8x256xbf16>
    %89 = arith.index_cast %c1_i32 : i32 to index
    %c0_43 = arith.constant 0 : index
    %c0_44 = arith.constant 0 : index
    %90 = vector.load %arg1[%89, %c0_43, %c0_44] : memref<8x8x1024xf32, #tpu.memory_space<vmem>>, vector<1x8x1024xf32>
    %91 = vector.shape_cast %90 : vector<1x8x1024xf32> to vector<8x1024xf32>
    %cst_45 = arith.constant dense<0.000000e+00> : vector<8x1024xf32>
    %92 = tpu.matmul %88, %3, %cst_45 {dimension_numbers = #tpu.dot_dimension_numbers<[1], [0], [0], [1], [0, 0, 1, 1], [], []>} : vector<8x256xbf16>, vector<256x1024xbf16>, vector<8x1024xf32> -> vector<8x1024xf32>
    %93 = arith.addf %91, %92 : vector<8x1024xf32>
    %94 = vector.extract_strided_slice %93 {offsets = [0, 0], sizes = [8, 256], strides = [1, 1]} : vector<8x1024xf32> to vector<8x256xf32>
    %cst_46 = arith.constant 5.000000e-01 : f32
    %95 = vector.broadcast %cst_46 : f32 to vector<8x256xf32>
    %96 = arith.mulf %95, %94 : vector<8x256xf32>
    %97 = math.tanh %96 : vector<8x256xf32>
    %cst_47 = arith.constant 5.000000e-01 : f32
    %98 = vector.broadcast %cst_47 : f32 to vector<8x256xf32>
    %99 = arith.mulf %98, %97 : vector<8x256xf32>
    %cst_48 = arith.constant 5.000000e-01 : f32
    %100 = vector.broadcast %cst_48 : f32 to vector<8x256xf32>
    %101 = arith.addf %99, %100 : vector<8x256xf32>
    %102 = vector.extract_strided_slice %93 {offsets = [0, 256], sizes = [8, 256], strides = [1, 1]} : vector<8x1024xf32> to vector<8x256xf32>
    %cst_49 = arith.constant 5.000000e-01 : f32
    %103 = vector.broadcast %cst_49 : f32 to vector<8x256xf32>
    %104 = arith.mulf %103, %102 : vector<8x256xf32>
    %105 = math.tanh %104 : vector<8x256xf32>
    %cst_50 = arith.constant 5.000000e-01 : f32
    %106 = vector.broadcast %cst_50 : f32 to vector<8x256xf32>
    %107 = arith.mulf %106, %105 : vector<8x256xf32>
    %cst_51 = arith.constant 5.000000e-01 : f32
    %108 = vector.broadcast %cst_51 : f32 to vector<8x256xf32>
    %109 = arith.addf %107, %108 : vector<8x256xf32>
    %110 = vector.extract_strided_slice %93 {offsets = [0, 512], sizes = [8, 256], strides = [1, 1]} : vector<8x1024xf32> to vector<8x256xf32>
    %111 = math.tanh %110 : vector<8x256xf32>
    %112 = vector.extract_strided_slice %93 {offsets = [0, 768], sizes = [8, 256], strides = [1, 1]} : vector<8x1024xf32> to vector<8x256xf32>
    %cst_52 = arith.constant 5.000000e-01 : f32
    %113 = vector.broadcast %cst_52 : f32 to vector<8x256xf32>
    %114 = arith.mulf %113, %112 : vector<8x256xf32>
    %115 = math.tanh %114 : vector<8x256xf32>
    %cst_53 = arith.constant 5.000000e-01 : f32
    %116 = vector.broadcast %cst_53 : f32 to vector<8x256xf32>
    %117 = arith.mulf %116, %115 : vector<8x256xf32>
    %cst_54 = arith.constant 5.000000e-01 : f32
    %118 = vector.broadcast %cst_54 : f32 to vector<8x256xf32>
    %119 = arith.addf %117, %118 : vector<8x256xf32>
    %120 = arith.mulf %109, %42 : vector<8x256xf32>
    %121 = arith.mulf %101, %111 : vector<8x256xf32>
    %122 = arith.addf %120, %121 : vector<8x256xf32>
    %123 = math.tanh %122 : vector<8x256xf32>
    %124 = arith.mulf %119, %123 : vector<8x256xf32>
    %125 = arith.truncf %124 : vector<8x256xf32> to vector<8x256xbf16>
    %c0_55 = arith.constant 0 : index
    %c0_56 = arith.constant 0 : index
    %126 = vector.load %arg8[%c0_55, %c0_56] : memref<8x512xbf16, #tpu.memory_space<vmem>>, vector<8x256xbf16>
    tpu.vector_store %arg8[%c0_55, %c0_56], %125 {strides = array<i32>} : memref<8x512xbf16, #tpu.memory_space<vmem>>, vector<8x256xbf16>,
    %c0_57 = arith.constant 0 : index
    %c0_58 = arith.constant 0 : index
    %127 = vector.load %arg8[%c0_57, %c0_58] : memref<8x512xbf16, #tpu.memory_space<vmem>>, vector<8x512xbf16>
    %cst_59 = arith.constant dense<0.000000e+00> : vector<8x1024xf32>
    %128 = tpu.matmul %127, %4, %cst_59 {dimension_numbers = #tpu.dot_dimension_numbers<[1], [0], [0], [1], [0, 0, 1, 1], [], []>} : vector<8x512xbf16>, vector<512x1024xbf16>, vector<8x1024xf32> -> vector<8x1024xf32>
    %129 = vector.broadcast %5 : vector<1x1024xf32> to vector<8x1024xf32>
    %130 = arith.addf %128, %129 : vector<8x1024xf32>
    %131 = vector.extract_strided_slice %130 {offsets = [0, 0], sizes = [8, 256], strides = [1, 1]} : vector<8x1024xf32> to vector<8x256xf32>
    %cst_60 = arith.constant 5.000000e-01 : f32
    %132 = vector.broadcast %cst_60 : f32 to vector<8x256xf32>
    %133 = arith.mulf %132, %131 : vector<8x256xf32>
    %134 = math.tanh %133 : vector<8x256xf32>
    %cst_61 = arith.constant 5.000000e-01 : f32
    %135 = vector.broadcast %cst_61 : f32 to vector<8x256xf32>
    %136 = arith.mulf %135, %134 : vector<8x256xf32>
    %cst_62 = arith.constant 5.000000e-01 : f32
    %137 = vector.broadcast %cst_62 : f32 to vector<8x256xf32>
    %138 = arith.addf %136, %137 : vector<8x256xf32>
    %139 = vector.extract_strided_slice %130 {offsets = [0, 256], sizes = [8, 256], strides = [1, 1]} : vector<8x1024xf32> to vector<8x256xf32>
    %cst_63 = arith.constant 5.000000e-01 : f32
    %140 = vector.broadcast %cst_63 : f32 to vector<8x256xf32>
    %141 = arith.mulf %140, %139 : vector<8x256xf32>
    %142 = math.tanh %141 : vector<8x256xf32>
    %cst_64 = arith.constant 5.000000e-01 : f32
    %143 = vector.broadcast %cst_64 : f32 to vector<8x256xf32>
    %144 = arith.mulf %143, %142 : vector<8x256xf32>
    %cst_65 = arith.constant 5.000000e-01 : f32
    %145 = vector.broadcast %cst_65 : f32 to vector<8x256xf32>
    %146 = arith.addf %144, %145 : vector<8x256xf32>
    %147 = vector.extract_strided_slice %130 {offsets = [0, 512], sizes = [8, 256], strides = [1, 1]} : vector<8x1024xf32> to vector<8x256xf32>
    %148 = math.tanh %147 : vector<8x256xf32>
    %149 = vector.extract_strided_slice %130 {offsets = [0, 768], sizes = [8, 256], strides = [1, 1]} : vector<8x1024xf32> to vector<8x256xf32>
    %cst_66 = arith.constant 5.000000e-01 : f32
    %150 = vector.broadcast %cst_66 : f32 to vector<8x256xf32>
    %151 = arith.mulf %150, %149 : vector<8x256xf32>
    %152 = math.tanh %151 : vector<8x256xf32>
    %cst_67 = arith.constant 5.000000e-01 : f32
    %153 = vector.broadcast %cst_67 : f32 to vector<8x256xf32>
    %154 = arith.mulf %153, %152 : vector<8x256xf32>
    %cst_68 = arith.constant 5.000000e-01 : f32
    %155 = vector.broadcast %cst_68 : f32 to vector<8x256xf32>
    %156 = arith.addf %154, %155 : vector<8x256xf32>
    %157 = arith.mulf %146, %79 : vector<8x256xf32>
    %158 = arith.mulf %138, %148 : vector<8x256xf32>
    %159 = arith.addf %157, %158 : vector<8x256xf32>
    %160 = math.tanh %159 : vector<8x256xf32>
    %161 = arith.mulf %156, %160 : vector<8x256xf32>
    %162 = arith.truncf %161 : vector<8x256xf32> to vector<8x256xbf16>
    %c0_69 = arith.constant 0 : index
    %c256_70 = arith.constant 256 : index
    %163 = vector.load %arg8[%c0_69, %c256_70] : memref<8x512xbf16, #tpu.memory_space<vmem>>, vector<8x256xbf16>
    tpu.vector_store %arg8[%c0_69, %c256_70], %162 {strides = array<i32>} : memref<8x512xbf16, #tpu.memory_space<vmem>>, vector<8x256xbf16>,
    %164 = arith.index_cast %c1_i32 : i32 to index
    %c0_71 = arith.constant 0 : index
    %c0_72 = arith.constant 0 : index
    %165 = vector.load %arg5[%164, %c0_71, %c0_72] : memref<8x8x256xf32, #tpu.memory_space<vmem>>, vector<1x8x256xf32>
    %166 = vector.shape_cast %165 : vector<1x8x256xf32> to vector<8x256xf32>
    %167 = vector.shape_cast %161 : vector<8x256xf32> to vector<1x8x256xf32>
    tpu.vector_store %arg5[%164, %c0_71, %c0_72], %167 {strides = array<i32>} : memref<8x8x256xf32, #tpu.memory_space<vmem>>, vector<1x8x256xf32>,
    %c2_i32 = arith.constant 2 : i32
    %c0_73 = arith.constant 0 : index
    %c0_74 = arith.constant 0 : index
    %168 = vector.load %arg8[%c0_73, %c0_74] : memref<8x512xbf16, #tpu.memory_space<vmem>>, vector<8x256xbf16>
    %169 = arith.index_cast %c2_i32 : i32 to index
    %c0_75 = arith.constant 0 : index
    %c0_76 = arith.constant 0 : index
    %170 = vector.load %arg1[%169, %c0_75, %c0_76] : memref<8x8x1024xf32, #tpu.memory_space<vmem>>, vector<1x8x1024xf32>
    %171 = vector.shape_cast %170 : vector<1x8x1024xf32> to vector<8x1024xf32>
    %cst_77 = arith.constant dense<0.000000e+00> : vector<8x1024xf32>
    %172 = tpu.matmul %168, %3, %cst_77 {dimension_numbers = #tpu.dot_dimension_numbers<[1], [0], [0], [1], [0, 0, 1, 1], [], []>} : vector<8x256xbf16>, vector<256x1024xbf16>, vector<8x1024xf32> -> vector<8x1024xf32>
    %173 = arith.addf %171, %172 : vector<8x1024xf32>
    %174 = vector.extract_strided_slice %173 {offsets = [0, 0], sizes = [8, 256], strides = [1, 1]} : vector<8x1024xf32> to vector<8x256xf32>
    %cst_78 = arith.constant 5.000000e-01 : f32
    %175 = vector.broadcast %cst_78 : f32 to vector<8x256xf32>
    %176 = arith.mulf %175, %174 : vector<8x256xf32>
    %177 = math.tanh %176 : vector<8x256xf32>
    %cst_79 = arith.constant 5.000000e-01 : f32
    %178 = vector.broadcast %cst_79 : f32 to vector<8x256xf32>
    %179 = arith.mulf %178, %177 : vector<8x256xf32>
    %cst_80 = arith.constant 5.000000e-01 : f32
    %180 = vector.broadcast %cst_80 : f32 to vector<8x256xf32>
    %181 = arith.addf %179, %180 : vector<8x256xf32>
    %182 = vector.extract_strided_slice %173 {offsets = [0, 256], sizes = [8, 256], strides = [1, 1]} : vector<8x1024xf32> to vector<8x256xf32>
    %cst_81 = arith.constant 5.000000e-01 : f32
    %183 = vector.broadcast %cst_81 : f32 to vector<8x256xf32>
    %184 = arith.mulf %183, %182 : vector<8x256xf32>
    %185 = math.tanh %184 : vector<8x256xf32>
    %cst_82 = arith.constant 5.000000e-01 : f32
    %186 = vector.broadcast %cst_82 : f32 to vector<8x256xf32>
    %187 = arith.mulf %186, %185 : vector<8x256xf32>
    %cst_83 = arith.constant 5.000000e-01 : f32
    %188 = vector.broadcast %cst_83 : f32 to vector<8x256xf32>
    %189 = arith.addf %187, %188 : vector<8x256xf32>
    %190 = vector.extract_strided_slice %173 {offsets = [0, 512], sizes = [8, 256], strides = [1, 1]} : vector<8x1024xf32> to vector<8x256xf32>
    %191 = math.tanh %190 : vector<8x256xf32>
    %192 = vector.extract_strided_slice %173 {offsets = [0, 768], sizes = [8, 256], strides = [1, 1]} : vector<8x1024xf32> to vector<8x256xf32>
    %cst_84 = arith.constant 5.000000e-01 : f32
    %193 = vector.broadcast %cst_84 : f32 to vector<8x256xf32>
    %194 = arith.mulf %193, %192 : vector<8x256xf32>
    %195 = math.tanh %194 : vector<8x256xf32>
    %cst_85 = arith.constant 5.000000e-01 : f32
    %196 = vector.broadcast %cst_85 : f32 to vector<8x256xf32>
    %197 = arith.mulf %196, %195 : vector<8x256xf32>
    %cst_86 = arith.constant 5.000000e-01 : f32
    %198 = vector.broadcast %cst_86 : f32 to vector<8x256xf32>
    %199 = arith.addf %197, %198 : vector<8x256xf32>
    %200 = arith.mulf %189, %122 : vector<8x256xf32>
    %201 = arith.mulf %181, %191 : vector<8x256xf32>
    %202 = arith.addf %200, %201 : vector<8x256xf32>
    %203 = math.tanh %202 : vector<8x256xf32>
    %204 = arith.mulf %199, %203 : vector<8x256xf32>
    %205 = arith.truncf %204 : vector<8x256xf32> to vector<8x256xbf16>
    %c0_87 = arith.constant 0 : index
    %c0_88 = arith.constant 0 : index
    %206 = vector.load %arg8[%c0_87, %c0_88] : memref<8x512xbf16, #tpu.memory_space<vmem>>, vector<8x256xbf16>
    tpu.vector_store %arg8[%c0_87, %c0_88], %205 {strides = array<i32>} : memref<8x512xbf16, #tpu.memory_space<vmem>>, vector<8x256xbf16>,
    %c0_89 = arith.constant 0 : index
    %c0_90 = arith.constant 0 : index
    %207 = vector.load %arg8[%c0_89, %c0_90] : memref<8x512xbf16, #tpu.memory_space<vmem>>, vector<8x512xbf16>
    %cst_91 = arith.constant dense<0.000000e+00> : vector<8x1024xf32>
    %208 = tpu.matmul %207, %4, %cst_91 {dimension_numbers = #tpu.dot_dimension_numbers<[1], [0], [0], [1], [0, 0, 1, 1], [], []>} : vector<8x512xbf16>, vector<512x1024xbf16>, vector<8x1024xf32> -> vector<8x1024xf32>
    %209 = vector.broadcast %5 : vector<1x1024xf32> to vector<8x1024xf32>
    %210 = arith.addf %208, %209 : vector<8x1024xf32>
    %211 = vector.extract_strided_slice %210 {offsets = [0, 0], sizes = [8, 256], strides = [1, 1]} : vector<8x1024xf32> to vector<8x256xf32>
    %cst_92 = arith.constant 5.000000e-01 : f32
    %212 = vector.broadcast %cst_92 : f32 to vector<8x256xf32>
    %213 = arith.mulf %212, %211 : vector<8x256xf32>
    %214 = math.tanh %213 : vector<8x256xf32>
    %cst_93 = arith.constant 5.000000e-01 : f32
    %215 = vector.broadcast %cst_93 : f32 to vector<8x256xf32>
    %216 = arith.mulf %215, %214 : vector<8x256xf32>
    %cst_94 = arith.constant 5.000000e-01 : f32
    %217 = vector.broadcast %cst_94 : f32 to vector<8x256xf32>
    %218 = arith.addf %216, %217 : vector<8x256xf32>
    %219 = vector.extract_strided_slice %210 {offsets = [0, 256], sizes = [8, 256], strides = [1, 1]} : vector<8x1024xf32> to vector<8x256xf32>
    %cst_95 = arith.constant 5.000000e-01 : f32
    %220 = vector.broadcast %cst_95 : f32 to vector<8x256xf32>
    %221 = arith.mulf %220, %219 : vector<8x256xf32>
    %222 = math.tanh %221 : vector<8x256xf32>
    %cst_96 = arith.constant 5.000000e-01 : f32
    %223 = vector.broadcast %cst_96 : f32 to vector<8x256xf32>
    %224 = arith.mulf %223, %222 : vector<8x256xf32>
    %cst_97 = arith.constant 5.000000e-01 : f32
    %225 = vector.broadcast %cst_97 : f32 to vector<8x256xf32>
    %226 = arith.addf %224, %225 : vector<8x256xf32>
    %227 = vector.extract_strided_slice %210 {offsets = [0, 512], sizes = [8, 256], strides = [1, 1]} : vector<8x1024xf32> to vector<8x256xf32>
    %228 = math.tanh %227 : vector<8x256xf32>
    %229 = vector.extract_strided_slice %210 {offsets = [0, 768], sizes = [8, 256], strides = [1, 1]} : vector<8x1024xf32> to vector<8x256xf32>
    %cst_98 = arith.constant 5.000000e-01 : f32
    %230 = vector.broadcast %cst_98 : f32 to vector<8x256xf32>
    %231 = arith.mulf %230, %229 : vector<8x256xf32>
    %232 = math.tanh %231 : vector<8x256xf32>
    %cst_99 = arith.constant 5.000000e-01 : f32
    %233 = vector.broadcast %cst_99 : f32 to vector<8x256xf32>
    %234 = arith.mulf %233, %232 : vector<8x256xf32>
    %cst_100 = arith.constant 5.000000e-01 : f32
    %235 = vector.broadcast %cst_100 : f32 to vector<8x256xf32>
    %236 = arith.addf %234, %235 : vector<8x256xf32>
    %237 = arith.mulf %226, %159 : vector<8x256xf32>
    %238 = arith.mulf %218, %228 : vector<8x256xf32>
    %239 = arith.addf %237, %238 : vector<8x256xf32>
    %240 = math.tanh %239 : vector<8x256xf32>
    %241 = arith.mulf %236, %240 : vector<8x256xf32>
    %242 = arith.truncf %241 : vector<8x256xf32> to vector<8x256xbf16>
    %c0_101 = arith.constant 0 : index
    %c256_102 = arith.constant 256 : index
    %243 = vector.load %arg8[%c0_101, %c256_102] : memref<8x512xbf16, #tpu.memory_space<vmem>>, vector<8x256xbf16>
    tpu.vector_store %arg8[%c0_101, %c256_102], %242 {strides = array<i32>} : memref<8x512xbf16, #tpu.memory_space<vmem>>, vector<8x256xbf16>,
    %244 = arith.index_cast %c2_i32 : i32 to index
    %c0_103 = arith.constant 0 : index
    %c0_104 = arith.constant 0 : index
    %245 = vector.load %arg5[%244, %c0_103, %c0_104] : memref<8x8x256xf32, #tpu.memory_space<vmem>>, vector<1x8x256xf32>
    %246 = vector.shape_cast %245 : vector<1x8x256xf32> to vector<8x256xf32>
    %247 = vector.shape_cast %241 : vector<8x256xf32> to vector<1x8x256xf32>
    tpu.vector_store %arg5[%244, %c0_103, %c0_104], %247 {strides = array<i32>} : memref<8x8x256xf32, #tpu.memory_space<vmem>>, vector<1x8x256xf32>,
    %c3_i32 = arith.constant 3 : i32
    %c0_105 = arith.constant 0 : index
    %c0_106 = arith.constant 0 : index
    %248 = vector.load %arg8[%c0_105, %c0_106] : memref<8x512xbf16, #tpu.memory_space<vmem>>, vector<8x256xbf16>
    %249 = arith.index_cast %c3_i32 : i32 to index
    %c0_107 = arith.constant 0 : index
    %c0_108 = arith.constant 0 : index
    %250 = vector.load %arg1[%249, %c0_107, %c0_108] : memref<8x8x1024xf32, #tpu.memory_space<vmem>>, vector<1x8x1024xf32>
    %251 = vector.shape_cast %250 : vector<1x8x1024xf32> to vector<8x1024xf32>
    %cst_109 = arith.constant dense<0.000000e+00> : vector<8x1024xf32>
    %252 = tpu.matmul %248, %3, %cst_109 {dimension_numbers = #tpu.dot_dimension_numbers<[1], [0], [0], [1], [0, 0, 1, 1], [], []>} : vector<8x256xbf16>, vector<256x1024xbf16>, vector<8x1024xf32> -> vector<8x1024xf32>
    %253 = arith.addf %251, %252 : vector<8x1024xf32>
    %254 = vector.extract_strided_slice %253 {offsets = [0, 0], sizes = [8, 256], strides = [1, 1]} : vector<8x1024xf32> to vector<8x256xf32>
    %cst_110 = arith.constant 5.000000e-01 : f32
    %255 = vector.broadcast %cst_110 : f32 to vector<8x256xf32>
    %256 = arith.mulf %255, %254 : vector<8x256xf32>
    %257 = math.tanh %256 : vector<8x256xf32>
    %cst_111 = arith.constant 5.000000e-01 : f32
    %258 = vector.broadcast %cst_111 : f32 to vector<8x256xf32>
    %259 = arith.mulf %258, %257 : vector<8x256xf32>
    %cst_112 = arith.constant 5.000000e-01 : f32
    %260 = vector.broadcast %cst_112 : f32 to vector<8x256xf32>
    %261 = arith.addf %259, %260 : vector<8x256xf32>
    %262 = vector.extract_strided_slice %253 {offsets = [0, 256], sizes = [8, 256], strides = [1, 1]} : vector<8x1024xf32> to vector<8x256xf32>
    %cst_113 = arith.constant 5.000000e-01 : f32
    %263 = vector.broadcast %cst_113 : f32 to vector<8x256xf32>
    %264 = arith.mulf %263, %262 : vector<8x256xf32>
    %265 = math.tanh %264 : vector<8x256xf32>
    %cst_114 = arith.constant 5.000000e-01 : f32
    %266 = vector.broadcast %cst_114 : f32 to vector<8x256xf32>
    %267 = arith.mulf %266, %265 : vector<8x256xf32>
    %cst_115 = arith.constant 5.000000e-01 : f32
    %268 = vector.broadcast %cst_115 : f32 to vector<8x256xf32>
    %269 = arith.addf %267, %268 : vector<8x256xf32>
    %270 = vector.extract_strided_slice %253 {offsets = [0, 512], sizes = [8, 256], strides = [1, 1]} : vector<8x1024xf32> to vector<8x256xf32>
    %271 = math.tanh %270 : vector<8x256xf32>
    %272 = vector.extract_strided_slice %253 {offsets = [0, 768], sizes = [8, 256], strides = [1, 1]} : vector<8x1024xf32> to vector<8x256xf32>
    %cst_116 = arith.constant 5.000000e-01 : f32
    %273 = vector.broadcast %cst_116 : f32 to vector<8x256xf32>
    %274 = arith.mulf %273, %272 : vector<8x256xf32>
    %275 = math.tanh %274 : vector<8x256xf32>
    %cst_117 = arith.constant 5.000000e-01 : f32
    %276 = vector.broadcast %cst_117 : f32 to vector<8x256xf32>
    %277 = arith.mulf %276, %275 : vector<8x256xf32>
    %cst_118 = arith.constant 5.000000e-01 : f32
    %278 = vector.broadcast %cst_118 : f32 to vector<8x256xf32>
    %279 = arith.addf %277, %278 : vector<8x256xf32>
    %280 = arith.mulf %269, %202 : vector<8x256xf32>
    %281 = arith.mulf %261, %271 : vector<8x256xf32>
    %282 = arith.addf %280, %281 : vector<8x256xf32>
    %283 = math.tanh %282 : vector<8x256xf32>
    %284 = arith.mulf %279, %283 : vector<8x256xf32>
    %285 = arith.truncf %284 : vector<8x256xf32> to vector<8x256xbf16>
    %c0_119 = arith.constant 0 : index
    %c0_120 = arith.constant 0 : index
    %286 = vector.load %arg8[%c0_119, %c0_120] : memref<8x512xbf16, #tpu.memory_space<vmem>>, vector<8x256xbf16>
    tpu.vector_store %arg8[%c0_119, %c0_120], %285 {strides = array<i32>} : memref<8x512xbf16, #tpu.memory_space<vmem>>, vector<8x256xbf16>,
    %c0_121 = arith.constant 0 : index
    %c0_122 = arith.constant 0 : index
    %287 = vector.load %arg8[%c0_121, %c0_122] : memref<8x512xbf16, #tpu.memory_space<vmem>>, vector<8x512xbf16>
    %cst_123 = arith.constant dense<0.000000e+00> : vector<8x1024xf32>
    %288 = tpu.matmul %287, %4, %cst_123 {dimension_numbers = #tpu.dot_dimension_numbers<[1], [0], [0], [1], [0, 0, 1, 1], [], []>} : vector<8x512xbf16>, vector<512x1024xbf16>, vector<8x1024xf32> -> vector<8x1024xf32>
    %289 = vector.broadcast %5 : vector<1x1024xf32> to vector<8x1024xf32>
    %290 = arith.addf %288, %289 : vector<8x1024xf32>
    %291 = vector.extract_strided_slice %290 {offsets = [0, 0], sizes = [8, 256], strides = [1, 1]} : vector<8x1024xf32> to vector<8x256xf32>
    %cst_124 = arith.constant 5.000000e-01 : f32
    %292 = vector.broadcast %cst_124 : f32 to vector<8x256xf32>
    %293 = arith.mulf %292, %291 : vector<8x256xf32>
    %294 = math.tanh %293 : vector<8x256xf32>
    %cst_125 = arith.constant 5.000000e-01 : f32
    %295 = vector.broadcast %cst_125 : f32 to vector<8x256xf32>
    %296 = arith.mulf %295, %294 : vector<8x256xf32>
    %cst_126 = arith.constant 5.000000e-01 : f32
    %297 = vector.broadcast %cst_126 : f32 to vector<8x256xf32>
    %298 = arith.addf %296, %297 : vector<8x256xf32>
    %299 = vector.extract_strided_slice %290 {offsets = [0, 256], sizes = [8, 256], strides = [1, 1]} : vector<8x1024xf32> to vector<8x256xf32>
    %cst_127 = arith.constant 5.000000e-01 : f32
    %300 = vector.broadcast %cst_127 : f32 to vector<8x256xf32>
    %301 = arith.mulf %300, %299 : vector<8x256xf32>
    %302 = math.tanh %301 : vector<8x256xf32>
    %cst_128 = arith.constant 5.000000e-01 : f32
    %303 = vector.broadcast %cst_128 : f32 to vector<8x256xf32>
    %304 = arith.mulf %303, %302 : vector<8x256xf32>
    %cst_129 = arith.constant 5.000000e-01 : f32
    %305 = vector.broadcast %cst_129 : f32 to vector<8x256xf32>
    %306 = arith.addf %304, %305 : vector<8x256xf32>
    %307 = vector.extract_strided_slice %290 {offsets = [0, 512], sizes = [8, 256], strides = [1, 1]} : vector<8x1024xf32> to vector<8x256xf32>
    %308 = math.tanh %307 : vector<8x256xf32>
    %309 = vector.extract_strided_slice %290 {offsets = [0, 768], sizes = [8, 256], strides = [1, 1]} : vector<8x1024xf32> to vector<8x256xf32>
    %cst_130 = arith.constant 5.000000e-01 : f32
    %310 = vector.broadcast %cst_130 : f32 to vector<8x256xf32>
    %311 = arith.mulf %310, %309 : vector<8x256xf32>
    %312 = math.tanh %311 : vector<8x256xf32>
    %cst_131 = arith.constant 5.000000e-01 : f32
    %313 = vector.broadcast %cst_131 : f32 to vector<8x256xf32>
    %314 = arith.mulf %313, %312 : vector<8x256xf32>
    %cst_132 = arith.constant 5.000000e-01 : f32
    %315 = vector.broadcast %cst_132 : f32 to vector<8x256xf32>
    %316 = arith.addf %314, %315 : vector<8x256xf32>
    %317 = arith.mulf %306, %239 : vector<8x256xf32>
    %318 = arith.mulf %298, %308 : vector<8x256xf32>
    %319 = arith.addf %317, %318 : vector<8x256xf32>
    %320 = math.tanh %319 : vector<8x256xf32>
    %321 = arith.mulf %316, %320 : vector<8x256xf32>
    %322 = arith.truncf %321 : vector<8x256xf32> to vector<8x256xbf16>
    %c0_133 = arith.constant 0 : index
    %c256_134 = arith.constant 256 : index
    %323 = vector.load %arg8[%c0_133, %c256_134] : memref<8x512xbf16, #tpu.memory_space<vmem>>, vector<8x256xbf16>
    tpu.vector_store %arg8[%c0_133, %c256_134], %322 {strides = array<i32>} : memref<8x512xbf16, #tpu.memory_space<vmem>>, vector<8x256xbf16>,
    %324 = arith.index_cast %c3_i32 : i32 to index
    %c0_135 = arith.constant 0 : index
    %c0_136 = arith.constant 0 : index
    %325 = vector.load %arg5[%324, %c0_135, %c0_136] : memref<8x8x256xf32, #tpu.memory_space<vmem>>, vector<1x8x256xf32>
    %326 = vector.shape_cast %325 : vector<1x8x256xf32> to vector<8x256xf32>
    %327 = vector.shape_cast %321 : vector<8x256xf32> to vector<1x8x256xf32>
    tpu.vector_store %arg5[%324, %c0_135, %c0_136], %327 {strides = array<i32>} : memref<8x8x256xf32, #tpu.memory_space<vmem>>, vector<1x8x256xf32>,
    %c4_i32 = arith.constant 4 : i32
    %c0_137 = arith.constant 0 : index
    %c0_138 = arith.constant 0 : index
    %328 = vector.load %arg8[%c0_137, %c0_138] : memref<8x512xbf16, #tpu.memory_space<vmem>>, vector<8x256xbf16>
    %329 = arith.index_cast %c4_i32 : i32 to index
    %c0_139 = arith.constant 0 : index
    %c0_140 = arith.constant 0 : index
    %330 = vector.load %arg1[%329, %c0_139, %c0_140] : memref<8x8x1024xf32, #tpu.memory_space<vmem>>, vector<1x8x1024xf32>
    %331 = vector.shape_cast %330 : vector<1x8x1024xf32> to vector<8x1024xf32>
    %cst_141 = arith.constant dense<0.000000e+00> : vector<8x1024xf32>
    %332 = tpu.matmul %328, %3, %cst_141 {dimension_numbers = #tpu.dot_dimension_numbers<[1], [0], [0], [1], [0, 0, 1, 1], [], []>} : vector<8x256xbf16>, vector<256x1024xbf16>, vector<8x1024xf32> -> vector<8x1024xf32>
    %333 = arith.addf %331, %332 : vector<8x1024xf32>
    %334 = vector.extract_strided_slice %333 {offsets = [0, 0], sizes = [8, 256], strides = [1, 1]} : vector<8x1024xf32> to vector<8x256xf32>
    %cst_142 = arith.constant 5.000000e-01 : f32
    %335 = vector.broadcast %cst_142 : f32 to vector<8x256xf32>
    %336 = arith.mulf %335, %334 : vector<8x256xf32>
    %337 = math.tanh %336 : vector<8x256xf32>
    %cst_143 = arith.constant 5.000000e-01 : f32
    %338 = vector.broadcast %cst_143 : f32 to vector<8x256xf32>
    %339 = arith.mulf %338, %337 : vector<8x256xf32>
    %cst_144 = arith.constant 5.000000e-01 : f32
    %340 = vector.broadcast %cst_144 : f32 to vector<8x256xf32>
    %341 = arith.addf %339, %340 : vector<8x256xf32>
    %342 = vector.extract_strided_slice %333 {offsets = [0, 256], sizes = [8, 256], strides = [1, 1]} : vector<8x1024xf32> to vector<8x256xf32>
    %cst_145 = arith.constant 5.000000e-01 : f32
    %343 = vector.broadcast %cst_145 : f32 to vector<8x256xf32>
    %344 = arith.mulf %343, %342 : vector<8x256xf32>
    %345 = math.tanh %344 : vector<8x256xf32>
    %cst_146 = arith.constant 5.000000e-01 : f32
    %346 = vector.broadcast %cst_146 : f32 to vector<8x256xf32>
    %347 = arith.mulf %346, %345 : vector<8x256xf32>
    %cst_147 = arith.constant 5.000000e-01 : f32
    %348 = vector.broadcast %cst_147 : f32 to vector<8x256xf32>
    %349 = arith.addf %347, %348 : vector<8x256xf32>
    %350 = vector.extract_strided_slice %333 {offsets = [0, 512], sizes = [8, 256], strides = [1, 1]} : vector<8x1024xf32> to vector<8x256xf32>
    %351 = math.tanh %350 : vector<8x256xf32>
    %352 = vector.extract_strided_slice %333 {offsets = [0, 768], sizes = [8, 256], strides = [1, 1]} : vector<8x1024xf32> to vector<8x256xf32>
    %cst_148 = arith.constant 5.000000e-01 : f32
    %353 = vector.broadcast %cst_148 : f32 to vector<8x256xf32>
    %354 = arith.mulf %353, %352 : vector<8x256xf32>
    %355 = math.tanh %354 : vector<8x256xf32>
    %cst_149 = arith.constant 5.000000e-01 : f32
    %356 = vector.broadcast %cst_149 : f32 to vector<8x256xf32>
    %357 = arith.mulf %356, %355 : vector<8x256xf32>
    %cst_150 = arith.constant 5.000000e-01 : f32
    %358 = vector.broadcast %cst_150 : f32 to vector<8x256xf32>
    %359 = arith.addf %357, %358 : vector<8x256xf32>
    %360 = arith.mulf %349, %282 : vector<8x256xf32>
    %361 = arith.mulf %341, %351 : vector<8x256xf32>
    %362 = arith.addf %360, %361 : vector<8x256xf32>
    %363 = math.tanh %362 : vector<8x256xf32>
    %364 = arith.mulf %359, %363 : vector<8x256xf32>
    %365 = arith.truncf %364 : vector<8x256xf32> to vector<8x256xbf16>
    %c0_151 = arith.constant 0 : index
    %c0_152 = arith.constant 0 : index
    %366 = vector.load %arg8[%c0_151, %c0_152] : memref<8x512xbf16, #tpu.memory_space<vmem>>, vector<8x256xbf16>
    tpu.vector_store %arg8[%c0_151, %c0_152], %365 {strides = array<i32>} : memref<8x512xbf16, #tpu.memory_space<vmem>>, vector<8x256xbf16>,
    %c0_153 = arith.constant 0 : index
    %c0_154 = arith.constant 0 : index
    %367 = vector.load %arg8[%c0_153, %c0_154] : memref<8x512xbf16, #tpu.memory_space<vmem>>, vector<8x512xbf16>
    %cst_155 = arith.constant dense<0.000000e+00> : vector<8x1024xf32>
    %368 = tpu.matmul %367, %4, %cst_155 {dimension_numbers = #tpu.dot_dimension_numbers<[1], [0], [0], [1], [0, 0, 1, 1], [], []>} : vector<8x512xbf16>, vector<512x1024xbf16>, vector<8x1024xf32> -> vector<8x1024xf32>
    %369 = vector.broadcast %5 : vector<1x1024xf32> to vector<8x1024xf32>
    %370 = arith.addf %368, %369 : vector<8x1024xf32>
    %371 = vector.extract_strided_slice %370 {offsets = [0, 0], sizes = [8, 256], strides = [1, 1]} : vector<8x1024xf32> to vector<8x256xf32>
    %cst_156 = arith.constant 5.000000e-01 : f32
    %372 = vector.broadcast %cst_156 : f32 to vector<8x256xf32>
    %373 = arith.mulf %372, %371 : vector<8x256xf32>
    %374 = math.tanh %373 : vector<8x256xf32>
    %cst_157 = arith.constant 5.000000e-01 : f32
    %375 = vector.broadcast %cst_157 : f32 to vector<8x256xf32>
    %376 = arith.mulf %375, %374 : vector<8x256xf32>
    %cst_158 = arith.constant 5.000000e-01 : f32
    %377 = vector.broadcast %cst_158 : f32 to vector<8x256xf32>
    %378 = arith.addf %376, %377 : vector<8x256xf32>
    %379 = vector.extract_strided_slice %370 {offsets = [0, 256], sizes = [8, 256], strides = [1, 1]} : vector<8x1024xf32> to vector<8x256xf32>
    %cst_159 = arith.constant 5.000000e-01 : f32
    %380 = vector.broadcast %cst_159 : f32 to vector<8x256xf32>
    %381 = arith.mulf %380, %379 : vector<8x256xf32>
    %382 = math.tanh %381 : vector<8x256xf32>
    %cst_160 = arith.constant 5.000000e-01 : f32
    %383 = vector.broadcast %cst_160 : f32 to vector<8x256xf32>
    %384 = arith.mulf %383, %382 : vector<8x256xf32>
    %cst_161 = arith.constant 5.000000e-01 : f32
    %385 = vector.broadcast %cst_161 : f32 to vector<8x256xf32>
    %386 = arith.addf %384, %385 : vector<8x256xf32>
    %387 = vector.extract_strided_slice %370 {offsets = [0, 512], sizes = [8, 256], strides = [1, 1]} : vector<8x1024xf32> to vector<8x256xf32>
    %388 = math.tanh %387 : vector<8x256xf32>
    %389 = vector.extract_strided_slice %370 {offsets = [0, 768], sizes = [8, 256], strides = [1, 1]} : vector<8x1024xf32> to vector<8x256xf32>
    %cst_162 = arith.constant 5.000000e-01 : f32
    %390 = vector.broadcast %cst_162 : f32 to vector<8x256xf32>
    %391 = arith.mulf %390, %389 : vector<8x256xf32>
    %392 = math.tanh %391 : vector<8x256xf32>
    %cst_163 = arith.constant 5.000000e-01 : f32
    %393 = vector.broadcast %cst_163 : f32 to vector<8x256xf32>
    %394 = arith.mulf %393, %392 : vector<8x256xf32>
    %cst_164 = arith.constant 5.000000e-01 : f32
    %395 = vector.broadcast %cst_164 : f32 to vector<8x256xf32>
    %396 = arith.addf %394, %395 : vector<8x256xf32>
    %397 = arith.mulf %386, %319 : vector<8x256xf32>
    %398 = arith.mulf %378, %388 : vector<8x256xf32>
    %399 = arith.addf %397, %398 : vector<8x256xf32>
    %400 = math.tanh %399 : vector<8x256xf32>
    %401 = arith.mulf %396, %400 : vector<8x256xf32>
    %402 = arith.truncf %401 : vector<8x256xf32> to vector<8x256xbf16>
    %c0_165 = arith.constant 0 : index
    %c256_166 = arith.constant 256 : index
    %403 = vector.load %arg8[%c0_165, %c256_166] : memref<8x512xbf16, #tpu.memory_space<vmem>>, vector<8x256xbf16>
    tpu.vector_store %arg8[%c0_165, %c256_166], %402 {strides = array<i32>} : memref<8x512xbf16, #tpu.memory_space<vmem>>, vector<8x256xbf16>,
    %404 = arith.index_cast %c4_i32 : i32 to index
    %c0_167 = arith.constant 0 : index
    %c0_168 = arith.constant 0 : index
    %405 = vector.load %arg5[%404, %c0_167, %c0_168] : memref<8x8x256xf32, #tpu.memory_space<vmem>>, vector<1x8x256xf32>
    %406 = vector.shape_cast %405 : vector<1x8x256xf32> to vector<8x256xf32>
    %407 = vector.shape_cast %401 : vector<8x256xf32> to vector<1x8x256xf32>
    tpu.vector_store %arg5[%404, %c0_167, %c0_168], %407 {strides = array<i32>} : memref<8x8x256xf32, #tpu.memory_space<vmem>>, vector<1x8x256xf32>,
    %c5_i32 = arith.constant 5 : i32
    %c0_169 = arith.constant 0 : index
    %c0_170 = arith.constant 0 : index
    %408 = vector.load %arg8[%c0_169, %c0_170] : memref<8x512xbf16, #tpu.memory_space<vmem>>, vector<8x256xbf16>
    %409 = arith.index_cast %c5_i32 : i32 to index
    %c0_171 = arith.constant 0 : index
    %c0_172 = arith.constant 0 : index
    %410 = vector.load %arg1[%409, %c0_171, %c0_172] : memref<8x8x1024xf32, #tpu.memory_space<vmem>>, vector<1x8x1024xf32>
    %411 = vector.shape_cast %410 : vector<1x8x1024xf32> to vector<8x1024xf32>
    %cst_173 = arith.constant dense<0.000000e+00> : vector<8x1024xf32>
    %412 = tpu.matmul %408, %3, %cst_173 {dimension_numbers = #tpu.dot_dimension_numbers<[1], [0], [0], [1], [0, 0, 1, 1], [], []>} : vector<8x256xbf16>, vector<256x1024xbf16>, vector<8x1024xf32> -> vector<8x1024xf32>
    %413 = arith.addf %411, %412 : vector<8x1024xf32>
    %414 = vector.extract_strided_slice %413 {offsets = [0, 0], sizes = [8, 256], strides = [1, 1]} : vector<8x1024xf32> to vector<8x256xf32>
    %cst_174 = arith.constant 5.000000e-01 : f32
    %415 = vector.broadcast %cst_174 : f32 to vector<8x256xf32>
    %416 = arith.mulf %415, %414 : vector<8x256xf32>
    %417 = math.tanh %416 : vector<8x256xf32>
    %cst_175 = arith.constant 5.000000e-01 : f32
    %418 = vector.broadcast %cst_175 : f32 to vector<8x256xf32>
    %419 = arith.mulf %418, %417 : vector<8x256xf32>
    %cst_176 = arith.constant 5.000000e-01 : f32
    %420 = vector.broadcast %cst_176 : f32 to vector<8x256xf32>
    %421 = arith.addf %419, %420 : vector<8x256xf32>
    %422 = vector.extract_strided_slice %413 {offsets = [0, 256], sizes = [8, 256], strides = [1, 1]} : vector<8x1024xf32> to vector<8x256xf32>
    %cst_177 = arith.constant 5.000000e-01 : f32
    %423 = vector.broadcast %cst_177 : f32 to vector<8x256xf32>
    %424 = arith.mulf %423, %422 : vector<8x256xf32>
    %425 = math.tanh %424 : vector<8x256xf32>
    %cst_178 = arith.constant 5.000000e-01 : f32
    %426 = vector.broadcast %cst_178 : f32 to vector<8x256xf32>
    %427 = arith.mulf %426, %425 : vector<8x256xf32>
    %cst_179 = arith.constant 5.000000e-01 : f32
    %428 = vector.broadcast %cst_179 : f32 to vector<8x256xf32>
    %429 = arith.addf %427, %428 : vector<8x256xf32>
    %430 = vector.extract_strided_slice %413 {offsets = [0, 512], sizes = [8, 256], strides = [1, 1]} : vector<8x1024xf32> to vector<8x256xf32>
    %431 = math.tanh %430 : vector<8x256xf32>
    %432 = vector.extract_strided_slice %413 {offsets = [0, 768], sizes = [8, 256], strides = [1, 1]} : vector<8x1024xf32> to vector<8x256xf32>
    %cst_180 = arith.constant 5.000000e-01 : f32
    %433 = vector.broadcast %cst_180 : f32 to vector<8x256xf32>
    %434 = arith.mulf %433, %432 : vector<8x256xf32>
    %435 = math.tanh %434 : vector<8x256xf32>
    %cst_181 = arith.constant 5.000000e-01 : f32
    %436 = vector.broadcast %cst_181 : f32 to vector<8x256xf32>
    %437 = arith.mulf %436, %435 : vector<8x256xf32>
    %cst_182 = arith.constant 5.000000e-01 : f32
    %438 = vector.broadcast %cst_182 : f32 to vector<8x256xf32>
    %439 = arith.addf %437, %438 : vector<8x256xf32>
    %440 = arith.mulf %429, %362 : vector<8x256xf32>
    %441 = arith.mulf %421, %431 : vector<8x256xf32>
    %442 = arith.addf %440, %441 : vector<8x256xf32>
    %443 = math.tanh %442 : vector<8x256xf32>
    %444 = arith.mulf %439, %443 : vector<8x256xf32>
    %445 = arith.truncf %444 : vector<8x256xf32> to vector<8x256xbf16>
    %c0_183 = arith.constant 0 : index
    %c0_184 = arith.constant 0 : index
    %446 = vector.load %arg8[%c0_183, %c0_184] : memref<8x512xbf16, #tpu.memory_space<vmem>>, vector<8x256xbf16>
    tpu.vector_store %arg8[%c0_183, %c0_184], %445 {strides = array<i32>} : memref<8x512xbf16, #tpu.memory_space<vmem>>, vector<8x256xbf16>,
    %c0_185 = arith.constant 0 : index
    %c0_186 = arith.constant 0 : index
    %447 = vector.load %arg8[%c0_185, %c0_186] : memref<8x512xbf16, #tpu.memory_space<vmem>>, vector<8x512xbf16>
    %cst_187 = arith.constant dense<0.000000e+00> : vector<8x1024xf32>
    %448 = tpu.matmul %447, %4, %cst_187 {dimension_numbers = #tpu.dot_dimension_numbers<[1], [0], [0], [1], [0, 0, 1, 1], [], []>} : vector<8x512xbf16>, vector<512x1024xbf16>, vector<8x1024xf32> -> vector<8x1024xf32>
    %449 = vector.broadcast %5 : vector<1x1024xf32> to vector<8x1024xf32>
    %450 = arith.addf %448, %449 : vector<8x1024xf32>
    %451 = vector.extract_strided_slice %450 {offsets = [0, 0], sizes = [8, 256], strides = [1, 1]} : vector<8x1024xf32> to vector<8x256xf32>
    %cst_188 = arith.constant 5.000000e-01 : f32
    %452 = vector.broadcast %cst_188 : f32 to vector<8x256xf32>
    %453 = arith.mulf %452, %451 : vector<8x256xf32>
    %454 = math.tanh %453 : vector<8x256xf32>
    %cst_189 = arith.constant 5.000000e-01 : f32
    %455 = vector.broadcast %cst_189 : f32 to vector<8x256xf32>
    %456 = arith.mulf %455, %454 : vector<8x256xf32>
    %cst_190 = arith.constant 5.000000e-01 : f32
    %457 = vector.broadcast %cst_190 : f32 to vector<8x256xf32>
    %458 = arith.addf %456, %457 : vector<8x256xf32>
    %459 = vector.extract_strided_slice %450 {offsets = [0, 256], sizes = [8, 256], strides = [1, 1]} : vector<8x1024xf32> to vector<8x256xf32>
    %cst_191 = arith.constant 5.000000e-01 : f32
    %460 = vector.broadcast %cst_191 : f32 to vector<8x256xf32>
    %461 = arith.mulf %460, %459 : vector<8x256xf32>
    %462 = math.tanh %461 : vector<8x256xf32>
    %cst_192 = arith.constant 5.000000e-01 : f32
    %463 = vector.broadcast %cst_192 : f32 to vector<8x256xf32>
    %464 = arith.mulf %463, %462 : vector<8x256xf32>
    %cst_193 = arith.constant 5.000000e-01 : f32
    %465 = vector.broadcast %cst_193 : f32 to vector<8x256xf32>
    %466 = arith.addf %464, %465 : vector<8x256xf32>
    %467 = vector.extract_strided_slice %450 {offsets = [0, 512], sizes = [8, 256], strides = [1, 1]} : vector<8x1024xf32> to vector<8x256xf32>
    %468 = math.tanh %467 : vector<8x256xf32>
    %469 = vector.extract_strided_slice %450 {offsets = [0, 768], sizes = [8, 256], strides = [1, 1]} : vector<8x1024xf32> to vector<8x256xf32>
    %cst_194 = arith.constant 5.000000e-01 : f32
    %470 = vector.broadcast %cst_194 : f32 to vector<8x256xf32>
    %471 = arith.mulf %470, %469 : vector<8x256xf32>
    %472 = math.tanh %471 : vector<8x256xf32>
    %cst_195 = arith.constant 5.000000e-01 : f32
    %473 = vector.broadcast %cst_195 : f32 to vector<8x256xf32>
    %474 = arith.mulf %473, %472 : vector<8x256xf32>
    %cst_196 = arith.constant 5.000000e-01 : f32
    %475 = vector.broadcast %cst_196 : f32 to vector<8x256xf32>
    %476 = arith.addf %474, %475 : vector<8x256xf32>
    %477 = arith.mulf %466, %399 : vector<8x256xf32>
    %478 = arith.mulf %458, %468 : vector<8x256xf32>
    %479 = arith.addf %477, %478 : vector<8x256xf32>
    %480 = math.tanh %479 : vector<8x256xf32>
    %481 = arith.mulf %476, %480 : vector<8x256xf32>
    %482 = arith.truncf %481 : vector<8x256xf32> to vector<8x256xbf16>
    %c0_197 = arith.constant 0 : index
    %c256_198 = arith.constant 256 : index
    %483 = vector.load %arg8[%c0_197, %c256_198] : memref<8x512xbf16, #tpu.memory_space<vmem>>, vector<8x256xbf16>
    tpu.vector_store %arg8[%c0_197, %c256_198], %482 {strides = array<i32>} : memref<8x512xbf16, #tpu.memory_space<vmem>>, vector<8x256xbf16>,
    %484 = arith.index_cast %c5_i32 : i32 to index
    %c0_199 = arith.constant 0 : index
    %c0_200 = arith.constant 0 : index
    %485 = vector.load %arg5[%484, %c0_199, %c0_200] : memref<8x8x256xf32, #tpu.memory_space<vmem>>, vector<1x8x256xf32>
    %486 = vector.shape_cast %485 : vector<1x8x256xf32> to vector<8x256xf32>
    %487 = vector.shape_cast %481 : vector<8x256xf32> to vector<1x8x256xf32>
    tpu.vector_store %arg5[%484, %c0_199, %c0_200], %487 {strides = array<i32>} : memref<8x8x256xf32, #tpu.memory_space<vmem>>, vector<1x8x256xf32>,
    %c6_i32 = arith.constant 6 : i32
    %c0_201 = arith.constant 0 : index
    %c0_202 = arith.constant 0 : index
    %488 = vector.load %arg8[%c0_201, %c0_202] : memref<8x512xbf16, #tpu.memory_space<vmem>>, vector<8x256xbf16>
    %489 = arith.index_cast %c6_i32 : i32 to index
    %c0_203 = arith.constant 0 : index
    %c0_204 = arith.constant 0 : index
    %490 = vector.load %arg1[%489, %c0_203, %c0_204] : memref<8x8x1024xf32, #tpu.memory_space<vmem>>, vector<1x8x1024xf32>
    %491 = vector.shape_cast %490 : vector<1x8x1024xf32> to vector<8x1024xf32>
    %cst_205 = arith.constant dense<0.000000e+00> : vector<8x1024xf32>
    %492 = tpu.matmul %488, %3, %cst_205 {dimension_numbers = #tpu.dot_dimension_numbers<[1], [0], [0], [1], [0, 0, 1, 1], [], []>} : vector<8x256xbf16>, vector<256x1024xbf16>, vector<8x1024xf32> -> vector<8x1024xf32>
    %493 = arith.addf %491, %492 : vector<8x1024xf32>
    %494 = vector.extract_strided_slice %493 {offsets = [0, 0], sizes = [8, 256], strides = [1, 1]} : vector<8x1024xf32> to vector<8x256xf32>
    %cst_206 = arith.constant 5.000000e-01 : f32
    %495 = vector.broadcast %cst_206 : f32 to vector<8x256xf32>
    %496 = arith.mulf %495, %494 : vector<8x256xf32>
    %497 = math.tanh %496 : vector<8x256xf32>
    %cst_207 = arith.constant 5.000000e-01 : f32
    %498 = vector.broadcast %cst_207 : f32 to vector<8x256xf32>
    %499 = arith.mulf %498, %497 : vector<8x256xf32>
    %cst_208 = arith.constant 5.000000e-01 : f32
    %500 = vector.broadcast %cst_208 : f32 to vector<8x256xf32>
    %501 = arith.addf %499, %500 : vector<8x256xf32>
    %502 = vector.extract_strided_slice %493 {offsets = [0, 256], sizes = [8, 256], strides = [1, 1]} : vector<8x1024xf32> to vector<8x256xf32>
    %cst_209 = arith.constant 5.000000e-01 : f32
    %503 = vector.broadcast %cst_209 : f32 to vector<8x256xf32>
    %504 = arith.mulf %503, %502 : vector<8x256xf32>
    %505 = math.tanh %504 : vector<8x256xf32>
    %cst_210 = arith.constant 5.000000e-01 : f32
    %506 = vector.broadcast %cst_210 : f32 to vector<8x256xf32>
    %507 = arith.mulf %506, %505 : vector<8x256xf32>
    %cst_211 = arith.constant 5.000000e-01 : f32
    %508 = vector.broadcast %cst_211 : f32 to vector<8x256xf32>
    %509 = arith.addf %507, %508 : vector<8x256xf32>
    %510 = vector.extract_strided_slice %493 {offsets = [0, 512], sizes = [8, 256], strides = [1, 1]} : vector<8x1024xf32> to vector<8x256xf32>
    %511 = math.tanh %510 : vector<8x256xf32>
    %512 = vector.extract_strided_slice %493 {offsets = [0, 768], sizes = [8, 256], strides = [1, 1]} : vector<8x1024xf32> to vector<8x256xf32>
    %cst_212 = arith.constant 5.000000e-01 : f32
    %513 = vector.broadcast %cst_212 : f32 to vector<8x256xf32>
    %514 = arith.mulf %513, %512 : vector<8x256xf32>
    %515 = math.tanh %514 : vector<8x256xf32>
    %cst_213 = arith.constant 5.000000e-01 : f32
    %516 = vector.broadcast %cst_213 : f32 to vector<8x256xf32>
    %517 = arith.mulf %516, %515 : vector<8x256xf32>
    %cst_214 = arith.constant 5.000000e-01 : f32
    %518 = vector.broadcast %cst_214 : f32 to vector<8x256xf32>
    %519 = arith.addf %517, %518 : vector<8x256xf32>
    %520 = arith.mulf %509, %442 : vector<8x256xf32>
    %521 = arith.mulf %501, %511 : vector<8x256xf32>
    %522 = arith.addf %520, %521 : vector<8x256xf32>
    %523 = math.tanh %522 : vector<8x256xf32>
    %524 = arith.mulf %519, %523 : vector<8x256xf32>
    %525 = arith.truncf %524 : vector<8x256xf32> to vector<8x256xbf16>
    %c0_215 = arith.constant 0 : index
    %c0_216 = arith.constant 0 : index
    %526 = vector.load %arg8[%c0_215, %c0_216] : memref<8x512xbf16, #tpu.memory_space<vmem>>, vector<8x256xbf16>
    tpu.vector_store %arg8[%c0_215, %c0_216], %525 {strides = array<i32>} : memref<8x512xbf16, #tpu.memory_space<vmem>>, vector<8x256xbf16>,
    %c0_217 = arith.constant 0 : index
    %c0_218 = arith.constant 0 : index
    %527 = vector.load %arg8[%c0_217, %c0_218] : memref<8x512xbf16, #tpu.memory_space<vmem>>, vector<8x512xbf16>
    %cst_219 = arith.constant dense<0.000000e+00> : vector<8x1024xf32>
    %528 = tpu.matmul %527, %4, %cst_219 {dimension_numbers = #tpu.dot_dimension_numbers<[1], [0], [0], [1], [0, 0, 1, 1], [], []>} : vector<8x512xbf16>, vector<512x1024xbf16>, vector<8x1024xf32> -> vector<8x1024xf32>
    %529 = vector.broadcast %5 : vector<1x1024xf32> to vector<8x1024xf32>
    %530 = arith.addf %528, %529 : vector<8x1024xf32>
    %531 = vector.extract_strided_slice %530 {offsets = [0, 0], sizes = [8, 256], strides = [1, 1]} : vector<8x1024xf32> to vector<8x256xf32>
    %cst_220 = arith.constant 5.000000e-01 : f32
    %532 = vector.broadcast %cst_220 : f32 to vector<8x256xf32>
    %533 = arith.mulf %532, %531 : vector<8x256xf32>
    %534 = math.tanh %533 : vector<8x256xf32>
    %cst_221 = arith.constant 5.000000e-01 : f32
    %535 = vector.broadcast %cst_221 : f32 to vector<8x256xf32>
    %536 = arith.mulf %535, %534 : vector<8x256xf32>
    %cst_222 = arith.constant 5.000000e-01 : f32
    %537 = vector.broadcast %cst_222 : f32 to vector<8x256xf32>
    %538 = arith.addf %536, %537 : vector<8x256xf32>
    %539 = vector.extract_strided_slice %530 {offsets = [0, 256], sizes = [8, 256], strides = [1, 1]} : vector<8x1024xf32> to vector<8x256xf32>
    %cst_223 = arith.constant 5.000000e-01 : f32
    %540 = vector.broadcast %cst_223 : f32 to vector<8x256xf32>
    %541 = arith.mulf %540, %539 : vector<8x256xf32>
    %542 = math.tanh %541 : vector<8x256xf32>
    %cst_224 = arith.constant 5.000000e-01 : f32
    %543 = vector.broadcast %cst_224 : f32 to vector<8x256xf32>
    %544 = arith.mulf %543, %542 : vector<8x256xf32>
    %cst_225 = arith.constant 5.000000e-01 : f32
    %545 = vector.broadcast %cst_225 : f32 to vector<8x256xf32>
    %546 = arith.addf %544, %545 : vector<8x256xf32>
    %547 = vector.extract_strided_slice %530 {offsets = [0, 512], sizes = [8, 256], strides = [1, 1]} : vector<8x1024xf32> to vector<8x256xf32>
    %548 = math.tanh %547 : vector<8x256xf32>
    %549 = vector.extract_strided_slice %530 {offsets = [0, 768], sizes = [8, 256], strides = [1, 1]} : vector<8x1024xf32> to vector<8x256xf32>
    %cst_226 = arith.constant 5.000000e-01 : f32
    %550 = vector.broadcast %cst_226 : f32 to vector<8x256xf32>
    %551 = arith.mulf %550, %549 : vector<8x256xf32>
    %552 = math.tanh %551 : vector<8x256xf32>
    %cst_227 = arith.constant 5.000000e-01 : f32
    %553 = vector.broadcast %cst_227 : f32 to vector<8x256xf32>
    %554 = arith.mulf %553, %552 : vector<8x256xf32>
    %cst_228 = arith.constant 5.000000e-01 : f32
    %555 = vector.broadcast %cst_228 : f32 to vector<8x256xf32>
    %556 = arith.addf %554, %555 : vector<8x256xf32>
    %557 = arith.mulf %546, %479 : vector<8x256xf32>
    %558 = arith.mulf %538, %548 : vector<8x256xf32>
    %559 = arith.addf %557, %558 : vector<8x256xf32>
    %560 = math.tanh %559 : vector<8x256xf32>
    %561 = arith.mulf %556, %560 : vector<8x256xf32>
    %562 = arith.truncf %561 : vector<8x256xf32> to vector<8x256xbf16>
    %c0_229 = arith.constant 0 : index
    %c256_230 = arith.constant 256 : index
    %563 = vector.load %arg8[%c0_229, %c256_230] : memref<8x512xbf16, #tpu.memory_space<vmem>>, vector<8x256xbf16>
    tpu.vector_store %arg8[%c0_229, %c256_230], %562 {strides = array<i32>} : memref<8x512xbf16, #tpu.memory_space<vmem>>, vector<8x256xbf16>,
    %564 = arith.index_cast %c6_i32 : i32 to index
    %c0_231 = arith.constant 0 : index
    %c0_232 = arith.constant 0 : index
    %565 = vector.load %arg5[%564, %c0_231, %c0_232] : memref<8x8x256xf32, #tpu.memory_space<vmem>>, vector<1x8x256xf32>
    %566 = vector.shape_cast %565 : vector<1x8x256xf32> to vector<8x256xf32>
    %567 = vector.shape_cast %561 : vector<8x256xf32> to vector<1x8x256xf32>
    tpu.vector_store %arg5[%564, %c0_231, %c0_232], %567 {strides = array<i32>} : memref<8x8x256xf32, #tpu.memory_space<vmem>>, vector<1x8x256xf32>,
    %c7_i32 = arith.constant 7 : i32
    %c0_233 = arith.constant 0 : index
    %c0_234 = arith.constant 0 : index
    %568 = vector.load %arg8[%c0_233, %c0_234] : memref<8x512xbf16, #tpu.memory_space<vmem>>, vector<8x256xbf16>
    %569 = arith.index_cast %c7_i32 : i32 to index
    %c0_235 = arith.constant 0 : index
    %c0_236 = arith.constant 0 : index
    %570 = vector.load %arg1[%569, %c0_235, %c0_236] : memref<8x8x1024xf32, #tpu.memory_space<vmem>>, vector<1x8x1024xf32>
    %571 = vector.shape_cast %570 : vector<1x8x1024xf32> to vector<8x1024xf32>
    %cst_237 = arith.constant dense<0.000000e+00> : vector<8x1024xf32>
    %572 = tpu.matmul %568, %3, %cst_237 {dimension_numbers = #tpu.dot_dimension_numbers<[1], [0], [0], [1], [0, 0, 1, 1], [], []>} : vector<8x256xbf16>, vector<256x1024xbf16>, vector<8x1024xf32> -> vector<8x1024xf32>
    %573 = arith.addf %571, %572 : vector<8x1024xf32>
    %574 = vector.extract_strided_slice %573 {offsets = [0, 0], sizes = [8, 256], strides = [1, 1]} : vector<8x1024xf32> to vector<8x256xf32>
    %cst_238 = arith.constant 5.000000e-01 : f32
    %575 = vector.broadcast %cst_238 : f32 to vector<8x256xf32>
    %576 = arith.mulf %575, %574 : vector<8x256xf32>
    %577 = math.tanh %576 : vector<8x256xf32>
    %cst_239 = arith.constant 5.000000e-01 : f32
    %578 = vector.broadcast %cst_239 : f32 to vector<8x256xf32>
    %579 = arith.mulf %578, %577 : vector<8x256xf32>
    %cst_240 = arith.constant 5.000000e-01 : f32
    %580 = vector.broadcast %cst_240 : f32 to vector<8x256xf32>
    %581 = arith.addf %579, %580 : vector<8x256xf32>
    %582 = vector.extract_strided_slice %573 {offsets = [0, 256], sizes = [8, 256], strides = [1, 1]} : vector<8x1024xf32> to vector<8x256xf32>
    %cst_241 = arith.constant 5.000000e-01 : f32
    %583 = vector.broadcast %cst_241 : f32 to vector<8x256xf32>
    %584 = arith.mulf %583, %582 : vector<8x256xf32>
    %585 = math.tanh %584 : vector<8x256xf32>
    %cst_242 = arith.constant 5.000000e-01 : f32
    %586 = vector.broadcast %cst_242 : f32 to vector<8x256xf32>
    %587 = arith.mulf %586, %585 : vector<8x256xf32>
    %cst_243 = arith.constant 5.000000e-01 : f32
    %588 = vector.broadcast %cst_243 : f32 to vector<8x256xf32>
    %589 = arith.addf %587, %588 : vector<8x256xf32>
    %590 = vector.extract_strided_slice %573 {offsets = [0, 512], sizes = [8, 256], strides = [1, 1]} : vector<8x1024xf32> to vector<8x256xf32>
    %591 = math.tanh %590 : vector<8x256xf32>
    %592 = vector.extract_strided_slice %573 {offsets = [0, 768], sizes = [8, 256], strides = [1, 1]} : vector<8x1024xf32> to vector<8x256xf32>
    %cst_244 = arith.constant 5.000000e-01 : f32
    %593 = vector.broadcast %cst_244 : f32 to vector<8x256xf32>
    %594 = arith.mulf %593, %592 : vector<8x256xf32>
    %595 = math.tanh %594 : vector<8x256xf32>
    %cst_245 = arith.constant 5.000000e-01 : f32
    %596 = vector.broadcast %cst_245 : f32 to vector<8x256xf32>
    %597 = arith.mulf %596, %595 : vector<8x256xf32>
    %cst_246 = arith.constant 5.000000e-01 : f32
    %598 = vector.broadcast %cst_246 : f32 to vector<8x256xf32>
    %599 = arith.addf %597, %598 : vector<8x256xf32>
    %600 = arith.mulf %589, %522 : vector<8x256xf32>
    %601 = arith.mulf %581, %591 : vector<8x256xf32>
    %602 = arith.addf %600, %601 : vector<8x256xf32>
    %603 = math.tanh %602 : vector<8x256xf32>
    %604 = arith.mulf %599, %603 : vector<8x256xf32>
    %605 = arith.truncf %604 : vector<8x256xf32> to vector<8x256xbf16>
    %c0_247 = arith.constant 0 : index
    %c0_248 = arith.constant 0 : index
    %606 = vector.load %arg8[%c0_247, %c0_248] : memref<8x512xbf16, #tpu.memory_space<vmem>>, vector<8x256xbf16>
    tpu.vector_store %arg8[%c0_247, %c0_248], %605 {strides = array<i32>} : memref<8x512xbf16, #tpu.memory_space<vmem>>, vector<8x256xbf16>,
    %c0_249 = arith.constant 0 : index
    %c0_250 = arith.constant 0 : index
    %607 = vector.load %arg8[%c0_249, %c0_250] : memref<8x512xbf16, #tpu.memory_space<vmem>>, vector<8x512xbf16>
    %cst_251 = arith.constant dense<0.000000e+00> : vector<8x1024xf32>
    %608 = tpu.matmul %607, %4, %cst_251 {dimension_numbers = #tpu.dot_dimension_numbers<[1], [0], [0], [1], [0, 0, 1, 1], [], []>} : vector<8x512xbf16>, vector<512x1024xbf16>, vector<8x1024xf32> -> vector<8x1024xf32>
    %609 = vector.broadcast %5 : vector<1x1024xf32> to vector<8x1024xf32>
    %610 = arith.addf %608, %609 : vector<8x1024xf32>
    %611 = vector.extract_strided_slice %610 {offsets = [0, 0], sizes = [8, 256], strides = [1, 1]} : vector<8x1024xf32> to vector<8x256xf32>
    %cst_252 = arith.constant 5.000000e-01 : f32
    %612 = vector.broadcast %cst_252 : f32 to vector<8x256xf32>
    %613 = arith.mulf %612, %611 : vector<8x256xf32>
    %614 = math.tanh %613 : vector<8x256xf32>
    %cst_253 = arith.constant 5.000000e-01 : f32
    %615 = vector.broadcast %cst_253 : f32 to vector<8x256xf32>
    %616 = arith.mulf %615, %614 : vector<8x256xf32>
    %cst_254 = arith.constant 5.000000e-01 : f32
    %617 = vector.broadcast %cst_254 : f32 to vector<8x256xf32>
    %618 = arith.addf %616, %617 : vector<8x256xf32>
    %619 = vector.extract_strided_slice %610 {offsets = [0, 256], sizes = [8, 256], strides = [1, 1]} : vector<8x1024xf32> to vector<8x256xf32>
    %cst_255 = arith.constant 5.000000e-01 : f32
    %620 = vector.broadcast %cst_255 : f32 to vector<8x256xf32>
    %621 = arith.mulf %620, %619 : vector<8x256xf32>
    %622 = math.tanh %621 : vector<8x256xf32>
    %cst_256 = arith.constant 5.000000e-01 : f32
    %623 = vector.broadcast %cst_256 : f32 to vector<8x256xf32>
    %624 = arith.mulf %623, %622 : vector<8x256xf32>
    %cst_257 = arith.constant 5.000000e-01 : f32
    %625 = vector.broadcast %cst_257 : f32 to vector<8x256xf32>
    %626 = arith.addf %624, %625 : vector<8x256xf32>
    %627 = vector.extract_strided_slice %610 {offsets = [0, 512], sizes = [8, 256], strides = [1, 1]} : vector<8x1024xf32> to vector<8x256xf32>
    %628 = math.tanh %627 : vector<8x256xf32>
    %629 = vector.extract_strided_slice %610 {offsets = [0, 768], sizes = [8, 256], strides = [1, 1]} : vector<8x1024xf32> to vector<8x256xf32>
    %cst_258 = arith.constant 5.000000e-01 : f32
    %630 = vector.broadcast %cst_258 : f32 to vector<8x256xf32>
    %631 = arith.mulf %630, %629 : vector<8x256xf32>
    %632 = math.tanh %631 : vector<8x256xf32>
    %cst_259 = arith.constant 5.000000e-01 : f32
    %633 = vector.broadcast %cst_259 : f32 to vector<8x256xf32>
    %634 = arith.mulf %633, %632 : vector<8x256xf32>
    %cst_260 = arith.constant 5.000000e-01 : f32
    %635 = vector.broadcast %cst_260 : f32 to vector<8x256xf32>
    %636 = arith.addf %634, %635 : vector<8x256xf32>
    %637 = arith.mulf %626, %559 : vector<8x256xf32>
    %638 = arith.mulf %618, %628 : vector<8x256xf32>
    %639 = arith.addf %637, %638 : vector<8x256xf32>
    %640 = math.tanh %639 : vector<8x256xf32>
    %641 = arith.mulf %636, %640 : vector<8x256xf32>
    %642 = arith.truncf %641 : vector<8x256xf32> to vector<8x256xbf16>
    %c0_261 = arith.constant 0 : index
    %c256_262 = arith.constant 256 : index
    %643 = vector.load %arg8[%c0_261, %c256_262] : memref<8x512xbf16, #tpu.memory_space<vmem>>, vector<8x256xbf16>
    tpu.vector_store %arg8[%c0_261, %c256_262], %642 {strides = array<i32>} : memref<8x512xbf16, #tpu.memory_space<vmem>>, vector<8x256xbf16>,
    %644 = arith.index_cast %c7_i32 : i32 to index
    %c0_263 = arith.constant 0 : index
    %c0_264 = arith.constant 0 : index
    %645 = vector.load %arg5[%644, %c0_263, %c0_264] : memref<8x8x256xf32, #tpu.memory_space<vmem>>, vector<1x8x256xf32>
    %646 = vector.shape_cast %645 : vector<1x8x256xf32> to vector<8x256xf32>
    %647 = vector.shape_cast %641 : vector<8x256xf32> to vector<1x8x256xf32>
    tpu.vector_store %arg5[%644, %c0_263, %c0_264], %647 {strides = array<i32>} : memref<8x8x256xf32, #tpu.memory_space<vmem>>, vector<1x8x256xf32>,
    %c8_i32 = arith.constant 8 : i32
    %c0_265 = arith.constant 0 : index
    %c0_266 = arith.constant 0 : index
    %648 = vector.load %arg6[%c0_265, %c0_266] : memref<8x256xf32, #tpu.memory_space<vmem>>, vector<8x256xf32>
    tpu.vector_store %arg6[%c0_265, %c0_266], %602 {strides = array<i32>} : memref<8x256xf32, #tpu.memory_space<vmem>>, vector<8x256xf32>,
    %c0_267 = arith.constant 0 : index
    %c0_268 = arith.constant 0 : index
    %649 = vector.load %arg7[%c0_267, %c0_268] : memref<8x256xf32, #tpu.memory_space<vmem>>, vector<8x256xf32>
    tpu.vector_store %arg7[%c0_267, %c0_268], %639 {strides = array<i32>} : memref<8x256xf32, #tpu.memory_space<vmem>>, vector<8x256xf32>,
    return
  }
  func.func @transform_0(%arg0: i32) -> (i32, i32, i32) {
    %c0_i32 = arith.constant 0 : i32
    %c0_i32_0 = arith.constant 0 : i32
    %c0_i32_1 = arith.constant 0 : i32
    return %arg0, %c0_i32, %c0_i32_0 : i32, i32, i32
  }
  func.func @transform_1(%arg0: i32) -> (i32, i32) {
    %c0_i32 = arith.constant 0 : i32
    %c0_i32_0 = arith.constant 0 : i32
    %c0_i32_1 = arith.constant 0 : i32
    return %c0_i32, %c0_i32_0 : i32, i32
  }
  func.func @transform_2(%arg0: i32) -> (i32, i32) {
    %c0_i32 = arith.constant 0 : i32
    %c0_i32_0 = arith.constant 0 : i32
    %c0_i32_1 = arith.constant 0 : i32
    return %c0_i32, %c0_i32_0 : i32, i32
  }
  func.func @transform_3(%arg0: i32) -> (i32, i32) {
    %c0_i32 = arith.constant 0 : i32
    %c0_i32_0 = arith.constant 0 : i32
    %c0_i32_1 = arith.constant 0 : i32
    return %c0_i32, %c0_i32_0 : i32, i32
  }
  func.func @transform_4(%arg0: i32) -> (i32, i32, i32) {
    %c0_i32 = arith.constant 0 : i32
    %c0_i32_0 = arith.constant 0 : i32
    %c0_i32_1 = arith.constant 0 : i32
    return %arg0, %c0_i32, %c0_i32_0 : i32, i32, i32
  }
}

</mosaic_0001>

<llo_original>
// kernel: tpu_custom_call.1
$region0: #{tpu_custom_call.1}
  #allocation0 [shape = 'u32[]', space=smem, size = 0x4, offset = 0x4, fixed_abs, tag = 'smem constant byte address 0x4 - core index']
  #allocation1 [shape = 'u32[144,128]{1,0:T(1,128)}', space=vmem, size = 0x12000, scoped, tag = 'internal scratch']
  #allocation2 [shape = 'f32[8,256]{1,0:T(8,128)}', space=vmem, size = 0x2000, scoped, tag = 'scratch operand']
  #allocation3 [shape = 'f32[8,256]{1,0:T(8,128)}', space=vmem, size = 0x2000, scoped, tag = 'scratch operand']
  #allocation4 [shape = 'bf16[8,512]{1,0:T(8,128)(2,1)}', space=vmem, size = 0x2000, scoped, tag = 'scratch operand']
  %s0 = inlined_call_operand.hbm [shape: f32[8,8,1024], index: 0, kind: input, shape index: {}]
  %s1 = inlined_call_operand.hbm [shape: bf16[256,1024], index: 1, kind: input, shape index: {}]
  %s2 = inlined_call_operand.hbm [shape: bf16[512,1024], index: 2, kind: input, shape index: {}]
  %s3 = inlined_call_operand.vmem [shape: f32[1,1024], index: 3, kind: input, shape index: {}]
  %s4 = inlined_call_operand.hbm [shape: f32[8,8,256], index: 4, kind: output, shape index: {}]
  %s5 = sld [smem:[#allocation0]]
  $region42: #{tpu_custom_call.1} parent=0
    _
  %s7 = ssub.s32 1, %s5
  %s8 = scalar_select 0, %s7, %s5
  $region1: #{tpu_custom_call.1} parent=0
    #allocation5 [shape = 'u8[262144]{0}', space=vmem, size = 0x40000, scoped, tag = 'input window, operand 0, single buffered']
    #allocation6 [shape = 's32[1]{0}', space=sflag, size = 0x4, scoped, tag = 'scoped memory for tpu_custom_call.1']
    #allocation7 [shape = 's32[1]{0}', space=sflag, size = 0x4, scoped, tag = 'scoped memory for tpu_custom_call.1']
    #allocation8 [shape = 'u8[524288]{0}', space=vmem, size = 0x80000, scoped, tag = 'input window, operand 1, single buffered']
    #allocation9 [shape = 's32[1]{0}', space=sflag, size = 0x4, scoped, tag = 'scoped memory for tpu_custom_call.1']
    #allocation10 [shape = 'u8[1048576]{0}', space=vmem, size = 0x100000, scoped, tag = 'input window, operand 2, single buffered']
    #allocation11 [shape = 'u8[65536]{0}', space=vmem, size = 0x10000, scoped, tag = 'output window, operand 0, single buffered']
    %9 = vsyncpa [#allocation6], 0
    %10 = vsyncpa [#allocation9], 0
    %11 = vsyncpa [#allocation7], 0
    // Predicated region
    $region2: #{tpu_custom_call.1} parent=1 // pred_check
      _
    $region3: #{tpu_custom_call.1} parent=1 // pred_check_branch
      %13 = sbr.rel (0) target = $region5
    $region4: #{tpu_custom_call.1} parent=1 // pred_region
      %s15 = ssub.s32 8192, 8192
      %16 = vsyncadd [#allocation6], %s15
      %s17 = sshll.u32 [#allocation5], 4
      %s18 = int_to_ptr.vmem [resolvable:$true] %s17
      %23 = dma.hbm_to_vmem [thread:$0]  %s0, 8192, %s18, [#allocation6], 1024, 1024, 64
    $region5: #{tpu_custom_call.1} parent=1 // pred_fallthru
      _
    // Predicated region
    $region6: #{tpu_custom_call.1} parent=1 // pred_check
      _
    $region7: #{tpu_custom_call.1} parent=1 // pred_check_branch
      %25 = sbr.rel (0) target = $region9
    $region8: #{tpu_custom_call.1} parent=1 // pred_region
      %s27 = ssub.s32 16384, 16384
      %28 = vsyncadd [#allocation9], %s27
      %s29 = sshll.u32 [#allocation8], 4
      %s30 = int_to_ptr.vmem [resolvable:$true] %s29
      %35 = dma.hbm_to_vmem [thread:$0]  %s1, 16384, %s30, [#allocation9], 512, 512, 32
    $region9: #{tpu_custom_call.1} parent=1 // pred_fallthru
      _
    // Predicated region
    $region10: #{tpu_custom_call.1} parent=1 // pred_check
      _
    $region11: #{tpu_custom_call.1} parent=1 // pred_check_branch
      %37 = sbr.rel (0) target = $region13
    $region12: #{tpu_custom_call.1} parent=1 // pred_region
      %s39 = ssub.s32 32768, 32768
      %40 = vsyncadd [#allocation9], %s39
      %s41 = sshll.u32 [#allocation10], 4
      %s42 = int_to_ptr.vmem [resolvable:$true] %s41
      %47 = dma.hbm_to_vmem [thread:$0]  %s2, 32768, %s42, [#allocation9], 512, 512, 32
    $region13: #{tpu_custom_call.1} parent=1 // pred_fallthru
      _
    // Predicated region
    $region14: #{tpu_custom_call.1} parent=1 // pred_check
      _
    $region15: #{tpu_custom_call.1} parent=1 // pred_check_branch
      %49 = sbr.rel (0) target = $region17
    $region16: #{tpu_custom_call.1} parent=1 // pred_region
      _
    $region17: #{tpu_custom_call.1} parent=1 // pred_fallthru
      _
    // Predicated region
    $region18: #{tpu_custom_call.1} parent=1 // pred_check
      _
    $region19: #{tpu_custom_call.1} parent=1 // pred_check_branch
      %51 = sbr.rel (0) target = $region21
    $region20: #{tpu_custom_call.1} parent=1 // pred_region
      %52 = dma.done [#allocation6], 8192
    $region21: #{tpu_custom_call.1} parent=1 // pred_fallthru
      _
    // Predicated region
    $region22: #{tpu_custom_call.1} parent=1 // pred_check
      _
    $region23: #{tpu_custom_call.1} parent=1 // pred_check_branch
      %54 = sbr.rel (0) target = $region25
    $region24: #{tpu_custom_call.1} parent=1 // pred_region
      %55 = dma.done [#allocation9], 16384
    $region25: #{tpu_custom_call.1} parent=1 // pred_fallthru
      _
    // Predicated region
    $region26: #{tpu_custom_call.1} parent=1 // pred_check
      _
    $region27: #{tpu_custom_call.1} parent=1 // pred_check_branch
      %57 = sbr.rel (0) target = $region29
    $region28: #{tpu_custom_call.1} parent=1 // pred_region
      %58 = dma.done [#allocation9], 32768
    $region29: #{tpu_custom_call.1} parent=1 // pred_fallthru
      _
    %p60 = scmp.eq.s32.totalorder 0, 0
    // Predicated region
    $region30: #{tpu_custom_call.1} parent=1 // pred_check
      %p61 = pneg %p60
    $region31: #{tpu_custom_call.1} parent=1 // pred_check_branch
      %63 = sbr.rel (%p61) target = $region33
    $region32: #{tpu_custom_call.1} parent=1 // pred_region
      %64 = vst [vmem:[#allocation2] sm:$0xff] 0.0
      %65 = vst [vmem:[#allocation2 + $0x8] sm:$0xff] 0.0
      %66 = vst [vmem:[#allocation3] sm:$0xff] 0.0
      %67 = vst [vmem:[#allocation3 + $0x8] sm:$0xff] 0.0
      %68 = vst [vmem:[#allocation4] sm:$0xff] 0
      %69 = vst [vmem:[#allocation4 + $0x8] sm:$0xff] 0
    $region33: #{tpu_custom_call.1} parent=1 // pred_fallthru
      _
    %v70 = vld [vmem:[#allocation8] sm:$0xff]
    %v71 = vld [vmem:[#allocation8 + $0x8] sm:$0xff]
    %v72 = vld [vmem:[#allocation8 + $0x10] sm:$0xff]
    %v73 = vld [vmem:[#allocation8 + $0x18] sm:$0xff]
    %v74 = vld [vmem:[#allocation8 + $0x20] sm:$0xff]
    %v75 = vld [vmem:[#allocation8 + $0x28] sm:$0xff]
    %v76 = vld [vmem:[#allocation8 + $0x30] sm:$0xff]
    %v77 = vld [vmem:[#allocation8 + $0x38] sm:$0xff]
    %v78 = vld [vmem:[#allocation8 + $0x40] sm:$0xff]
    %v79 = vld [vmem:[#allocation8 + $0x48] sm:$0xff]
    %v80 = vld [vmem:[#allocation8 + $0x50] sm:$0xff]
    %v81 = vld [vmem:[#allocation8 + $0x58] sm:$0xff]
    %v82 = vld [vmem:[#allocation8 + $0x60] sm:$0xff]
    %v83 = vld [vmem:[#allocation8 + $0x68] sm:$0xff]
    %v84 = vld [vmem:[#allocation8 + $0x70] sm:$0xff]
    %v85 = vld [vmem:[#allocation8 + $0x78] sm:$0xff]
    %v86 = vld [vmem:[#allocation8 + $0x80] sm:$0xff]
    %v87 = vld [vmem:[#allocation8 + $0x88] sm:$0xff]
    %v88 = vld [vmem:[#allocation8 + $0x90] sm:$0xff]
    %v89 = vld [vmem:[#allocation8 + $0x98] sm:$0xff]
    %v90 = vld [vmem:[#allocation8 + $0xa0] sm:$0xff]
    %v91 = vld [vmem:[#allocation8 + $0xa8] sm:$0xff]
    %v92 = vld [vmem:[#allocation8 + $0xb0] sm:$0xff]
    %v93 = vld [vmem:[#allocation8 + $0xb8] sm:$0xff]
    %v94 = vld [vmem:[#allocation8 + $0xc0] sm:$0xff]
    %v95 = vld [vmem:[#allocation8 + $0xc8] sm:$0xff]
    %v96 = vld [vmem:[#allocation8 + $0xd0] sm:$0xff]
    %v97 = vld [vmem:[#allocation8 + $0xd8] sm:$0xff]
    %v98 = vld [vmem:[#allocation8 + $0xe0] sm:$0xff]
    %v99 = vld [vmem:[#allocation8 + $0xe8] sm:$0xff]
    %v100 = vld [vmem:[#allocation8 + $0xf0] sm:$0xff]
    %v101 = vld [vmem:[#allocation8 + $0xf8] sm:$0xff]
    %v102 = vld [vmem:[#allocation8 + $0x100] sm:$0xff]
    %v103 = vld [vmem:[#allocation8 + $0x108] sm:$0xff]
    %v104 = vld [vmem:[#allocation8 + $0x110] sm:$0xff]
    %v105 = vld [vmem:[#allocation8 + $0x118] sm:$0xff]
    %v106 = vld [vmem:[#allocation8 + $0x120] sm:$0xff]
    %v107 = vld [vmem:[#allocation8 + $0x128] sm:$0xff]
    %v108 = vld [vmem:[#allocation8 + $0x130] sm:$0xff]
    %v109 = vld [vmem:[#allocation8 + $0x138] sm:$0xff]
    %v110 = vld [vmem:[#allocation8 + $0x140] sm:$0xff]
    %v111 = vld [vmem:[#allocation8 + $0x148] sm:$0xff]
    %v112 = vld [vmem:[#allocation8 + $0x150] sm:$0xff]
    %v113 = vld [vmem:[#allocation8 + $0x158] sm:$0xff]
    %v114 = vld [vmem:[#allocation8 + $0x160] sm:$0xff]
    %v115 = vld [vmem:[#allocation8 + $0x168] sm:$0xff]
    %v116 = vld [vmem:[#allocation8 + $0x170] sm:$0xff]
    %v117 = vld [vmem:[#allocation8 + $0x178] sm:$0xff]
    %v118 = vld [vmem:[#allocation8 + $0x180] sm:$0xff]
    %v119 = vld [vmem:[#allocation8 + $0x188] sm:$0xff]
    %v120 = vld [vmem:[#allocation8 + $0x190] sm:$0xff]
    %v121 = vld [vmem:[#allocation8 + $0x198] sm:$0xff]
    %v122 = vld [vmem:[#allocation8 + $0x1a0] sm:$0xff]
    %v123 = vld [vmem:[#allocation8 + $0x1a8] sm:$0xff]
    %v124 = vld [vmem:[#allocation8 + $0x1b0] sm:$0xff]
    %v125 = vld [vmem:[#allocation8 + $0x1b8] sm:$0xff]
    %v126 = vld [vmem:[#allocation8 + $0x1c0] sm:$0xff]
    %v127 = vld [vmem:[#allocation8 + $0x1c8] sm:$0xff]
    %v128 = vld [vmem:[#allocation8 + $0x1d0] sm:$0xff]
    %v129 = vld [vmem:[#allocation8 + $0x1d8] sm:$0xff]
    %v130 = vld [vmem:[#allocation8 + $0x1e0] sm:$0xff]
    %v131 = vld [vmem:[#allocation8 + $0x1e8] sm:$0xff]
    %v132 = vld [vmem:[#allocation8 + $0x1f0] sm:$0xff]
    %v133 = vld [vmem:[#allocation8 + $0x1f8] sm:$0xff]
    %v134 = vld [vmem:[#allocation8 + $0x200] sm:$0xff]
    %v135 = vld [vmem:[#allocation8 + $0x208] sm:$0xff]
    %v136 = vld [vmem:[#allocation8 + $0x210] sm:$0xff]
    %v137 = vld [vmem:[#allocation8 + $0x218] sm:$0xff]
    %v138 = vld [vmem:[#allocation8 + $0x220] sm:$0xff]
    %v139 = vld [vmem:[#allocation8 + $0x228] sm:$0xff]
    %v140 = vld [vmem:[#allocation8 + $0x230] sm:$0xff]
    %v141 = vld [vmem:[#allocation8 + $0x238] sm:$0xff]
    %v142 = vld [vmem:[#allocation8 + $0x240] sm:$0xff]
    %v143 = vld [vmem:[#allocation8 + $0x248] sm:$0xff]
    %v144 = vld [vmem:[#allocation8 + $0x250] sm:$0xff]
    %v145 = vld [vmem:[#allocation8 + $0x258] sm:$0xff]
    %v146 = vld [vmem:[#allocation8 + $0x260] sm:$0xff]
    %v147 = vld [vmem:[#allocation8 + $0x268] sm:$0xff]
    %v148 = vld [vmem:[#allocation8 + $0x270] sm:$0xff]
    %v149 = vld [vmem:[#allocation8 + $0x278] sm:$0xff]
    %v150 = vld [vmem:[#allocation8 + $0x280] sm:$0xff]
    %v151 = vld [vmem:[#allocation8 + $0x288] sm:$0xff]
    %v152 = vld [vmem:[#allocation8 + $0x290] sm:$0xff]
    %v153 = vld [vmem:[#allocation8 + $0x298] sm:$0xff]
    %v154 = vld [vmem:[#allocation8 + $0x2a0] sm:$0xff]
    %v155 = vld [vmem:[#allocation8 + $0x2a8] sm:$0xff]
    %v156 = vld [vmem:[#allocation8 + $0x2b0] sm:$0xff]
    %v157 = vld [vmem:[#allocation8 + $0x2b8] sm:$0xff]
    %v158 = vld [vmem:[#allocation8 + $0x2c0] sm:$0xff]
    %v159 = vld [vmem:[#allocation8 + $0x2c8] sm:$0xff]
    %v160 = vld [vmem:[#allocation8 + $0x2d0] sm:$0xff]
    %v161 = vld [vmem:[#allocation8 + $0x2d8] sm:$0xff]
    %v162 = vld [vmem:[#allocation8 + $0x2e0] sm:$0xff]
    %v163 = vld [vmem:[#allocation8 + $0x2e8] sm:$0xff]
    %v164 = vld [vmem:[#allocation8 + $0x2f0] sm:$0xff]
    %v165 = vld [vmem:[#allocation8 + $0x2f8] sm:$0xff]
    %v166 = vld [vmem:[#allocation8 + $0x300] sm:$0xff]
    %v167 = vld [vmem:[#allocation8 + $0x308] sm:$0xff]
    %v168 = vld [vmem:[#allocation8 + $0x310] sm:$0xff]
    %v169 = vld [vmem:[#allocation8 + $0x318] sm:$0xff]
    %v170 = vld [vmem:[#allocation8 + $0x320] sm:$0xff]
    %v171 = vld [vmem:[#allocation8 + $0x328] sm:$0xff]
    %v172 = vld [vmem:[#allocation8 + $0x330] sm:$0xff]
    %v173 = vld [vmem:[#allocation8 + $0x338] sm:$0xff]
    %v174 = vld [vmem:[#allocation8 + $0x340] sm:$0xff]
    %v175 = vld [vmem:[#allocation8 + $0x348] sm:$0xff]
    %v176 = vld [vmem:[#allocation8 + $0x350] sm:$0xff]
    %v177 = vld [vmem:[#allocation8 + $0x358] sm:$0xff]
    %v178 = vld [vmem:[#allocation8 + $0x360] sm:$0xff]
    %v179 = vld [vmem:[#allocation8 + $0x368] sm:$0xff]
    %v180 = vld [vmem:[#allocation8 + $0x370] sm:$0xff]
    %v181 = vld [vmem:[#allocation8 + $0x378] sm:$0xff]
    %v182 = vld [vmem:[#allocation8 + $0x380] sm:$0xff]
    %v183 = vld [vmem:[#allocation8 + $0x388] sm:$0xff]
    %v184 = vld [vmem:[#allocation8 + $0x390] sm:$0xff]
    %v185 = vld [vmem:[#allocation8 + $0x398] sm:$0xff]
    %v186 = vld [vmem:[#allocation8 + $0x3a0] sm:$0xff]
    %v187 = vld [vmem:[#allocation8 + $0x3a8] sm:$0xff]
    %v188 = vld [vmem:[#allocation8 + $0x3b0] sm:$0xff]
    %v189 = vld [vmem:[#allocation8 + $0x3b8] sm:$0xff]
    %v190 = vld [vmem:[#allocation8 + $0x3c0] sm:$0xff]
    %v191 = vld [vmem:[#allocation8 + $0x3c8] sm:$0xff]
    %v192 = vld [vmem:[#allocation8 + $0x3d0] sm:$0xff]
    %v193 = vld [vmem:[#allocation8 + $0x3d8] sm:$0xff]
    %v194 = vld [vmem:[#allocation8 + $0x3e0] sm:$0xff]
    %v195 = vld [vmem:[#allocation8 + $0x3e8] sm:$0xff]
    %v196 = vld [vmem:[#allocation8 + $0x3f0] sm:$0xff]
    %v197 = vld [vmem:[#allocation8 + $0x3f8] sm:$0xff]
    %v198 = vld [vmem:[#allocation10] sm:$0xff]
    %v199 = vld [vmem:[#allocation10 + $0x8] sm:$0xff]
    %v200 = vld [vmem:[#allocation10 + $0x10] sm:$0xff]
    %v201 = vld [vmem:[#allocation10 + $0x18] sm:$0xff]
    %v202 = vld [vmem:[#allocation10 + $0x20] sm:$0xff]
    %v203 = vld [vmem:[#allocation10 + $0x28] sm:$0xff]
    %v204 = vld [vmem:[#allocation10 + $0x30] sm:$0xff]
    %v205 = vld [vmem:[#allocation10 + $0x38] sm:$0xff]
    %v206 = vld [vmem:[#allocation10 + $0x40] sm:$0xff]
    %v207 = vld [vmem:[#allocation10 + $0x48] sm:$0xff]
    %v208 = vld [vmem:[#allocation10 + $0x50] sm:$0xff]
    %v209 = vld [vmem:[#allocation10 + $0x58] sm:$0xff]
    %v210 = vld [vmem:[#allocation10 + $0x60] sm:$0xff]
    %v211 = vld [vmem:[#allocation10 + $0x68] sm:$0xff]
    %v212 = vld [vmem:[#allocation10 + $0x70] sm:$0xff]
    %v213 = vld [vmem:[#allocation10 + $0x78] sm:$0xff]
    %v214 = vld [vmem:[#allocation10 + $0x80] sm:$0xff]
    %v215 = vld [vmem:[#allocation10 + $0x88] sm:$0xff]
    %v216 = vld [vmem:[#allocation10 + $0x90] sm:$0xff]
    %v217 = vld [vmem:[#allocation10 + $0x98] sm:$0xff]
    %v218 = vld [vmem:[#allocation10 + $0xa0] sm:$0xff]
    %v219 = vld [vmem:[#allocation10 + $0xa8] sm:$0xff]
    %v220 = vld [vmem:[#allocation10 + $0xb0] sm:$0xff]
    %v221 = vld [vmem:[#allocation10 + $0xb8] sm:$0xff]
    %v222 = vld [vmem:[#allocation10 + $0xc0] sm:$0xff]
    %v223 = vld [vmem:[#allocation10 + $0xc8] sm:$0xff]
    %v224 = vld [vmem:[#allocation10 + $0xd0] sm:$0xff]
    %v225 = vld [vmem:[#allocation10 + $0xd8] sm:$0xff]
    %v226 = vld [vmem:[#allocation10 + $0xe0] sm:$0xff]
    %v227 = vld [vmem:[#allocation10 + $0xe8] sm:$0xff]
    %v228 = vld [vmem:[#allocation10 + $0xf0] sm:$0xff]
    %v229 = vld [vmem:[#allocation10 + $0xf8] sm:$0xff]
    %v230 = vld [vmem:[#allocation10 + $0x100] sm:$0xff]
    %v231 = vld [vmem:[#allocation10 + $0x108] sm:$0xff]
    %v232 = vld [vmem:[#allocation10 + $0x110] sm:$0xff]
    %v233 = vld [vmem:[#allocation10 + $0x118] sm:$0xff]
    %v234 = vld [vmem:[#allocation10 + $0x120] sm:$0xff]
    %v235 = vld [vmem:[#allocation10 + $0x128] sm:$0xff]
    %v236 = vld [vmem:[#allocation10 + $0x130] sm:$0xff]
    %v237 = vld [vmem:[#allocation10 + $0x138] sm:$0xff]
    %v238 = vld [vmem:[#allocation10 + $0x140] sm:$0xff]
    %v239 = vld [vmem:[#allocation10 + $0x148] sm:$0xff]
    %v240 = vld [vmem:[#allocation10 + $0x150] sm:$0xff]
    %v241 = vld [vmem:[#allocation10 + $0x158] sm:$0xff]
    %v242 = vld [vmem:[#allocation10 + $0x160] sm:$0xff]
    %v243 = vld [vmem:[#allocation10 + $0x168] sm:$0xff]
    %v244 = vld [vmem:[#allocation10 + $0x170] sm:$0xff]
    %v245 = vld [vmem:[#allocation10 + $0x178] sm:$0xff]
    %v246 = vld [vmem:[#allocation10 + $0x180] sm:$0xff]
    %v247 = vld [vmem:[#allocation10 + $0x188] sm:$0xff]
    %v248 = vld [vmem:[#allocation10 + $0x190] sm:$0xff]
    %v249 = vld [vmem:[#allocation10 + $0x198] sm:$0xff]
    %v250 = vld [vmem:[#allocation10 + $0x1a0] sm:$0xff]
    %v251 = vld [vmem:[#allocation10 + $0x1a8] sm:$0xff]
    %v252 = vld [vmem:[#allocation10 + $0x1b0] sm:$0xff]
    %v253 = vld [vmem:[#allocation10 + $0x1b8] sm:$0xff]
    %v254 = vld [vmem:[#allocation10 + $0x1c0] sm:$0xff]
    %v255 = vld [vmem:[#allocation10 + $0x1c8] sm:$0xff]
    %v256 = vld [vmem:[#allocation10 + $0x1d0] sm:$0xff]
    %v257 = vld [vmem:[#allocation10 + $0x1d8] sm:$0xff]
    %v258 = vld [vmem:[#allocation10 + $0x1e0] sm:$0xff]
    %v259 = vld [vmem:[#allocation10 + $0x1e8] sm:$0xff]
    %v260 = vld [vmem:[#allocation10 + $0x1f0] sm:$0xff]
    %v261 = vld [vmem:[#allocation10 + $0x1f8] sm:$0xff]
    %v262 = vld [vmem:[#allocation10 + $0x200] sm:$0xff]
    %v263 = vld [vmem:[#allocation10 + $0x208] sm:$0xff]
    %v264 = vld [vmem:[#allocation10 + $0x210] sm:$0xff]
    %v265 = vld [vmem:[#allocation10 + $0x218] sm:$0xff]
    %v266 = vld [vmem:[#allocation10 + $0x220] sm:$0xff]
    %v267 = vld [vmem:[#allocation10 + $0x228] sm:$0xff]
    %v268 = vld [vmem:[#allocation10 + $0x230] sm:$0xff]
    %v269 = vld [vmem:[#allocation10 + $0x238] sm:$0xff]
    %v270 = vld [vmem:[#allocation10 + $0x240] sm:$0xff]
    %v271 = vld [vmem:[#allocation10 + $0x248] sm:$0xff]
    %v272 = vld [vmem:[#allocation10 + $0x250] sm:$0xff]
    %v273 = vld [vmem:[#allocation10 + $0x258] sm:$0xff]
    %v274 = vld [vmem:[#allocation10 + $0x260] sm:$0xff]
    %v275 = vld [vmem:[#allocation10 + $0x268] sm:$0xff]
    %v276 = vld [vmem:[#allocation10 + $0x270] sm:$0xff]
    %v277 = vld [vmem:[#allocation10 + $0x278] sm:$0xff]
    %v278 = vld [vmem:[#allocation10 + $0x280] sm:$0xff]
    %v279 = vld [vmem:[#allocation10 + $0x288] sm:$0xff]
    %v280 = vld [vmem:[#allocation10 + $0x290] sm:$0xff]
    %v281 = vld [vmem:[#allocation10 + $0x298] sm:$0xff]
    %v282 = vld [vmem:[#allocation10 + $0x2a0] sm:$0xff]
    %v283 = vld [vmem:[#allocation10 + $0x2a8] sm:$0xff]
    %v284 = vld [vmem:[#allocation10 + $0x2b0] sm:$0xff]
    %v285 = vld [vmem:[#allocation10 + $0x2b8] sm:$0xff]
    %v286 = vld [vmem:[#allocation10 + $0x2c0] sm:$0xff]
    %v287 = vld [vmem:[#allocation10 + $0x2c8] sm:$0xff]
    %v288 = vld [vmem:[#allocation10 + $0x2d0] sm:$0xff]
    %v289 = vld [vmem:[#allocation10 + $0x2d8] sm:$0xff]
    %v290 = vld [vmem:[#allocation10 + $0x2e0] sm:$0xff]
    %v291 = vld [vmem:[#allocation10 + $0x2e8] sm:$0xff]
    %v292 = vld [vmem:[#allocation10 + $0x2f0] sm:$0xff]
    %v293 = vld [vmem:[#allocation10 + $0x2f8] sm:$0xff]
    %v294 = vld [vmem:[#allocation10 + $0x300] sm:$0xff]
    %v295 = vld [vmem:[#allocation10 + $0x308] sm:$0xff]
    %v296 = vld [vmem:[#allocation10 + $0x310] sm:$0xff]
    %v297 = vld [vmem:[#allocation10 + $0x318] sm:$0xff]
    %v298 = vld [vmem:[#allocation10 + $0x320] sm:$0xff]
    %v299 = vld [vmem:[#allocation10 + $0x328] sm:$0xff]
    %v300 = vld [vmem:[#allocation10 + $0x330] sm:$0xff]
    %v301 = vld [vmem:[#allocation10 + $0x338] sm:$0xff]
    %v302 = vld [vmem:[#allocation10 + $0x340] sm:$0xff]
    %v303 = vld [vmem:[#allocation10 + $0x348] sm:$0xff]
    %v304 = vld [vmem:[#allocation10 + $0x350] sm:$0xff]
    %v305 = vld [vmem:[#allocation10 + $0x358] sm:$0xff]
    %v306 = vld [vmem:[#allocation10 + $0x360] sm:$0xff]
    %v307 = vld [vmem:[#allocation10 + $0x368] sm:$0xff]
    %v308 = vld [vmem:[#allocation10 + $0x370] sm:$0xff]
    %v309 = vld [vmem:[#allocation10 + $0x378] sm:$0xff]
    %v310 = vld [vmem:[#allocation10 + $0x380] sm:$0xff]
    %v311 = vld [vmem:[#allocation10 + $0x388] sm:$0xff]
    %v312 = vld [vmem:[#allocation10 + $0x390] sm:$0xff]
    %v313 = vld [vmem:[#allocation10 + $0x398] sm:$0xff]
    %v314 = vld [vmem:[#allocation10 + $0x3a0] sm:$0xff]
    %v315 = vld [vmem:[#allocation10 + $0x3a8] sm:$0xff]
    %v316 = vld [vmem:[#allocation10 + $0x3b0] sm:$0xff]
    %v317 = vld [vmem:[#allocation10 + $0x3b8] sm:$0xff]
    %v318 = vld [vmem:[#allocation10 + $0x3c0] sm:$0xff]
    %v319 = vld [vmem:[#allocation10 + $0x3c8] sm:$0xff]
    %v320 = vld [vmem:[#allocation10 + $0x3d0] sm:$0xff]
    %v321 = vld [vmem:[#allocation10 + $0x3d8] sm:$0xff]
    %v322 = vld [vmem:[#allocation10 + $0x3e0] sm:$0xff]
    %v323 = vld [vmem:[#allocation10 + $0x3e8] sm:$0xff]
    %v324 = vld [vmem:[#allocation10 + $0x3f0] sm:$0xff]
    %v325 = vld [vmem:[#allocation10 + $0x3f8] sm:$0xff]
    %v326 = vld [vmem:[#allocation10 + $0x400] sm:$0xff]
    %v327 = vld [vmem:[#allocation10 + $0x408] sm:$0xff]
    %v328 = vld [vmem:[#allocation10 + $0x410] sm:$0xff]
    %v329 = vld [vmem:[#allocation10 + $0x418] sm:$0xff]
    %v330 = vld [vmem:[#allocation10 + $0x420] sm:$0xff]
    %v331 = vld [vmem:[#allocation10 + $0x428] sm:$0xff]
    %v332 = vld [vmem:[#allocation10 + $0x430] sm:$0xff]
    %v333 = vld [vmem:[#allocation10 + $0x438] sm:$0xff]
    %v334 = vld [vmem:[#allocation10 + $0x440] sm:$0xff]
    %v335 = vld [vmem:[#allocation10 + $0x448] sm:$0xff]
    %v336 = vld [vmem:[#allocation10 + $0x450] sm:$0xff]
    %v337 = vld [vmem:[#allocation10 + $0x458] sm:$0xff]
    %v338 = vld [vmem:[#allocation10 + $0x460] sm:$0xff]
    %v339 = vld [vmem:[#allocation10 + $0x468] sm:$0xff]
    %v340 = vld [vmem:[#allocation10 + $0x470] sm:$0xff]
    %v341 = vld [vmem:[#allocation10 + $0x478] sm:$0xff]
    %v342 = vld [vmem:[#allocation10 + $0x480] sm:$0xff]
    %v343 = vld [vmem:[#allocation10 + $0x488] sm:$0xff]
    %v344 = vld [vmem:[#allocation10 + $0x490] sm:$0xff]
    %v345 = vld [vmem:[#allocation10 + $0x498] sm:$0xff]
    %v346 = vld [vmem:[#allocation10 + $0x4a0] sm:$0xff]
    %v347 = vld [vmem:[#allocation10 + $0x4a8] sm:$0xff]
    %v348 = vld [vmem:[#allocation10 + $0x4b0] sm:$0xff]
    %v349 = vld [vmem:[#allocation10 + $0x4b8] sm:$0xff]
    %v350 = vld [vmem:[#allocation10 + $0x4c0] sm:$0xff]
    %v351 = vld [vmem:[#allocation10 + $0x4c8] sm:$0xff]
    %v352 = vld [vmem:[#allocation10 + $0x4d0] sm:$0xff]
    %v353 = vld [vmem:[#allocation10 + $0x4d8] sm:$0xff]
    %v354 = vld [vmem:[#allocation10 + $0x4e0] sm:$0xff]
    %v355 = vld [vmem:[#allocation10 + $0x4e8] sm:$0xff]
    %v356 = vld [vmem:[#allocation10 + $0x4f0] sm:$0xff]
    %v357 = vld [vmem:[#allocation10 + $0x4f8] sm:$0xff]
    %v358 = vld [vmem:[#allocation10 + $0x500] sm:$0xff]
    %v359 = vld [vmem:[#allocation10 + $0x508] sm:$0xff]
    %v360 = vld [vmem:[#allocation10 + $0x510] sm:$0xff]
    %v361 = vld [vmem:[#allocation10 + $0x518] sm:$0xff]
    %v362 = vld [vmem:[#allocation10 + $0x520] sm:$0xff]
    %v363 = vld [vmem:[#allocation10 + $0x528] sm:$0xff]
    %v364 = vld [vmem:[#allocation10 + $0x530] sm:$0xff]
    %v365 = vld [vmem:[#allocation10 + $0x538] sm:$0xff]
    %v366 = vld [vmem:[#allocation10 + $0x540] sm:$0xff]
    %v367 = vld [vmem:[#allocation10 + $0x548] sm:$0xff]
    %v368 = vld [vmem:[#allocation10 + $0x550] sm:$0xff]
    %v369 = vld [vmem:[#allocation10 + $0x558] sm:$0xff]
    %v370 = vld [vmem:[#allocation10 + $0x560] sm:$0xff]
    %v371 = vld [vmem:[#allocation10 + $0x568] sm:$0xff]
    %v372 = vld [vmem:[#allocation10 + $0x570] sm:$0xff]
    %v373 = vld [vmem:[#allocation10 + $0x578] sm:$0xff]
    %v374 = vld [vmem:[#allocation10 + $0x580] sm:$0xff]
    %v375 = vld [vmem:[#allocation10 + $0x588] sm:$0xff]
    %v376 = vld [vmem:[#allocation10 + $0x590] sm:$0xff]
    %v377 = vld [vmem:[#allocation10 + $0x598] sm:$0xff]
    %v378 = vld [vmem:[#allocation10 + $0x5a0] sm:$0xff]
    %v379 = vld [vmem:[#allocation10 + $0x5a8] sm:$0xff]
    %v380 = vld [vmem:[#allocation10 + $0x5b0] sm:$0xff]
    %v381 = vld [vmem:[#allocation10 + $0x5b8] sm:$0xff]
    %v382 = vld [vmem:[#allocation10 + $0x5c0] sm:$0xff]
    %v383 = vld [vmem:[#allocation10 + $0x5c8] sm:$0xff]
    %v384 = vld [vmem:[#allocation10 + $0x5d0] sm:$0xff]
    %v385 = vld [vmem:[#allocation10 + $0x5d8] sm:$0xff]
    %v386 = vld [vmem:[#allocation10 + $0x5e0] sm:$0xff]
    %v387 = vld [vmem:[#allocation10 + $0x5e8] sm:$0xff]
    %v388 = vld [vmem:[#allocation10 + $0x5f0] sm:$0xff]
    %v389 = vld [vmem:[#allocation10 + $0x5f8] sm:$0xff]
    %v390 = vld [vmem:[#allocation10 + $0x600] sm:$0xff]
    %v391 = vld [vmem:[#allocation10 + $0x608] sm:$0xff]
    %v392 = vld [vmem:[#allocation10 + $0x610] sm:$0xff]
    %v393 = vld [vmem:[#allocation10 + $0x618] sm:$0xff]
    %v394 = vld [vmem:[#allocation10 + $0x620] sm:$0xff]
    %v395 = vld [vmem:[#allocation10 + $0x628] sm:$0xff]
    %v396 = vld [vmem:[#allocation10 + $0x630] sm:$0xff]
    %v397 = vld [vmem:[#allocation10 + $0x638] sm:$0xff]
    %v398 = vld [vmem:[#allocation10 + $0x640] sm:$0xff]
    %v399 = vld [vmem:[#allocation10 + $0x648] sm:$0xff]
    %v400 = vld [vmem:[#allocation10 + $0x650] sm:$0xff]
    %v401 = vld [vmem:[#allocation10 + $0x658] sm:$0xff]
    %v402 = vld [vmem:[#allocation10 + $0x660] sm:$0xff]
    %v403 = vld [vmem:[#allocation10 + $0x668] sm:$0xff]
    %v404 = vld [vmem:[#allocation10 + $0x670] sm:$0xff]
    %v405 = vld [vmem:[#allocation10 + $0x678] sm:$0xff]
    %v406 = vld [vmem:[#allocation10 + $0x680] sm:$0xff]
    %v407 = vld [vmem:[#allocation10 + $0x688] sm:$0xff]
    %v408 = vld [vmem:[#allocation10 + $0x690] sm:$0xff]
    %v409 = vld [vmem:[#allocation10 + $0x698] sm:$0xff]
    %v410 = vld [vmem:[#allocation10 + $0x6a0] sm:$0xff]
    %v411 = vld [vmem:[#allocation10 + $0x6a8] sm:$0xff]
    %v412 = vld [vmem:[#allocation10 + $0x6b0] sm:$0xff]
    %v413 = vld [vmem:[#allocation10 + $0x6b8] sm:$0xff]
    %v414 = vld [vmem:[#allocation10 + $0x6c0] sm:$0xff]
    %v415 = vld [vmem:[#allocation10 + $0x6c8] sm:$0xff]
    %v416 = vld [vmem:[#allocation10 + $0x6d0] sm:$0xff]
    %v417 = vld [vmem:[#allocation10 + $0x6d8] sm:$0xff]
    %v418 = vld [vmem:[#allocation10 + $0x6e0] sm:$0xff]
    %v419 = vld [vmem:[#allocation10 + $0x6e8] sm:$0xff]
    %v420 = vld [vmem:[#allocation10 + $0x6f0] sm:$0xff]
    %v421 = vld [vmem:[#allocation10 + $0x6f8] sm:$0xff]
    %v422 = vld [vmem:[#allocation10 + $0x700] sm:$0xff]
    %v423 = vld [vmem:[#allocation10 + $0x708] sm:$0xff]
    %v424 = vld [vmem:[#allocation10 + $0x710] sm:$0xff]
    %v425 = vld [vmem:[#allocation10 + $0x718] sm:$0xff]
    %v426 = vld [vmem:[#allocation10 + $0x720] sm:$0xff]
    %v427 = vld [vmem:[#allocation10 + $0x728] sm:$0xff]
    %v428 = vld [vmem:[#allocation10 + $0x730] sm:$0xff]
    %v429 = vld [vmem:[#allocation10 + $0x738] sm:$0xff]
    %v430 = vld [vmem:[#allocation10 + $0x740] sm:$0xff]
    %v431 = vld [vmem:[#allocation10 + $0x748] sm:$0xff]
    %v432 = vld [vmem:[#allocation10 + $0x750] sm:$0xff]
    %v433 = vld [vmem:[#allocation10 + $0x758] sm:$0xff]
    %v434 = vld [vmem:[#allocation10 + $0x760] sm:$0xff]
    %v435 = vld [vmem:[#allocation10 + $0x768] sm:$0xff]
    %v436 = vld [vmem:[#allocation10 + $0x770] sm:$0xff]
    %v437 = vld [vmem:[#allocation10 + $0x778] sm:$0xff]
    %v438 = vld [vmem:[#allocation10 + $0x780] sm:$0xff]
    %v439 = vld [vmem:[#allocation10 + $0x788] sm:$0xff]
    %v440 = vld [vmem:[#allocation10 + $0x790] sm:$0xff]
    %v441 = vld [vmem:[#allocation10 + $0x798] sm:$0xff]
    %v442 = vld [vmem:[#allocation10 + $0x7a0] sm:$0xff]
    %v443 = vld [vmem:[#allocation10 + $0x7a8] sm:$0xff]
    %v444 = vld [vmem:[#allocation10 + $0x7b0] sm:$0xff]
    %v445 = vld [vmem:[#allocation10 + $0x7b8] sm:$0xff]
    %v446 = vld [vmem:[#allocation10 + $0x7c0] sm:$0xff]
    %v447 = vld [vmem:[#allocation10 + $0x7c8] sm:$0xff]
    %v448 = vld [vmem:[#allocation10 + $0x7d0] sm:$0xff]
    %v449 = vld [vmem:[#allocation10 + $0x7d8] sm:$0xff]
    %v450 = vld [vmem:[#allocation10 + $0x7e0] sm:$0xff]
    %v451 = vld [vmem:[#allocation10 + $0x7e8] sm:$0xff]
    %v452 = vld [vmem:[#allocation10 + $0x7f0] sm:$0xff]
    %v453 = vld [vmem:[#allocation10 + $0x7f8] sm:$0xff]
    %v454 = vld [vmem:[%s3] sm:$0xff]
    %v455 = vld [vmem:[#allocation2] sm:$0xff]
    %v456 = vld [vmem:[#allocation2 + $0x8] sm:$0xff]
    %v457 = vld [vmem:[#allocation3] sm:$0xff]
    %v458 = vld [vmem:[#allocation3 + $0x8] sm:$0xff]
    %v459 = vld [vmem:[#allocation4] sm:$0xff]
    %v460 = vld [vmem:[#allocation5] sm:$0xff]
    %v461 = vld [vmem:[#allocation5 + $0x8] sm:$0xff]
    %v462 = vld [vmem:[#allocation5 + $0x10] sm:$0xff]
    %v463 = vld [vmem:[#allocation5 + $0x18] sm:$0xff]
    %v464 = vld [vmem:[#allocation5 + $0x20] sm:$0xff]
    %v465 = vld [vmem:[#allocation5 + $0x28] sm:$0xff]
    %v466 = vld [vmem:[#allocation5 + $0x30] sm:$0xff]
    %v467 = vld [vmem:[#allocation5 + $0x38] sm:$0xff]
    %v469 = vunpack.c.l.b16 %v459
    %v470 = vunpack.c.h.b16 %v459
    %v471 = vpack.c.b16 %v469, %v469
    %v472 = vpack.c.b16 %v470, %v470
    %v603 = vunpack.c.l.b16 %v70
    %v604 = vunpack.c.h.b16 %v70
    %v605 = vunpack.c.l.b16 %v71
    %v606 = vunpack.c.h.b16 %v71
    %v607 = vunpack.c.l.b16 %v72
    %v608 = vunpack.c.h.b16 %v72
    %v609 = vunpack.c.l.b16 %v73
    %v610 = vunpack.c.h.b16 %v73
    %v611 = vunpack.c.l.b16 %v74
    %v612 = vunpack.c.h.b16 %v74
    %v613 = vunpack.c.l.b16 %v75
    %v614 = vunpack.c.h.b16 %v75
    %v615 = vunpack.c.l.b16 %v76
    %v616 = vunpack.c.h.b16 %v76
    %v617 = vunpack.c.l.b16 %v77
    %v618 = vunpack.c.h.b16 %v77
    %v619 = vunpack.c.l.b16 %v78
    %v620 = vunpack.c.h.b16 %v78
    %v621 = vunpack.c.l.b16 %v79
    %v622 = vunpack.c.h.b16 %v79
    %v623 = vunpack.c.l.b16 %v80
    %v624 = vunpack.c.h.b16 %v80
    %v625 = vunpack.c.l.b16 %v81
    %v626 = vunpack.c.h.b16 %v81
    %v627 = vunpack.c.l.b16 %v82
    %v628 = vunpack.c.h.b16 %v82
    %v629 = vunpack.c.l.b16 %v83
    %v630 = vunpack.c.h.b16 %v83
    %v631 = vunpack.c.l.b16 %v84
    %v632 = vunpack.c.h.b16 %v84
    %v633 = vunpack.c.l.b16 %v85
    %v634 = vunpack.c.h.b16 %v85
    %v635 = vunpack.c.l.b16 %v86
    %v636 = vunpack.c.h.b16 %v86
    %v637 = vunpack.c.l.b16 %v87
    %v638 = vunpack.c.h.b16 %v87
    %v639 = vunpack.c.l.b16 %v88
    %v640 = vunpack.c.h.b16 %v88
    %v641 = vunpack.c.l.b16 %v89
    %v642 = vunpack.c.h.b16 %v89
    %v643 = vunpack.c.l.b16 %v90
    %v644 = vunpack.c.h.b16 %v90
    %v645 = vunpack.c.l.b16 %v91
    %v646 = vunpack.c.h.b16 %v91
    %v647 = vunpack.c.l.b16 %v92
    %v648 = vunpack.c.h.b16 %v92
    %v649 = vunpack.c.l.b16 %v93
    %v650 = vunpack.c.h.b16 %v93
    %v651 = vunpack.c.l.b16 %v94
    %v652 = vunpack.c.h.b16 %v94
    %v653 = vunpack.c.l.b16 %v95
    %v654 = vunpack.c.h.b16 %v95
    %v655 = vunpack.c.l.b16 %v96
    %v656 = vunpack.c.h.b16 %v96
    %v657 = vunpack.c.l.b16 %v97
    %v658 = vunpack.c.h.b16 %v97
    %v659 = vunpack.c.l.b16 %v98
    %v660 = vunpack.c.h.b16 %v98
    %v661 = vunpack.c.l.b16 %v99
    %v662 = vunpack.c.h.b16 %v99
    %v663 = vunpack.c.l.b16 %v100
    %v664 = vunpack.c.h.b16 %v100
    %v665 = vunpack.c.l.b16 %v101
    %v666 = vunpack.c.h.b16 %v101
    %v667 = vunpack.c.l.b16 %v102
    %v668 = vunpack.c.h.b16 %v102
    %v669 = vunpack.c.l.b16 %v103
    %v670 = vunpack.c.h.b16 %v103
    %v671 = vunpack.c.l.b16 %v104
    %v672 = vunpack.c.h.b16 %v104
    %v673 = vunpack.c.l.b16 %v105
    %v674 = vunpack.c.h.b16 %v105
    %v675 = vunpack.c.l.b16 %v106
    %v676 = vunpack.c.h.b16 %v106
    %v677 = vunpack.c.l.b16 %v107
    %v678 = vunpack.c.h.b16 %v107
    %v679 = vunpack.c.l.b16 %v108
    %v680 = vunpack.c.h.b16 %v108
    %v681 = vunpack.c.l.b16 %v109
    %v682 = vunpack.c.h.b16 %v109
    %v683 = vunpack.c.l.b16 %v110
    %v684 = vunpack.c.h.b16 %v110
    %v685 = vunpack.c.l.b16 %v111
    %v686 = vunpack.c.h.b16 %v111
    %v687 = vunpack.c.l.b16 %v112
    %v688 = vunpack.c.h.b16 %v112
    %v689 = vunpack.c.l.b16 %v113
    %v690 = vunpack.c.h.b16 %v113
    %v691 = vunpack.c.l.b16 %v114
    %v692 = vunpack.c.h.b16 %v114
    %v693 = vunpack.c.l.b16 %v115
    %v694 = vunpack.c.h.b16 %v115
    %v695 = vunpack.c.l.b16 %v116
    %v696 = vunpack.c.h.b16 %v116
    %v697 = vunpack.c.l.b16 %v117
    %v698 = vunpack.c.h.b16 %v117
    %v699 = vunpack.c.l.b16 %v118
    %v700 = vunpack.c.h.b16 %v118
    %v701 = vunpack.c.l.b16 %v119
    %v702 = vunpack.c.h.b16 %v119
    %v703 = vunpack.c.l.b16 %v120
    %v704 = vunpack.c.h.b16 %v120
    %v705 = vunpack.c.l.b16 %v121
    %v706 = vunpack.c.h.b16 %v121
    %v707 = vunpack.c.l.b16 %v122
    %v708 = vunpack.c.h.b16 %v122
    %v709 = vunpack.c.l.b16 %v123
    %v710 = vunpack.c.h.b16 %v123
    %v711 = vunpack.c.l.b16 %v124
    %v712 = vunpack.c.h.b16 %v124
    %v713 = vunpack.c.l.b16 %v125
    %v714 = vunpack.c.h.b16 %v125
    %v715 = vunpack.c.l.b16 %v126
    %v716 = vunpack.c.h.b16 %v126
    %v717 = vunpack.c.l.b16 %v127
    %v718 = vunpack.c.h.b16 %v127
    %v719 = vunpack.c.l.b16 %v128
    %v720 = vunpack.c.h.b16 %v128
    %v721 = vunpack.c.l.b16 %v129
    %v722 = vunpack.c.h.b16 %v129
    %v723 = vunpack.c.l.b16 %v130
    %v724 = vunpack.c.h.b16 %v130
    %v725 = vunpack.c.l.b16 %v131
    %v726 = vunpack.c.h.b16 %v131
    %v727 = vunpack.c.l.b16 %v132
    %v728 = vunpack.c.h.b16 %v132
    %v729 = vunpack.c.l.b16 %v133
    %v730 = vunpack.c.h.b16 %v133
    %v731 = vunpack.c.l.b16 %v134
    %v732 = vunpack.c.h.b16 %v134
    %v733 = vunpack.c.l.b16 %v135
    %v734 = vunpack.c.h.b16 %v135
    %v735 = vunpack.c.l.b16 %v136
    %v736 = vunpack.c.h.b16 %v136
    %v737 = vunpack.c.l.b16 %v137
    %v738 = vunpack.c.h.b16 %v137
    %v739 = vunpack.c.l.b16 %v138
    %v740 = vunpack.c.h.b16 %v138
    %v741 = vunpack.c.l.b16 %v139
    %v742 = vunpack.c.h.b16 %v139
    %v743 = vunpack.c.l.b16 %v140
    %v744 = vunpack.c.h.b16 %v140
    %v745 = vunpack.c.l.b16 %v141
    %v746 = vunpack.c.h.b16 %v141
    %v747 = vunpack.c.l.b16 %v142
    %v748 = vunpack.c.h.b16 %v142
    %v749 = vunpack.c.l.b16 %v143
    %v750 = vunpack.c.h.b16 %v143
    %v751 = vunpack.c.l.b16 %v144
    %v752 = vunpack.c.h.b16 %v144
    %v753 = vunpack.c.l.b16 %v145
    %v754 = vunpack.c.h.b16 %v145
    %v755 = vunpack.c.l.b16 %v146
    %v756 = vunpack.c.h.b16 %v146
    %v757 = vunpack.c.l.b16 %v147
    %v758 = vunpack.c.h.b16 %v147
    %v759 = vunpack.c.l.b16 %v148
    %v760 = vunpack.c.h.b16 %v148
    %v761 = vunpack.c.l.b16 %v149
    %v762 = vunpack.c.h.b16 %v149
    %v763 = vunpack.c.l.b16 %v150
    %v764 = vunpack.c.h.b16 %v150
    %v765 = vunpack.c.l.b16 %v151
    %v766 = vunpack.c.h.b16 %v151
    %v767 = vunpack.c.l.b16 %v152
    %v768 = vunpack.c.h.b16 %v152
    %v769 = vunpack.c.l.b16 %v153
    %v770 = vunpack.c.h.b16 %v153
    %v771 = vunpack.c.l.b16 %v154
    %v772 = vunpack.c.h.b16 %v154
    %v773 = vunpack.c.l.b16 %v155
    %v774 = vunpack.c.h.b16 %v155
    %v775 = vunpack.c.l.b16 %v156
    %v776 = vunpack.c.h.b16 %v156
    %v777 = vunpack.c.l.b16 %v157
    %v778 = vunpack.c.h.b16 %v157
    %v779 = vunpack.c.l.b16 %v158
    %v780 = vunpack.c.h.b16 %v158
    %v781 = vunpack.c.l.b16 %v159
    %v782 = vunpack.c.h.b16 %v159
    %v783 = vunpack.c.l.b16 %v160
    %v784 = vunpack.c.h.b16 %v160
    %v785 = vunpack.c.l.b16 %v161
    %v786 = vunpack.c.h.b16 %v161
    %v787 = vunpack.c.l.b16 %v162
    %v788 = vunpack.c.h.b16 %v162
    %v789 = vunpack.c.l.b16 %v163
    %v790 = vunpack.c.h.b16 %v163
    %v791 = vunpack.c.l.b16 %v164
    %v792 = vunpack.c.h.b16 %v164
    %v793 = vunpack.c.l.b16 %v165
    %v794 = vunpack.c.h.b16 %v165
    %v795 = vunpack.c.l.b16 %v166
    %v796 = vunpack.c.h.b16 %v166
    %v797 = vunpack.c.l.b16 %v167
    %v798 = vunpack.c.h.b16 %v167
    %v799 = vunpack.c.l.b16 %v168
    %v800 = vunpack.c.h.b16 %v168
    %v801 = vunpack.c.l.b16 %v169
    %v802 = vunpack.c.h.b16 %v169
    %v803 = vunpack.c.l.b16 %v170
    %v804 = vunpack.c.h.b16 %v170
    %v805 = vunpack.c.l.b16 %v171
    %v806 = vunpack.c.h.b16 %v171
    %v807 = vunpack.c.l.b16 %v172
    %v808 = vunpack.c.h.b16 %v172
    %v809 = vunpack.c.l.b16 %v173
    %v810 = vunpack.c.h.b16 %v173
    %v811 = vunpack.c.l.b16 %v174
    %v812 = vunpack.c.h.b16 %v174
    %v813 = vunpack.c.l.b16 %v175
    %v814 = vunpack.c.h.b16 %v175
    %v815 = vunpack.c.l.b16 %v176
    %v816 = vunpack.c.h.b16 %v176
    %v817 = vunpack.c.l.b16 %v177
    %v818 = vunpack.c.h.b16 %v177
    %v819 = vunpack.c.l.b16 %v178
    %v820 = vunpack.c.h.b16 %v178
    %v821 = vunpack.c.l.b16 %v179
    %v822 = vunpack.c.h.b16 %v179
    %v823 = vunpack.c.l.b16 %v180
    %v824 = vunpack.c.h.b16 %v180
    %v825 = vunpack.c.l.b16 %v181
    %v826 = vunpack.c.h.b16 %v181
    %v827 = vunpack.c.l.b16 %v182
    %v828 = vunpack.c.h.b16 %v182
    %v829 = vunpack.c.l.b16 %v183
    %v830 = vunpack.c.h.b16 %v183
    %v831 = vunpack.c.l.b16 %v184
    %v832 = vunpack.c.h.b16 %v184
    %v833 = vunpack.c.l.b16 %v185
    %v834 = vunpack.c.h.b16 %v185
    %v835 = vunpack.c.l.b16 %v186
    %v836 = vunpack.c.h.b16 %v186
    %v837 = vunpack.c.l.b16 %v187
    %v838 = vunpack.c.h.b16 %v187
    %v839 = vunpack.c.l.b16 %v188
    %v840 = vunpack.c.h.b16 %v188
    %v841 = vunpack.c.l.b16 %v189
    %v842 = vunpack.c.h.b16 %v189
    %v843 = vunpack.c.l.b16 %v190
    %v844 = vunpack.c.h.b16 %v190
    %v845 = vunpack.c.l.b16 %v191
    %v846 = vunpack.c.h.b16 %v191
    %v847 = vunpack.c.l.b16 %v192
    %v848 = vunpack.c.h.b16 %v192
    %v849 = vunpack.c.l.b16 %v193
    %v850 = vunpack.c.h.b16 %v193
    %v851 = vunpack.c.l.b16 %v194
    %v852 = vunpack.c.h.b16 %v194
    %v853 = vunpack.c.l.b16 %v195
    %v854 = vunpack.c.h.b16 %v195
    %v855 = vunpack.c.l.b16 %v196
    %v856 = vunpack.c.h.b16 %v196
    %v857 = vunpack.c.l.b16 %v197
    %v858 = vunpack.c.h.b16 %v197
    %v859 = vpack.c.b16 %v611, %v603
    %v860 = vpack.c.b16 %v612, %v604
    %v861 = vpack.c.b16 %v613, %v605
    %v862 = vpack.c.b16 %v614, %v606
    %v863 = vpack.c.b16 %v615, %v607
    %v864 = vpack.c.b16 %v616, %v608
    %v865 = vpack.c.b16 %v617, %v609
    %v866 = vpack.c.b16 %v618, %v610
    %v867 = vpack.c.b16 %v627, %v619
    %v868 = vpack.c.b16 %v628, %v620
    %v869 = vpack.c.b16 %v629, %v621
    %v870 = vpack.c.b16 %v630, %v622
    %v871 = vpack.c.b16 %v631, %v623
    %v872 = vpack.c.b16 %v632, %v624
    %v873 = vpack.c.b16 %v633, %v625
    %v874 = vpack.c.b16 %v634, %v626
    %v875 = vpack.c.b16 %v643, %v635
    %v876 = vpack.c.b16 %v644, %v636
    %v877 = vpack.c.b16 %v645, %v637
    %v878 = vpack.c.b16 %v646, %v638
    %v879 = vpack.c.b16 %v647, %v639
    %v880 = vpack.c.b16 %v648, %v640
    %v881 = vpack.c.b16 %v649, %v641
    %v882 = vpack.c.b16 %v650, %v642
    %v883 = vpack.c.b16 %v659, %v651
    %v884 = vpack.c.b16 %v660, %v652
    %v885 = vpack.c.b16 %v661, %v653
    %v886 = vpack.c.b16 %v662, %v654
    %v887 = vpack.c.b16 %v663, %v655
    %v888 = vpack.c.b16 %v664, %v656
    %v889 = vpack.c.b16 %v665, %v657
    %v890 = vpack.c.b16 %v666, %v658
    %v891 = vpack.c.b16 %v675, %v667
    %v892 = vpack.c.b16 %v676, %v668
    %v893 = vpack.c.b16 %v677, %v669
    %v894 = vpack.c.b16 %v678, %v670
    %v895 = vpack.c.b16 %v679, %v671
    %v896 = vpack.c.b16 %v680, %v672
    %v897 = vpack.c.b16 %v681, %v673
    %v898 = vpack.c.b16 %v682, %v674
    %v899 = vpack.c.b16 %v691, %v683
    %v900 = vpack.c.b16 %v692, %v684
    %v901 = vpack.c.b16 %v693, %v685
    %v902 = vpack.c.b16 %v694, %v686
    %v903 = vpack.c.b16 %v695, %v687
    %v904 = vpack.c.b16 %v696, %v688
    %v905 = vpack.c.b16 %v697, %v689
    %v906 = vpack.c.b16 %v698, %v690
    %v907 = vpack.c.b16 %v707, %v699
    %v908 = vpack.c.b16 %v708, %v700
    %v909 = vpack.c.b16 %v709, %v701
    %v910 = vpack.c.b16 %v710, %v702
    %v911 = vpack.c.b16 %v711, %v703
    %v912 = vpack.c.b16 %v712, %v704
    %v913 = vpack.c.b16 %v713, %v705
    %v914 = vpack.c.b16 %v714, %v706
    %v915 = vpack.c.b16 %v723, %v715
    %v916 = vpack.c.b16 %v724, %v716
    %v917 = vpack.c.b16 %v725, %v717
    %v918 = vpack.c.b16 %v726, %v718
    %v919 = vpack.c.b16 %v727, %v719
    %v920 = vpack.c.b16 %v728, %v720
    %v921 = vpack.c.b16 %v729, %v721
    %v922 = vpack.c.b16 %v730, %v722
    %v923 = vpack.c.b16 %v739, %v731
    %v924 = vpack.c.b16 %v740, %v732
    %v925 = vpack.c.b16 %v741, %v733
    %v926 = vpack.c.b16 %v742, %v734
    %v927 = vpack.c.b16 %v743, %v735
    %v928 = vpack.c.b16 %v744, %v736
    %v929 = vpack.c.b16 %v745, %v737
    %v930 = vpack.c.b16 %v746, %v738
    %v931 = vpack.c.b16 %v755, %v747
    %v932 = vpack.c.b16 %v756, %v748
    %v933 = vpack.c.b16 %v757, %v749
    %v934 = vpack.c.b16 %v758, %v750
    %v935 = vpack.c.b16 %v759, %v751
    %v936 = vpack.c.b16 %v760, %v752
    %v937 = vpack.c.b16 %v761, %v753
    %v938 = vpack.c.b16 %v762, %v754
    %v939 = vpack.c.b16 %v771, %v763
    %v940 = vpack.c.b16 %v772, %v764
    %v941 = vpack.c.b16 %v773, %v765
    %v942 = vpack.c.b16 %v774, %v766
    %v943 = vpack.c.b16 %v775, %v767
    %v944 = vpack.c.b16 %v776, %v768
    %v945 = vpack.c.b16 %v777, %v769
    %v946 = vpack.c.b16 %v778, %v770
    %v947 = vpack.c.b16 %v787, %v779
    %v948 = vpack.c.b16 %v788, %v780
    %v949 = vpack.c.b16 %v789, %v781
    %v950 = vpack.c.b16 %v790, %v782
    %v951 = vpack.c.b16 %v791, %v783
    %v952 = vpack.c.b16 %v792, %v784
    %v953 = vpack.c.b16 %v793, %v785
    %v954 = vpack.c.b16 %v794, %v786
    %v955 = vpack.c.b16 %v803, %v795
    %v956 = vpack.c.b16 %v804, %v796
    %v957 = vpack.c.b16 %v805, %v797
    %v958 = vpack.c.b16 %v806, %v798
    %v959 = vpack.c.b16 %v807, %v799
    %v960 = vpack.c.b16 %v808, %v800
    %v961 = vpack.c.b16 %v809, %v801
    %v962 = vpack.c.b16 %v810, %v802
    %v963 = vpack.c.b16 %v819, %v811
    %v964 = vpack.c.b16 %v820, %v812
    %v965 = vpack.c.b16 %v821, %v813
    %v966 = vpack.c.b16 %v822, %v814
    %v967 = vpack.c.b16 %v823, %v815
    %v968 = vpack.c.b16 %v824, %v816
    %v969 = vpack.c.b16 %v825, %v817
    %v970 = vpack.c.b16 %v826, %v818
    %v971 = vpack.c.b16 %v835, %v827
    %v972 = vpack.c.b16 %v836, %v828
    %v973 = vpack.c.b16 %v837, %v829
    %v974 = vpack.c.b16 %v838, %v830
    %v975 = vpack.c.b16 %v839, %v831
    %v976 = vpack.c.b16 %v840, %v832
    %v977 = vpack.c.b16 %v841, %v833
    %v978 = vpack.c.b16 %v842, %v834
    %v979 = vpack.c.b16 %v851, %v843
    %v980 = vpack.c.b16 %v852, %v844
    %v981 = vpack.c.b16 %v853, %v845
    %v982 = vpack.c.b16 %v854, %v846
    %v983 = vpack.c.b16 %v855, %v847
    %v984 = vpack.c.b16 %v856, %v848
    %v985 = vpack.c.b16 %v857, %v849
    %v986 = vpack.c.b16 %v858, %v850
    %1115 = vmatprep.subr.bf16.mxu0 %v860
    %1116 = vmatpush1.bf16.msra.mxu0 %v859
    %1117 = vmatprep.subr.bf16.mxu0 %v868
    %1118 = vmatpush1.bf16.msra.mxu0 %v867
    %1119 = vmatprep.subr.bf16.mxu0 %v876
    %1120 = vmatpush1.bf16.msra.mxu0 %v875
    %1121 = vmatprep.subr.bf16.mxu0 %v884
    %1122 = vmatpush1.bf16.msra.mxu0 %v883
    %1123 = vmatprep.subr.bf16.mxu0 %v892
    %1124 = vmatpush1.bf16.msra.mxu0 %v891
    %1125 = vmatprep.subr.bf16.mxu0 %v900
    %1126 = vmatpush1.bf16.msra.mxu0 %v899
    %1127 = vmatprep.subr.bf16.mxu0 %v908
    %1128 = vmatpush1.bf16.msra.mxu0 %v907
    %1129 = vmatprep.subr.bf16.mxu0 %v916
    %1130 = vmatpush1.bf16.msra.mxu0 %v915
    %1131 = vmatprep.subr.bf16.mxu0 %v924
    %1132 = vmatpush1.bf16.msra.mxu0 %v923
    %1133 = vmatprep.subr.bf16.mxu0 %v932
    %1134 = vmatpush1.bf16.msra.mxu0 %v931
    %1135 = vmatprep.subr.bf16.mxu0 %v940
    %1136 = vmatpush1.bf16.msra.mxu0 %v939
    %1137 = vmatprep.subr.bf16.mxu0 %v948
    %1138 = vmatpush1.bf16.msra.mxu0 %v947
    %1139 = vmatprep.subr.bf16.mxu0 %v956
    %1140 = vmatpush1.bf16.msra.mxu0 %v955
    %1141 = vmatprep.subr.bf16.mxu0 %v964
    %1142 = vmatpush1.bf16.msra.mxu0 %v963
    %1143 = vmatprep.subr.bf16.mxu0 %v972
    %1144 = vmatpush1.bf16.msra.mxu0 %v971
    %1145 = vmatprep.subr.bf16.mxu0 %v980
    %1146 = vmatpush1.bf16.msra.mxu0 %v979
    %1147 = vmatprep.mubr.bf16.mxu0 %v472
    %1148 = vmatmul.mubr.bf16.gmra.mrb[0].mxu0 %v471
    %v1149 = vpop.f32.mrb[0].mxu0
    %v1150 = vadd.f32 0.0, %v1149
    %v1151 = vpop.f32.mrb[0].mxu0
    %v1152 = vadd.f32 0.0, %v1151
    %v1153 = vpop.f32.mrb[0].mxu0
    %v1154 = vpop.f32.mrb[0].mxu0
    %1155 = vdwg.mxu0
    %1156 = vmatprep.subr.bf16.mxu0 %v862
    %1157 = vmatpush1.bf16.msra.mxu0 %v861
    %1158 = vmatprep.subr.bf16.mxu0 %v870
    %1159 = vmatpush1.bf16.msra.mxu0 %v869
    %1160 = vmatprep.subr.bf16.mxu0 %v878
    %1161 = vmatpush1.bf16.msra.mxu0 %v877
    %1162 = vmatprep.subr.bf16.mxu0 %v886
    %1163 = vmatpush1.bf16.msra.mxu0 %v885
    %1164 = vmatprep.subr.bf16.mxu0 %v894
    %1165 = vmatpush1.bf16.msra.mxu0 %v893
    %1166 = vmatprep.subr.bf16.mxu0 %v902
    %1167 = vmatpush1.bf16.msra.mxu0 %v901
    %1168 = vmatprep.subr.bf16.mxu0 %v910
    %1169 = vmatpush1.bf16.msra.mxu0 %v909
    %1170 = vmatprep.subr.bf16.mxu0 %v918
    %1171 = vmatpush1.bf16.msra.mxu0 %v917
    %1172 = vmatprep.subr.bf16.mxu0 %v926
    %1173 = vmatpush1.bf16.msra.mxu0 %v925
    %1174 = vmatprep.subr.bf16.mxu0 %v934
    %1175 = vmatpush1.bf16.msra.mxu0 %v933
    %1176 = vmatprep.subr.bf16.mxu0 %v942
    %1177 = vmatpush1.bf16.msra.mxu0 %v941
    %1178 = vmatprep.subr.bf16.mxu0 %v950
    %1179 = vmatpush1.bf16.msra.mxu0 %v949
    %1180 = vmatprep.subr.bf16.mxu0 %v958
    %1181 = vmatpush1.bf16.msra.mxu0 %v957
    %1182 = vmatprep.subr.bf16.mxu0 %v966
    %1183 = vmatpush1.bf16.msra.mxu0 %v965
    %1184 = vmatprep.subr.bf16.mxu0 %v974
    %1185 = vmatpush1.bf16.msra.mxu0 %v973
    %1186 = vmatprep.subr.bf16.mxu0 %v982
    %1187 = vmatpush1.bf16.msra.mxu0 %v981
    %1188 = vmatprep.mubr.bf16.mxu0 %v472
    %1189 = vmatmul.mubr.bf16.gmra.mrb[0].mxu0 %v471
    %v1190 = vpop.f32.mrb[0].mxu0
    %v1191 = vadd.f32 0.0, %v1190
    %v1192 = vpop.f32.mrb[0].mxu0
    %v1193 = vadd.f32 0.0, %v1192
    %v1194 = vpop.f32.mrb[0].mxu0
    %v1195 = vpop.f32.mrb[0].mxu0
    %1196 = vdwg.mxu0
    %1197 = vmatprep.subr.bf16.mxu0 %v864
    %1198 = vmatpush1.bf16.msra.mxu0 %v863
    %1199 = vmatprep.subr.bf16.mxu0 %v872
    %1200 = vmatpush1.bf16.msra.mxu0 %v871
    %1201 = vmatprep.subr.bf16.mxu0 %v880
    %1202 = vmatpush1.bf16.msra.mxu0 %v879
    %1203 = vmatprep.subr.bf16.mxu0 %v888
    %1204 = vmatpush1.bf16.msra.mxu0 %v887
    %1205 = vmatprep.subr.bf16.mxu0 %v896
    %1206 = vmatpush1.bf16.msra.mxu0 %v895
    %1207 = vmatprep.subr.bf16.mxu0 %v904
    %1208 = vmatpush1.bf16.msra.mxu0 %v903
    %1209 = vmatprep.subr.bf16.mxu0 %v912
    %1210 = vmatpush1.bf16.msra.mxu0 %v911
    %1211 = vmatprep.subr.bf16.mxu0 %v920
    %1212 = vmatpush1.bf16.msra.mxu0 %v919
    %1213 = vmatprep.subr.bf16.mxu0 %v928
    %1214 = vmatpush1.bf16.msra.mxu0 %v927
    %1215 = vmatprep.subr.bf16.mxu0 %v936
    %1216 = vmatpush1.bf16.msra.mxu0 %v935
    %1217 = vmatprep.subr.bf16.mxu0 %v944
    %1218 = vmatpush1.bf16.msra.mxu0 %v943
    %1219 = vmatprep.subr.bf16.mxu0 %v952
    %1220 = vmatpush1.bf16.msra.mxu0 %v951
    %1221 = vmatprep.subr.bf16.mxu0 %v960
    %1222 = vmatpush1.bf16.msra.mxu0 %v959
    %1223 = vmatprep.subr.bf16.mxu0 %v968
    %1224 = vmatpush1.bf16.msra.mxu0 %v967
    %1225 = vmatprep.subr.bf16.mxu0 %v976
    %1226 = vmatpush1.bf16.msra.mxu0 %v975
    %1227 = vmatprep.subr.bf16.mxu0 %v984
    %1228 = vmatpush1.bf16.msra.mxu0 %v983
    %1229 = vmatprep.mubr.bf16.mxu0 %v472
    %1230 = vmatmul.mubr.bf16.gmra.mrb[0].mxu0 %v471
    %v1231 = vpop.f32.mrb[0].mxu0
    %v1232 = vadd.f32 0.0, %v1231
    %v1233 = vpop.f32.mrb[0].mxu0
    %v1234 = vadd.f32 0.0, %v1233
    %v1235 = vpop.f32.mrb[0].mxu0
    %v1236 = vpop.f32.mrb[0].mxu0
    %1237 = vdwg.mxu0
    %1238 = vmatprep.subr.bf16.mxu0 %v866
    %1239 = vmatpush1.bf16.msra.mxu0 %v865
    %1240 = vmatprep.subr.bf16.mxu0 %v874
    %1241 = vmatpush1.bf16.msra.mxu0 %v873
    %1242 = vmatprep.subr.bf16.mxu0 %v882
    %1243 = vmatpush1.bf16.msra.mxu0 %v881
    %1244 = vmatprep.subr.bf16.mxu0 %v890
    %1245 = vmatpush1.bf16.msra.mxu0 %v889
    %1246 = vmatprep.subr.bf16.mxu0 %v898
    %1247 = vmatpush1.bf16.msra.mxu0 %v897
    %1248 = vmatprep.subr.bf16.mxu0 %v906
    %1249 = vmatpush1.bf16.msra.mxu0 %v905
    %1250 = vmatprep.subr.bf16.mxu0 %v914
    %1251 = vmatpush1.bf16.msra.mxu0 %v913
    %1252 = vmatprep.subr.bf16.mxu0 %v922
    %1253 = vmatpush1.bf16.msra.mxu0 %v921
    %1254 = vmatprep.subr.bf16.mxu0 %v930
    %1255 = vmatpush1.bf16.msra.mxu0 %v929
    %1256 = vmatprep.subr.bf16.mxu0 %v938
    %1257 = vmatpush1.bf16.msra.mxu0 %v937
    %1258 = vmatprep.subr.bf16.mxu0 %v946
    %1259 = vmatpush1.bf16.msra.mxu0 %v945
    %1260 = vmatprep.subr.bf16.mxu0 %v954
    %1261 = vmatpush1.bf16.msra.mxu0 %v953
    %1262 = vmatprep.subr.bf16.mxu0 %v962
    %1263 = vmatpush1.bf16.msra.mxu0 %v961
    %1264 = vmatprep.subr.bf16.mxu0 %v970
    %1265 = vmatpush1.bf16.msra.mxu0 %v969
    %1266 = vmatprep.subr.bf16.mxu0 %v978
    %1267 = vmatpush1.bf16.msra.mxu0 %v977
    %1268 = vmatprep.subr.bf16.mxu0 %v986
    %1269 = vmatpush1.bf16.msra.mxu0 %v985
    %1270 = vmatprep.mubr.bf16.mxu0 %v472
    %1271 = vmatmul.mubr.bf16.gmra.mrb[0].mxu0 %v471
    %v1272 = vpop.f32.mrb[0].mxu0
    %v1273 = vadd.f32 0.0, %v1272
    %v1274 = vpop.f32.mrb[0].mxu0
    %v1275 = vadd.f32 0.0, %v1274
    %v1276 = vpop.f32.mrb[0].mxu0
    %v1277 = vpop.f32.mrb[0].mxu0
    %1278 = vdwg.mxu0
    %v1279 = vadd.f32 %v460, %v1150
    %v1280 = vadd.f32 %v461, %v1152
    %v1281 = vadd.f32 %v462, %v1191
    %v1282 = vadd.f32 %v463, %v1193
    %v1283 = vadd.f32 %v464, %v1232
    %v1284 = vadd.f32 %v465, %v1234
    %v1285 = vadd.f32 %v466, %v1273
    %v1286 = vadd.f32 %v467, %v1275
    %v1287 = vmul.f32 %v1279, 0.5
    %v1288 = vmul.f32 %v1280, 0.5
    %v1289 = vtanh.pop %v1287
    %v1290 = vtanh.pop %v1288
    %v1291 = vmul.f32 %v1289, 0.5
    %v1292 = vmul.f32 %v1290, 0.5
    %v1293 = vadd.f32 %v1291, 0.5
    %v1294 = vadd.f32 %v1292, 0.5
    %v1295 = vmul.f32 %v1281, 0.5
    %v1296 = vmul.f32 %v1282, 0.5
    %v1297 = vtanh.pop %v1295
    %v1298 = vtanh.pop %v1296
    %v1299 = vmul.f32 %v1297, 0.5
    %v1300 = vmul.f32 %v1298, 0.5
    %v1301 = vadd.f32 %v1299, 0.5
    %v1302 = vadd.f32 %v1300, 0.5
    %v1303 = vtanh.pop %v1283
    %v1304 = vtanh.pop %v1284
    %v1305 = vmul.f32 %v1285, 0.5
    %v1306 = vmul.f32 %v1286, 0.5
    %v1307 = vtanh.pop %v1305
    %v1308 = vtanh.pop %v1306
    %v1309 = vmul.f32 %v1307, 0.5
    %v1310 = vmul.f32 %v1308, 0.5
    %v1311 = vadd.f32 %v1309, 0.5
    %v1312 = vadd.f32 %v1310, 0.5
    %v1313 = vmul.f32 %v1301, %v455
    %v1314 = vmul.f32 %v1302, %v456
    %v1315 = vmul.f32 %v1293, %v1303
    %v1316 = vmul.f32 %v1294, %v1304
    %v1317 = vadd.f32 %v1313, %v1315
    %v1318 = vadd.f32 %v1314, %v1316
    %v1319 = vtanh.pop %v1317
    %v1320 = vtanh.pop %v1318
    %v1321 = vmul.f32 %v1311, %v1319
    %v1322 = vmul.f32 %v1312, %v1320
    %v1323 = vpack.c.bf16 %v1321, %v1321
    %v1324 = vpack.c.bf16 %v1322, %v1322
    %v1327 = vunpack.c.l.b16 %v1323
    %v1328 = vunpack.c.l.b16 %v1324
    %v1329 = vpack.c.b16 %v1328, %v1327
    %1331 = vst [vmem:[#allocation4] sm:$0xff] %v1329
    %v1332 = vld [vmem:[#allocation4] sm:$0xff]
    %v1333 = vld [vmem:[#allocation4 + $0x8] sm:$0xff]
    %v1335 = vlaneseq
    %v1336 = vshrl.u32 %v1335, 7
    %v1337 = vsub.s32 0, %v1336
    %v1338 = vrot.slane %v454, %v1337
    %v1339 = vlaneseq
    %v1340 = vshrl.u32 %v1339, 7
    %v1341 = vsub.s32 1, %v1340
    %v1342 = vrot.slane %v454, %v1341
    %v1343 = vlaneseq
    %v1344 = vshrl.u32 %v1343, 7
    %v1345 = vsub.s32 2, %v1344
    %v1346 = vrot.slane %v454, %v1345
    %v1347 = vlaneseq
    %v1348 = vshrl.u32 %v1347, 7
    %v1349 = vsub.s32 3, %v1348
    %v1350 = vrot.slane %v454, %v1349
    %v1351 = vlaneseq
    %v1352 = vshrl.u32 %v1351, 7
    %v1353 = vsub.s32 4, %v1352
    %v1354 = vrot.slane %v454, %v1353
    %v1355 = vlaneseq
    %v1356 = vshrl.u32 %v1355, 7
    %v1357 = vsub.s32 5, %v1356
    %v1358 = vrot.slane %v454, %v1357
    %v1359 = vlaneseq
    %v1360 = vshrl.u32 %v1359, 7
    %v1361 = vsub.s32 6, %v1360
    %v1362 = vrot.slane %v454, %v1361
    %v1363 = vlaneseq
    %v1364 = vshrl.u32 %v1363, 7
    %v1365 = vsub.s32 7, %v1364
    %v1366 = vrot.slane %v454, %v1365
    %v1377 = vunpack.c.l.b16 %v1332
    %v1378 = vunpack.c.h.b16 %v1332
    %v1379 = vunpack.c.l.b16 %v1333
    %v1380 = vunpack.c.h.b16 %v1333
    %v1381 = vpack.c.b16 %v1377, %v1377
    %v1382 = vpack.c.b16 %v1378, %v1378
    %v1383 = vpack.c.b16 %v1379, %v1379
    %v1384 = vpack.c.b16 %v1380, %v1380
    %v1645 = vunpack.c.l.b16 %v198
    %v1646 = vunpack.c.h.b16 %v198
    %v1647 = vunpack.c.l.b16 %v199
    %v1648 = vunpack.c.h.b16 %v199
    %v1649 = vunpack.c.l.b16 %v200
    %v1650 = vunpack.c.h.b16 %v200
    %v1651 = vunpack.c.l.b16 %v201
    %v1652 = vunpack.c.h.b16 %v201
    %v1653 = vunpack.c.l.b16 %v202
    %v1654 = vunpack.c.h.b16 %v202
    %v1655 = vunpack.c.l.b16 %v203
    %v1656 = vunpack.c.h.b16 %v203
    %v1657 = vunpack.c.l.b16 %v204
    %v1658 = vunpack.c.h.b16 %v204
    %v1659 = vunpack.c.l.b16 %v205
    %v1660 = vunpack.c.h.b16 %v205
    %v1661 = vunpack.c.l.b16 %v206
    %v1662 = vunpack.c.h.b16 %v206
    %v1663 = vunpack.c.l.b16 %v207
    %v1664 = vunpack.c.h.b16 %v207
    %v1665 = vunpack.c.l.b16 %v208
    %v1666 = vunpack.c.h.b16 %v208
    %v1667 = vunpack.c.l.b16 %v209
    %v1668 = vunpack.c.h.b16 %v209
    %v1669 = vunpack.c.l.b16 %v210
    %v1670 = vunpack.c.h.b16 %v210
    %v1671 = vunpack.c.l.b16 %v211
    %v1672 = vunpack.c.h.b16 %v211
    %v1673 = vunpack.c.l.b16 %v212
    %v1674 = vunpack.c.h.b16 %v212
    %v1675 = vunpack.c.l.b16 %v213
    %v1676 = vunpack.c.h.b16 %v213
    %v1677 = vunpack.c.l.b16 %v214
    %v1678 = vunpack.c.h.b16 %v214
    %v1679 = vunpack.c.l.b16 %v215
    %v1680 = vunpack.c.h.b16 %v215
    %v1681 = vunpack.c.l.b16 %v216
    %v1682 = vunpack.c.h.b16 %v216
    %v1683 = vunpack.c.l.b16 %v217
    %v1684 = vunpack.c.h.b16 %v217
    %v1685 = vunpack.c.l.b16 %v218
    %v1686 = vunpack.c.h.b16 %v218
    %v1687 = vunpack.c.l.b16 %v219
    %v1688 = vunpack.c.h.b16 %v219
    %v1689 = vunpack.c.l.b16 %v220
    %v1690 = vunpack.c.h.b16 %v220
    %v1691 = vunpack.c.l.b16 %v221
    %v1692 = vunpack.c.h.b16 %v221
    %v1693 = vunpack.c.l.b16 %v222
    %v1694 = vunpack.c.h.b16 %v222
    %v1695 = vunpack.c.l.b16 %v223
    %v1696 = vunpack.c.h.b16 %v223
    %v1697 = vunpack.c.l.b16 %v224
    %v1698 = vunpack.c.h.b16 %v224
    %v1699 = vunpack.c.l.b16 %v225
    %v1700 = vunpack.c.h.b16 %v225
    %v1701 = vunpack.c.l.b16 %v226
    %v1702 = vunpack.c.h.b16 %v226
    %v1703 = vunpack.c.l.b16 %v227
    %v1704 = vunpack.c.h.b16 %v227
    %v1705 = vunpack.c.l.b16 %v228
    %v1706 = vunpack.c.h.b16 %v228
    %v1707 = vunpack.c.l.b16 %v229
    %v1708 = vunpack.c.h.b16 %v229
    %v1709 = vunpack.c.l.b16 %v230
    %v1710 = vunpack.c.h.b16 %v230
    %v1711 = vunpack.c.l.b16 %v231
    %v1712 = vunpack.c.h.b16 %v231
    %v1713 = vunpack.c.l.b16 %v232
    %v1714 = vunpack.c.h.b16 %v232
    %v1715 = vunpack.c.l.b16 %v233
    %v1716 = vunpack.c.h.b16 %v233
    %v1717 = vunpack.c.l.b16 %v234
    %v1718 = vunpack.c.h.b16 %v234
    %v1719 = vunpack.c.l.b16 %v235
    %v1720 = vunpack.c.h.b16 %v235
    %v1721 = vunpack.c.l.b16 %v236
    %v1722 = vunpack.c.h.b16 %v236
    %v1723 = vunpack.c.l.b16 %v237
    %v1724 = vunpack.c.h.b16 %v237
    %v1725 = vunpack.c.l.b16 %v238
    %v1726 = vunpack.c.h.b16 %v238
    %v1727 = vunpack.c.l.b16 %v239
    %v1728 = vunpack.c.h.b16 %v239
    %v1729 = vunpack.c.l.b16 %v240
    %v1730 = vunpack.c.h.b16 %v240
    %v1731 = vunpack.c.l.b16 %v241
    %v1732 = vunpack.c.h.b16 %v241
    %v1733 = vunpack.c.l.b16 %v242
    %v1734 = vunpack.c.h.b16 %v242
    %v1735 = vunpack.c.l.b16 %v243
    %v1736 = vunpack.c.h.b16 %v243
    %v1737 = vunpack.c.l.b16 %v244
    %v1738 = vunpack.c.h.b16 %v244
    %v1739 = vunpack.c.l.b16 %v245
    %v1740 = vunpack.c.h.b16 %v245
    %v1741 = vunpack.c.l.b16 %v246
    %v1742 = vunpack.c.h.b16 %v246
    %v1743 = vunpack.c.l.b16 %v247
    %v1744 = vunpack.c.h.b16 %v247
    %v1745 = vunpack.c.l.b16 %v248
    %v1746 = vunpack.c.h.b16 %v248
    %v1747 = vunpack.c.l.b16 %v249
    %v1748 = vunpack.c.h.b16 %v249
    %v1749 = vunpack.c.l.b16 %v250
    %v1750 = vunpack.c.h.b16 %v250
    %v1751 = vunpack.c.l.b16 %v251
    %v1752 = vunpack.c.h.b16 %v251
    %v1753 = vunpack.c.l.b16 %v252
    %v1754 = vunpack.c.h.b16 %v252
    %v1755 = vunpack.c.l.b16 %v253
    %v1756 = vunpack.c.h.b16 %v253
    %v1757 = vunpack.c.l.b16 %v254
    %v1758 = vunpack.c.h.b16 %v254
    %v1759 = vunpack.c.l.b16 %v255
    %v1760 = vunpack.c.h.b16 %v255
    %v1761 = vunpack.c.l.b16 %v256
    %v1762 = vunpack.c.h.b16 %v256
    %v1763 = vunpack.c.l.b16 %v257
    %v1764 = vunpack.c.h.b16 %v257
    %v1765 = vunpack.c.l.b16 %v258
    %v1766 = vunpack.c.h.b16 %v258
    %v1767 = vunpack.c.l.b16 %v259
    %v1768 = vunpack.c.h.b16 %v259
    %v1769 = vunpack.c.l.b16 %v260
    %v1770 = vunpack.c.h.b16 %v260
    %v1771 = vunpack.c.l.b16 %v261
    %v1772 = vunpack.c.h.b16 %v261
    %v1773 = vunpack.c.l.b16 %v262
    %v1774 = vunpack.c.h.b16 %v262
    %v1775 = vunpack.c.l.b16 %v263
    %v1776 = vunpack.c.h.b16 %v263
    %v1777 = vunpack.c.l.b16 %v264
    %v1778 = vunpack.c.h.b16 %v264
    %v1779 = vunpack.c.l.b16 %v265
    %v1780 = vunpack.c.h.b16 %v265
    %v1781 = vunpack.c.l.b16 %v266
    %v1782 = vunpack.c.h.b16 %v266
    %v1783 = vunpack.c.l.b16 %v267
    %v1784 = vunpack.c.h.b16 %v267
    %v1785 = vunpack.c.l.b16 %v268
    %v1786 = vunpack.c.h.b16 %v268
    %v1787 = vunpack.c.l.b16 %v269
    %v1788 = vunpack.c.h.b16 %v269
    %v1789 = vunpack.c.l.b16 %v270
    %v1790 = vunpack.c.h.b16 %v270
    %v1791 = vunpack.c.l.b16 %v271
    %v1792 = vunpack.c.h.b16 %v271
    %v1793 = vunpack.c.l.b16 %v272
    %v1794 = vunpack.c.h.b16 %v272
    %v1795 = vunpack.c.l.b16 %v273
    %v1796 = vunpack.c.h.b16 %v273
    %v1797 = vunpack.c.l.b16 %v274
    %v1798 = vunpack.c.h.b16 %v274
    %v1799 = vunpack.c.l.b16 %v275
    %v1800 = vunpack.c.h.b16 %v275
    %v1801 = vunpack.c.l.b16 %v276
    %v1802 = vunpack.c.h.b16 %v276
    %v1803 = vunpack.c.l.b16 %v277
    %v1804 = vunpack.c.h.b16 %v277
    %v1805 = vunpack.c.l.b16 %v278
    %v1806 = vunpack.c.h.b16 %v278
    %v1807 = vunpack.c.l.b16 %v279
    %v1808 = vunpack.c.h.b16 %v279
    %v1809 = vunpack.c.l.b16 %v280
    %v1810 = vunpack.c.h.b16 %v280
    %v1811 = vunpack.c.l.b16 %v281
    %v1812 = vunpack.c.h.b16 %v281
    %v1813 = vunpack.c.l.b16 %v282
    %v1814 = vunpack.c.h.b16 %v282
    %v1815 = vunpack.c.l.b16 %v283
    %v1816 = vunpack.c.h.b16 %v283
    %v1817 = vunpack.c.l.b16 %v284
    %v1818 = vunpack.c.h.b16 %v284
    %v1819 = vunpack.c.l.b16 %v285
    %v1820 = vunpack.c.h.b16 %v285
    %v1821 = vunpack.c.l.b16 %v286
    %v1822 = vunpack.c.h.b16 %v286
    %v1823 = vunpack.c.l.b16 %v287
    %v1824 = vunpack.c.h.b16 %v287
    %v1825 = vunpack.c.l.b16 %v288
    %v1826 = vunpack.c.h.b16 %v288
    %v1827 = vunpack.c.l.b16 %v289
    %v1828 = vunpack.c.h.b16 %v289
    %v1829 = vunpack.c.l.b16 %v290
    %v1830 = vunpack.c.h.b16 %v290
    %v1831 = vunpack.c.l.b16 %v291
    %v1832 = vunpack.c.h.b16 %v291
    %v1833 = vunpack.c.l.b16 %v292
    %v1834 = vunpack.c.h.b16 %v292
    %v1835 = vunpack.c.l.b16 %v293
    %v1836 = vunpack.c.h.b16 %v293
    %v1837 = vunpack.c.l.b16 %v294
    %v1838 = vunpack.c.h.b16 %v294
    %v1839 = vunpack.c.l.b16 %v295
    %v1840 = vunpack.c.h.b16 %v295
    %v1841 = vunpack.c.l.b16 %v296
    %v1842 = vunpack.c.h.b16 %v296
    %v1843 = vunpack.c.l.b16 %v297
    %v1844 = vunpack.c.h.b16 %v297
    %v1845 = vunpack.c.l.b16 %v298
    %v1846 = vunpack.c.h.b16 %v298
    %v1847 = vunpack.c.l.b16 %v299
    %v1848 = vunpack.c.h.b16 %v299
    %v1849 = vunpack.c.l.b16 %v300
    %v1850 = vunpack.c.h.b16 %v300
    %v1851 = vunpack.c.l.b16 %v301
    %v1852 = vunpack.c.h.b16 %v301
    %v1853 = vunpack.c.l.b16 %v302
    %v1854 = vunpack.c.h.b16 %v302
    %v1855 = vunpack.c.l.b16 %v303
    %v1856 = vunpack.c.h.b16 %v303
    %v1857 = vunpack.c.l.b16 %v304
    %v1858 = vunpack.c.h.b16 %v304
    %v1859 = vunpack.c.l.b16 %v305
    %v1860 = vunpack.c.h.b16 %v305
    %v1861 = vunpack.c.l.b16 %v306
    %v1862 = vunpack.c.h.b16 %v306
    %v1863 = vunpack.c.l.b16 %v307
    %v1864 = vunpack.c.h.b16 %v307
    %v1865 = vunpack.c.l.b16 %v308
    %v1866 = vunpack.c.h.b16 %v308
    %v1867 = vunpack.c.l.b16 %v309
    %v1868 = vunpack.c.h.b16 %v309
    %v1869 = vunpack.c.l.b16 %v310
    %v1870 = vunpack.c.h.b16 %v310
    %v1871 = vunpack.c.l.b16 %v311
    %v1872 = vunpack.c.h.b16 %v311
    %v1873 = vunpack.c.l.b16 %v312
    %v1874 = vunpack.c.h.b16 %v312
    %v1875 = vunpack.c.l.b16 %v313
    %v1876 = vunpack.c.h.b16 %v313
    %v1877 = vunpack.c.l.b16 %v314
    %v1878 = vunpack.c.h.b16 %v314
    %v1879 = vunpack.c.l.b16 %v315
    %v1880 = vunpack.c.h.b16 %v315
    %v1881 = vunpack.c.l.b16 %v316
    %v1882 = vunpack.c.h.b16 %v316
    %v1883 = vunpack.c.l.b16 %v317
    %v1884 = vunpack.c.h.b16 %v317
    %v1885 = vunpack.c.l.b16 %v318
    %v1886 = vunpack.c.h.b16 %v318
    %v1887 = vunpack.c.l.b16 %v319
    %v1888 = vunpack.c.h.b16 %v319
    %v1889 = vunpack.c.l.b16 %v320
    %v1890 = vunpack.c.h.b16 %v320
    %v1891 = vunpack.c.l.b16 %v321
    %v1892 = vunpack.c.h.b16 %v321
    %v1893 = vunpack.c.l.b16 %v322
    %v1894 = vunpack.c.h.b16 %v322
    %v1895 = vunpack.c.l.b16 %v323
    %v1896 = vunpack.c.h.b16 %v323
    %v1897 = vunpack.c.l.b16 %v324
    %v1898 = vunpack.c.h.b16 %v324
    %v1899 = vunpack.c.l.b16 %v325
    %v1900 = vunpack.c.h.b16 %v325
    %v1901 = vunpack.c.l.b16 %v326
    %v1902 = vunpack.c.h.b16 %v326
    %v1903 = vunpack.c.l.b16 %v327
    %v1904 = vunpack.c.h.b16 %v327
    %v1905 = vunpack.c.l.b16 %v328
    %v1906 = vunpack.c.h.b16 %v328
    %v1907 = vunpack.c.l.b16 %v329
    %v1908 = vunpack.c.h.b16 %v329
    %v1909 = vunpack.c.l.b16 %v330
    %v1910 = vunpack.c.h.b16 %v330
    %v1911 = vunpack.c.l.b16 %v331
    %v1912 = vunpack.c.h.b16 %v331
    %v1913 = vunpack.c.l.b16 %v332
    %v1914 = vunpack.c.h.b16 %v332
    %v1915 = vunpack.c.l.b16 %v333
    %v1916 = vunpack.c.h.b16 %v333
    %v1917 = vunpack.c.l.b16 %v334
    %v1918 = vunpack.c.h.b16 %v334
    %v1919 = vunpack.c.l.b16 %v335
    %v1920 = vunpack.c.h.b16 %v335
    %v1921 = vunpack.c.l.b16 %v336
    %v1922 = vunpack.c.h.b16 %v336
    %v1923 = vunpack.c.l.b16 %v337
    %v1924 = vunpack.c.h.b16 %v337
    %v1925 = vunpack.c.l.b16 %v338
    %v1926 = vunpack.c.h.b16 %v338
    %v1927 = vunpack.c.l.b16 %v339
    %v1928 = vunpack.c.h.b16 %v339
    %v1929 = vunpack.c.l.b16 %v340
    %v1930 = vunpack.c.h.b16 %v340
    %v1931 = vunpack.c.l.b16 %v341
    %v1932 = vunpack.c.h.b16 %v341
    %v1933 = vunpack.c.l.b16 %v342
    %v1934 = vunpack.c.h.b16 %v342
    %v1935 = vunpack.c.l.b16 %v343
    %v1936 = vunpack.c.h.b16 %v343
    %v1937 = vunpack.c.l.b16 %v344
    %v1938 = vunpack.c.h.b16 %v344
    %v1939 = vunpack.c.l.b16 %v345
    %v1940 = vunpack.c.h.b16 %v345
    %v1941 = vunpack.c.l.b16 %v346
    %v1942 = vunpack.c.h.b16 %v346
    %v1943 = vunpack.c.l.b16 %v347
    %v1944 = vunpack.c.h.b16 %v347
    %v1945 = vunpack.c.l.b16 %v348
    %v1946 = vunpack.c.h.b16 %v348
    %v1947 = vunpack.c.l.b16 %v349
    %v1948 = vunpack.c.h.b16 %v349
    %v1949 = vunpack.c.l.b16 %v350
    %v1950 = vunpack.c.h.b16 %v350
    %v1951 = vunpack.c.l.b16 %v351
    %v1952 = vunpack.c.h.b16 %v351
    %v1953 = vunpack.c.l.b16 %v352
    %v1954 = vunpack.c.h.b16 %v352
    %v1955 = vunpack.c.l.b16 %v353
    %v1956 = vunpack.c.h.b16 %v353
    %v1957 = vunpack.c.l.b16 %v354
    %v1958 = vunpack.c.h.b16 %v354
    %v1959 = vunpack.c.l.b16 %v355
    %v1960 = vunpack.c.h.b16 %v355
    %v1961 = vunpack.c.l.b16 %v356
    %v1962 = vunpack.c.h.b16 %v356
    %v1963 = vunpack.c.l.b16 %v357
    %v1964 = vunpack.c.h.b16 %v357
    %v1965 = vunpack.c.l.b16 %v358
    %v1966 = vunpack.c.h.b16 %v358
    %v1967 = vunpack.c.l.b16 %v359
    %v1968 = vunpack.c.h.b16 %v359
    %v1969 = vunpack.c.l.b16 %v360
    %v1970 = vunpack.c.h.b16 %v360
    %v1971 = vunpack.c.l.b16 %v361
    %v1972 = vunpack.c.h.b16 %v361
    %v1973 = vunpack.c.l.b16 %v362
    %v1974 = vunpack.c.h.b16 %v362
    %v1975 = vunpack.c.l.b16 %v363
    %v1976 = vunpack.c.h.b16 %v363
    %v1977 = vunpack.c.l.b16 %v364
    %v1978 = vunpack.c.h.b16 %v364
    %v1979 = vunpack.c.l.b16 %v365
    %v1980 = vunpack.c.h.b16 %v365
    %v1981 = vunpack.c.l.b16 %v366
    %v1982 = vunpack.c.h.b16 %v366
    %v1983 = vunpack.c.l.b16 %v367
    %v1984 = vunpack.c.h.b16 %v367
    %v1985 = vunpack.c.l.b16 %v368
    %v1986 = vunpack.c.h.b16 %v368
    %v1987 = vunpack.c.l.b16 %v369
    %v1988 = vunpack.c.h.b16 %v369
    %v1989 = vunpack.c.l.b16 %v370
    %v1990 = vunpack.c.h.b16 %v370
    %v1991 = vunpack.c.l.b16 %v371
    %v1992 = vunpack.c.h.b16 %v371
    %v1993 = vunpack.c.l.b16 %v372
    %v1994 = vunpack.c.h.b16 %v372
    %v1995 = vunpack.c.l.b16 %v373
    %v1996 = vunpack.c.h.b16 %v373
    %v1997 = vunpack.c.l.b16 %v374
    %v1998 = vunpack.c.h.b16 %v374
    %v1999 = vunpack.c.l.b16 %v375
    %v2000 = vunpack.c.h.b16 %v375
    %v2001 = vunpack.c.l.b16 %v376
    %v2002 = vunpack.c.h.b16 %v376
    %v2003 = vunpack.c.l.b16 %v377
    %v2004 = vunpack.c.h.b16 %v377
    %v2005 = vunpack.c.l.b16 %v378
    %v2006 = vunpack.c.h.b16 %v378
    %v2007 = vunpack.c.l.b16 %v379
    %v2008 = vunpack.c.h.b16 %v379
    %v2009 = vunpack.c.l.b16 %v380
    %v2010 = vunpack.c.h.b16 %v380
    %v2011 = vunpack.c.l.b16 %v381
    %v2012 = vunpack.c.h.b16 %v381
    %v2013 = vunpack.c.l.b16 %v382
    %v2014 = vunpack.c.h.b16 %v382
    %v2015 = vunpack.c.l.b16 %v383
    %v2016 = vunpack.c.h.b16 %v383
    %v2017 = vunpack.c.l.b16 %v384
    %v2018 = vunpack.c.h.b16 %v384
    %v2019 = vunpack.c.l.b16 %v385
    %v2020 = vunpack.c.h.b16 %v385
    %v2021 = vunpack.c.l.b16 %v386
    %v2022 = vunpack.c.h.b16 %v386
    %v2023 = vunpack.c.l.b16 %v387
    %v2024 = vunpack.c.h.b16 %v387
    %v2025 = vunpack.c.l.b16 %v388
    %v2026 = vunpack.c.h.b16 %v388
    %v2027 = vunpack.c.l.b16 %v389
    %v2028 = vunpack.c.h.b16 %v389
    %v2029 = vunpack.c.l.b16 %v390
    %v2030 = vunpack.c.h.b16 %v390
    %v2031 = vunpack.c.l.b16 %v391
    %v2032 = vunpack.c.h.b16 %v391
    %v2033 = vunpack.c.l.b16 %v392
    %v2034 = vunpack.c.h.b16 %v392
    %v2035 = vunpack.c.l.b16 %v393
    %v2036 = vunpack.c.h.b16 %v393
    %v2037 = vunpack.c.l.b16 %v394
    %v2038 = vunpack.c.h.b16 %v394
    %v2039 = vunpack.c.l.b16 %v395
    %v2040 = vunpack.c.h.b16 %v395
    %v2041 = vunpack.c.l.b16 %v396
    %v2042 = vunpack.c.h.b16 %v396
    %v2043 = vunpack.c.l.b16 %v397
    %v2044 = vunpack.c.h.b16 %v397
    %v2045 = vunpack.c.l.b16 %v398
    %v2046 = vunpack.c.h.b16 %v398
    %v2047 = vunpack.c.l.b16 %v399
    %v2048 = vunpack.c.h.b16 %v399
    %v2049 = vunpack.c.l.b16 %v400
    %v2050 = vunpack.c.h.b16 %v400
    %v2051 = vunpack.c.l.b16 %v401
    %v2052 = vunpack.c.h.b16 %v401
    %v2053 = vunpack.c.l.b16 %v402
    %v2054 = vunpack.c.h.b16 %v402
    %v2055 = vunpack.c.l.b16 %v403
    %v2056 = vunpack.c.h.b16 %v403
    %v2057 = vunpack.c.l.b16 %v404
    %v2058 = vunpack.c.h.b16 %v404
    %v2059 = vunpack.c.l.b16 %v405
    %v2060 = vunpack.c.h.b16 %v405
    %v2061 = vunpack.c.l.b16 %v406
    %v2062 = vunpack.c.h.b16 %v406
    %v2063 = vunpack.c.l.b16 %v407
    %v2064 = vunpack.c.h.b16 %v407
    %v2065 = vunpack.c.l.b16 %v408
    %v2066 = vunpack.c.h.b16 %v408
    %v2067 = vunpack.c.l.b16 %v409
    %v2068 = vunpack.c.h.b16 %v409
    %v2069 = vunpack.c.l.b16 %v410
    %v2070 = vunpack.c.h.b16 %v410
    %v2071 = vunpack.c.l.b16 %v411
    %v2072 = vunpack.c.h.b16 %v411
    %v2073 = vunpack.c.l.b16 %v412
    %v2074 = vunpack.c.h.b16 %v412
    %v2075 = vunpack.c.l.b16 %v413
    %v2076 = vunpack.c.h.b16 %v413
    %v2077 = vunpack.c.l.b16 %v414
    %v2078 = vunpack.c.h.b16 %v414
    %v2079 = vunpack.c.l.b16 %v415
    %v2080 = vunpack.c.h.b16 %v415
    %v2081 = vunpack.c.l.b16 %v416
    %v2082 = vunpack.c.h.b16 %v416
    %v2083 = vunpack.c.l.b16 %v417
    %v2084 = vunpack.c.h.b16 %v417
    %v2085 = vunpack.c.l.b16 %v418
    %v2086 = vunpack.c.h.b16 %v418
    %v2087 = vunpack.c.l.b16 %v419
    %v2088 = vunpack.c.h.b16 %v419
    %v2089 = vunpack.c.l.b16 %v420
    %v2090 = vunpack.c.h.b16 %v420
    %v2091 = vunpack.c.l.b16 %v421
    %v2092 = vunpack.c.h.b16 %v421
    %v2093 = vunpack.c.l.b16 %v422
    %v2094 = vunpack.c.h.b16 %v422
    %v2095 = vunpack.c.l.b16 %v423
    %v2096 = vunpack.c.h.b16 %v423
    %v2097 = vunpack.c.l.b16 %v424
    %v2098 = vunpack.c.h.b16 %v424
    %v2099 = vunpack.c.l.b16 %v425
    %v2100 = vunpack.c.h.b16 %v425
    %v2101 = vunpack.c.l.b16 %v426
    %v2102 = vunpack.c.h.b16 %v426
    %v2103 = vunpack.c.l.b16 %v427
    %v2104 = vunpack.c.h.b16 %v427
    %v2105 = vunpack.c.l.b16 %v428
    %v2106 = vunpack.c.h.b16 %v428
    %v2107 = vunpack.c.l.b16 %v429
    %v2108 = vunpack.c.h.b16 %v429
    %v2109 = vunpack.c.l.b16 %v430
    %v2110 = vunpack.c.h.b16 %v430
    %v2111 = vunpack.c.l.b16 %v431
    %v2112 = vunpack.c.h.b16 %v431
    %v2113 = vunpack.c.l.b16 %v432
    %v2114 = vunpack.c.h.b16 %v432
    %v2115 = vunpack.c.l.b16 %v433
    %v2116 = vunpack.c.h.b16 %v433
    %v2117 = vunpack.c.l.b16 %v434
    %v2118 = vunpack.c.h.b16 %v434
    %v2119 = vunpack.c.l.b16 %v435
    %v2120 = vunpack.c.h.b16 %v435
    %v2121 = vunpack.c.l.b16 %v436
    %v2122 = vunpack.c.h.b16 %v436
    %v2123 = vunpack.c.l.b16 %v437
    %v2124 = vunpack.c.h.b16 %v437
    %v2125 = vunpack.c.l.b16 %v438
    %v2126 = vunpack.c.h.b16 %v438
    %v2127 = vunpack.c.l.b16 %v439
    %v2128 = vunpack.c.h.b16 %v439
    %v2129 = vunpack.c.l.b16 %v440
    %v2130 = vunpack.c.h.b16 %v440
    %v2131 = vunpack.c.l.b16 %v441
    %v2132 = vunpack.c.h.b16 %v441
    %v2133 = vunpack.c.l.b16 %v442
    %v2134 = vunpack.c.h.b16 %v442
    %v2135 = vunpack.c.l.b16 %v443
    %v2136 = vunpack.c.h.b16 %v443
    %v2137 = vunpack.c.l.b16 %v444
    %v2138 = vunpack.c.h.b16 %v444
    %v2139 = vunpack.c.l.b16 %v445
    %v2140 = vunpack.c.h.b16 %v445
    %v2141 = vunpack.c.l.b16 %v446
    %v2142 = vunpack.c.h.b16 %v446
    %v2143 = vunpack.c.l.b16 %v447
    %v2144 = vunpack.c.h.b16 %v447
    %v2145 = vunpack.c.l.b16 %v448
    %v2146 = vunpack.c.h.b16 %v448
    %v2147 = vunpack.c.l.b16 %v449
    %v2148 = vunpack.c.h.b16 %v449
    %v2149 = vunpack.c.l.b16 %v450
    %v2150 = vunpack.c.h.b16 %v450
    %v2151 = vunpack.c.l.b16 %v451
    %v2152 = vunpack.c.h.b16 %v451
    %v2153 = vunpack.c.l.b16 %v452
    %v2154 = vunpack.c.h.b16 %v452
    %v2155 = vunpack.c.l.b16 %v453
    %v2156 = vunpack.c.h.b16 %v453
    %v2157 = vpack.c.b16 %v1653, %v1645
    %v2158 = vpack.c.b16 %v1654, %v1646
    %v2159 = vpack.c.b16 %v1655, %v1647
    %v2160 = vpack.c.b16 %v1656, %v1648
    %v2161 = vpack.c.b16 %v1657, %v1649
    %v2162 = vpack.c.b16 %v1658, %v1650
    %v2163 = vpack.c.b16 %v1659, %v1651
    %v2164 = vpack.c.b16 %v1660, %v1652
    %v2165 = vpack.c.b16 %v1669, %v1661
    %v2166 = vpack.c.b16 %v1670, %v1662
    %v2167 = vpack.c.b16 %v1671, %v1663
    %v2168 = vpack.c.b16 %v1672, %v1664
    %v2169 = vpack.c.b16 %v1673, %v1665
    %v2170 = vpack.c.b16 %v1674, %v1666
    %v2171 = vpack.c.b16 %v1675, %v1667
    %v2172 = vpack.c.b16 %v1676, %v1668
    %v2173 = vpack.c.b16 %v1685, %v1677
    %v2174 = vpack.c.b16 %v1686, %v1678
    %v2175 = vpack.c.b16 %v1687, %v1679
    %v2176 = vpack.c.b16 %v1688, %v1680
    %v2177 = vpack.c.b16 %v1689, %v1681
    %v2178 = vpack.c.b16 %v1690, %v1682
    %v2179 = vpack.c.b16 %v1691, %v1683
    %v2180 = vpack.c.b16 %v1692, %v1684
    %v2181 = vpack.c.b16 %v1701, %v1693
    %v2182 = vpack.c.b16 %v1702, %v1694
    %v2183 = vpack.c.b16 %v1703, %v1695
    %v2184 = vpack.c.b16 %v1704, %v1696
    %v2185 = vpack.c.b16 %v1705, %v1697
    %v2186 = vpack.c.b16 %v1706, %v1698
    %v2187 = vpack.c.b16 %v1707, %v1699
    %v2188 = vpack.c.b16 %v1708, %v1700
    %v2189 = vpack.c.b16 %v1717, %v1709
    %v2190 = vpack.c.b16 %v1718, %v1710
    %v2191 = vpack.c.b16 %v1719, %v1711
    %v2192 = vpack.c.b16 %v1720, %v1712
    %v2193 = vpack.c.b16 %v1721, %v1713
    %v2194 = vpack.c.b16 %v1722, %v1714
    %v2195 = vpack.c.b16 %v1723, %v1715
    %v2196 = vpack.c.b16 %v1724, %v1716
    %v2197 = vpack.c.b16 %v1733, %v1725
    %v2198 = vpack.c.b16 %v1734, %v1726
    %v2199 = vpack.c.b16 %v1735, %v1727
    %v2200 = vpack.c.b16 %v1736, %v1728
    %v2201 = vpack.c.b16 %v1737, %v1729
    %v2202 = vpack.c.b16 %v1738, %v1730
    %v2203 = vpack.c.b16 %v1739, %v1731
    %v2204 = vpack.c.b16 %v1740, %v1732
    %v2205 = vpack.c.b16 %v1749, %v1741
    %v2206 = vpack.c.b16 %v1750, %v1742
    %v2207 = vpack.c.b16 %v1751, %v1743
    %v2208 = vpack.c.b16 %v1752, %v1744
    %v2209 = vpack.c.b16 %v1753, %v1745
    %v2210 = vpack.c.b16 %v1754, %v1746
    %v2211 = vpack.c.b16 %v1755, %v1747
    %v2212 = vpack.c.b16 %v1756, %v1748
    %v2213 = vpack.c.b16 %v1765, %v1757
    %v2214 = vpack.c.b16 %v1766, %v1758
    %v2215 = vpack.c.b16 %v1767, %v1759
    %v2216 = vpack.c.b16 %v1768, %v1760
    %v2217 = vpack.c.b16 %v1769, %v1761
    %v2218 = vpack.c.b16 %v1770, %v1762
    %v2219 = vpack.c.b16 %v1771, %v1763
    %v2220 = vpack.c.b16 %v1772, %v1764
    %v2221 = vpack.c.b16 %v1781, %v1773
    %v2222 = vpack.c.b16 %v1782, %v1774
    %v2223 = vpack.c.b16 %v1783, %v1775
    %v2224 = vpack.c.b16 %v1784, %v1776
    %v2225 = vpack.c.b16 %v1785, %v1777
    %v2226 = vpack.c.b16 %v1786, %v1778
    %v2227 = vpack.c.b16 %v1787, %v1779
    %v2228 = vpack.c.b16 %v1788, %v1780
    %v2229 = vpack.c.b16 %v1797, %v1789
    %v2230 = vpack.c.b16 %v1798, %v1790
    %v2231 = vpack.c.b16 %v1799, %v1791
    %v2232 = vpack.c.b16 %v1800, %v1792
    %v2233 = vpack.c.b16 %v1801, %v1793
    %v2234 = vpack.c.b16 %v1802, %v1794
    %v2235 = vpack.c.b16 %v1803, %v1795
    %v2236 = vpack.c.b16 %v1804, %v1796
    %v2237 = vpack.c.b16 %v1813, %v1805
    %v2238 = vpack.c.b16 %v1814, %v1806
    %v2239 = vpack.c.b16 %v1815, %v1807
    %v2240 = vpack.c.b16 %v1816, %v1808
    %v2241 = vpack.c.b16 %v1817, %v1809
    %v2242 = vpack.c.b16 %v1818, %v1810
    %v2243 = vpack.c.b16 %v1819, %v1811
    %v2244 = vpack.c.b16 %v1820, %v1812
    %v2245 = vpack.c.b16 %v1829, %v1821
    %v2246 = vpack.c.b16 %v1830, %v1822
    %v2247 = vpack.c.b16 %v1831, %v1823
    %v2248 = vpack.c.b16 %v1832, %v1824
    %v2249 = vpack.c.b16 %v1833, %v1825
    %v2250 = vpack.c.b16 %v1834, %v1826
    %v2251 = vpack.c.b16 %v1835, %v1827
    %v2252 = vpack.c.b16 %v1836, %v1828
    %v2253 = vpack.c.b16 %v1845, %v1837
    %v2254 = vpack.c.b16 %v1846, %v1838
    %v2255 = vpack.c.b16 %v1847, %v1839
    %v2256 = vpack.c.b16 %v1848, %v1840
    %v2257 = vpack.c.b16 %v1849, %v1841
    %v2258 = vpack.c.b16 %v1850, %v1842
    %v2259 = vpack.c.b16 %v1851, %v1843
    %v2260 = vpack.c.b16 %v1852, %v1844
    %v2261 = vpack.c.b16 %v1861, %v1853
    %v2262 = vpack.c.b16 %v1862, %v1854
    %v2263 = vpack.c.b16 %v1863, %v1855
    %v2264 = vpack.c.b16 %v1864, %v1856
    %v2265 = vpack.c.b16 %v1865, %v1857
    %v2266 = vpack.c.b16 %v1866, %v1858
    %v2267 = vpack.c.b16 %v1867, %v1859
    %v2268 = vpack.c.b16 %v1868, %v1860
    %v2269 = vpack.c.b16 %v1877, %v1869
    %v2270 = vpack.c.b16 %v1878, %v1870
    %v2271 = vpack.c.b16 %v1879, %v1871
    %v2272 = vpack.c.b16 %v1880, %v1872
    %v2273 = vpack.c.b16 %v1881, %v1873
    %v2274 = vpack.c.b16 %v1882, %v1874
    %v2275 = vpack.c.b16 %v1883, %v1875
    %v2276 = vpack.c.b16 %v1884, %v1876
    %v2277 = vpack.c.b16 %v1893, %v1885
    %v2278 = vpack.c.b16 %v1894, %v1886
    %v2279 = vpack.c.b16 %v1895, %v1887
    %v2280 = vpack.c.b16 %v1896, %v1888
    %v2281 = vpack.c.b16 %v1897, %v1889
    %v2282 = vpack.c.b16 %v1898, %v1890
    %v2283 = vpack.c.b16 %v1899, %v1891
    %v2284 = vpack.c.b16 %v1900, %v1892
    %v2285 = vpack.c.b16 %v1909, %v1901
    %v2286 = vpack.c.b16 %v1910, %v1902
    %v2287 = vpack.c.b16 %v1911, %v1903
    %v2288 = vpack.c.b16 %v1912, %v1904
    %v2289 = vpack.c.b16 %v1913, %v1905
    %v2290 = vpack.c.b16 %v1914, %v1906
    %v2291 = vpack.c.b16 %v1915, %v1907
    %v2292 = vpack.c.b16 %v1916, %v1908
    %v2293 = vpack.c.b16 %v1925, %v1917
    %v2294 = vpack.c.b16 %v1926, %v1918
    %v2295 = vpack.c.b16 %v1927, %v1919
    %v2296 = vpack.c.b16 %v1928, %v1920
    %v2297 = vpack.c.b16 %v1929, %v1921
    %v2298 = vpack.c.b16 %v1930, %v1922
    %v2299 = vpack.c.b16 %v1931, %v1923
    %v2300 = vpack.c.b16 %v1932, %v1924
    %v2301 = vpack.c.b16 %v1941, %v1933
    %v2302 = vpack.c.b16 %v1942, %v1934
    %v2303 = vpack.c.b16 %v1943, %v1935
    %v2304 = vpack.c.b16 %v1944, %v1936
    %v2305 = vpack.c.b16 %v1945, %v1937
    %v2306 = vpack.c.b16 %v1946, %v1938
    %v2307 = vpack.c.b16 %v1947, %v1939
    %v2308 = vpack.c.b16 %v1948, %v1940
    %v2309 = vpack.c.b16 %v1957, %v1949
    %v2310 = vpack.c.b16 %v1958, %v1950
    %v2311 = vpack.c.b16 %v1959, %v1951
    %v2312 = vpack.c.b16 %v1960, %v1952
    %v2313 = vpack.c.b16 %v1961, %v1953
    %v2314 = vpack.c.b16 %v1962, %v1954
    %v2315 = vpack.c.b16 %v1963, %v1955
    %v2316 = vpack.c.b16 %v1964, %v1956
    %v2317 = vpack.c.b16 %v1973, %v1965
    %v2318 = vpack.c.b16 %v1974, %v1966
    %v2319 = vpack.c.b16 %v1975, %v1967
    %v2320 = vpack.c.b16 %v1976, %v1968
    %v2321 = vpack.c.b16 %v1977, %v1969
    %v2322 = vpack.c.b16 %v1978, %v1970
    %v2323 = vpack.c.b16 %v1979, %v1971
    %v2324 = vpack.c.b16 %v1980, %v1972
    %v2325 = vpack.c.b16 %v1989, %v1981
    %v2326 = vpack.c.b16 %v1990, %v1982
    %v2327 = vpack.c.b16 %v1991, %v1983
    %v2328 = vpack.c.b16 %v1992, %v1984
    %v2329 = vpack.c.b16 %v1993, %v1985
    %v2330 = vpack.c.b16 %v1994, %v1986
    %v2331 = vpack.c.b16 %v1995, %v1987
    %v2332 = vpack.c.b16 %v1996, %v1988
    %v2333 = vpack.c.b16 %v2005, %v1997
    %v2334 = vpack.c.b16 %v2006, %v1998
    %v2335 = vpack.c.b16 %v2007, %v1999
    %v2336 = vpack.c.b16 %v2008, %v2000
    %v2337 = vpack.c.b16 %v2009, %v2001
    %v2338 = vpack.c.b16 %v2010, %v2002
    %v2339 = vpack.c.b16 %v2011, %v2003
    %v2340 = vpack.c.b16 %v2012, %v2004
    %v2341 = vpack.c.b16 %v2021, %v2013
    %v2342 = vpack.c.b16 %v2022, %v2014
    %v2343 = vpack.c.b16 %v2023, %v2015
    %v2344 = vpack.c.b16 %v2024, %v2016
    %v2345 = vpack.c.b16 %v2025, %v2017
    %v2346 = vpack.c.b16 %v2026, %v2018
    %v2347 = vpack.c.b16 %v2027, %v2019
    %v2348 = vpack.c.b16 %v2028, %v2020
    %v2349 = vpack.c.b16 %v2037, %v2029
    %v2350 = vpack.c.b16 %v2038, %v2030
    %v2351 = vpack.c.b16 %v2039, %v2031
    %v2352 = vpack.c.b16 %v2040, %v2032
    %v2353 = vpack.c.b16 %v2041, %v2033
    %v2354 = vpack.c.b16 %v2042, %v2034
    %v2355 = vpack.c.b16 %v2043, %v2035
    %v2356 = vpack.c.b16 %v2044, %v2036
    %v2357 = vpack.c.b16 %v2053, %v2045
    %v2358 = vpack.c.b16 %v2054, %v2046
    %v2359 = vpack.c.b16 %v2055, %v2047
    %v2360 = vpack.c.b16 %v2056, %v2048
    %v2361 = vpack.c.b16 %v2057, %v2049
    %v2362 = vpack.c.b16 %v2058, %v2050
    %v2363 = vpack.c.b16 %v2059, %v2051
    %v2364 = vpack.c.b16 %v2060, %v2052
    %v2365 = vpack.c.b16 %v2069, %v2061
    %v2366 = vpack.c.b16 %v2070, %v2062
    %v2367 = vpack.c.b16 %v2071, %v2063
    %v2368 = vpack.c.b16 %v2072, %v2064
    %v2369 = vpack.c.b16 %v2073, %v2065
    %v2370 = vpack.c.b16 %v2074, %v2066
    %v2371 = vpack.c.b16 %v2075, %v2067
    %v2372 = vpack.c.b16 %v2076, %v2068
    %v2373 = vpack.c.b16 %v2085, %v2077
    %v2374 = vpack.c.b16 %v2086, %v2078
    %v2375 = vpack.c.b16 %v2087, %v2079
    %v2376 = vpack.c.b16 %v2088, %v2080
    %v2377 = vpack.c.b16 %v2089, %v2081
    %v2378 = vpack.c.b16 %v2090, %v2082
    %v2379 = vpack.c.b16 %v2091, %v2083
    %v2380 = vpack.c.b16 %v2092, %v2084
    %v2381 = vpack.c.b16 %v2101, %v2093
    %v2382 = vpack.c.b16 %v2102, %v2094
    %v2383 = vpack.c.b16 %v2103, %v2095
    %v2384 = vpack.c.b16 %v2104, %v2096
    %v2385 = vpack.c.b16 %v2105, %v2097
    %v2386 = vpack.c.b16 %v2106, %v2098
    %v2387 = vpack.c.b16 %v2107, %v2099
    %v2388 = vpack.c.b16 %v2108, %v2100
    %v2389 = vpack.c.b16 %v2117, %v2109
    %v2390 = vpack.c.b16 %v2118, %v2110
    %v2391 = vpack.c.b16 %v2119, %v2111
    %v2392 = vpack.c.b16 %v2120, %v2112
    %v2393 = vpack.c.b16 %v2121, %v2113
    %v2394 = vpack.c.b16 %v2122, %v2114
    %v2395 = vpack.c.b16 %v2123, %v2115
    %v2396 = vpack.c.b16 %v2124, %v2116
    %v2397 = vpack.c.b16 %v2133, %v2125
    %v2398 = vpack.c.b16 %v2134, %v2126
    %v2399 = vpack.c.b16 %v2135, %v2127
    %v2400 = vpack.c.b16 %v2136, %v2128
    %v2401 = vpack.c.b16 %v2137, %v2129
    %v2402 = vpack.c.b16 %v2138, %v2130
    %v2403 = vpack.c.b16 %v2139, %v2131
    %v2404 = vpack.c.b16 %v2140, %v2132
    %v2405 = vpack.c.b16 %v2149, %v2141
    %v2406 = vpack.c.b16 %v2150, %v2142
    %v2407 = vpack.c.b16 %v2151, %v2143
    %v2408 = vpack.c.b16 %v2152, %v2144
    %v2409 = vpack.c.b16 %v2153, %v2145
    %v2410 = vpack.c.b16 %v2154, %v2146
    %v2411 = vpack.c.b16 %v2155, %v2147
    %v2412 = vpack.c.b16 %v2156, %v2148
    %2669 = vmatprep.subr.bf16.mxu0 %v2158
    %2670 = vmatpush1.bf16.msra.mxu0 %v2157
    %2671 = vmatprep.subr.bf16.mxu0 %v2166
    %2672 = vmatpush1.bf16.msra.mxu0 %v2165
    %2673 = vmatprep.subr.bf16.mxu0 %v2174
    %2674 = vmatpush1.bf16.msra.mxu0 %v2173
    %2675 = vmatprep.subr.bf16.mxu0 %v2182
    %2676 = vmatpush1.bf16.msra.mxu0 %v2181
    %2677 = vmatprep.subr.bf16.mxu0 %v2190
    %2678 = vmatpush1.bf16.msra.mxu0 %v2189
    %2679 = vmatprep.subr.bf16.mxu0 %v2198
    %2680 = vmatpush1.bf16.msra.mxu0 %v2197
    %2681 = vmatprep.subr.bf16.mxu0 %v2206
    %2682 = vmatpush1.bf16.msra.mxu0 %v2205
    %2683 = vmatprep.subr.bf16.mxu0 %v2214
    %2684 = vmatpush1.bf16.msra.mxu0 %v2213
    %2685 = vmatprep.subr.bf16.mxu0 %v2222
    %2686 = vmatpush1.bf16.msra.mxu0 %v2221
    %2687 = vmatprep.subr.bf16.mxu0 %v2230
    %2688 = vmatpush1.bf16.msra.mxu0 %v2229
    %2689 = vmatprep.subr.bf16.mxu0 %v2238
    %2690 = vmatpush1.bf16.msra.mxu0 %v2237
    %2691 = vmatprep.subr.bf16.mxu0 %v2246
    %2692 = vmatpush1.bf16.msra.mxu0 %v2245
    %2693 = vmatprep.subr.bf16.mxu0 %v2254
    %2694 = vmatpush1.bf16.msra.mxu0 %v2253
    %2695 = vmatprep.subr.bf16.mxu0 %v2262
    %2696 = vmatpush1.bf16.msra.mxu0 %v2261
    %2697 = vmatprep.subr.bf16.mxu0 %v2270
    %2698 = vmatpush1.bf16.msra.mxu0 %v2269
    %2699 = vmatprep.subr.bf16.mxu0 %v2278
    %2700 = vmatpush1.bf16.msra.mxu0 %v2277
    %2701 = vmatprep.mubr.bf16.mxu0 %v1382
    %2702 = vmatmul.mubr.bf16.gmra.mrb[0].mxu0 %v1381
    %v2703 = vpop.f32.mrb[0].mxu0
    %v2704 = vadd.f32 %v1338, %v2703
    %v2705 = vpop.f32.mrb[0].mxu0
    %v2706 = vadd.f32 %v1342, %v2705
    %v2707 = vpop.f32.mrb[0].mxu0
    %v2708 = vpop.f32.mrb[0].mxu0
    %2709 = vdwg.mxu0
    %2710 = vmatprep.subr.bf16.mxu0 %v2286
    %2711 = vmatpush1.bf16.msra.mxu0 %v2285
    %2712 = vmatprep.subr.bf16.mxu0 %v2294
    %2713 = vmatpush1.bf16.msra.mxu0 %v2293
    %2714 = vmatprep.subr.bf16.mxu0 %v2302
    %2715 = vmatpush1.bf16.msra.mxu0 %v2301
    %2716 = vmatprep.subr.bf16.mxu0 %v2310
    %2717 = vmatpush1.bf16.msra.mxu0 %v2309
    %2718 = vmatprep.subr.bf16.mxu0 %v2318
    %2719 = vmatpush1.bf16.msra.mxu0 %v2317
    %2720 = vmatprep.subr.bf16.mxu0 %v2326
    %2721 = vmatpush1.bf16.msra.mxu0 %v2325
    %2722 = vmatprep.subr.bf16.mxu0 %v2334
    %2723 = vmatpush1.bf16.msra.mxu0 %v2333
    %2724 = vmatprep.subr.bf16.mxu0 %v2342
    %2725 = vmatpush1.bf16.msra.mxu0 %v2341
    %2726 = vmatprep.subr.bf16.mxu0 %v2350
    %2727 = vmatpush1.bf16.msra.mxu0 %v2349
    %2728 = vmatprep.subr.bf16.mxu0 %v2358
    %2729 = vmatpush1.bf16.msra.mxu0 %v2357
    %2730 = vmatprep.subr.bf16.mxu0 %v2366
    %2731 = vmatpush1.bf16.msra.mxu0 %v2365
    %2732 = vmatprep.subr.bf16.mxu0 %v2374
    %2733 = vmatpush1.bf16.msra.mxu0 %v2373
    %2734 = vmatprep.subr.bf16.mxu0 %v2382
    %2735 = vmatpush1.bf16.msra.mxu0 %v2381
    %2736 = vmatprep.subr.bf16.mxu0 %v2390
    %2737 = vmatpush1.bf16.msra.mxu0 %v2389
    %2738 = vmatprep.subr.bf16.mxu0 %v2398
    %2739 = vmatpush1.bf16.msra.mxu0 %v2397
    %2740 = vmatprep.subr.bf16.mxu0 %v2406
    %2741 = vmatpush1.bf16.msra.mxu0 %v2405
    %2742 = vmatprep.mubr.bf16.mxu0 %v1384
    %2743 = vmatmul.mubr.bf16.gmra.mrb[0].mxu0 %v1383
    %v2744 = vpop.f32.mrb[0].mxu0
    %v2745 = vadd.f32 %v2704, %v2744
    %v2746 = vpop.f32.mrb[0].mxu0
    %v2747 = vadd.f32 %v2706, %v2746
    %v2748 = vpop.f32.mrb[0].mxu0
    %v2749 = vpop.f32.mrb[0].mxu0
    %2750 = vdwg.mxu0
    %2751 = vmatprep.subr.bf16.mxu0 %v2160
    %2752 = vmatpush1.bf16.msra.mxu0 %v2159
    %2753 = vmatprep.subr.bf16.mxu0 %v2168
    %2754 = vmatpush1.bf16.msra.mxu0 %v2167
    %2755 = vmatprep.subr.bf16.mxu0 %v2176
    %2756 = vmatpush1.bf16.msra.mxu0 %v2175
    %2757 = vmatprep.subr.bf16.mxu0 %v2184
    %2758 = vmatpush1.bf16.msra.mxu0 %v2183
    %2759 = vmatprep.subr.bf16.mxu0 %v2192
    %2760 = vmatpush1.bf16.msra.mxu0 %v2191
    %2761 = vmatprep.subr.bf16.mxu0 %v2200
    %2762 = vmatpush1.bf16.msra.mxu0 %v2199
    %2763 = vmatprep.subr.bf16.mxu0 %v2208
    %2764 = vmatpush1.bf16.msra.mxu0 %v2207
    %2765 = vmatprep.subr.bf16.mxu0 %v2216
    %2766 = vmatpush1.bf16.msra.mxu0 %v2215
    %2767 = vmatprep.subr.bf16.mxu0 %v2224
    %2768 = vmatpush1.bf16.msra.mxu0 %v2223
    %2769 = vmatprep.subr.bf16.mxu0 %v2232
    %2770 = vmatpush1.bf16.msra.mxu0 %v2231
    %2771 = vmatprep.subr.bf16.mxu0 %v2240
    %2772 = vmatpush1.bf16.msra.mxu0 %v2239
    %2773 = vmatprep.subr.bf16.mxu0 %v2248
    %2774 = vmatpush1.bf16.msra.mxu0 %v2247
    %2775 = vmatprep.subr.bf16.mxu0 %v2256
    %2776 = vmatpush1.bf16.msra.mxu0 %v2255
    %2777 = vmatprep.subr.bf16.mxu0 %v2264
    %2778 = vmatpush1.bf16.msra.mxu0 %v2263
    %2779 = vmatprep.subr.bf16.mxu0 %v2272
    %2780 = vmatpush1.bf16.msra.mxu0 %v2271
    %2781 = vmatprep.subr.bf16.mxu0 %v2280
    %2782 = vmatpush1.bf16.msra.mxu0 %v2279
    %2783 = vmatprep.mubr.bf16.mxu0 %v1382
    %2784 = vmatmul.mubr.bf16.gmra.mrb[0].mxu0 %v1381
    %v2785 = vpop.f32.mrb[0].mxu0
    %v2786 = vadd.f32 %v1346, %v2785
    %v2787 = vpop.f32.mrb[0].mxu0
    %v2788 = vadd.f32 %v1350, %v2787
    %v2789 = vpop.f32.mrb[0].mxu0
    %v2790 = vpop.f32.mrb[0].mxu0
    %2791 = vdwg.mxu0
    %2792 = vmatprep.subr.bf16.mxu0 %v2288
    %2793 = vmatpush1.bf16.msra.mxu0 %v2287
    %2794 = vmatprep.subr.bf16.mxu0 %v2296
    %2795 = vmatpush1.bf16.msra.mxu0 %v2295
    %2796 = vmatprep.subr.bf16.mxu0 %v2304
    %2797 = vmatpush1.bf16.msra.mxu0 %v2303
    %2798 = vmatprep.subr.bf16.mxu0 %v2312
    %2799 = vmatpush1.bf16.msra.mxu0 %v2311
    %2800 = vmatprep.subr.bf16.mxu0 %v2320
    %2801 = vmatpush1.bf16.msra.mxu0 %v2319
    %2802 = vmatprep.subr.bf16.mxu0 %v2328
    %2803 = vmatpush1.bf16.msra.mxu0 %v2327
    %2804 = vmatprep.subr.bf16.mxu0 %v2336
    %2805 = vmatpush1.bf16.msra.mxu0 %v2335
    %2806 = vmatprep.subr.bf16.mxu0 %v2344
    %2807 = vmatpush1.bf16.msra.mxu0 %v2343
    %2808 = vmatprep.subr.bf16.mxu0 %v2352
    %2809 = vmatpush1.bf16.msra.mxu0 %v2351
    %2810 = vmatprep.subr.bf16.mxu0 %v2360
    %2811 = vmatpush1.bf16.msra.mxu0 %v2359
    %2812 = vmatprep.subr.bf16.mxu0 %v2368
    %2813 = vmatpush1.bf16.msra.mxu0 %v2367
    %2814 = vmatprep.subr.bf16.mxu0 %v2376
    %2815 = vmatpush1.bf16.msra.mxu0 %v2375
    %2816 = vmatprep.subr.bf16.mxu0 %v2384
    %2817 = vmatpush1.bf16.msra.mxu0 %v2383
    %2818 = vmatprep.subr.bf16.mxu0 %v2392
    %2819 = vmatpush1.bf16.msra.mxu0 %v2391
    %2820 = vmatprep.subr.bf16.mxu0 %v2400
    %2821 = vmatpush1.bf16.msra.mxu0 %v2399
    %2822 = vmatprep.subr.bf16.mxu0 %v2408
    %2823 = vmatpush1.bf16.msra.mxu0 %v2407
    %2824 = vmatprep.mubr.bf16.mxu0 %v1384
    %2825 = vmatmul.mubr.bf16.gmra.mrb[0].mxu0 %v1383
    %v2826 = vpop.f32.mrb[0].mxu0
    %v2827 = vadd.f32 %v2786, %v2826
    %v2828 = vpop.f32.mrb[0].mxu0
    %v2829 = vadd.f32 %v2788, %v2828
    %v2830 = vpop.f32.mrb[0].mxu0
    %v2831 = vpop.f32.mrb[0].mxu0
    %2832 = vdwg.mxu0
    %2833 = vmatprep.subr.bf16.mxu0 %v2162
    %2834 = vmatpush1.bf16.msra.mxu0 %v2161
    %2835 = vmatprep.subr.bf16.mxu0 %v2170
    %2836 = vmatpush1.bf16.msra.mxu0 %v2169
    %2837 = vmatprep.subr.bf16.mxu0 %v2178
    %2838 = vmatpush1.bf16.msra.mxu0 %v2177
    %2839 = vmatprep.subr.bf16.mxu0 %v2186
    %2840 = vmatpush1.bf16.msra.mxu0 %v2185
    %2841 = vmatprep.subr.bf16.mxu0 %v2194
    %2842 = vmatpush1.bf16.msra.mxu0 %v2193
    %2843 = vmatprep.subr.bf16.mxu0 %v2202
    %2844 = vmatpush1.bf16.msra.mxu0 %v2201
    %2845 = vmatprep.subr.bf16.mxu0 %v2210
    %2846 = vmatpush1.bf16.msra.mxu0 %v2209
    %2847 = vmatprep.subr.bf16.mxu0 %v2218
    %2848 = vmatpush1.bf16.msra.mxu0 %v2217
    %2849 = vmatprep.subr.bf16.mxu0 %v2226
    %2850 = vmatpush1.bf16.msra.mxu0 %v2225
    %2851 = vmatprep.subr.bf16.mxu0 %v2234
    %2852 = vmatpush1.bf16.msra.mxu0 %v2233
    %2853 = vmatprep.subr.bf16.mxu0 %v2242
    %2854 = vmatpush1.bf16.msra.mxu0 %v2241
    %2855 = vmatprep.subr.bf16.mxu0 %v2250
    %2856 = vmatpush1.bf16.msra.mxu0 %v2249
    %2857 = vmatprep.subr.bf16.mxu0 %v2258
    %2858 = vmatpush1.bf16.msra.mxu0 %v2257
    %2859 = vmatprep.subr.bf16.mxu0 %v2266
    %2860 = vmatpush1.bf16.msra.mxu0 %v2265
    %2861 = vmatprep.subr.bf16.mxu0 %v2274
    %2862 = vmatpush1.bf16.msra.mxu0 %v2273
    %2863 = vmatprep.subr.bf16.mxu0 %v2282
    %2864 = vmatpush1.bf16.msra.mxu0 %v2281
    %2865 = vmatprep.mubr.bf16.mxu0 %v1382
    %2866 = vmatmul.mubr.bf16.gmra.mrb[0].mxu0 %v1381
    %v2867 = vpop.f32.mrb[0].mxu0
    %v2868 = vadd.f32 %v1354, %v2867
    %v2869 = vpop.f32.mrb[0].mxu0
    %v2870 = vadd.f32 %v1358, %v2869
    %v2871 = vpop.f32.mrb[0].mxu0
    %v2872 = vpop.f32.mrb[0].mxu0
    %2873 = vdwg.mxu0
    %2874 = vmatprep.subr.bf16.mxu0 %v2290
    %2875 = vmatpush1.bf16.msra.mxu0 %v2289
    %2876 = vmatprep.subr.bf16.mxu0 %v2298
    %2877 = vmatpush1.bf16.msra.mxu0 %v2297
    %2878 = vmatprep.subr.bf16.mxu0 %v2306
    %2879 = vmatpush1.bf16.msra.mxu0 %v2305
    %2880 = vmatprep.subr.bf16.mxu0 %v2314
    %2881 = vmatpush1.bf16.msra.mxu0 %v2313
    %2882 = vmatprep.subr.bf16.mxu0 %v2322
    %2883 = vmatpush1.bf16.msra.mxu0 %v2321
    %2884 = vmatprep.subr.bf16.mxu0 %v2330
    %2885 = vmatpush1.bf16.msra.mxu0 %v2329
    %2886 = vmatprep.subr.bf16.mxu0 %v2338
    %2887 = vmatpush1.bf16.msra.mxu0 %v2337
    %2888 = vmatprep.subr.bf16.mxu0 %v2346
    %2889 = vmatpush1.bf16.msra.mxu0 %v2345
    %2890 = vmatprep.subr.bf16.mxu0 %v2354
    %2891 = vmatpush1.bf16.msra.mxu0 %v2353
    %2892 = vmatprep.subr.bf16.mxu0 %v2362
    %2893 = vmatpush1.bf16.msra.mxu0 %v2361
    %2894 = vmatprep.subr.bf16.mxu0 %v2370
    %2895 = vmatpush1.bf16.msra.mxu0 %v2369
    %2896 = vmatprep.subr.bf16.mxu0 %v2378
    %2897 = vmatpush1.bf16.msra.mxu0 %v2377
    %2898 = vmatprep.subr.bf16.mxu0 %v2386
    %2899 = vmatpush1.bf16.msra.mxu0 %v2385
    %2900 = vmatprep.subr.bf16.mxu0 %v2394
    %2901 = vmatpush1.bf16.msra.mxu0 %v2393
    %2902 = vmatprep.subr.bf16.mxu0 %v2402
    %2903 = vmatpush1.bf16.msra.mxu0 %v2401
    %2904 = vmatprep.subr.bf16.mxu0 %v2410
    %2905 = vmatpush1.bf16.msra.mxu0 %v2409
    %2906 = vmatprep.mubr.bf16.mxu0 %v1384
    %2907 = vmatmul.mubr.bf16.gmra.mrb[0].mxu0 %v1383
    %v2908 = vpop.f32.mrb[0].mxu0
    %v2909 = vadd.f32 %v2868, %v2908
    %v2910 = vpop.f32.mrb[0].mxu0
    %v2911 = vadd.f32 %v2870, %v2910
    %v2912 = vpop.f32.mrb[0].mxu0
    %v2913 = vpop.f32.mrb[0].mxu0
    %2914 = vdwg.mxu0
    %2915 = vmatprep.subr.bf16.mxu0 %v2164
    %2916 = vmatpush1.bf16.msra.mxu0 %v2163
    %2917 = vmatprep.subr.bf16.mxu0 %v2172
    %2918 = vmatpush1.bf16.msra.mxu0 %v2171
    %2919 = vmatprep.subr.bf16.mxu0 %v2180
    %2920 = vmatpush1.bf16.msra.mxu0 %v2179
    %2921 = vmatprep.subr.bf16.mxu0 %v2188
    %2922 = vmatpush1.bf16.msra.mxu0 %v2187
    %2923 = vmatprep.subr.bf16.mxu0 %v2196
    %2924 = vmatpush1.bf16.msra.mxu0 %v2195
    %2925 = vmatprep.subr.bf16.mxu0 %v2204
    %2926 = vmatpush1.bf16.msra.mxu0 %v2203
    %2927 = vmatprep.subr.bf16.mxu0 %v2212
    %2928 = vmatpush1.bf16.msra.mxu0 %v2211
    %2929 = vmatprep.subr.bf16.mxu0 %v2220
    %2930 = vmatpush1.bf16.msra.mxu0 %v2219
    %2931 = vmatprep.subr.bf16.mxu0 %v2228
    %2932 = vmatpush1.bf16.msra.mxu0 %v2227
    %2933 = vmatprep.subr.bf16.mxu0 %v2236
    %2934 = vmatpush1.bf16.msra.mxu0 %v2235
    %2935 = vmatprep.subr.bf16.mxu0 %v2244
    %2936 = vmatpush1.bf16.msra.mxu0 %v2243
    %2937 = vmatprep.subr.bf16.mxu0 %v2252
    %2938 = vmatpush1.bf16.msra.mxu0 %v2251
    %2939 = vmatprep.subr.bf16.mxu0 %v2260
    %2940 = vmatpush1.bf16.msra.mxu0 %v2259
    %2941 = vmatprep.subr.bf16.mxu0 %v2268
    %2942 = vmatpush1.bf16.msra.mxu0 %v2267
    %2943 = vmatprep.subr.bf16.mxu0 %v2276
    %2944 = vmatpush1.bf16.msra.mxu0 %v2275
    %2945 = vmatprep.subr.bf16.mxu0 %v2284
    %2946 = vmatpush1.bf16.msra.mxu0 %v2283
    %2947 = vmatprep.mubr.bf16.mxu0 %v1382
    %2948 = vmatmul.mubr.bf16.gmra.mrb[0].mxu0 %v1381
    %v2949 = vpop.f32.mrb[0].mxu0
    %v2950 = vadd.f32 %v1362, %v2949
    %v2951 = vpop.f32.mrb[0].mxu0
    %v2952 = vadd.f32 %v1366, %v2951
    %v2953 = vpop.f32.mrb[0].mxu0
    %v2954 = vpop.f32.mrb[0].mxu0
    %2955 = vdwg.mxu0
    %2956 = vmatprep.subr.bf16.mxu0 %v2292
    %2957 = vmatpush1.bf16.msra.mxu0 %v2291
    %2958 = vmatprep.subr.bf16.mxu0 %v2300
    %2959 = vmatpush1.bf16.msra.mxu0 %v2299
    %2960 = vmatprep.subr.bf16.mxu0 %v2308
    %2961 = vmatpush1.bf16.msra.mxu0 %v2307
    %2962 = vmatprep.subr.bf16.mxu0 %v2316
    %2963 = vmatpush1.bf16.msra.mxu0 %v2315
    %2964 = vmatprep.subr.bf16.mxu0 %v2324
    %2965 = vmatpush1.bf16.msra.mxu0 %v2323
    %2966 = vmatprep.subr.bf16.mxu0 %v2332
    %2967 = vmatpush1.bf16.msra.mxu0 %v2331
    %2968 = vmatprep.subr.bf16.mxu0 %v2340
    %2969 = vmatpush1.bf16.msra.mxu0 %v2339
    %2970 = vmatprep.subr.bf16.mxu0 %v2348
    %2971 = vmatpush1.bf16.msra.mxu0 %v2347
    %2972 = vmatprep.subr.bf16.mxu0 %v2356
    %2973 = vmatpush1.bf16.msra.mxu0 %v2355
    %2974 = vmatprep.subr.bf16.mxu0 %v2364
    %2975 = vmatpush1.bf16.msra.mxu0 %v2363
    %2976 = vmatprep.subr.bf16.mxu0 %v2372
    %2977 = vmatpush1.bf16.msra.mxu0 %v2371
    %2978 = vmatprep.subr.bf16.mxu0 %v2380
    %2979 = vmatpush1.bf16.msra.mxu0 %v2379
    %2980 = vmatprep.subr.bf16.mxu0 %v2388
    %2981 = vmatpush1.bf16.msra.mxu0 %v2387
    %2982 = vmatprep.subr.bf16.mxu0 %v2396
    %2983 = vmatpush1.bf16.msra.mxu0 %v2395
    %2984 = vmatprep.subr.bf16.mxu0 %v2404
    %2985 = vmatpush1.bf16.msra.mxu0 %v2403
    %2986 = vmatprep.subr.bf16.mxu0 %v2412
    %2987 = vmatpush1.bf16.msra.mxu0 %v2411
    %2988 = vmatprep.mubr.bf16.mxu0 %v1384
    %2989 = vmatmul.mubr.bf16.gmra.mrb[0].mxu0 %v1383
    %v2990 = vpop.f32.mrb[0].mxu0
    %v2991 = vadd.f32 %v2950, %v2990
    %v2992 = vpop.f32.mrb[0].mxu0
    %v2993 = vadd.f32 %v2952, %v2992
    %v2994 = vpop.f32.mrb[0].mxu0
    %v2995 = vpop.f32.mrb[0].mxu0
    %2996 = vdwg.mxu0
    %v2997 = vmul.f32 %v2745, 0.5
    %v2998 = vmul.f32 %v2747, 0.5
    %v2999 = vtanh.pop %v2997
    %v3000 = vtanh.pop %v2998
    %v3001 = vmul.f32 %v2999, 0.5
    %v3002 = vmul.f32 %v3000, 0.5
    %v3003 = vadd.f32 %v3001, 0.5
    %v3004 = vadd.f32 %v3002, 0.5
    %v3005 = vmul.f32 %v2827, 0.5
    %v3006 = vmul.f32 %v2829, 0.5
    %v3007 = vtanh.pop %v3005
    %v3008 = vtanh.pop %v3006
    %v3009 = vmul.f32 %v3007, 0.5
    %v3010 = vmul.f32 %v3008, 0.5
    %v3011 = vadd.f32 %v3009, 0.5
    %v3012 = vadd.f32 %v3010, 0.5
    %v3013 = vtanh.pop %v2909
    %v3014 = vtanh.pop %v2911
    %v3015 = vmul.f32 %v2991, 0.5
    %v3016 = vmul.f32 %v2993, 0.5
    %v3017 = vtanh.pop %v3015
    %v3018 = vtanh.pop %v3016
    %v3019 = vmul.f32 %v3017, 0.5
    %v3020 = vmul.f32 %v3018, 0.5
    %v3021 = vadd.f32 %v3019, 0.5
    %v3022 = vadd.f32 %v3020, 0.5
    %v3023 = vmul.f32 %v3011, %v457
    %v3024 = vmul.f32 %v3012, %v458
    %v3025 = vmul.f32 %v3003, %v3013
    %v3026 = vmul.f32 %v3004, %v3014
    %v3027 = vadd.f32 %v3023, %v3025
    %v3028 = vadd.f32 %v3024, %v3026
    %v3029 = vtanh.pop %v3027
    %v3030 = vtanh.pop %v3028
    %v3031 = vmul.f32 %v3021, %v3029
    %v3032 = vmul.f32 %v3022, %v3030
    %v3033 = vpack.c.bf16 %v3031, %v3031
    %v3034 = vpack.c.bf16 %v3032, %v3032
    %v3037 = vunpack.c.l.b16 %v3033
    %v3038 = vunpack.c.l.b16 %v3034
    %v3039 = vpack.c.b16 %v3038, %v3037
    %3041 = vst [vmem:[#allocation4 + $0x8] sm:$0xff] %v3039
    %3042 = vst [vmem:[#allocation11] sm:$0xff] %v3031
    %3043 = vst [vmem:[#allocation11 + $0x8] sm:$0xff] %v3032
    %v3044 = vld [vmem:[#allocation4] sm:$0xff]
    %s3045 = scalar_lea.vmem [#allocation5], 64
    %v3046 = vld [vmem:[%s3045] sm:$0xff]
    %v3047 = vld [vmem:[%s3045 + $0x8] sm:$0xff]
    %v3048 = vld [vmem:[%s3045 + $0x10] sm:$0xff]
    %v3049 = vld [vmem:[%s3045 + $0x18] sm:$0xff]
    %v3050 = vld [vmem:[%s3045 + $0x20] sm:$0xff]
    %v3051 = vld [vmem:[%s3045 + $0x28] sm:$0xff]
    %v3052 = vld [vmem:[%s3045 + $0x30] sm:$0xff]
    %v3053 = vld [vmem:[%s3045 + $0x38] sm:$0xff]
    %v3055 = vunpack.c.l.b16 %v3044
    %v3056 = vunpack.c.h.b16 %v3044
    %v3057 = vpack.c.b16 %v3055, %v3055
    %v3058 = vpack.c.b16 %v3056, %v3056
    %3061 = vmatprep.subr.bf16.mxu0 %v860
    %3062 = vmatpush1.bf16.msra.mxu0 %v859
    %3063 = vmatprep.subr.bf16.mxu0 %v868
    %3064 = vmatpush1.bf16.msra.mxu0 %v867
    %3065 = vmatprep.subr.bf16.mxu0 %v876
    %3066 = vmatpush1.bf16.msra.mxu0 %v875
    %3067 = vmatprep.subr.bf16.mxu0 %v884
    %3068 = vmatpush1.bf16.msra.mxu0 %v883
    %3069 = vmatprep.subr.bf16.mxu0 %v892
    %3070 = vmatpush1.bf16.msra.mxu0 %v891
    %3071 = vmatprep.subr.bf16.mxu0 %v900
    %3072 = vmatpush1.bf16.msra.mxu0 %v899
    %3073 = vmatprep.subr.bf16.mxu0 %v908
    %3074 = vmatpush1.bf16.msra.mxu0 %v907
    %3075 = vmatprep.subr.bf16.mxu0 %v916
    %3076 = vmatpush1.bf16.msra.mxu0 %v915
    %3077 = vmatprep.subr.bf16.mxu0 %v924
    %3078 = vmatpush1.bf16.msra.mxu0 %v923
    %3079 = vmatprep.subr.bf16.mxu0 %v932
    %3080 = vmatpush1.bf16.msra.mxu0 %v931
    %3081 = vmatprep.subr.bf16.mxu0 %v940
    %3082 = vmatpush1.bf16.msra.mxu0 %v939
    %3083 = vmatprep.subr.bf16.mxu0 %v948
    %3084 = vmatpush1.bf16.msra.mxu0 %v947
    %3085 = vmatprep.subr.bf16.mxu0 %v956
    %3086 = vmatpush1.bf16.msra.mxu0 %v955
    %3087 = vmatprep.subr.bf16.mxu0 %v964
    %3088 = vmatpush1.bf16.msra.mxu0 %v963
    %3089 = vmatprep.subr.bf16.mxu0 %v972
    %3090 = vmatpush1.bf16.msra.mxu0 %v971
    %3091 = vmatprep.subr.bf16.mxu0 %v980
    %3092 = vmatpush1.bf16.msra.mxu0 %v979
    %3093 = vmatprep.mubr.bf16.mxu0 %v3058
    %3094 = vmatmul.mubr.bf16.gmra.mrb[0].mxu0 %v3057
    %v3095 = vpop.f32.mrb[0].mxu0
    %v3096 = vadd.f32 0.0, %v3095
    %v3097 = vpop.f32.mrb[0].mxu0
    %v3098 = vadd.f32 0.0, %v3097
    %v3099 = vpop.f32.mrb[0].mxu0
    %v3100 = vpop.f32.mrb[0].mxu0
    %3101 = vdwg.mxu0
    %3102 = vmatprep.subr.bf16.mxu0 %v862
    %3103 = vmatpush1.bf16.msra.mxu0 %v861
    %3104 = vmatprep.subr.bf16.mxu0 %v870
    %3105 = vmatpush1.bf16.msra.mxu0 %v869
    %3106 = vmatprep.subr.bf16.mxu0 %v878
    %3107 = vmatpush1.bf16.msra.mxu0 %v877
    %3108 = vmatprep.subr.bf16.mxu0 %v886
    %3109 = vmatpush1.bf16.msra.mxu0 %v885
    %3110 = vmatprep.subr.bf16.mxu0 %v894
    %3111 = vmatpush1.bf16.msra.mxu0 %v893
    %3112 = vmatprep.subr.bf16.mxu0 %v902
    %3113 = vmatpush1.bf16.msra.mxu0 %v901
    %3114 = vmatprep.subr.bf16.mxu0 %v910
    %3115 = vmatpush1.bf16.msra.mxu0 %v909
    %3116 = vmatprep.subr.bf16.mxu0 %v918
    %3117 = vmatpush1.bf16.msra.mxu0 %v917
    %3118 = vmatprep.subr.bf16.mxu0 %v926
    %3119 = vmatpush1.bf16.msra.mxu0 %v925
    %3120 = vmatprep.subr.bf16.mxu0 %v934
    %3121 = vmatpush1.bf16.msra.mxu0 %v933
    %3122 = vmatprep.subr.bf16.mxu0 %v942
    %3123 = vmatpush1.bf16.msra.mxu0 %v941
    %3124 = vmatprep.subr.bf16.mxu0 %v950
    %3125 = vmatpush1.bf16.msra.mxu0 %v949
    %3126 = vmatprep.subr.bf16.mxu0 %v958
    %3127 = vmatpush1.bf16.msra.mxu0 %v957
    %3128 = vmatprep.subr.bf16.mxu0 %v966
    %3129 = vmatpush1.bf16.msra.mxu0 %v965
    %3130 = vmatprep.subr.bf16.mxu0 %v974
    %3131 = vmatpush1.bf16.msra.mxu0 %v973
    %3132 = vmatprep.subr.bf16.mxu0 %v982
    %3133 = vmatpush1.bf16.msra.mxu0 %v981
    %3134 = vmatprep.mubr.bf16.mxu0 %v3058
    %3135 = vmatmul.mubr.bf16.gmra.mrb[0].mxu0 %v3057
    %v3136 = vpop.f32.mrb[0].mxu0
    %v3137 = vadd.f32 0.0, %v3136
    %v3138 = vpop.f32.mrb[0].mxu0
    %v3139 = vadd.f32 0.0, %v3138
    %v3140 = vpop.f32.mrb[0].mxu0
    %v3141 = vpop.f32.mrb[0].mxu0
    %3142 = vdwg.mxu0
    %3143 = vmatprep.subr.bf16.mxu0 %v864
    %3144 = vmatpush1.bf16.msra.mxu0 %v863
    %3145 = vmatprep.subr.bf16.mxu0 %v872
    %3146 = vmatpush1.bf16.msra.mxu0 %v871
    %3147 = vmatprep.subr.bf16.mxu0 %v880
    %3148 = vmatpush1.bf16.msra.mxu0 %v879
    %3149 = vmatprep.subr.bf16.mxu0 %v888
    %3150 = vmatpush1.bf16.msra.mxu0 %v887
    %3151 = vmatprep.subr.bf16.mxu0 %v896
    %3152 = vmatpush1.bf16.msra.mxu0 %v895
    %3153 = vmatprep.subr.bf16.mxu0 %v904
    %3154 = vmatpush1.bf16.msra.mxu0 %v903
    %3155 = vmatprep.subr.bf16.mxu0 %v912
    %3156 = vmatpush1.bf16.msra.mxu0 %v911
    %3157 = vmatprep.subr.bf16.mxu0 %v920
    %3158 = vmatpush1.bf16.msra.mxu0 %v919
    %3159 = vmatprep.subr.bf16.mxu0 %v928
    %3160 = vmatpush1.bf16.msra.mxu0 %v927
    %3161 = vmatprep.subr.bf16.mxu0 %v936
    %3162 = vmatpush1.bf16.msra.mxu0 %v935
    %3163 = vmatprep.subr.bf16.mxu0 %v944
    %3164 = vmatpush1.bf16.msra.mxu0 %v943
    %3165 = vmatprep.subr.bf16.mxu0 %v952
    %3166 = vmatpush1.bf16.msra.mxu0 %v951
    %3167 = vmatprep.subr.bf16.mxu0 %v960
    %3168 = vmatpush1.bf16.msra.mxu0 %v959
    %3169 = vmatprep.subr.bf16.mxu0 %v968
    %3170 = vmatpush1.bf16.msra.mxu0 %v967
    %3171 = vmatprep.subr.bf16.mxu0 %v976
    %3172 = vmatpush1.bf16.msra.mxu0 %v975
    %3173 = vmatprep.subr.bf16.mxu0 %v984
    %3174 = vmatpush1.bf16.msra.mxu0 %v983
    %3175 = vmatprep.mubr.bf16.mxu0 %v3058
    %3176 = vmatmul.mubr.bf16.gmra.mrb[0].mxu0 %v3057
    %v3177 = vpop.f32.mrb[0].mxu0
    %v3178 = vadd.f32 0.0, %v3177
    %v3179 = vpop.f32.mrb[0].mxu0
    %v3180 = vadd.f32 0.0, %v3179
    %v3181 = vpop.f32.mrb[0].mxu0
    %v3182 = vpop.f32.mrb[0].mxu0
    %3183 = vdwg.mxu0
    %3184 = vmatprep.subr.bf16.mxu0 %v866
    %3185 = vmatpush1.bf16.msra.mxu0 %v865
    %3186 = vmatprep.subr.bf16.mxu0 %v874
    %3187 = vmatpush1.bf16.msra.mxu0 %v873
    %3188 = vmatprep.subr.bf16.mxu0 %v882
    %3189 = vmatpush1.bf16.msra.mxu0 %v881
    %3190 = vmatprep.subr.bf16.mxu0 %v890
    %3191 = vmatpush1.bf16.msra.mxu0 %v889
    %3192 = vmatprep.subr.bf16.mxu0 %v898
    %3193 = vmatpush1.bf16.msra.mxu0 %v897
    %3194 = vmatprep.subr.bf16.mxu0 %v906
    %3195 = vmatpush1.bf16.msra.mxu0 %v905
    %3196 = vmatprep.subr.bf16.mxu0 %v914
    %3197 = vmatpush1.bf16.msra.mxu0 %v913
    %3198 = vmatprep.subr.bf16.mxu0 %v922
    %3199 = vmatpush1.bf16.msra.mxu0 %v921
    %3200 = vmatprep.subr.bf16.mxu0 %v930
    %3201 = vmatpush1.bf16.msra.mxu0 %v929
    %3202 = vmatprep.subr.bf16.mxu0 %v938
    %3203 = vmatpush1.bf16.msra.mxu0 %v937
    %3204 = vmatprep.subr.bf16.mxu0 %v946
    %3205 = vmatpush1.bf16.msra.mxu0 %v945
    %3206 = vmatprep.subr.bf16.mxu0 %v954
    %3207 = vmatpush1.bf16.msra.mxu0 %v953
    %3208 = vmatprep.subr.bf16.mxu0 %v962
    %3209 = vmatpush1.bf16.msra.mxu0 %v961
    %3210 = vmatprep.subr.bf16.mxu0 %v970
    %3211 = vmatpush1.bf16.msra.mxu0 %v969
    %3212 = vmatprep.subr.bf16.mxu0 %v978
    %3213 = vmatpush1.bf16.msra.mxu0 %v977
    %3214 = vmatprep.subr.bf16.mxu0 %v986
    %3215 = vmatpush1.bf16.msra.mxu0 %v985
    %3216 = vmatprep.mubr.bf16.mxu0 %v3058
    %3217 = vmatmul.mubr.bf16.gmra.mrb[0].mxu0 %v3057
    %v3218 = vpop.f32.mrb[0].mxu0
    %v3219 = vadd.f32 0.0, %v3218
    %v3220 = vpop.f32.mrb[0].mxu0
    %v3221 = vadd.f32 0.0, %v3220
    %v3222 = vpop.f32.mrb[0].mxu0
    %v3223 = vpop.f32.mrb[0].mxu0
    %3224 = vdwg.mxu0
    %v3225 = vadd.f32 %v3046, %v3096
    %v3226 = vadd.f32 %v3047, %v3098
    %v3227 = vadd.f32 %v3048, %v3137
    %v3228 = vadd.f32 %v3049, %v3139
    %v3229 = vadd.f32 %v3050, %v3178
    %v3230 = vadd.f32 %v3051, %v3180
    %v3231 = vadd.f32 %v3052, %v3219
    %v3232 = vadd.f32 %v3053, %v3221
    %v3233 = vmul.f32 %v3225, 0.5
    %v3234 = vmul.f32 %v3226, 0.5
    %v3235 = vtanh.pop %v3233
    %v3236 = vtanh.pop %v3234
    %v3237 = vmul.f32 %v3235, 0.5
    %v3238 = vmul.f32 %v3236, 0.5
    %v3239 = vadd.f32 %v3237, 0.5
    %v3240 = vadd.f32 %v3238, 0.5
    %v3241 = vmul.f32 %v3227, 0.5
    %v3242 = vmul.f32 %v3228, 0.5
    %v3243 = vtanh.pop %v3241
    %v3244 = vtanh.pop %v3242
    %v3245 = vmul.f32 %v3243, 0.5
    %v3246 = vmul.f32 %v3244, 0.5
    %v3247 = vadd.f32 %v3245, 0.5
    %v3248 = vadd.f32 %v3246, 0.5
    %v3249 = vtanh.pop %v3229
    %v3250 = vtanh.pop %v3230
    %v3251 = vmul.f32 %v3231, 0.5
    %v3252 = vmul.f32 %v3232, 0.5
    %v3253 = vtanh.pop %v3251
    %v3254 = vtanh.pop %v3252
    %v3255 = vmul.f32 %v3253, 0.5
    %v3256 = vmul.f32 %v3254, 0.5
    %v3257 = vadd.f32 %v3255, 0.5
    %v3258 = vadd.f32 %v3256, 0.5
    %v3259 = vmul.f32 %v3247, %v1317
    %v3260 = vmul.f32 %v3248, %v1318
    %v3261 = vmul.f32 %v3239, %v3249
    %v3262 = vmul.f32 %v3240, %v3250
    %v3263 = vadd.f32 %v3259, %v3261
    %v3264 = vadd.f32 %v3260, %v3262
    %v3265 = vtanh.pop %v3263
    %v3266 = vtanh.pop %v3264
    %v3267 = vmul.f32 %v3257, %v3265
    %v3268 = vmul.f32 %v3258, %v3266
    %v3269 = vpack.c.bf16 %v3267, %v3267
    %v3270 = vpack.c.bf16 %v3268, %v3268
    %v3273 = vunpack.c.l.b16 %v3269
    %v3274 = vunpack.c.l.b16 %v3270
    %v3275 = vpack.c.b16 %v3274, %v3273
    %3277 = vst [vmem:[#allocation4] sm:$0xff] %v3275
    %v3278 = vld [vmem:[#allocation4] sm:$0xff]
    %v3279 = vld [vmem:[#allocation4 + $0x8] sm:$0xff]
    %v3282 = vunpack.c.l.b16 %v3278
    %v3283 = vunpack.c.h.b16 %v3278
    %v3284 = vunpack.c.l.b16 %v3279
    %v3285 = vunpack.c.h.b16 %v3279
    %v3286 = vpack.c.b16 %v3282, %v3282
    %v3287 = vpack.c.b16 %v3283, %v3283
    %v3288 = vpack.c.b16 %v3284, %v3284
    %v3289 = vpack.c.b16 %v3285, %v3285
    %3294 = vmatprep.subr.bf16.mxu0 %v2158
    %3295 = vmatpush1.bf16.msra.mxu0 %v2157
    %3296 = vmatprep.subr.bf16.mxu0 %v2166
    %3297 = vmatpush1.bf16.msra.mxu0 %v2165
    %3298 = vmatprep.subr.bf16.mxu0 %v2174
    %3299 = vmatpush1.bf16.msra.mxu0 %v2173
    %3300 = vmatprep.subr.bf16.mxu0 %v2182
    %3301 = vmatpush1.bf16.msra.mxu0 %v2181
    %3302 = vmatprep.subr.bf16.mxu0 %v2190
    %3303 = vmatpush1.bf16.msra.mxu0 %v2189
    %3304 = vmatprep.subr.bf16.mxu0 %v2198
    %3305 = vmatpush1.bf16.msra.mxu0 %v2197
    %3306 = vmatprep.subr.bf16.mxu0 %v2206
    %3307 = vmatpush1.bf16.msra.mxu0 %v2205
    %3308 = vmatprep.subr.bf16.mxu0 %v2214
    %3309 = vmatpush1.bf16.msra.mxu0 %v2213
    %3310 = vmatprep.subr.bf16.mxu0 %v2222
    %3311 = vmatpush1.bf16.msra.mxu0 %v2221
    %3312 = vmatprep.subr.bf16.mxu0 %v2230
    %3313 = vmatpush1.bf16.msra.mxu0 %v2229
    %3314 = vmatprep.subr.bf16.mxu0 %v2238
    %3315 = vmatpush1.bf16.msra.mxu0 %v2237
    %3316 = vmatprep.subr.bf16.mxu0 %v2246
    %3317 = vmatpush1.bf16.msra.mxu0 %v2245
    %3318 = vmatprep.subr.bf16.mxu0 %v2254
    %3319 = vmatpush1.bf16.msra.mxu0 %v2253
    %3320 = vmatprep.subr.bf16.mxu0 %v2262
    %3321 = vmatpush1.bf16.msra.mxu0 %v2261
    %3322 = vmatprep.subr.bf16.mxu0 %v2270
    %3323 = vmatpush1.bf16.msra.mxu0 %v2269
    %3324 = vmatprep.subr.bf16.mxu0 %v2278
    %3325 = vmatpush1.bf16.msra.mxu0 %v2277
    %3326 = vmatprep.mubr.bf16.mxu0 %v3287
    %3327 = vmatmul.mubr.bf16.gmra.mrb[0].mxu0 %v3286
    %v3328 = vpop.f32.mrb[0].mxu0
    %v3329 = vadd.f32 %v1338, %v3328
    %v3330 = vpop.f32.mrb[0].mxu0
    %v3331 = vadd.f32 %v1342, %v3330
    %v3332 = vpop.f32.mrb[0].mxu0
    %v3333 = vpop.f32.mrb[0].mxu0
    %3334 = vdwg.mxu0
    %3335 = vmatprep.subr.bf16.mxu0 %v2286
    %3336 = vmatpush1.bf16.msra.mxu0 %v2285
    %3337 = vmatprep.subr.bf16.mxu0 %v2294
    %3338 = vmatpush1.bf16.msra.mxu0 %v2293
    %3339 = vmatprep.subr.bf16.mxu0 %v2302
    %3340 = vmatpush1.bf16.msra.mxu0 %v2301
    %3341 = vmatprep.subr.bf16.mxu0 %v2310
    %3342 = vmatpush1.bf16.msra.mxu0 %v2309
    %3343 = vmatprep.subr.bf16.mxu0 %v2318
    %3344 = vmatpush1.bf16.msra.mxu0 %v2317
    %3345 = vmatprep.subr.bf16.mxu0 %v2326
    %3346 = vmatpush1.bf16.msra.mxu0 %v2325
    %3347 = vmatprep.subr.bf16.mxu0 %v2334
    %3348 = vmatpush1.bf16.msra.mxu0 %v2333
    %3349 = vmatprep.subr.bf16.mxu0 %v2342
    %3350 = vmatpush1.bf16.msra.mxu0 %v2341
    %3351 = vmatprep.subr.bf16.mxu0 %v2350
    %3352 = vmatpush1.bf16.msra.mxu0 %v2349
    %3353 = vmatprep.subr.bf16.mxu0 %v2358
    %3354 = vmatpush1.bf16.msra.mxu0 %v2357
    %3355 = vmatprep.subr.bf16.mxu0 %v2366
    %3356 = vmatpush1.bf16.msra.mxu0 %v2365
    %3357 = vmatprep.subr.bf16.mxu0 %v2374
    %3358 = vmatpush1.bf16.msra.mxu0 %v2373
    %3359 = vmatprep.subr.bf16.mxu0 %v2382
    %3360 = vmatpush1.bf16.msra.mxu0 %v2381
    %3361 = vmatprep.subr.bf16.mxu0 %v2390
    %3362 = vmatpush1.bf16.msra.mxu0 %v2389
    %3363 = vmatprep.subr.bf16.mxu0 %v2398
    %3364 = vmatpush1.bf16.msra.mxu0 %v2397
    %3365 = vmatprep.subr.bf16.mxu0 %v2406
    %3366 = vmatpush1.bf16.msra.mxu0 %v2405
    %3367 = vmatprep.mubr.bf16.mxu0 %v3289
    %3368 = vmatmul.mubr.bf16.gmra.mrb[0].mxu0 %v3288
    %v3369 = vpop.f32.mrb[0].mxu0
    %v3370 = vadd.f32 %v3329, %v3369
    %v3371 = vpop.f32.mrb[0].mxu0
    %v3372 = vadd.f32 %v3331, %v3371
    %v3373 = vpop.f32.mrb[0].mxu0
    %v3374 = vpop.f32.mrb[0].mxu0
    %3375 = vdwg.mxu0
    %3376 = vmatprep.subr.bf16.mxu0 %v2160
    %3377 = vmatpush1.bf16.msra.mxu0 %v2159
    %3378 = vmatprep.subr.bf16.mxu0 %v2168
    %3379 = vmatpush1.bf16.msra.mxu0 %v2167
    %3380 = vmatprep.subr.bf16.mxu0 %v2176
    %3381 = vmatpush1.bf16.msra.mxu0 %v2175
    %3382 = vmatprep.subr.bf16.mxu0 %v2184
    %3383 = vmatpush1.bf16.msra.mxu0 %v2183
    %3384 = vmatprep.subr.bf16.mxu0 %v2192
    %3385 = vmatpush1.bf16.msra.mxu0 %v2191
    %3386 = vmatprep.subr.bf16.mxu0 %v2200
    %3387 = vmatpush1.bf16.msra.mxu0 %v2199
    %3388 = vmatprep.subr.bf16.mxu0 %v2208
    %3389 = vmatpush1.bf16.msra.mxu0 %v2207
    %3390 = vmatprep.subr.bf16.mxu0 %v2216
    %3391 = vmatpush1.bf16.msra.mxu0 %v2215
    %3392 = vmatprep.subr.bf16.mxu0 %v2224
    %3393 = vmatpush1.bf16.msra.mxu0 %v2223
    %3394 = vmatprep.subr.bf16.mxu0 %v2232
    %3395 = vmatpush1.bf16.msra.mxu0 %v2231
    %3396 = vmatprep.subr.bf16.mxu0 %v2240
    %3397 = vmatpush1.bf16.msra.mxu0 %v2239
    %3398 = vmatprep.subr.bf16.mxu0 %v2248
    %3399 = vmatpush1.bf16.msra.mxu0 %v2247
    %3400 = vmatprep.subr.bf16.mxu0 %v2256
    %3401 = vmatpush1.bf16.msra.mxu0 %v2255
    %3402 = vmatprep.subr.bf16.mxu0 %v2264
    %3403 = vmatpush1.bf16.msra.mxu0 %v2263
    %3404 = vmatprep.subr.bf16.mxu0 %v2272
    %3405 = vmatpush1.bf16.msra.mxu0 %v2271
    %3406 = vmatprep.subr.bf16.mxu0 %v2280
    %3407 = vmatpush1.bf16.msra.mxu0 %v2279
    %3408 = vmatprep.mubr.bf16.mxu0 %v3287
    %3409 = vmatmul.mubr.bf16.gmra.mrb[0].mxu0 %v3286
    %v3410 = vpop.f32.mrb[0].mxu0
    %v3411 = vadd.f32 %v1346, %v3410
    %v3412 = vpop.f32.mrb[0].mxu0
    %v3413 = vadd.f32 %v1350, %v3412
    %v3414 = vpop.f32.mrb[0].mxu0
    %v3415 = vpop.f32.mrb[0].mxu0
    %3416 = vdwg.mxu0
    %3417 = vmatprep.subr.bf16.mxu0 %v2288
    %3418 = vmatpush1.bf16.msra.mxu0 %v2287
    %3419 = vmatprep.subr.bf16.mxu0 %v2296
    %3420 = vmatpush1.bf16.msra.mxu0 %v2295
    %3421 = vmatprep.subr.bf16.mxu0 %v2304
    %3422 = vmatpush1.bf16.msra.mxu0 %v2303
    %3423 = vmatprep.subr.bf16.mxu0 %v2312
    %3424 = vmatpush1.bf16.msra.mxu0 %v2311
    %3425 = vmatprep.subr.bf16.mxu0 %v2320
    %3426 = vmatpush1.bf16.msra.mxu0 %v2319
    %3427 = vmatprep.subr.bf16.mxu0 %v2328
    %3428 = vmatpush1.bf16.msra.mxu0 %v2327
    %3429 = vmatprep.subr.bf16.mxu0 %v2336
    %3430 = vmatpush1.bf16.msra.mxu0 %v2335
    %3431 = vmatprep.subr.bf16.mxu0 %v2344
    %3432 = vmatpush1.bf16.msra.mxu0 %v2343
    %3433 = vmatprep.subr.bf16.mxu0 %v2352
    %3434 = vmatpush1.bf16.msra.mxu0 %v2351
    %3435 = vmatprep.subr.bf16.mxu0 %v2360
    %3436 = vmatpush1.bf16.msra.mxu0 %v2359
    %3437 = vmatprep.subr.bf16.mxu0 %v2368
    %3438 = vmatpush1.bf16.msra.mxu0 %v2367
    %3439 = vmatprep.subr.bf16.mxu0 %v2376
    %3440 = vmatpush1.bf16.msra.mxu0 %v2375
    %3441 = vmatprep.subr.bf16.mxu0 %v2384
    %3442 = vmatpush1.bf16.msra.mxu0 %v2383
    %3443 = vmatprep.subr.bf16.mxu0 %v2392
    %3444 = vmatpush1.bf16.msra.mxu0 %v2391
    %3445 = vmatprep.subr.bf16.mxu0 %v2400
    %3446 = vmatpush1.bf16.msra.mxu0 %v2399
    %3447 = vmatprep.subr.bf16.mxu0 %v2408
    %3448 = vmatpush1.bf16.msra.mxu0 %v2407
    %3449 = vmatprep.mubr.bf16.mxu0 %v3289
    %3450 = vmatmul.mubr.bf16.gmra.mrb[0].mxu0 %v3288
    %v3451 = vpop.f32.mrb[0].mxu0
    %v3452 = vadd.f32 %v3411, %v3451
    %v3453 = vpop.f32.mrb[0].mxu0
    %v3454 = vadd.f32 %v3413, %v3453
    %v3455 = vpop.f32.mrb[0].mxu0
    %v3456 = vpop.f32.mrb[0].mxu0
    %3457 = vdwg.mxu0
    %3458 = vmatprep.subr.bf16.mxu0 %v2162
    %3459 = vmatpush1.bf16.msra.mxu0 %v2161
    %3460 = vmatprep.subr.bf16.mxu0 %v2170
    %3461 = vmatpush1.bf16.msra.mxu0 %v2169
    %3462 = vmatprep.subr.bf16.mxu0 %v2178
    %3463 = vmatpush1.bf16.msra.mxu0 %v2177
    %3464 = vmatprep.subr.bf16.mxu0 %v2186
    %3465 = vmatpush1.bf16.msra.mxu0 %v2185
    %3466 = vmatprep.subr.bf16.mxu0 %v2194
    %3467 = vmatpush1.bf16.msra.mxu0 %v2193
    %3468 = vmatprep.subr.bf16.mxu0 %v2202
    %3469 = vmatpush1.bf16.msra.mxu0 %v2201
    %3470 = vmatprep.subr.bf16.mxu0 %v2210
    %3471 = vmatpush1.bf16.msra.mxu0 %v2209
    %3472 = vmatprep.subr.bf16.mxu0 %v2218
    %3473 = vmatpush1.bf16.msra.mxu0 %v2217
    %3474 = vmatprep.subr.bf16.mxu0 %v2226
    %3475 = vmatpush1.bf16.msra.mxu0 %v2225
    %3476 = vmatprep.subr.bf16.mxu0 %v2234
    %3477 = vmatpush1.bf16.msra.mxu0 %v2233
    %3478 = vmatprep.subr.bf16.mxu0 %v2242
    %3479 = vmatpush1.bf16.msra.mxu0 %v2241
    %3480 = vmatprep.subr.bf16.mxu0 %v2250
    %3481 = vmatpush1.bf16.msra.mxu0 %v2249
    %3482 = vmatprep.subr.bf16.mxu0 %v2258
    %3483 = vmatpush1.bf16.msra.mxu0 %v2257
    %3484 = vmatprep.subr.bf16.mxu0 %v2266
    %3485 = vmatpush1.bf16.msra.mxu0 %v2265
    %3486 = vmatprep.subr.bf16.mxu0 %v2274
    %3487 = vmatpush1.bf16.msra.mxu0 %v2273
    %3488 = vmatprep.subr.bf16.mxu0 %v2282
    %3489 = vmatpush1.bf16.msra.mxu0 %v2281
    %3490 = vmatprep.mubr.bf16.mxu0 %v3287
    %3491 = vmatmul.mubr.bf16.gmra.mrb[0].mxu0 %v3286
    %v3492 = vpop.f32.mrb[0].mxu0
    %v3493 = vadd.f32 %v1354, %v3492
    %v3494 = vpop.f32.mrb[0].mxu0
    %v3495 = vadd.f32 %v1358, %v3494
    %v3496 = vpop.f32.mrb[0].mxu0
    %v3497 = vpop.f32.mrb[0].mxu0
    %3498 = vdwg.mxu0
    %3499 = vmatprep.subr.bf16.mxu0 %v2290
    %3500 = vmatpush1.bf16.msra.mxu0 %v2289
    %3501 = vmatprep.subr.bf16.mxu0 %v2298
    %3502 = vmatpush1.bf16.msra.mxu0 %v2297
    %3503 = vmatprep.subr.bf16.mxu0 %v2306
    %3504 = vmatpush1.bf16.msra.mxu0 %v2305
    %3505 = vmatprep.subr.bf16.mxu0 %v2314
    %3506 = vmatpush1.bf16.msra.mxu0 %v2313
    %3507 = vmatprep.subr.bf16.mxu0 %v2322
    %3508 = vmatpush1.bf16.msra.mxu0 %v2321
    %3509 = vmatprep.subr.bf16.mxu0 %v2330
    %3510 = vmatpush1.bf16.msra.mxu0 %v2329
    %3511 = vmatprep.subr.bf16.mxu0 %v2338
    %3512 = vmatpush1.bf16.msra.mxu0 %v2337
    %3513 = vmatprep.subr.bf16.mxu0 %v2346
    %3514 = vmatpush1.bf16.msra.mxu0 %v2345
    %3515 = vmatprep.subr.bf16.mxu0 %v2354
    %3516 = vmatpush1.bf16.msra.mxu0 %v2353
    %3517 = vmatprep.subr.bf16.mxu0 %v2362
    %3518 = vmatpush1.bf16.msra.mxu0 %v2361
    %3519 = vmatprep.subr.bf16.mxu0 %v2370
    %3520 = vmatpush1.bf16.msra.mxu0 %v2369
    %3521 = vmatprep.subr.bf16.mxu0 %v2378
    %3522 = vmatpush1.bf16.msra.mxu0 %v2377
    %3523 = vmatprep.subr.bf16.mxu0 %v2386
    %3524 = vmatpush1.bf16.msra.mxu0 %v2385
    %3525 = vmatprep.subr.bf16.mxu0 %v2394
    %3526 = vmatpush1.bf16.msra.mxu0 %v2393
    %3527 = vmatprep.subr.bf16.mxu0 %v2402
    %3528 = vmatpush1.bf16.msra.mxu0 %v2401
    %3529 = vmatprep.subr.bf16.mxu0 %v2410
    %3530 = vmatpush1.bf16.msra.mxu0 %v2409
    %3531 = vmatprep.mubr.bf16.mxu0 %v3289
    %3532 = vmatmul.mubr.bf16.gmra.mrb[0].mxu0 %v3288
    %v3533 = vpop.f32.mrb[0].mxu0
    %v3534 = vadd.f32 %v3493, %v3533
    %v3535 = vpop.f32.mrb[0].mxu0
    %v3536 = vadd.f32 %v3495, %v3535
    %v3537 = vpop.f32.mrb[0].mxu0
    %v3538 = vpop.f32.mrb[0].mxu0
    %3539 = vdwg.mxu0
    %3540 = vmatprep.subr.bf16.mxu0 %v2164
    %3541 = vmatpush1.bf16.msra.mxu0 %v2163
    %3542 = vmatprep.subr.bf16.mxu0 %v2172
    %3543 = vmatpush1.bf16.msra.mxu0 %v2171
    %3544 = vmatprep.subr.bf16.mxu0 %v2180
    %3545 = vmatpush1.bf16.msra.mxu0 %v2179
    %3546 = vmatprep.subr.bf16.mxu0 %v2188
    %3547 = vmatpush1.bf16.msra.mxu0 %v2187
    %3548 = vmatprep.subr.bf16.mxu0 %v2196
    %3549 = vmatpush1.bf16.msra.mxu0 %v2195
    %3550 = vmatprep.subr.bf16.mxu0 %v2204
    %3551 = vmatpush1.bf16.msra.mxu0 %v2203
    %3552 = vmatprep.subr.bf16.mxu0 %v2212
    %3553 = vmatpush1.bf16.msra.mxu0 %v2211
    %3554 = vmatprep.subr.bf16.mxu0 %v2220
    %3555 = vmatpush1.bf16.msra.mxu0 %v2219
    %3556 = vmatprep.subr.bf16.mxu0 %v2228
    %3557 = vmatpush1.bf16.msra.mxu0 %v2227
    %3558 = vmatprep.subr.bf16.mxu0 %v2236
    %3559 = vmatpush1.bf16.msra.mxu0 %v2235
    %3560 = vmatprep.subr.bf16.mxu0 %v2244
    %3561 = vmatpush1.bf16.msra.mxu0 %v2243
    %3562 = vmatprep.subr.bf16.mxu0 %v2252
    %3563 = vmatpush1.bf16.msra.mxu0 %v2251
    %3564 = vmatprep.subr.bf16.mxu0 %v2260
    %3565 = vmatpush1.bf16.msra.mxu0 %v2259
    %3566 = vmatprep.subr.bf16.mxu0 %v2268
    %3567 = vmatpush1.bf16.msra.mxu0 %v2267
    %3568 = vmatprep.subr.bf16.mxu0 %v2276
    %3569 = vmatpush1.bf16.msra.mxu0 %v2275
    %3570 = vmatprep.subr.bf16.mxu0 %v2284
    %3571 = vmatpush1.bf16.msra.mxu0 %v2283
    %3572 = vmatprep.mubr.bf16.mxu0 %v3287
    %3573 = vmatmul.mubr.bf16.gmra.mrb[0].mxu0 %v3286
    %v3574 = vpop.f32.mrb[0].mxu0
    %v3575 = vadd.f32 %v1362, %v3574
    %v3576 = vpop.f32.mrb[0].mxu0
    %v3577 = vadd.f32 %v1366, %v3576
    %v3578 = vpop.f32.mrb[0].mxu0
    %v3579 = vpop.f32.mrb[0].mxu0
    %3580 = vdwg.mxu0
    %3581 = vmatprep.subr.bf16.mxu0 %v2292
    %3582 = vmatpush1.bf16.msra.mxu0 %v2291
    %3583 = vmatprep.subr.bf16.mxu0 %v2300
    %3584 = vmatpush1.bf16.msra.mxu0 %v2299
    %3585 = vmatprep.subr.bf16.mxu0 %v2308
    %3586 = vmatpush1.bf16.msra.mxu0 %v2307
    %3587 = vmatprep.subr.bf16.mxu0 %v2316
    %3588 = vmatpush1.bf16.msra.mxu0 %v2315
    %3589 = vmatprep.subr.bf16.mxu0 %v2324
    %3590 = vmatpush1.bf16.msra.mxu0 %v2323
    %3591 = vmatprep.subr.bf16.mxu0 %v2332
    %3592 = vmatpush1.bf16.msra.mxu0 %v2331
    %3593 = vmatprep.subr.bf16.mxu0 %v2340
    %3594 = vmatpush1.bf16.msra.mxu0 %v2339
    %3595 = vmatprep.subr.bf16.mxu0 %v2348
    %3596 = vmatpush1.bf16.msra.mxu0 %v2347
    %3597 = vmatprep.subr.bf16.mxu0 %v2356
    %3598 = vmatpush1.bf16.msra.mxu0 %v2355
    %3599 = vmatprep.subr.bf16.mxu0 %v2364
    %3600 = vmatpush1.bf16.msra.mxu0 %v2363
    %3601 = vmatprep.subr.bf16.mxu0 %v2372
    %3602 = vmatpush1.bf16.msra.mxu0 %v2371
    %3603 = vmatprep.subr.bf16.mxu0 %v2380
    %3604 = vmatpush1.bf16.msra.mxu0 %v2379
    %3605 = vmatprep.subr.bf16.mxu0 %v2388
    %3606 = vmatpush1.bf16.msra.mxu0 %v2387
    %3607 = vmatprep.subr.bf16.mxu0 %v2396
    %3608 = vmatpush1.bf16.msra.mxu0 %v2395
    %3609 = vmatprep.subr.bf16.mxu0 %v2404
    %3610 = vmatpush1.bf16.msra.mxu0 %v2403
    %3611 = vmatprep.subr.bf16.mxu0 %v2412
    %3612 = vmatpush1.bf16.msra.mxu0 %v2411
    %3613 = vmatprep.mubr.bf16.mxu0 %v3289
    %3614 = vmatmul.mubr.bf16.gmra.mrb[0].mxu0 %v3288
    %v3615 = vpop.f32.mrb[0].mxu0
    %v3616 = vadd.f32 %v3575, %v3615
    %v3617 = vpop.f32.mrb[0].mxu0
    %v3618 = vadd.f32 %v3577, %v3617
    %v3619 = vpop.f32.mrb[0].mxu0
    %v3620 = vpop.f32.mrb[0].mxu0
    %3621 = vdwg.mxu0
    %v3622 = vmul.f32 %v3370, 0.5
    %v3623 = vmul.f32 %v3372, 0.5
    %v3624 = vtanh.pop %v3622
    %v3625 = vtanh.pop %v3623
    %v3626 = vmul.f32 %v3624, 0.5
    %v3627 = vmul.f32 %v3625, 0.5
    %v3628 = vadd.f32 %v3626, 0.5
    %v3629 = vadd.f32 %v3627, 0.5
    %v3630 = vmul.f32 %v3452, 0.5
    %v3631 = vmul.f32 %v3454, 0.5
    %v3632 = vtanh.pop %v3630
    %v3633 = vtanh.pop %v3631
    %v3634 = vmul.f32 %v3632, 0.5
    %v3635 = vmul.f32 %v3633, 0.5
    %v3636 = vadd.f32 %v3634, 0.5
    %v3637 = vadd.f32 %v3635, 0.5
    %v3638 = vtanh.pop %v3534
    %v3639 = vtanh.pop %v3536
    %v3640 = vmul.f32 %v3616, 0.5
    %v3641 = vmul.f32 %v3618, 0.5
    %v3642 = vtanh.pop %v3640
    %v3643 = vtanh.pop %v3641
    %v3644 = vmul.f32 %v3642, 0.5
    %v3645 = vmul.f32 %v3643, 0.5
    %v3646 = vadd.f32 %v3644, 0.5
    %v3647 = vadd.f32 %v3645, 0.5
    %v3648 = vmul.f32 %v3636, %v3027
    %v3649 = vmul.f32 %v3637, %v3028
    %v3650 = vmul.f32 %v3628, %v3638
    %v3651 = vmul.f32 %v3629, %v3639
    %v3652 = vadd.f32 %v3648, %v3650
    %v3653 = vadd.f32 %v3649, %v3651
    %v3654 = vtanh.pop %v3652
    %v3655 = vtanh.pop %v3653
    %v3656 = vmul.f32 %v3646, %v3654
    %v3657 = vmul.f32 %v3647, %v3655
    %v3658 = vpack.c.bf16 %v3656, %v3656
    %v3659 = vpack.c.bf16 %v3657, %v3657
    %v3662 = vunpack.c.l.b16 %v3658
    %v3663 = vunpack.c.l.b16 %v3659
    %v3664 = vpack.c.b16 %v3663, %v3662
    %3666 = vst [vmem:[#allocation4 + $0x8] sm:$0xff] %v3664
    %s3667 = scalar_lea.vmem [#allocation11], 16
    %3668 = vst [vmem:[%s3667] sm:$0xff] %v3656
    %3669 = vst [vmem:[%s3667 + $0x8] sm:$0xff] %v3657
    %v3670 = vld [vmem:[#allocation4] sm:$0xff]
    %s3671 = scalar_lea.vmem [#allocation5], 128
    %v3672 = vld [vmem:[%s3671] sm:$0xff]
    %v3673 = vld [vmem:[%s3671 + $0x8] sm:$0xff]
    %v3674 = vld [vmem:[%s3671 + $0x10] sm:$0xff]
    %v3675 = vld [vmem:[%s3671 + $0x18] sm:$0xff]
    %v3676 = vld [vmem:[%s3671 + $0x20] sm:$0xff]
    %v3677 = vld [vmem:[%s3671 + $0x28] sm:$0xff]
    %v3678 = vld [vmem:[%s3671 + $0x30] sm:$0xff]
    %v3679 = vld [vmem:[%s3671 + $0x38] sm:$0xff]
    %v3681 = vunpack.c.l.b16 %v3670
    %v3682 = vunpack.c.h.b16 %v3670
    %v3683 = vpack.c.b16 %v3681, %v3681
    %v3684 = vpack.c.b16 %v3682, %v3682
    %3687 = vmatprep.subr.bf16.mxu0 %v860
    %3688 = vmatpush1.bf16.msra.mxu0 %v859
    %3689 = vmatprep.subr.bf16.mxu0 %v868
    %3690 = vmatpush1.bf16.msra.mxu0 %v867
    %3691 = vmatprep.subr.bf16.mxu0 %v876
    %3692 = vmatpush1.bf16.msra.mxu0 %v875
    %3693 = vmatprep.subr.bf16.mxu0 %v884
    %3694 = vmatpush1.bf16.msra.mxu0 %v883
    %3695 = vmatprep.subr.bf16.mxu0 %v892
    %3696 = vmatpush1.bf16.msra.mxu0 %v891
    %3697 = vmatprep.subr.bf16.mxu0 %v900
    %3698 = vmatpush1.bf16.msra.mxu0 %v899
    %3699 = vmatprep.subr.bf16.mxu0 %v908
    %3700 = vmatpush1.bf16.msra.mxu0 %v907
    %3701 = vmatprep.subr.bf16.mxu0 %v916
    %3702 = vmatpush1.bf16.msra.mxu0 %v915
    %3703 = vmatprep.subr.bf16.mxu0 %v924
    %3704 = vmatpush1.bf16.msra.mxu0 %v923
    %3705 = vmatprep.subr.bf16.mxu0 %v932
    %3706 = vmatpush1.bf16.msra.mxu0 %v931
    %3707 = vmatprep.subr.bf16.mxu0 %v940
    %3708 = vmatpush1.bf16.msra.mxu0 %v939
    %3709 = vmatprep.subr.bf16.mxu0 %v948
    %3710 = vmatpush1.bf16.msra.mxu0 %v947
    %3711 = vmatprep.subr.bf16.mxu0 %v956
    %3712 = vmatpush1.bf16.msra.mxu0 %v955
    %3713 = vmatprep.subr.bf16.mxu0 %v964
    %3714 = vmatpush1.bf16.msra.mxu0 %v963
    %3715 = vmatprep.subr.bf16.mxu0 %v972
    %3716 = vmatpush1.bf16.msra.mxu0 %v971
    %3717 = vmatprep.subr.bf16.mxu0 %v980
    %3718 = vmatpush1.bf16.msra.mxu0 %v979
    %3719 = vmatprep.mubr.bf16.mxu0 %v3684
    %3720 = vmatmul.mubr.bf16.gmra.mrb[0].mxu0 %v3683
    %v3721 = vpop.f32.mrb[0].mxu0
    %v3722 = vadd.f32 0.0, %v3721
    %v3723 = vpop.f32.mrb[0].mxu0
    %v3724 = vadd.f32 0.0, %v3723
    %v3725 = vpop.f32.mrb[0].mxu0
    %v3726 = vpop.f32.mrb[0].mxu0
    %3727 = vdwg.mxu0
    %3728 = vmatprep.subr.bf16.mxu0 %v862
    %3729 = vmatpush1.bf16.msra.mxu0 %v861
    %3730 = vmatprep.subr.bf16.mxu0 %v870
    %3731 = vmatpush1.bf16.msra.mxu0 %v869
    %3732 = vmatprep.subr.bf16.mxu0 %v878
    %3733 = vmatpush1.bf16.msra.mxu0 %v877
    %3734 = vmatprep.subr.bf16.mxu0 %v886
    %3735 = vmatpush1.bf16.msra.mxu0 %v885
    %3736 = vmatprep.subr.bf16.mxu0 %v894
    %3737 = vmatpush1.bf16.msra.mxu0 %v893
    %3738 = vmatprep.subr.bf16.mxu0 %v902
    %3739 = vmatpush1.bf16.msra.mxu0 %v901
    %3740 = vmatprep.subr.bf16.mxu0 %v910
    %3741 = vmatpush1.bf16.msra.mxu0 %v909
    %3742 = vmatprep.subr.bf16.mxu0 %v918
    %3743 = vmatpush1.bf16.msra.mxu0 %v917
    %3744 = vmatprep.subr.bf16.mxu0 %v926
    %3745 = vmatpush1.bf16.msra.mxu0 %v925
    %3746 = vmatprep.subr.bf16.mxu0 %v934
    %3747 = vmatpush1.bf16.msra.mxu0 %v933
    %3748 = vmatprep.subr.bf16.mxu0 %v942
    %3749 = vmatpush1.bf16.msra.mxu0 %v941
    %3750 = vmatprep.subr.bf16.mxu0 %v950
    %3751 = vmatpush1.bf16.msra.mxu0 %v949
    %3752 = vmatprep.subr.bf16.mxu0 %v958
    %3753 = vmatpush1.bf16.msra.mxu0 %v957
    %3754 = vmatprep.subr.bf16.mxu0 %v966
    %3755 = vmatpush1.bf16.msra.mxu0 %v965
    %3756 = vmatprep.subr.bf16.mxu0 %v974
    %3757 = vmatpush1.bf16.msra.mxu0 %v973
    %3758 = vmatprep.subr.bf16.mxu0 %v982
    %3759 = vmatpush1.bf16.msra.mxu0 %v981
    %3760 = vmatprep.mubr.bf16.mxu0 %v3684
    %3761 = vmatmul.mubr.bf16.gmra.mrb[0].mxu0 %v3683
    %v3762 = vpop.f32.mrb[0].mxu0
    %v3763 = vadd.f32 0.0, %v3762
    %v3764 = vpop.f32.mrb[0].mxu0
    %v3765 = vadd.f32 0.0, %v3764
    %v3766 = vpop.f32.mrb[0].mxu0
    %v3767 = vpop.f32.mrb[0].mxu0
    %3768 = vdwg.mxu0
    %3769 = vmatprep.subr.bf16.mxu0 %v864
    %3770 = vmatpush1.bf16.msra.mxu0 %v863
    %3771 = vmatprep.subr.bf16.mxu0 %v872
    %3772 = vmatpush1.bf16.msra.mxu0 %v871
    %3773 = vmatprep.subr.bf16.mxu0 %v880
    %3774 = vmatpush1.bf16.msra.mxu0 %v879
    %3775 = vmatprep.subr.bf16.mxu0 %v888
    %3776 = vmatpush1.bf16.msra.mxu0 %v887
    %3777 = vmatprep.subr.bf16.mxu0 %v896
    %3778 = vmatpush1.bf16.msra.mxu0 %v895
    %3779 = vmatprep.subr.bf16.mxu0 %v904
    %3780 = vmatpush1.bf16.msra.mxu0 %v903
    %3781 = vmatprep.subr.bf16.mxu0 %v912
    %3782 = vmatpush1.bf16.msra.mxu0 %v911
    %3783 = vmatprep.subr.bf16.mxu0 %v920
    %3784 = vmatpush1.bf16.msra.mxu0 %v919
    %3785 = vmatprep.subr.bf16.mxu0 %v928
    %3786 = vmatpush1.bf16.msra.mxu0 %v927
    %3787 = vmatprep.subr.bf16.mxu0 %v936
    %3788 = vmatpush1.bf16.msra.mxu0 %v935
    %3789 = vmatprep.subr.bf16.mxu0 %v944
    %3790 = vmatpush1.bf16.msra.mxu0 %v943
    %3791 = vmatprep.subr.bf16.mxu0 %v952
    %3792 = vmatpush1.bf16.msra.mxu0 %v951
    %3793 = vmatprep.subr.bf16.mxu0 %v960
    %3794 = vmatpush1.bf16.msra.mxu0 %v959
    %3795 = vmatprep.subr.bf16.mxu0 %v968
    %3796 = vmatpush1.bf16.msra.mxu0 %v967
    %3797 = vmatprep.subr.bf16.mxu0 %v976
    %3798 = vmatpush1.bf16.msra.mxu0 %v975
    %3799 = vmatprep.subr.bf16.mxu0 %v984
    %3800 = vmatpush1.bf16.msra.mxu0 %v983
    %3801 = vmatprep.mubr.bf16.mxu0 %v3684
    %3802 = vmatmul.mubr.bf16.gmra.mrb[0].mxu0 %v3683
    %v3803 = vpop.f32.mrb[0].mxu0
    %v3804 = vadd.f32 0.0, %v3803
    %v3805 = vpop.f32.mrb[0].mxu0
    %v3806 = vadd.f32 0.0, %v3805
    %v3807 = vpop.f32.mrb[0].mxu0
    %v3808 = vpop.f32.mrb[0].mxu0
    %3809 = vdwg.mxu0
    %3810 = vmatprep.subr.bf16.mxu0 %v866
    %3811 = vmatpush1.bf16.msra.mxu0 %v865
    %3812 = vmatprep.subr.bf16.mxu0 %v874
    %3813 = vmatpush1.bf16.msra.mxu0 %v873
    %3814 = vmatprep.subr.bf16.mxu0 %v882
    %3815 = vmatpush1.bf16.msra.mxu0 %v881
    %3816 = vmatprep.subr.bf16.mxu0 %v890
    %3817 = vmatpush1.bf16.msra.mxu0 %v889
    %3818 = vmatprep.subr.bf16.mxu0 %v898
    %3819 = vmatpush1.bf16.msra.mxu0 %v897
    %3820 = vmatprep.subr.bf16.mxu0 %v906
    %3821 = vmatpush1.bf16.msra.mxu0 %v905
    %3822 = vmatprep.subr.bf16.mxu0 %v914
    %3823 = vmatpush1.bf16.msra.mxu0 %v913
    %3824 = vmatprep.subr.bf16.mxu0 %v922
    %3825 = vmatpush1.bf16.msra.mxu0 %v921
    %3826 = vmatprep.subr.bf16.mxu0 %v930
    %3827 = vmatpush1.bf16.msra.mxu0 %v929
    %3828 = vmatprep.subr.bf16.mxu0 %v938
    %3829 = vmatpush1.bf16.msra.mxu0 %v937
    %3830 = vmatprep.subr.bf16.mxu0 %v946
    %3831 = vmatpush1.bf16.msra.mxu0 %v945
    %3832 = vmatprep.subr.bf16.mxu0 %v954
    %3833 = vmatpush1.bf16.msra.mxu0 %v953
    %3834 = vmatprep.subr.bf16.mxu0 %v962
    %3835 = vmatpush1.bf16.msra.mxu0 %v961
    %3836 = vmatprep.subr.bf16.mxu0 %v970
    %3837 = vmatpush1.bf16.msra.mxu0 %v969
    %3838 = vmatprep.subr.bf16.mxu0 %v978
    %3839 = vmatpush1.bf16.msra.mxu0 %v977
    %3840 = vmatprep.subr.bf16.mxu0 %v986
    %3841 = vmatpush1.bf16.msra.mxu0 %v985
    %3842 = vmatprep.mubr.bf16.mxu0 %v3684
    %3843 = vmatmul.mubr.bf16.gmra.mrb[0].mxu0 %v3683
    %v3844 = vpop.f32.mrb[0].mxu0
    %v3845 = vadd.f32 0.0, %v3844
    %v3846 = vpop.f32.mrb[0].mxu0
    %v3847 = vadd.f32 0.0, %v3846
    %v3848 = vpop.f32.mrb[0].mxu0
    %v3849 = vpop.f32.mrb[0].mxu0
    %3850 = vdwg.mxu0
    %v3851 = vadd.f32 %v3672, %v3722
    %v3852 = vadd.f32 %v3673, %v3724
    %v3853 = vadd.f32 %v3674, %v3763
    %v3854 = vadd.f32 %v3675, %v3765
    %v3855 = vadd.f32 %v3676, %v3804
    %v3856 = vadd.f32 %v3677, %v3806
    %v3857 = vadd.f32 %v3678, %v3845
    %v3858 = vadd.f32 %v3679, %v3847
    %v3859 = vmul.f32 %v3851, 0.5
    %v3860 = vmul.f32 %v3852, 0.5
    %v3861 = vtanh.pop %v3859
    %v3862 = vtanh.pop %v3860
    %v3863 = vmul.f32 %v3861, 0.5
    %v3864 = vmul.f32 %v3862, 0.5
    %v3865 = vadd.f32 %v3863, 0.5
    %v3866 = vadd.f32 %v3864, 0.5
    %v3867 = vmul.f32 %v3853, 0.5
    %v3868 = vmul.f32 %v3854, 0.5
    %v3869 = vtanh.pop %v3867
    %v3870 = vtanh.pop %v3868
    %v3871 = vmul.f32 %v3869, 0.5
    %v3872 = vmul.f32 %v3870, 0.5
    %v3873 = vadd.f32 %v3871, 0.5
    %v3874 = vadd.f32 %v3872, 0.5
    %v3875 = vtanh.pop %v3855
    %v3876 = vtanh.pop %v3856
    %v3877 = vmul.f32 %v3857, 0.5
    %v3878 = vmul.f32 %v3858, 0.5
    %v3879 = vtanh.pop %v3877
    %v3880 = vtanh.pop %v3878
    %v3881 = vmul.f32 %v3879, 0.5
    %v3882 = vmul.f32 %v3880, 0.5
    %v3883 = vadd.f32 %v3881, 0.5
    %v3884 = vadd.f32 %v3882, 0.5
    %v3885 = vmul.f32 %v3873, %v3263
    %v3886 = vmul.f32 %v3874, %v3264
    %v3887 = vmul.f32 %v3865, %v3875
    %v3888 = vmul.f32 %v3866, %v3876
    %v3889 = vadd.f32 %v3885, %v3887
    %v3890 = vadd.f32 %v3886, %v3888
    %v3891 = vtanh.pop %v3889
    %v3892 = vtanh.pop %v3890
    %v3893 = vmul.f32 %v3883, %v3891
    %v3894 = vmul.f32 %v3884, %v3892
    %v3895 = vpack.c.bf16 %v3893, %v3893
    %v3896 = vpack.c.bf16 %v3894, %v3894
    %v3899 = vunpack.c.l.b16 %v3895
    %v3900 = vunpack.c.l.b16 %v3896
    %v3901 = vpack.c.b16 %v3900, %v3899
    %3903 = vst [vmem:[#allocation4] sm:$0xff] %v3901
    %v3904 = vld [vmem:[#allocation4] sm:$0xff]
    %v3905 = vld [vmem:[#allocation4 + $0x8] sm:$0xff]
    %v3908 = vunpack.c.l.b16 %v3904
    %v3909 = vunpack.c.h.b16 %v3904
    %v3910 = vunpack.c.l.b16 %v3905
    %v3911 = vunpack.c.h.b16 %v3905
    %v3912 = vpack.c.b16 %v3908, %v3908
    %v3913 = vpack.c.b16 %v3909, %v3909
    %v3914 = vpack.c.b16 %v3910, %v3910
    %v3915 = vpack.c.b16 %v3911, %v3911
    %3920 = vmatprep.subr.bf16.mxu0 %v2158
    %3921 = vmatpush1.bf16.msra.mxu0 %v2157
    %3922 = vmatprep.subr.bf16.mxu0 %v2166
    %3923 = vmatpush1.bf16.msra.mxu0 %v2165
    %3924 = vmatprep.subr.bf16.mxu0 %v2174
    %3925 = vmatpush1.bf16.msra.mxu0 %v2173
    %3926 = vmatprep.subr.bf16.mxu0 %v2182
    %3927 = vmatpush1.bf16.msra.mxu0 %v2181
    %3928 = vmatprep.subr.bf16.mxu0 %v2190
    %3929 = vmatpush1.bf16.msra.mxu0 %v2189
    %3930 = vmatprep.subr.bf16.mxu0 %v2198
    %3931 = vmatpush1.bf16.msra.mxu0 %v2197
    %3932 = vmatprep.subr.bf16.mxu0 %v2206
    %3933 = vmatpush1.bf16.msra.mxu0 %v2205
    %3934 = vmatprep.subr.bf16.mxu0 %v2214
    %3935 = vmatpush1.bf16.msra.mxu0 %v2213
    %3936 = vmatprep.subr.bf16.mxu0 %v2222
    %3937 = vmatpush1.bf16.msra.mxu0 %v2221
    %3938 = vmatprep.subr.bf16.mxu0 %v2230
    %3939 = vmatpush1.bf16.msra.mxu0 %v2229
    %3940 = vmatprep.subr.bf16.mxu0 %v2238
    %3941 = vmatpush1.bf16.msra.mxu0 %v2237
    %3942 = vmatprep.subr.bf16.mxu0 %v2246
    %3943 = vmatpush1.bf16.msra.mxu0 %v2245
    %3944 = vmatprep.subr.bf16.mxu0 %v2254
    %3945 = vmatpush1.bf16.msra.mxu0 %v2253
    %3946 = vmatprep.subr.bf16.mxu0 %v2262
    %3947 = vmatpush1.bf16.msra.mxu0 %v2261
    %3948 = vmatprep.subr.bf16.mxu0 %v2270
    %3949 = vmatpush1.bf16.msra.mxu0 %v2269
    %3950 = vmatprep.subr.bf16.mxu0 %v2278
    %3951 = vmatpush1.bf16.msra.mxu0 %v2277
    %3952 = vmatprep.mubr.bf16.mxu0 %v3913
    %3953 = vmatmul.mubr.bf16.gmra.mrb[0].mxu0 %v3912
    %v3954 = vpop.f32.mrb[0].mxu0
    %v3955 = vadd.f32 %v1338, %v3954
    %v3956 = vpop.f32.mrb[0].mxu0
    %v3957 = vadd.f32 %v1342, %v3956
    %v3958 = vpop.f32.mrb[0].mxu0
    %v3959 = vpop.f32.mrb[0].mxu0
    %3960 = vdwg.mxu0
    %3961 = vmatprep.subr.bf16.mxu0 %v2286
    %3962 = vmatpush1.bf16.msra.mxu0 %v2285
    %3963 = vmatprep.subr.bf16.mxu0 %v2294
    %3964 = vmatpush1.bf16.msra.mxu0 %v2293
    %3965 = vmatprep.subr.bf16.mxu0 %v2302
    %3966 = vmatpush1.bf16.msra.mxu0 %v2301
    %3967 = vmatprep.subr.bf16.mxu0 %v2310
    %3968 = vmatpush1.bf16.msra.mxu0 %v2309
    %3969 = vmatprep.subr.bf16.mxu0 %v2318
    %3970 = vmatpush1.bf16.msra.mxu0 %v2317
    %3971 = vmatprep.subr.bf16.mxu0 %v2326
    %3972 = vmatpush1.bf16.msra.mxu0 %v2325
    %3973 = vmatprep.subr.bf16.mxu0 %v2334
    %3974 = vmatpush1.bf16.msra.mxu0 %v2333
    %3975 = vmatprep.subr.bf16.mxu0 %v2342
    %3976 = vmatpush1.bf16.msra.mxu0 %v2341
    %3977 = vmatprep.subr.bf16.mxu0 %v2350
    %3978 = vmatpush1.bf16.msra.mxu0 %v2349
    %3979 = vmatprep.subr.bf16.mxu0 %v2358
    %3980 = vmatpush1.bf16.msra.mxu0 %v2357
    %3981 = vmatprep.subr.bf16.mxu0 %v2366
    %3982 = vmatpush1.bf16.msra.mxu0 %v2365
    %3983 = vmatprep.subr.bf16.mxu0 %v2374
    %3984 = vmatpush1.bf16.msra.mxu0 %v2373
    %3985 = vmatprep.subr.bf16.mxu0 %v2382
    %3986 = vmatpush1.bf16.msra.mxu0 %v2381
    %3987 = vmatprep.subr.bf16.mxu0 %v2390
    %3988 = vmatpush1.bf16.msra.mxu0 %v2389
    %3989 = vmatprep.subr.bf16.mxu0 %v2398
    %3990 = vmatpush1.bf16.msra.mxu0 %v2397
    %3991 = vmatprep.subr.bf16.mxu0 %v2406
    %3992 = vmatpush1.bf16.msra.mxu0 %v2405
    %3993 = vmatprep.mubr.bf16.mxu0 %v3915
    %3994 = vmatmul.mubr.bf16.gmra.mrb[0].mxu0 %v3914
    %v3995 = vpop.f32.mrb[0].mxu0
    %v3996 = vadd.f32 %v3955, %v3995
    %v3997 = vpop.f32.mrb[0].mxu0
    %v3998 = vadd.f32 %v3957, %v3997
    %v3999 = vpop.f32.mrb[0].mxu0
    %v4000 = vpop.f32.mrb[0].mxu0
    %4001 = vdwg.mxu0
    %4002 = vmatprep.subr.bf16.mxu0 %v2160
    %4003 = vmatpush1.bf16.msra.mxu0 %v2159
    %4004 = vmatprep.subr.bf16.mxu0 %v2168
    %4005 = vmatpush1.bf16.msra.mxu0 %v2167
    %4006 = vmatprep.subr.bf16.mxu0 %v2176
    %4007 = vmatpush1.bf16.msra.mxu0 %v2175
    %4008 = vmatprep.subr.bf16.mxu0 %v2184
    %4009 = vmatpush1.bf16.msra.mxu0 %v2183
    %4010 = vmatprep.subr.bf16.mxu0 %v2192
    %4011 = vmatpush1.bf16.msra.mxu0 %v2191
    %4012 = vmatprep.subr.bf16.mxu0 %v2200
    %4013 = vmatpush1.bf16.msra.mxu0 %v2199
    %4014 = vmatprep.subr.bf16.mxu0 %v2208
    %4015 = vmatpush1.bf16.msra.mxu0 %v2207
    %4016 = vmatprep.subr.bf16.mxu0 %v2216
    %4017 = vmatpush1.bf16.msra.mxu0 %v2215
    %4018 = vmatprep.subr.bf16.mxu0 %v2224
    %4019 = vmatpush1.bf16.msra.mxu0 %v2223
    %4020 = vmatprep.subr.bf16.mxu0 %v2232
    %4021 = vmatpush1.bf16.msra.mxu0 %v2231
    %4022 = vmatprep.subr.bf16.mxu0 %v2240
    %4023 = vmatpush1.bf16.msra.mxu0 %v2239
    %4024 = vmatprep.subr.bf16.mxu0 %v2248
    %4025 = vmatpush1.bf16.msra.mxu0 %v2247
    %4026 = vmatprep.subr.bf16.mxu0 %v2256
    %4027 = vmatpush1.bf16.msra.mxu0 %v2255
    %4028 = vmatprep.subr.bf16.mxu0 %v2264
    %4029 = vmatpush1.bf16.msra.mxu0 %v2263
    %4030 = vmatprep.subr.bf16.mxu0 %v2272
    %4031 = vmatpush1.bf16.msra.mxu0 %v2271
    %4032 = vmatprep.subr.bf16.mxu0 %v2280
    %4033 = vmatpush1.bf16.msra.mxu0 %v2279
    %4034 = vmatprep.mubr.bf16.mxu0 %v3913
    %4035 = vmatmul.mubr.bf16.gmra.mrb[0].mxu0 %v3912
    %v4036 = vpop.f32.mrb[0].mxu0
    %v4037 = vadd.f32 %v1346, %v4036
    %v4038 = vpop.f32.mrb[0].mxu0
    %v4039 = vadd.f32 %v1350, %v4038
    %v4040 = vpop.f32.mrb[0].mxu0
    %v4041 = vpop.f32.mrb[0].mxu0
    %4042 = vdwg.mxu0
    %4043 = vmatprep.subr.bf16.mxu0 %v2288
    %4044 = vmatpush1.bf16.msra.mxu0 %v2287
    %4045 = vmatprep.subr.bf16.mxu0 %v2296
    %4046 = vmatpush1.bf16.msra.mxu0 %v2295
    %4047 = vmatprep.subr.bf16.mxu0 %v2304
    %4048 = vmatpush1.bf16.msra.mxu0 %v2303
    %4049 = vmatprep.subr.bf16.mxu0 %v2312
    %4050 = vmatpush1.bf16.msra.mxu0 %v2311
    %4051 = vmatprep.subr.bf16.mxu0 %v2320
    %4052 = vmatpush1.bf16.msra.mxu0 %v2319
    %4053 = vmatprep.subr.bf16.mxu0 %v2328
    %4054 = vmatpush1.bf16.msra.mxu0 %v2327
    %4055 = vmatprep.subr.bf16.mxu0 %v2336
    %4056 = vmatpush1.bf16.msra.mxu0 %v2335
    %4057 = vmatprep.subr.bf16.mxu0 %v2344
    %4058 = vmatpush1.bf16.msra.mxu0 %v2343
    %4059 = vmatprep.subr.bf16.mxu0 %v2352
    %4060 = vmatpush1.bf16.msra.mxu0 %v2351
    %4061 = vmatprep.subr.bf16.mxu0 %v2360
    %4062 = vmatpush1.bf16.msra.mxu0 %v2359
    %4063 = vmatprep.subr.bf16.mxu0 %v2368
    %4064 = vmatpush1.bf16.msra.mxu0 %v2367
    %4065 = vmatprep.subr.bf16.mxu0 %v2376
    %4066 = vmatpush1.bf16.msra.mxu0 %v2375
    %4067 = vmatprep.subr.bf16.mxu0 %v2384
    %4068 = vmatpush1.bf16.msra.mxu0 %v2383
    %4069 = vmatprep.subr.bf16.mxu0 %v2392
    %4070 = vmatpush1.bf16.msra.mxu0 %v2391
    %4071 = vmatprep.subr.bf16.mxu0 %v2400
    %4072 = vmatpush1.bf16.msra.mxu0 %v2399
    %4073 = vmatprep.subr.bf16.mxu0 %v2408
    %4074 = vmatpush1.bf16.msra.mxu0 %v2407
    %4075 = vmatprep.mubr.bf16.mxu0 %v3915
    %4076 = vmatmul.mubr.bf16.gmra.mrb[0].mxu0 %v3914
    %v4077 = vpop.f32.mrb[0].mxu0
    %v4078 = vadd.f32 %v4037, %v4077
    %v4079 = vpop.f32.mrb[0].mxu0
    %v4080 = vadd.f32 %v4039, %v4079
    %v4081 = vpop.f32.mrb[0].mxu0
    %v4082 = vpop.f32.mrb[0].mxu0
    %4083 = vdwg.mxu0
    %4084 = vmatprep.subr.bf16.mxu0 %v2162
    %4085 = vmatpush1.bf16.msra.mxu0 %v2161
    %4086 = vmatprep.subr.bf16.mxu0 %v2170
    %4087 = vmatpush1.bf16.msra.mxu0 %v2169
    %4088 = vmatprep.subr.bf16.mxu0 %v2178
    %4089 = vmatpush1.bf16.msra.mxu0 %v2177
    %4090 = vmatprep.subr.bf16.mxu0 %v2186
    %4091 = vmatpush1.bf16.msra.mxu0 %v2185
    %4092 = vmatprep.subr.bf16.mxu0 %v2194
    %4093 = vmatpush1.bf16.msra.mxu0 %v2193
    %4094 = vmatprep.subr.bf16.mxu0 %v2202
    %4095 = vmatpush1.bf16.msra.mxu0 %v2201
    %4096 = vmatprep.subr.bf16.mxu0 %v2210
    %4097 = vmatpush1.bf16.msra.mxu0 %v2209
    %4098 = vmatprep.subr.bf16.mxu0 %v2218
    %4099 = vmatpush1.bf16.msra.mxu0 %v2217
    %4100 = vmatprep.subr.bf16.mxu0 %v2226
    %4101 = vmatpush1.bf16.msra.mxu0 %v2225
    %4102 = vmatprep.subr.bf16.mxu0 %v2234
    %4103 = vmatpush1.bf16.msra.mxu0 %v2233
    %4104 = vmatprep.subr.bf16.mxu0 %v2242
    %4105 = vmatpush1.bf16.msra.mxu0 %v2241
    %4106 = vmatprep.subr.bf16.mxu0 %v2250
    %4107 = vmatpush1.bf16.msra.mxu0 %v2249
    %4108 = vmatprep.subr.bf16.mxu0 %v2258
    %4109 = vmatpush1.bf16.msra.mxu0 %v2257
    %4110 = vmatprep.subr.bf16.mxu0 %v2266
    %4111 = vmatpush1.bf16.msra.mxu0 %v2265
    %4112 = vmatprep.subr.bf16.mxu0 %v2274
    %4113 = vmatpush1.bf16.msra.mxu0 %v2273
    %4114 = vmatprep.subr.bf16.mxu0 %v2282
    %4115 = vmatpush1.bf16.msra.mxu0 %v2281
    %4116 = vmatprep.mubr.bf16.mxu0 %v3913
    %4117 = vmatmul.mubr.bf16.gmra.mrb[0].mxu0 %v3912
    %v4118 = vpop.f32.mrb[0].mxu0
    %v4119 = vadd.f32 %v1354, %v4118
    %v4120 = vpop.f32.mrb[0].mxu0
    %v4121 = vadd.f32 %v1358, %v4120
    %v4122 = vpop.f32.mrb[0].mxu0
    %v4123 = vpop.f32.mrb[0].mxu0
    %4124 = vdwg.mxu0
    %4125 = vmatprep.subr.bf16.mxu0 %v2290
    %4126 = vmatpush1.bf16.msra.mxu0 %v2289
    %4127 = vmatprep.subr.bf16.mxu0 %v2298
    %4128 = vmatpush1.bf16.msra.mxu0 %v2297
    %4129 = vmatprep.subr.bf16.mxu0 %v2306
    %4130 = vmatpush1.bf16.msra.mxu0 %v2305
    %4131 = vmatprep.subr.bf16.mxu0 %v2314
    %4132 = vmatpush1.bf16.msra.mxu0 %v2313
    %4133 = vmatprep.subr.bf16.mxu0 %v2322
    %4134 = vmatpush1.bf16.msra.mxu0 %v2321
    %4135 = vmatprep.subr.bf16.mxu0 %v2330
    %4136 = vmatpush1.bf16.msra.mxu0 %v2329
    %4137 = vmatprep.subr.bf16.mxu0 %v2338
    %4138 = vmatpush1.bf16.msra.mxu0 %v2337
    %4139 = vmatprep.subr.bf16.mxu0 %v2346
    %4140 = vmatpush1.bf16.msra.mxu0 %v2345
    %4141 = vmatprep.subr.bf16.mxu0 %v2354
    %4142 = vmatpush1.bf16.msra.mxu0 %v2353
    %4143 = vmatprep.subr.bf16.mxu0 %v2362
    %4144 = vmatpush1.bf16.msra.mxu0 %v2361
    %4145 = vmatprep.subr.bf16.mxu0 %v2370
    %4146 = vmatpush1.bf16.msra.mxu0 %v2369
    %4147 = vmatprep.subr.bf16.mxu0 %v2378
    %4148 = vmatpush1.bf16.msra.mxu0 %v2377
    %4149 = vmatprep.subr.bf16.mxu0 %v2386
    %4150 = vmatpush1.bf16.msra.mxu0 %v2385
    %4151 = vmatprep.subr.bf16.mxu0 %v2394
    %4152 = vmatpush1.bf16.msra.mxu0 %v2393
    %4153 = vmatprep.subr.bf16.mxu0 %v2402
    %4154 = vmatpush1.bf16.msra.mxu0 %v2401
    %4155 = vmatprep.subr.bf16.mxu0 %v2410
    %4156 = vmatpush1.bf16.msra.mxu0 %v2409
    %4157 = vmatprep.mubr.bf16.mxu0 %v3915
    %4158 = vmatmul.mubr.bf16.gmra.mrb[0].mxu0 %v3914
    %v4159 = vpop.f32.mrb[0].mxu0
    %v4160 = vadd.f32 %v4119, %v4159
    %v4161 = vpop.f32.mrb[0].mxu0
    %v4162 = vadd.f32 %v4121, %v4161
    %v4163 = vpop.f32.mrb[0].mxu0
    %v4164 = vpop.f32.mrb[0].mxu0
    %4165 = vdwg.mxu0
    %4166 = vmatprep.subr.bf16.mxu0 %v2164
    %4167 = vmatpush1.bf16.msra.mxu0 %v2163
    %4168 = vmatprep.subr.bf16.mxu0 %v2172
    %4169 = vmatpush1.bf16.msra.mxu0 %v2171
    %4170 = vmatprep.subr.bf16.mxu0 %v2180
    %4171 = vmatpush1.bf16.msra.mxu0 %v2179
    %4172 = vmatprep.subr.bf16.mxu0 %v2188
    %4173 = vmatpush1.bf16.msra.mxu0 %v2187
    %4174 = vmatprep.subr.bf16.mxu0 %v2196
    %4175 = vmatpush1.bf16.msra.mxu0 %v2195
    %4176 = vmatprep.subr.bf16.mxu0 %v2204
    %4177 = vmatpush1.bf16.msra.mxu0 %v2203
    %4178 = vmatprep.subr.bf16.mxu0 %v2212
    %4179 = vmatpush1.bf16.msra.mxu0 %v2211
    %4180 = vmatprep.subr.bf16.mxu0 %v2220
    %4181 = vmatpush1.bf16.msra.mxu0 %v2219
    %4182 = vmatprep.subr.bf16.mxu0 %v2228
    %4183 = vmatpush1.bf16.msra.mxu0 %v2227
    %4184 = vmatprep.subr.bf16.mxu0 %v2236
    %4185 = vmatpush1.bf16.msra.mxu0 %v2235
    %4186 = vmatprep.subr.bf16.mxu0 %v2244
    %4187 = vmatpush1.bf16.msra.mxu0 %v2243
    %4188 = vmatprep.subr.bf16.mxu0 %v2252
    %4189 = vmatpush1.bf16.msra.mxu0 %v2251
    %4190 = vmatprep.subr.bf16.mxu0 %v2260
    %4191 = vmatpush1.bf16.msra.mxu0 %v2259
    %4192 = vmatprep.subr.bf16.mxu0 %v2268
    %4193 = vmatpush1.bf16.msra.mxu0 %v2267
    %4194 = vmatprep.subr.bf16.mxu0 %v2276
    %4195 = vmatpush1.bf16.msra.mxu0 %v2275
    %4196 = vmatprep.subr.bf16.mxu0 %v2284
    %4197 = vmatpush1.bf16.msra.mxu0 %v2283
    %4198 = vmatprep.mubr.bf16.mxu0 %v3913
    %4199 = vmatmul.mubr.bf16.gmra.mrb[0].mxu0 %v3912
    %v4200 = vpop.f32.mrb[0].mxu0
    %v4201 = vadd.f32 %v1362, %v4200
    %v4202 = vpop.f32.mrb[0].mxu0
    %v4203 = vadd.f32 %v1366, %v4202
    %v4204 = vpop.f32.mrb[0].mxu0
    %v4205 = vpop.f32.mrb[0].mxu0
    %4206 = vdwg.mxu0
    %4207 = vmatprep.subr.bf16.mxu0 %v2292
    %4208 = vmatpush1.bf16.msra.mxu0 %v2291
    %4209 = vmatprep.subr.bf16.mxu0 %v2300
    %4210 = vmatpush1.bf16.msra.mxu0 %v2299
    %4211 = vmatprep.subr.bf16.mxu0 %v2308
    %4212 = vmatpush1.bf16.msra.mxu0 %v2307
    %4213 = vmatprep.subr.bf16.mxu0 %v2316
    %4214 = vmatpush1.bf16.msra.mxu0 %v2315
    %4215 = vmatprep.subr.bf16.mxu0 %v2324
    %4216 = vmatpush1.bf16.msra.mxu0 %v2323
    %4217 = vmatprep.subr.bf16.mxu0 %v2332
    %4218 = vmatpush1.bf16.msra.mxu0 %v2331
    %4219 = vmatprep.subr.bf16.mxu0 %v2340
    %4220 = vmatpush1.bf16.msra.mxu0 %v2339
    %4221 = vmatprep.subr.bf16.mxu0 %v2348
    %4222 = vmatpush1.bf16.msra.mxu0 %v2347
    %4223 = vmatprep.subr.bf16.mxu0 %v2356
    %4224 = vmatpush1.bf16.msra.mxu0 %v2355
    %4225 = vmatprep.subr.bf16.mxu0 %v2364
    %4226 = vmatpush1.bf16.msra.mxu0 %v2363
    %4227 = vmatprep.subr.bf16.mxu0 %v2372
    %4228 = vmatpush1.bf16.msra.mxu0 %v2371
    %4229 = vmatprep.subr.bf16.mxu0 %v2380
    %4230 = vmatpush1.bf16.msra.mxu0 %v2379
    %4231 = vmatprep.subr.bf16.mxu0 %v2388
    %4232 = vmatpush1.bf16.msra.mxu0 %v2387
    %4233 = vmatprep.subr.bf16.mxu0 %v2396
    %4234 = vmatpush1.bf16.msra.mxu0 %v2395
    %4235 = vmatprep.subr.bf16.mxu0 %v2404
    %4236 = vmatpush1.bf16.msra.mxu0 %v2403
    %4237 = vmatprep.subr.bf16.mxu0 %v2412
    %4238 = vmatpush1.bf16.msra.mxu0 %v2411
    %4239 = vmatprep.mubr.bf16.mxu0 %v3915
    %4240 = vmatmul.mubr.bf16.gmra.mrb[0].mxu0 %v3914
    %v4241 = vpop.f32.mrb[0].mxu0
    %v4242 = vadd.f32 %v4201, %v4241
    %v4243 = vpop.f32.mrb[0].mxu0
    %v4244 = vadd.f32 %v4203, %v4243
    %v4245 = vpop.f32.mrb[0].mxu0
    %v4246 = vpop.f32.mrb[0].mxu0
    %4247 = vdwg.mxu0
    %v4248 = vmul.f32 %v3996, 0.5
    %v4249 = vmul.f32 %v3998, 0.5
    %v4250 = vtanh.pop %v4248
    %v4251 = vtanh.pop %v4249
    %v4252 = vmul.f32 %v4250, 0.5
    %v4253 = vmul.f32 %v4251, 0.5
    %v4254 = vadd.f32 %v4252, 0.5
    %v4255 = vadd.f32 %v4253, 0.5
    %v4256 = vmul.f32 %v4078, 0.5
    %v4257 = vmul.f32 %v4080, 0.5
    %v4258 = vtanh.pop %v4256
    %v4259 = vtanh.pop %v4257
    %v4260 = vmul.f32 %v4258, 0.5
    %v4261 = vmul.f32 %v4259, 0.5
    %v4262 = vadd.f32 %v4260, 0.5
    %v4263 = vadd.f32 %v4261, 0.5
    %v4264 = vtanh.pop %v4160
    %v4265 = vtanh.pop %v4162
    %v4266 = vmul.f32 %v4242, 0.5
    %v4267 = vmul.f32 %v4244, 0.5
    %v4268 = vtanh.pop %v4266
    %v4269 = vtanh.pop %v4267
    %v4270 = vmul.f32 %v4268, 0.5
    %v4271 = vmul.f32 %v4269, 0.5
    %v4272 = vadd.f32 %v4270, 0.5
    %v4273 = vadd.f32 %v4271, 0.5
    %v4274 = vmul.f32 %v4262, %v3652
    %v4275 = vmul.f32 %v4263, %v3653
    %v4276 = vmul.f32 %v4254, %v4264
    %v4277 = vmul.f32 %v4255, %v4265
    %v4278 = vadd.f32 %v4274, %v4276
    %v4279 = vadd.f32 %v4275, %v4277
    %v4280 = vtanh.pop %v4278
    %v4281 = vtanh.pop %v4279
    %v4282 = vmul.f32 %v4272, %v4280
    %v4283 = vmul.f32 %v4273, %v4281
    %v4284 = vpack.c.bf16 %v4282, %v4282
    %v4285 = vpack.c.bf16 %v4283, %v4283
    %v4288 = vunpack.c.l.b16 %v4284
    %v4289 = vunpack.c.l.b16 %v4285
    %v4290 = vpack.c.b16 %v4289, %v4288
    %4292 = vst [vmem:[#allocation4 + $0x8] sm:$0xff] %v4290
    %s4293 = scalar_lea.vmem [#allocation11], 32
    %4294 = vst [vmem:[%s4293] sm:$0xff] %v4282
    %4295 = vst [vmem:[%s4293 + $0x8] sm:$0xff] %v4283
    %v4296 = vld [vmem:[#allocation4] sm:$0xff]
    %s4297 = scalar_lea.vmem [#allocation5], 192
    %v4298 = vld [vmem:[%s4297] sm:$0xff]
    %v4299 = vld [vmem:[%s4297 + $0x8] sm:$0xff]
    %v4300 = vld [vmem:[%s4297 + $0x10] sm:$0xff]
    %v4301 = vld [vmem:[%s4297 + $0x18] sm:$0xff]
    %v4302 = vld [vmem:[%s4297 + $0x20] sm:$0xff]
    %v4303 = vld [vmem:[%s4297 + $0x28] sm:$0xff]
    %v4304 = vld [vmem:[%s4297 + $0x30] sm:$0xff]
    %v4305 = vld [vmem:[%s4297 + $0x38] sm:$0xff]
    %v4307 = vunpack.c.l.b16 %v4296
    %v4308 = vunpack.c.h.b16 %v4296
    %v4309 = vpack.c.b16 %v4307, %v4307
    %v4310 = vpack.c.b16 %v4308, %v4308
    %4313 = vmatprep.subr.bf16.mxu0 %v860
    %4314 = vmatpush1.bf16.msra.mxu0 %v859
    %4315 = vmatprep.subr.bf16.mxu0 %v868
    %4316 = vmatpush1.bf16.msra.mxu0 %v867
    %4317 = vmatprep.subr.bf16.mxu0 %v876
    %4318 = vmatpush1.bf16.msra.mxu0 %v875
    %4319 = vmatprep.subr.bf16.mxu0 %v884
    %4320 = vmatpush1.bf16.msra.mxu0 %v883
    %4321 = vmatprep.subr.bf16.mxu0 %v892
    %4322 = vmatpush1.bf16.msra.mxu0 %v891
    %4323 = vmatprep.subr.bf16.mxu0 %v900
    %4324 = vmatpush1.bf16.msra.mxu0 %v899
    %4325 = vmatprep.subr.bf16.mxu0 %v908
    %4326 = vmatpush1.bf16.msra.mxu0 %v907
    %4327 = vmatprep.subr.bf16.mxu0 %v916
    %4328 = vmatpush1.bf16.msra.mxu0 %v915
    %4329 = vmatprep.subr.bf16.mxu0 %v924
    %4330 = vmatpush1.bf16.msra.mxu0 %v923
    %4331 = vmatprep.subr.bf16.mxu0 %v932
    %4332 = vmatpush1.bf16.msra.mxu0 %v931
    %4333 = vmatprep.subr.bf16.mxu0 %v940
    %4334 = vmatpush1.bf16.msra.mxu0 %v939
    %4335 = vmatprep.subr.bf16.mxu0 %v948
    %4336 = vmatpush1.bf16.msra.mxu0 %v947
    %4337 = vmatprep.subr.bf16.mxu0 %v956
    %4338 = vmatpush1.bf16.msra.mxu0 %v955
    %4339 = vmatprep.subr.bf16.mxu0 %v964
    %4340 = vmatpush1.bf16.msra.mxu0 %v963
    %4341 = vmatprep.subr.bf16.mxu0 %v972
    %4342 = vmatpush1.bf16.msra.mxu0 %v971
    %4343 = vmatprep.subr.bf16.mxu0 %v980
    %4344 = vmatpush1.bf16.msra.mxu0 %v979
    %4345 = vmatprep.mubr.bf16.mxu0 %v4310
    %4346 = vmatmul.mubr.bf16.gmra.mrb[0].mxu0 %v4309
    %v4347 = vpop.f32.mrb[0].mxu0
    %v4348 = vadd.f32 0.0, %v4347
    %v4349 = vpop.f32.mrb[0].mxu0
    %v4350 = vadd.f32 0.0, %v4349
    %v4351 = vpop.f32.mrb[0].mxu0
    %v4352 = vpop.f32.mrb[0].mxu0
    %4353 = vdwg.mxu0
    %4354 = vmatprep.subr.bf16.mxu0 %v862
    %4355 = vmatpush1.bf16.msra.mxu0 %v861
    %4356 = vmatprep.subr.bf16.mxu0 %v870
    %4357 = vmatpush1.bf16.msra.mxu0 %v869
    %4358 = vmatprep.subr.bf16.mxu0 %v878
    %4359 = vmatpush1.bf16.msra.mxu0 %v877
    %4360 = vmatprep.subr.bf16.mxu0 %v886
    %4361 = vmatpush1.bf16.msra.mxu0 %v885
    %4362 = vmatprep.subr.bf16.mxu0 %v894
    %4363 = vmatpush1.bf16.msra.mxu0 %v893
    %4364 = vmatprep.subr.bf16.mxu0 %v902
    %4365 = vmatpush1.bf16.msra.mxu0 %v901
    %4366 = vmatprep.subr.bf16.mxu0 %v910
    %4367 = vmatpush1.bf16.msra.mxu0 %v909
    %4368 = vmatprep.subr.bf16.mxu0 %v918
    %4369 = vmatpush1.bf16.msra.mxu0 %v917
    %4370 = vmatprep.subr.bf16.mxu0 %v926
    %4371 = vmatpush1.bf16.msra.mxu0 %v925
    %4372 = vmatprep.subr.bf16.mxu0 %v934
    %4373 = vmatpush1.bf16.msra.mxu0 %v933
    %4374 = vmatprep.subr.bf16.mxu0 %v942
    %4375 = vmatpush1.bf16.msra.mxu0 %v941
    %4376 = vmatprep.subr.bf16.mxu0 %v950
    %4377 = vmatpush1.bf16.msra.mxu0 %v949
    %4378 = vmatprep.subr.bf16.mxu0 %v958
    %4379 = vmatpush1.bf16.msra.mxu0 %v957
    %4380 = vmatprep.subr.bf16.mxu0 %v966
    %4381 = vmatpush1.bf16.msra.mxu0 %v965
    %4382 = vmatprep.subr.bf16.mxu0 %v974
    %4383 = vmatpush1.bf16.msra.mxu0 %v973
    %4384 = vmatprep.subr.bf16.mxu0 %v982
    %4385 = vmatpush1.bf16.msra.mxu0 %v981
    %4386 = vmatprep.mubr.bf16.mxu0 %v4310
    %4387 = vmatmul.mubr.bf16.gmra.mrb[0].mxu0 %v4309
    %v4388 = vpop.f32.mrb[0].mxu0
    %v4389 = vadd.f32 0.0, %v4388
    %v4390 = vpop.f32.mrb[0].mxu0
    %v4391 = vadd.f32 0.0, %v4390
    %v4392 = vpop.f32.mrb[0].mxu0
    %v4393 = vpop.f32.mrb[0].mxu0
    %4394 = vdwg.mxu0
    %4395 = vmatprep.subr.bf16.mxu0 %v864
    %4396 = vmatpush1.bf16.msra.mxu0 %v863
    %4397 = vmatprep.subr.bf16.mxu0 %v872
    %4398 = vmatpush1.bf16.msra.mxu0 %v871
    %4399 = vmatprep.subr.bf16.mxu0 %v880
    %4400 = vmatpush1.bf16.msra.mxu0 %v879
    %4401 = vmatprep.subr.bf16.mxu0 %v888
    %4402 = vmatpush1.bf16.msra.mxu0 %v887
    %4403 = vmatprep.subr.bf16.mxu0 %v896
    %4404 = vmatpush1.bf16.msra.mxu0 %v895
    %4405 = vmatprep.subr.bf16.mxu0 %v904
    %4406 = vmatpush1.bf16.msra.mxu0 %v903
    %4407 = vmatprep.subr.bf16.mxu0 %v912
    %4408 = vmatpush1.bf16.msra.mxu0 %v911
    %4409 = vmatprep.subr.bf16.mxu0 %v920
    %4410 = vmatpush1.bf16.msra.mxu0 %v919
    %4411 = vmatprep.subr.bf16.mxu0 %v928
    %4412 = vmatpush1.bf16.msra.mxu0 %v927
    %4413 = vmatprep.subr.bf16.mxu0 %v936
    %4414 = vmatpush1.bf16.msra.mxu0 %v935
    %4415 = vmatprep.subr.bf16.mxu0 %v944
    %4416 = vmatpush1.bf16.msra.mxu0 %v943
    %4417 = vmatprep.subr.bf16.mxu0 %v952
    %4418 = vmatpush1.bf16.msra.mxu0 %v951
    %4419 = vmatprep.subr.bf16.mxu0 %v960
    %4420 = vmatpush1.bf16.msra.mxu0 %v959
    %4421 = vmatprep.subr.bf16.mxu0 %v968
    %4422 = vmatpush1.bf16.msra.mxu0 %v967
    %4423 = vmatprep.subr.bf16.mxu0 %v976
    %4424 = vmatpush1.bf16.msra.mxu0 %v975
    %4425 = vmatprep.subr.bf16.mxu0 %v984
    %4426 = vmatpush1.bf16.msra.mxu0 %v983
    %4427 = vmatprep.mubr.bf16.mxu0 %v4310
    %4428 = vmatmul.mubr.bf16.gmra.mrb[0].mxu0 %v4309
    %v4429 = vpop.f32.mrb[0].mxu0
    %v4430 = vadd.f32 0.0, %v4429
    %v4431 = vpop.f32.mrb[0].mxu0
    %v4432 = vadd.f32 0.0, %v4431
    %v4433 = vpop.f32.mrb[0].mxu0
    %v4434 = vpop.f32.mrb[0].mxu0
    %4435 = vdwg.mxu0
    %4436 = vmatprep.subr.bf16.mxu0 %v866
    %4437 = vmatpush1.bf16.msra.mxu0 %v865
    %4438 = vmatprep.subr.bf16.mxu0 %v874
    %4439 = vmatpush1.bf16.msra.mxu0 %v873
    %4440 = vmatprep.subr.bf16.mxu0 %v882
    %4441 = vmatpush1.bf16.msra.mxu0 %v881
    %4442 = vmatprep.subr.bf16.mxu0 %v890
    %4443 = vmatpush1.bf16.msra.mxu0 %v889
    %4444 = vmatprep.subr.bf16.mxu0 %v898
    %4445 = vmatpush1.bf16.msra.mxu0 %v897
    %4446 = vmatprep.subr.bf16.mxu0 %v906
    %4447 = vmatpush1.bf16.msra.mxu0 %v905
    %4448 = vmatprep.subr.bf16.mxu0 %v914
    %4449 = vmatpush1.bf16.msra.mxu0 %v913
    %4450 = vmatprep.subr.bf16.mxu0 %v922
    %4451 = vmatpush1.bf16.msra.mxu0 %v921
    %4452 = vmatprep.subr.bf16.mxu0 %v930
    %4453 = vmatpush1.bf16.msra.mxu0 %v929
    %4454 = vmatprep.subr.bf16.mxu0 %v938
    %4455 = vmatpush1.bf16.msra.mxu0 %v937
    %4456 = vmatprep.subr.bf16.mxu0 %v946
    %4457 = vmatpush1.bf16.msra.mxu0 %v945
    %4458 = vmatprep.subr.bf16.mxu0 %v954
    %4459 = vmatpush1.bf16.msra.mxu0 %v953
    %4460 = vmatprep.subr.bf16.mxu0 %v962
    %4461 = vmatpush1.bf16.msra.mxu0 %v961
    %4462 = vmatprep.subr.bf16.mxu0 %v970
    %4463 = vmatpush1.bf16.msra.mxu0 %v969
    %4464 = vmatprep.subr.bf16.mxu0 %v978
    %4465 = vmatpush1.bf16.msra.mxu0 %v977
    %4466 = vmatprep.subr.bf16.mxu0 %v986
    %4467 = vmatpush1.bf16.msra.mxu0 %v985
    %4468 = vmatprep.mubr.bf16.mxu0 %v4310
    %4469 = vmatmul.mubr.bf16.gmra.mrb[0].mxu0 %v4309
    %v4470 = vpop.f32.mrb[0].mxu0
    %v4471 = vadd.f32 0.0, %v4470
    %v4472 = vpop.f32.mrb[0].mxu0
    %v4473 = vadd.f32 0.0, %v4472
    %v4474 = vpop.f32.mrb[0].mxu0
    %v4475 = vpop.f32.mrb[0].mxu0
    %4476 = vdwg.mxu0
    %v4477 = vadd.f32 %v4298, %v4348
    %v4478 = vadd.f32 %v4299, %v4350
    %v4479 = vadd.f32 %v4300, %v4389
    %v4480 = vadd.f32 %v4301, %v4391
    %v4481 = vadd.f32 %v4302, %v4430
    %v4482 = vadd.f32 %v4303, %v4432
    %v4483 = vadd.f32 %v4304, %v4471
    %v4484 = vadd.f32 %v4305, %v4473
    %v4485 = vmul.f32 %v4477, 0.5
    %v4486 = vmul.f32 %v4478, 0.5
    %v4487 = vtanh.pop %v4485
    %v4488 = vtanh.pop %v4486
    %v4489 = vmul.f32 %v4487, 0.5
    %v4490 = vmul.f32 %v4488, 0.5
    %v4491 = vadd.f32 %v4489, 0.5
    %v4492 = vadd.f32 %v4490, 0.5
    %v4493 = vmul.f32 %v4479, 0.5
    %v4494 = vmul.f32 %v4480, 0.5
    %v4495 = vtanh.pop %v4493
    %v4496 = vtanh.pop %v4494
    %v4497 = vmul.f32 %v4495, 0.5
    %v4498 = vmul.f32 %v4496, 0.5
    %v4499 = vadd.f32 %v4497, 0.5
    %v4500 = vadd.f32 %v4498, 0.5
    %v4501 = vtanh.pop %v4481
    %v4502 = vtanh.pop %v4482
    %v4503 = vmul.f32 %v4483, 0.5
    %v4504 = vmul.f32 %v4484, 0.5
    %v4505 = vtanh.pop %v4503
    %v4506 = vtanh.pop %v4504
    %v4507 = vmul.f32 %v4505, 0.5
    %v4508 = vmul.f32 %v4506, 0.5
    %v4509 = vadd.f32 %v4507, 0.5
    %v4510 = vadd.f32 %v4508, 0.5
    %v4511 = vmul.f32 %v4499, %v3889
    %v4512 = vmul.f32 %v4500, %v3890
    %v4513 = vmul.f32 %v4491, %v4501
    %v4514 = vmul.f32 %v4492, %v4502
    %v4515 = vadd.f32 %v4511, %v4513
    %v4516 = vadd.f32 %v4512, %v4514
    %v4517 = vtanh.pop %v4515
    %v4518 = vtanh.pop %v4516
    %v4519 = vmul.f32 %v4509, %v4517
    %v4520 = vmul.f32 %v4510, %v4518
    %v4521 = vpack.c.bf16 %v4519, %v4519
    %v4522 = vpack.c.bf16 %v4520, %v4520
    %v4525 = vunpack.c.l.b16 %v4521
    %v4526 = vunpack.c.l.b16 %v4522
    %v4527 = vpack.c.b16 %v4526, %v4525
    %4529 = vst [vmem:[#allocation4] sm:$0xff] %v4527
    %v4530 = vld [vmem:[#allocation4] sm:$0xff]
    %v4531 = vld [vmem:[#allocation4 + $0x8] sm:$0xff]
    %v4534 = vunpack.c.l.b16 %v4530
    %v4535 = vunpack.c.h.b16 %v4530
    %v4536 = vunpack.c.l.b16 %v4531
    %v4537 = vunpack.c.h.b16 %v4531
    %v4538 = vpack.c.b16 %v4534, %v4534
    %v4539 = vpack.c.b16 %v4535, %v4535
    %v4540 = vpack.c.b16 %v4536, %v4536
    %v4541 = vpack.c.b16 %v4537, %v4537
    %4546 = vmatprep.subr.bf16.mxu0 %v2158
    %4547 = vmatpush1.bf16.msra.mxu0 %v2157
    %4548 = vmatprep.subr.bf16.mxu0 %v2166
    %4549 = vmatpush1.bf16.msra.mxu0 %v2165
    %4550 = vmatprep.subr.bf16.mxu0 %v2174
    %4551 = vmatpush1.bf16.msra.mxu0 %v2173
    %4552 = vmatprep.subr.bf16.mxu0 %v2182
    %4553 = vmatpush1.bf16.msra.mxu0 %v2181
    %4554 = vmatprep.subr.bf16.mxu0 %v2190
    %4555 = vmatpush1.bf16.msra.mxu0 %v2189
    %4556 = vmatprep.subr.bf16.mxu0 %v2198
    %4557 = vmatpush1.bf16.msra.mxu0 %v2197
    %4558 = vmatprep.subr.bf16.mxu0 %v2206
    %4559 = vmatpush1.bf16.msra.mxu0 %v2205
    %4560 = vmatprep.subr.bf16.mxu0 %v2214
    %4561 = vmatpush1.bf16.msra.mxu0 %v2213
    %4562 = vmatprep.subr.bf16.mxu0 %v2222
    %4563 = vmatpush1.bf16.msra.mxu0 %v2221
    %4564 = vmatprep.subr.bf16.mxu0 %v2230
    %4565 = vmatpush1.bf16.msra.mxu0 %v2229
    %4566 = vmatprep.subr.bf16.mxu0 %v2238
    %4567 = vmatpush1.bf16.msra.mxu0 %v2237
    %4568 = vmatprep.subr.bf16.mxu0 %v2246
    %4569 = vmatpush1.bf16.msra.mxu0 %v2245
    %4570 = vmatprep.subr.bf16.mxu0 %v2254
    %4571 = vmatpush1.bf16.msra.mxu0 %v2253
    %4572 = vmatprep.subr.bf16.mxu0 %v2262
    %4573 = vmatpush1.bf16.msra.mxu0 %v2261
    %4574 = vmatprep.subr.bf16.mxu0 %v2270
    %4575 = vmatpush1.bf16.msra.mxu0 %v2269
    %4576 = vmatprep.subr.bf16.mxu0 %v2278
    %4577 = vmatpush1.bf16.msra.mxu0 %v2277
    %4578 = vmatprep.mubr.bf16.mxu0 %v4539
    %4579 = vmatmul.mubr.bf16.gmra.mrb[0].mxu0 %v4538
    %v4580 = vpop.f32.mrb[0].mxu0
    %v4581 = vadd.f32 %v1338, %v4580
    %v4582 = vpop.f32.mrb[0].mxu0
    %v4583 = vadd.f32 %v1342, %v4582
    %v4584 = vpop.f32.mrb[0].mxu0
    %v4585 = vpop.f32.mrb[0].mxu0
    %4586 = vdwg.mxu0
    %4587 = vmatprep.subr.bf16.mxu0 %v2286
    %4588 = vmatpush1.bf16.msra.mxu0 %v2285
    %4589 = vmatprep.subr.bf16.mxu0 %v2294
    %4590 = vmatpush1.bf16.msra.mxu0 %v2293
    %4591 = vmatprep.subr.bf16.mxu0 %v2302
    %4592 = vmatpush1.bf16.msra.mxu0 %v2301
    %4593 = vmatprep.subr.bf16.mxu0 %v2310
    %4594 = vmatpush1.bf16.msra.mxu0 %v2309
    %4595 = vmatprep.subr.bf16.mxu0 %v2318
    %4596 = vmatpush1.bf16.msra.mxu0 %v2317
    %4597 = vmatprep.subr.bf16.mxu0 %v2326
    %4598 = vmatpush1.bf16.msra.mxu0 %v2325
    %4599 = vmatprep.subr.bf16.mxu0 %v2334
    %4600 = vmatpush1.bf16.msra.mxu0 %v2333
    %4601 = vmatprep.subr.bf16.mxu0 %v2342
    %4602 = vmatpush1.bf16.msra.mxu0 %v2341
    %4603 = vmatprep.subr.bf16.mxu0 %v2350
    %4604 = vmatpush1.bf16.msra.mxu0 %v2349
    %4605 = vmatprep.subr.bf16.mxu0 %v2358
    %4606 = vmatpush1.bf16.msra.mxu0 %v2357
    %4607 = vmatprep.subr.bf16.mxu0 %v2366
    %4608 = vmatpush1.bf16.msra.mxu0 %v2365
    %4609 = vmatprep.subr.bf16.mxu0 %v2374
    %4610 = vmatpush1.bf16.msra.mxu0 %v2373
    %4611 = vmatprep.subr.bf16.mxu0 %v2382
    %4612 = vmatpush1.bf16.msra.mxu0 %v2381
    %4613 = vmatprep.subr.bf16.mxu0 %v2390
    %4614 = vmatpush1.bf16.msra.mxu0 %v2389
    %4615 = vmatprep.subr.bf16.mxu0 %v2398
    %4616 = vmatpush1.bf16.msra.mxu0 %v2397
    %4617 = vmatprep.subr.bf16.mxu0 %v2406
    %4618 = vmatpush1.bf16.msra.mxu0 %v2405
    %4619 = vmatprep.mubr.bf16.mxu0 %v4541
    %4620 = vmatmul.mubr.bf16.gmra.mrb[0].mxu0 %v4540
    %v4621 = vpop.f32.mrb[0].mxu0
    %v4622 = vadd.f32 %v4581, %v4621
    %v4623 = vpop.f32.mrb[0].mxu0
    %v4624 = vadd.f32 %v4583, %v4623
    %v4625 = vpop.f32.mrb[0].mxu0
    %v4626 = vpop.f32.mrb[0].mxu0
    %4627 = vdwg.mxu0
    %4628 = vmatprep.subr.bf16.mxu0 %v2160
    %4629 = vmatpush1.bf16.msra.mxu0 %v2159
    %4630 = vmatprep.subr.bf16.mxu0 %v2168
    %4631 = vmatpush1.bf16.msra.mxu0 %v2167
    %4632 = vmatprep.subr.bf16.mxu0 %v2176
    %4633 = vmatpush1.bf16.msra.mxu0 %v2175
    %4634 = vmatprep.subr.bf16.mxu0 %v2184
    %4635 = vmatpush1.bf16.msra.mxu0 %v2183
    %4636 = vmatprep.subr.bf16.mxu0 %v2192
    %4637 = vmatpush1.bf16.msra.mxu0 %v2191
    %4638 = vmatprep.subr.bf16.mxu0 %v2200
    %4639 = vmatpush1.bf16.msra.mxu0 %v2199
    %4640 = vmatprep.subr.bf16.mxu0 %v2208
    %4641 = vmatpush1.bf16.msra.mxu0 %v2207
    %4642 = vmatprep.subr.bf16.mxu0 %v2216
    %4643 = vmatpush1.bf16.msra.mxu0 %v2215
    %4644 = vmatprep.subr.bf16.mxu0 %v2224
    %4645 = vmatpush1.bf16.msra.mxu0 %v2223
    %4646 = vmatprep.subr.bf16.mxu0 %v2232
    %4647 = vmatpush1.bf16.msra.mxu0 %v2231
    %4648 = vmatprep.subr.bf16.mxu0 %v2240
    %4649 = vmatpush1.bf16.msra.mxu0 %v2239
    %4650 = vmatprep.subr.bf16.mxu0 %v2248
    %4651 = vmatpush1.bf16.msra.mxu0 %v2247
    %4652 = vmatprep.subr.bf16.mxu0 %v2256
    %4653 = vmatpush1.bf16.msra.mxu0 %v2255
    %4654 = vmatprep.subr.bf16.mxu0 %v2264
    %4655 = vmatpush1.bf16.msra.mxu0 %v2263
    %4656 = vmatprep.subr.bf16.mxu0 %v2272
    %4657 = vmatpush1.bf16.msra.mxu0 %v2271
    %4658 = vmatprep.subr.bf16.mxu0 %v2280
    %4659 = vmatpush1.bf16.msra.mxu0 %v2279
    %4660 = vmatprep.mubr.bf16.mxu0 %v4539
    %4661 = vmatmul.mubr.bf16.gmra.mrb[0].mxu0 %v4538
    %v4662 = vpop.f32.mrb[0].mxu0
    %v4663 = vadd.f32 %v1346, %v4662
    %v4664 = vpop.f32.mrb[0].mxu0
    %v4665 = vadd.f32 %v1350, %v4664
    %v4666 = vpop.f32.mrb[0].mxu0
    %v4667 = vpop.f32.mrb[0].mxu0
    %4668 = vdwg.mxu0
    %4669 = vmatprep.subr.bf16.mxu0 %v2288
    %4670 = vmatpush1.bf16.msra.mxu0 %v2287
    %4671 = vmatprep.subr.bf16.mxu0 %v2296
    %4672 = vmatpush1.bf16.msra.mxu0 %v2295
    %4673 = vmatprep.subr.bf16.mxu0 %v2304
    %4674 = vmatpush1.bf16.msra.mxu0 %v2303
    %4675 = vmatprep.subr.bf16.mxu0 %v2312
    %4676 = vmatpush1.bf16.msra.mxu0 %v2311
    %4677 = vmatprep.subr.bf16.mxu0 %v2320
    %4678 = vmatpush1.bf16.msra.mxu0 %v2319
    %4679 = vmatprep.subr.bf16.mxu0 %v2328
    %4680 = vmatpush1.bf16.msra.mxu0 %v2327
    %4681 = vmatprep.subr.bf16.mxu0 %v2336
    %4682 = vmatpush1.bf16.msra.mxu0 %v2335
    %4683 = vmatprep.subr.bf16.mxu0 %v2344
    %4684 = vmatpush1.bf16.msra.mxu0 %v2343
    %4685 = vmatprep.subr.bf16.mxu0 %v2352
    %4686 = vmatpush1.bf16.msra.mxu0 %v2351
    %4687 = vmatprep.subr.bf16.mxu0 %v2360
    %4688 = vmatpush1.bf16.msra.mxu0 %v2359
    %4689 = vmatprep.subr.bf16.mxu0 %v2368
    %4690 = vmatpush1.bf16.msra.mxu0 %v2367
    %4691 = vmatprep.subr.bf16.mxu0 %v2376
    %4692 = vmatpush1.bf16.msra.mxu0 %v2375
    %4693 = vmatprep.subr.bf16.mxu0 %v2384
    %4694 = vmatpush1.bf16.msra.mxu0 %v2383
    %4695 = vmatprep.subr.bf16.mxu0 %v2392
    %4696 = vmatpush1.bf16.msra.mxu0 %v2391
    %4697 = vmatprep.subr.bf16.mxu0 %v2400
    %4698 = vmatpush1.bf16.msra.mxu0 %v2399
    %4699 = vmatprep.subr.bf16.mxu0 %v2408
    %4700 = vmatpush1.bf16.msra.mxu0 %v2407
    %4701 = vmatprep.mubr.bf16.mxu0 %v4541
    %4702 = vmatmul.mubr.bf16.gmra.mrb[0].mxu0 %v4540
    %v4703 = vpop.f32.mrb[0].mxu0
    %v4704 = vadd.f32 %v4663, %v4703
    %v4705 = vpop.f32.mrb[0].mxu0
    %v4706 = vadd.f32 %v4665, %v4705
    %v4707 = vpop.f32.mrb[0].mxu0
    %v4708 = vpop.f32.mrb[0].mxu0
    %4709 = vdwg.mxu0
    %4710 = vmatprep.subr.bf16.mxu0 %v2162
    %4711 = vmatpush1.bf16.msra.mxu0 %v2161
    %4712 = vmatprep.subr.bf16.mxu0 %v2170
    %4713 = vmatpush1.bf16.msra.mxu0 %v2169
    %4714 = vmatprep.subr.bf16.mxu0 %v2178
    %4715 = vmatpush1.bf16.msra.mxu0 %v2177
    %4716 = vmatprep.subr.bf16.mxu0 %v2186
    %4717 = vmatpush1.bf16.msra.mxu0 %v2185
    %4718 = vmatprep.subr.bf16.mxu0 %v2194
    %4719 = vmatpush1.bf16.msra.mxu0 %v2193
    %4720 = vmatprep.subr.bf16.mxu0 %v2202
    %4721 = vmatpush1.bf16.msra.mxu0 %v2201
    %4722 = vmatprep.subr.bf16.mxu0 %v2210
    %4723 = vmatpush1.bf16.msra.mxu0 %v2209
    %4724 = vmatprep.subr.bf16.mxu0 %v2218
    %4725 = vmatpush1.bf16.msra.mxu0 %v2217
    %4726 = vmatprep.subr.bf16.mxu0 %v2226
    %4727 = vmatpush1.bf16.msra.mxu0 %v2225
    %4728 = vmatprep.subr.bf16.mxu0 %v2234
    %4729 = vmatpush1.bf16.msra.mxu0 %v2233
    %4730 = vmatprep.subr.bf16.mxu0 %v2242
    %4731 = vmatpush1.bf16.msra.mxu0 %v2241
    %4732 = vmatprep.subr.bf16.mxu0 %v2250
    %4733 = vmatpush1.bf16.msra.mxu0 %v2249
    %4734 = vmatprep.subr.bf16.mxu0 %v2258
    %4735 = vmatpush1.bf16.msra.mxu0 %v2257
    %4736 = vmatprep.subr.bf16.mxu0 %v2266
    %4737 = vmatpush1.bf16.msra.mxu0 %v2265
    %4738 = vmatprep.subr.bf16.mxu0 %v2274
    %4739 = vmatpush1.bf16.msra.mxu0 %v2273
    %4740 = vmatprep.subr.bf16.mxu0 %v2282
    %4741 = vmatpush1.bf16.msra.mxu0 %v2281
    %4742 = vmatprep.mubr.bf16.mxu0 %v4539
    %4743 = vmatmul.mubr.bf16.gmra.mrb[0].mxu0 %v4538
    %v4744 = vpop.f32.mrb[0].mxu0
    %v4745 = vadd.f32 %v1354, %v4744
    %v4746 = vpop.f32.mrb[0].mxu0
    %v4747 = vadd.f32 %v1358, %v4746
    %v4748 = vpop.f32.mrb[0].mxu0
    %v4749 = vpop.f32.mrb[0].mxu0
    %4750 = vdwg.mxu0
    %4751 = vmatprep.subr.bf16.mxu0 %v2290
    %4752 = vmatpush1.bf16.msra.mxu0 %v2289
    %4753 = vmatprep.subr.bf16.mxu0 %v2298
    %4754 = vmatpush1.bf16.msra.mxu0 %v2297
    %4755 = vmatprep.subr.bf16.mxu0 %v2306
    %4756 = vmatpush1.bf16.msra.mxu0 %v2305
    %4757 = vmatprep.subr.bf16.mxu0 %v2314
    %4758 = vmatpush1.bf16.msra.mxu0 %v2313
    %4759 = vmatprep.subr.bf16.mxu0 %v2322
    %4760 = vmatpush1.bf16.msra.mxu0 %v2321
    %4761 = vmatprep.subr.bf16.mxu0 %v2330
    %4762 = vmatpush1.bf16.msra.mxu0 %v2329
    %4763 = vmatprep.subr.bf16.mxu0 %v2338
    %4764 = vmatpush1.bf16.msra.mxu0 %v2337
    %4765 = vmatprep.subr.bf16.mxu0 %v2346
    %4766 = vmatpush1.bf16.msra.mxu0 %v2345
    %4767 = vmatprep.subr.bf16.mxu0 %v2354
    %4768 = vmatpush1.bf16.msra.mxu0 %v2353
    %4769 = vmatprep.subr.bf16.mxu0 %v2362
    %4770 = vmatpush1.bf16.msra.mxu0 %v2361
    %4771 = vmatprep.subr.bf16.mxu0 %v2370
    %4772 = vmatpush1.bf16.msra.mxu0 %v2369
    %4773 = vmatprep.subr.bf16.mxu0 %v2378
    %4774 = vmatpush1.bf16.msra.mxu0 %v2377
    %4775 = vmatprep.subr.bf16.mxu0 %v2386
    %4776 = vmatpush1.bf16.msra.mxu0 %v2385
    %4777 = vmatprep.subr.bf16.mxu0 %v2394
    %4778 = vmatpush1.bf16.msra.mxu0 %v2393
    %4779 = vmatprep.subr.bf16.mxu0 %v2402
    %4780 = vmatpush1.bf16.msra.mxu0 %v2401
    %4781 = vmatprep.subr.bf16.mxu0 %v2410
    %4782 = vmatpush1.bf16.msra.mxu0 %v2409
    %4783 = vmatprep.mubr.bf16.mxu0 %v4541
    %4784 = vmatmul.mubr.bf16.gmra.mrb[0].mxu0 %v4540
    %v4785 = vpop.f32.mrb[0].mxu0
    %v4786 = vadd.f32 %v4745, %v4785
    %v4787 = vpop.f32.mrb[0].mxu0
    %v4788 = vadd.f32 %v4747, %v4787
    %v4789 = vpop.f32.mrb[0].mxu0
    %v4790 = vpop.f32.mrb[0].mxu0
    %4791 = vdwg.mxu0
    %4792 = vmatprep.subr.bf16.mxu0 %v2164
    %4793 = vmatpush1.bf16.msra.mxu0 %v2163
    %4794 = vmatprep.subr.bf16.mxu0 %v2172
    %4795 = vmatpush1.bf16.msra.mxu0 %v2171
    %4796 = vmatprep.subr.bf16.mxu0 %v2180
    %4797 = vmatpush1.bf16.msra.mxu0 %v2179
    %4798 = vmatprep.subr.bf16.mxu0 %v2188
    %4799 = vmatpush1.bf16.msra.mxu0 %v2187
    %4800 = vmatprep.subr.bf16.mxu0 %v2196
    %4801 = vmatpush1.bf16.msra.mxu0 %v2195
    %4802 = vmatprep.subr.bf16.mxu0 %v2204
    %4803 = vmatpush1.bf16.msra.mxu0 %v2203
    %4804 = vmatprep.subr.bf16.mxu0 %v2212
    %4805 = vmatpush1.bf16.msra.mxu0 %v2211
    %4806 = vmatprep.subr.bf16.mxu0 %v2220
    %4807 = vmatpush1.bf16.msra.mxu0 %v2219
    %4808 = vmatprep.subr.bf16.mxu0 %v2228
    %4809 = vmatpush1.bf16.msra.mxu0 %v2227
    %4810 = vmatprep.subr.bf16.mxu0 %v2236
    %4811 = vmatpush1.bf16.msra.mxu0 %v2235
    %4812 = vmatprep.subr.bf16.mxu0 %v2244
    %4813 = vmatpush1.bf16.msra.mxu0 %v2243
    %4814 = vmatprep.subr.bf16.mxu0 %v2252
    %4815 = vmatpush1.bf16.msra.mxu0 %v2251
    %4816 = vmatprep.subr.bf16.mxu0 %v2260
    %4817 = vmatpush1.bf16.msra.mxu0 %v2259
    %4818 = vmatprep.subr.bf16.mxu0 %v2268
    %4819 = vmatpush1.bf16.msra.mxu0 %v2267
    %4820 = vmatprep.subr.bf16.mxu0 %v2276
    %4821 = vmatpush1.bf16.msra.mxu0 %v2275
    %4822 = vmatprep.subr.bf16.mxu0 %v2284
    %4823 = vmatpush1.bf16.msra.mxu0 %v2283
    %4824 = vmatprep.mubr.bf16.mxu0 %v4539
    %4825 = vmatmul.mubr.bf16.gmra.mrb[0].mxu0 %v4538
    %v4826 = vpop.f32.mrb[0].mxu0
    %v4827 = vadd.f32 %v1362, %v4826
    %v4828 = vpop.f32.mrb[0].mxu0
    %v4829 = vadd.f32 %v1366, %v4828
    %v4830 = vpop.f32.mrb[0].mxu0
    %v4831 = vpop.f32.mrb[0].mxu0
    %4832 = vdwg.mxu0
    %4833 = vmatprep.subr.bf16.mxu0 %v2292
    %4834 = vmatpush1.bf16.msra.mxu0 %v2291
    %4835 = vmatprep.subr.bf16.mxu0 %v2300
    %4836 = vmatpush1.bf16.msra.mxu0 %v2299
    %4837 = vmatprep.subr.bf16.mxu0 %v2308
    %4838 = vmatpush1.bf16.msra.mxu0 %v2307
    %4839 = vmatprep.subr.bf16.mxu0 %v2316
    %4840 = vmatpush1.bf16.msra.mxu0 %v2315
    %4841 = vmatprep.subr.bf16.mxu0 %v2324
    %4842 = vmatpush1.bf16.msra.mxu0 %v2323
    %4843 = vmatprep.subr.bf16.mxu0 %v2332
    %4844 = vmatpush1.bf16.msra.mxu0 %v2331
    %4845 = vmatprep.subr.bf16.mxu0 %v2340
    %4846 = vmatpush1.bf16.msra.mxu0 %v2339
    %4847 = vmatprep.subr.bf16.mxu0 %v2348
    %4848 = vmatpush1.bf16.msra.mxu0 %v2347
    %4849 = vmatprep.subr.bf16.mxu0 %v2356
    %4850 = vmatpush1.bf16.msra.mxu0 %v2355
    %4851 = vmatprep.subr.bf16.mxu0 %v2364
    %4852 = vmatpush1.bf16.msra.mxu0 %v2363
    %4853 = vmatprep.subr.bf16.mxu0 %v2372
    %4854 = vmatpush1.bf16.msra.mxu0 %v2371
    %4855 = vmatprep.subr.bf16.mxu0 %v2380
    %4856 = vmatpush1.bf16.msra.mxu0 %v2379
    %4857 = vmatprep.subr.bf16.mxu0 %v2388
    %4858 = vmatpush1.bf16.msra.mxu0 %v2387
    %4859 = vmatprep.subr.bf16.mxu0 %v2396
    %4860 = vmatpush1.bf16.msra.mxu0 %v2395
    %4861 = vmatprep.subr.bf16.mxu0 %v2404
    %4862 = vmatpush1.bf16.msra.mxu0 %v2403
    %4863 = vmatprep.subr.bf16.mxu0 %v2412
    %4864 = vmatpush1.bf16.msra.mxu0 %v2411
    %4865 = vmatprep.mubr.bf16.mxu0 %v4541
    %4866 = vmatmul.mubr.bf16.gmra.mrb[0].mxu0 %v4540
    %v4867 = vpop.f32.mrb[0].mxu0
    %v4868 = vadd.f32 %v4827, %v4867
    %v4869 = vpop.f32.mrb[0].mxu0
    %v4870 = vadd.f32 %v4829, %v4869
    %v4871 = vpop.f32.mrb[0].mxu0
    %v4872 = vpop.f32.mrb[0].mxu0
    %4873 = vdwg.mxu0
    %v4874 = vmul.f32 %v4622, 0.5
    %v4875 = vmul.f32 %v4624, 0.5
    %v4876 = vtanh.pop %v4874
    %v4877 = vtanh.pop %v4875
    %v4878 = vmul.f32 %v4876, 0.5
    %v4879 = vmul.f32 %v4877, 0.5
    %v4880 = vadd.f32 %v4878, 0.5
    %v4881 = vadd.f32 %v4879, 0.5
    %v4882 = vmul.f32 %v4704, 0.5
    %v4883 = vmul.f32 %v4706, 0.5
    %v4884 = vtanh.pop %v4882
    %v4885 = vtanh.pop %v4883
    %v4886 = vmul.f32 %v4884, 0.5
    %v4887 = vmul.f32 %v4885, 0.5
    %v4888 = vadd.f32 %v4886, 0.5
    %v4889 = vadd.f32 %v4887, 0.5
    %v4890 = vtanh.pop %v4786
    %v4891 = vtanh.pop %v4788
    %v4892 = vmul.f32 %v4868, 0.5
    %v4893 = vmul.f32 %v4870, 0.5
    %v4894 = vtanh.pop %v4892
    %v4895 = vtanh.pop %v4893
    %v4896 = vmul.f32 %v4894, 0.5
    %v4897 = vmul.f32 %v4895, 0.5
    %v4898 = vadd.f32 %v4896, 0.5
    %v4899 = vadd.f32 %v4897, 0.5
    %v4900 = vmul.f32 %v4888, %v4278
    %v4901 = vmul.f32 %v4889, %v4279
    %v4902 = vmul.f32 %v4880, %v4890
    %v4903 = vmul.f32 %v4881, %v4891
    %v4904 = vadd.f32 %v4900, %v4902
    %v4905 = vadd.f32 %v4901, %v4903
    %v4906 = vtanh.pop %v4904
    %v4907 = vtanh.pop %v4905
    %v4908 = vmul.f32 %v4898, %v4906
    %v4909 = vmul.f32 %v4899, %v4907
    %v4910 = vpack.c.bf16 %v4908, %v4908
    %v4911 = vpack.c.bf16 %v4909, %v4909
    %v4914 = vunpack.c.l.b16 %v4910
    %v4915 = vunpack.c.l.b16 %v4911
    %v4916 = vpack.c.b16 %v4915, %v4914
    %4918 = vst [vmem:[#allocation4 + $0x8] sm:$0xff] %v4916
    %s4919 = scalar_lea.vmem [#allocation11], 48
    %4920 = vst [vmem:[%s4919] sm:$0xff] %v4908
    %4921 = vst [vmem:[%s4919 + $0x8] sm:$0xff] %v4909
    %v4922 = vld [vmem:[#allocation4] sm:$0xff]
    %s4923 = scalar_lea.vmem [#allocation5], 256
    %v4924 = vld [vmem:[%s4923] sm:$0xff]
    %v4925 = vld [vmem:[%s4923 + $0x8] sm:$0xff]
    %v4926 = vld [vmem:[%s4923 + $0x10] sm:$0xff]
    %v4927 = vld [vmem:[%s4923 + $0x18] sm:$0xff]
    %v4928 = vld [vmem:[%s4923 + $0x20] sm:$0xff]
    %v4929 = vld [vmem:[%s4923 + $0x28] sm:$0xff]
    %v4930 = vld [vmem:[%s4923 + $0x30] sm:$0xff]
    %v4931 = vld [vmem:[%s4923 + $0x38] sm:$0xff]
    %v4933 = vunpack.c.l.b16 %v4922
    %v4934 = vunpack.c.h.b16 %v4922
    %v4935 = vpack.c.b16 %v4933, %v4933
    %v4936 = vpack.c.b16 %v4934, %v4934
    %4939 = vmatprep.subr.bf16.mxu0 %v860
    %4940 = vmatpush1.bf16.msra.mxu0 %v859
    %4941 = vmatprep.subr.bf16.mxu0 %v868
    %4942 = vmatpush1.bf16.msra.mxu0 %v867
    %4943 = vmatprep.subr.bf16.mxu0 %v876
    %4944 = vmatpush1.bf16.msra.mxu0 %v875
    %4945 = vmatprep.subr.bf16.mxu0 %v884
    %4946 = vmatpush1.bf16.msra.mxu0 %v883
    %4947 = vmatprep.subr.bf16.mxu0 %v892
    %4948 = vmatpush1.bf16.msra.mxu0 %v891
    %4949 = vmatprep.subr.bf16.mxu0 %v900
    %4950 = vmatpush1.bf16.msra.mxu0 %v899
    %4951 = vmatprep.subr.bf16.mxu0 %v908
    %4952 = vmatpush1.bf16.msra.mxu0 %v907
    %4953 = vmatprep.subr.bf16.mxu0 %v916
    %4954 = vmatpush1.bf16.msra.mxu0 %v915
    %4955 = vmatprep.subr.bf16.mxu0 %v924
    %4956 = vmatpush1.bf16.msra.mxu0 %v923
    %4957 = vmatprep.subr.bf16.mxu0 %v932
    %4958 = vmatpush1.bf16.msra.mxu0 %v931
    %4959 = vmatprep.subr.bf16.mxu0 %v940
    %4960 = vmatpush1.bf16.msra.mxu0 %v939
    %4961 = vmatprep.subr.bf16.mxu0 %v948
    %4962 = vmatpush1.bf16.msra.mxu0 %v947
    %4963 = vmatprep.subr.bf16.mxu0 %v956
    %4964 = vmatpush1.bf16.msra.mxu0 %v955
    %4965 = vmatprep.subr.bf16.mxu0 %v964
    %4966 = vmatpush1.bf16.msra.mxu0 %v963
    %4967 = vmatprep.subr.bf16.mxu0 %v972
    %4968 = vmatpush1.bf16.msra.mxu0 %v971
    %4969 = vmatprep.subr.bf16.mxu0 %v980
    %4970 = vmatpush1.bf16.msra.mxu0 %v979
    %4971 = vmatprep.mubr.bf16.mxu0 %v4936
    %4972 = vmatmul.mubr.bf16.gmra.mrb[0].mxu0 %v4935
    %v4973 = vpop.f32.mrb[0].mxu0
    %v4974 = vadd.f32 0.0, %v4973
    %v4975 = vpop.f32.mrb[0].mxu0
    %v4976 = vadd.f32 0.0, %v4975
    %v4977 = vpop.f32.mrb[0].mxu0
    %v4978 = vpop.f32.mrb[0].mxu0
    %4979 = vdwg.mxu0
    %4980 = vmatprep.subr.bf16.mxu0 %v862
    %4981 = vmatpush1.bf16.msra.mxu0 %v861
    %4982 = vmatprep.subr.bf16.mxu0 %v870
    %4983 = vmatpush1.bf16.msra.mxu0 %v869
    %4984 = vmatprep.subr.bf16.mxu0 %v878
    %4985 = vmatpush1.bf16.msra.mxu0 %v877
    %4986 = vmatprep.subr.bf16.mxu0 %v886
    %4987 = vmatpush1.bf16.msra.mxu0 %v885
    %4988 = vmatprep.subr.bf16.mxu0 %v894
    %4989 = vmatpush1.bf16.msra.mxu0 %v893
    %4990 = vmatprep.subr.bf16.mxu0 %v902
    %4991 = vmatpush1.bf16.msra.mxu0 %v901
    %4992 = vmatprep.subr.bf16.mxu0 %v910
    %4993 = vmatpush1.bf16.msra.mxu0 %v909
    %4994 = vmatprep.subr.bf16.mxu0 %v918
    %4995 = vmatpush1.bf16.msra.mxu0 %v917
    %4996 = vmatprep.subr.bf16.mxu0 %v926
    %4997 = vmatpush1.bf16.msra.mxu0 %v925
    %4998 = vmatprep.subr.bf16.mxu0 %v934
    %4999 = vmatpush1.bf16.msra.mxu0 %v933
    %5000 = vmatprep.subr.bf16.mxu0 %v942
    %5001 = vmatpush1.bf16.msra.mxu0 %v941
    %5002 = vmatprep.subr.bf16.mxu0 %v950
    %5003 = vmatpush1.bf16.msra.mxu0 %v949
    %5004 = vmatprep.subr.bf16.mxu0 %v958
    %5005 = vmatpush1.bf16.msra.mxu0 %v957
    %5006 = vmatprep.subr.bf16.mxu0 %v966
    %5007 = vmatpush1.bf16.msra.mxu0 %v965
    %5008 = vmatprep.subr.bf16.mxu0 %v974
    %5009 = vmatpush1.bf16.msra.mxu0 %v973
    %5010 = vmatprep.subr.bf16.mxu0 %v982
    %5011 = vmatpush1.bf16.msra.mxu0 %v981
    %5012 = vmatprep.mubr.bf16.mxu0 %v4936
    %5013 = vmatmul.mubr.bf16.gmra.mrb[0].mxu0 %v4935
    %v5014 = vpop.f32.mrb[0].mxu0
    %v5015 = vadd.f32 0.0, %v5014
    %v5016 = vpop.f32.mrb[0].mxu0
    %v5017 = vadd.f32 0.0, %v5016
    %v5018 = vpop.f32.mrb[0].mxu0
    %v5019 = vpop.f32.mrb[0].mxu0
    %5020 = vdwg.mxu0
    %5021 = vmatprep.subr.bf16.mxu0 %v864
    %5022 = vmatpush1.bf16.msra.mxu0 %v863
    %5023 = vmatprep.subr.bf16.mxu0 %v872
    %5024 = vmatpush1.bf16.msra.mxu0 %v871
    %5025 = vmatprep.subr.bf16.mxu0 %v880
    %5026 = vmatpush1.bf16.msra.mxu0 %v879
    %5027 = vmatprep.subr.bf16.mxu0 %v888
    %5028 = vmatpush1.bf16.msra.mxu0 %v887
    %5029 = vmatprep.subr.bf16.mxu0 %v896
    %5030 = vmatpush1.bf16.msra.mxu0 %v895
    %5031 = vmatprep.subr.bf16.mxu0 %v904
    %5032 = vmatpush1.bf16.msra.mxu0 %v903
    %5033 = vmatprep.subr.bf16.mxu0 %v912
    %5034 = vmatpush1.bf16.msra.mxu0 %v911
    %5035 = vmatprep.subr.bf16.mxu0 %v920
    %5036 = vmatpush1.bf16.msra.mxu0 %v919
    %5037 = vmatprep.subr.bf16.mxu0 %v928
    %5038 = vmatpush1.bf16.msra.mxu0 %v927
    %5039 = vmatprep.subr.bf16.mxu0 %v936
    %5040 = vmatpush1.bf16.msra.mxu0 %v935
    %5041 = vmatprep.subr.bf16.mxu0 %v944
    %5042 = vmatpush1.bf16.msra.mxu0 %v943
    %5043 = vmatprep.subr.bf16.mxu0 %v952
    %5044 = vmatpush1.bf16.msra.mxu0 %v951
    %5045 = vmatprep.subr.bf16.mxu0 %v960
    %5046 = vmatpush1.bf16.msra.mxu0 %v959
    %5047 = vmatprep.subr.bf16.mxu0 %v968
    %5048 = vmatpush1.bf16.msra.mxu0 %v967
    %5049 = vmatprep.subr.bf16.mxu0 %v976
    %5050 = vmatpush1.bf16.msra.mxu0 %v975
    %5051 = vmatprep.subr.bf16.mxu0 %v984
    %5052 = vmatpush1.bf16.msra.mxu0 %v983
    %5053 = vmatprep.mubr.bf16.mxu0 %v4936
    %5054 = vmatmul.mubr.bf16.gmra.mrb[0].mxu0 %v4935
    %v5055 = vpop.f32.mrb[0].mxu0
    %v5056 = vadd.f32 0.0, %v5055
    %v5057 = vpop.f32.mrb[0].mxu0
    %v5058 = vadd.f32 0.0, %v5057
    %v5059 = vpop.f32.mrb[0].mxu0
    %v5060 = vpop.f32.mrb[0].mxu0
    %5061 = vdwg.mxu0
    %5062 = vmatprep.subr.bf16.mxu0 %v866
    %5063 = vmatpush1.bf16.msra.mxu0 %v865
    %5064 = vmatprep.subr.bf16.mxu0 %v874
    %5065 = vmatpush1.bf16.msra.mxu0 %v873
    %5066 = vmatprep.subr.bf16.mxu0 %v882
    %5067 = vmatpush1.bf16.msra.mxu0 %v881
    %5068 = vmatprep.subr.bf16.mxu0 %v890
    %5069 = vmatpush1.bf16.msra.mxu0 %v889
    %5070 = vmatprep.subr.bf16.mxu0 %v898
    %5071 = vmatpush1.bf16.msra.mxu0 %v897
    %5072 = vmatprep.subr.bf16.mxu0 %v906
    %5073 = vmatpush1.bf16.msra.mxu0 %v905
    %5074 = vmatprep.subr.bf16.mxu0 %v914
    %5075 = vmatpush1.bf16.msra.mxu0 %v913
    %5076 = vmatprep.subr.bf16.mxu0 %v922
    %5077 = vmatpush1.bf16.msra.mxu0 %v921
    %5078 = vmatprep.subr.bf16.mxu0 %v930
    %5079 = vmatpush1.bf16.msra.mxu0 %v929
    %5080 = vmatprep.subr.bf16.mxu0 %v938
    %5081 = vmatpush1.bf16.msra.mxu0 %v937
    %5082 = vmatprep.subr.bf16.mxu0 %v946
    %5083 = vmatpush1.bf16.msra.mxu0 %v945
    %5084 = vmatprep.subr.bf16.mxu0 %v954
    %5085 = vmatpush1.bf16.msra.mxu0 %v953
    %5086 = vmatprep.subr.bf16.mxu0 %v962
    %5087 = vmatpush1.bf16.msra.mxu0 %v961
    %5088 = vmatprep.subr.bf16.mxu0 %v970
    %5089 = vmatpush1.bf16.msra.mxu0 %v969
    %5090 = vmatprep.subr.bf16.mxu0 %v978
    %5091 = vmatpush1.bf16.msra.mxu0 %v977
    %5092 = vmatprep.subr.bf16.mxu0 %v986
    %5093 = vmatpush1.bf16.msra.mxu0 %v985
    %5094 = vmatprep.mubr.bf16.mxu0 %v4936
    %5095 = vmatmul.mubr.bf16.gmra.mrb[0].mxu0 %v4935
    %v5096 = vpop.f32.mrb[0].mxu0
    %v5097 = vadd.f32 0.0, %v5096
    %v5098 = vpop.f32.mrb[0].mxu0
    %v5099 = vadd.f32 0.0, %v5098
    %v5100 = vpop.f32.mrb[0].mxu0
    %v5101 = vpop.f32.mrb[0].mxu0
    %5102 = vdwg.mxu0
    %v5103 = vadd.f32 %v4924, %v4974
    %v5104 = vadd.f32 %v4925, %v4976
    %v5105 = vadd.f32 %v4926, %v5015
    %v5106 = vadd.f32 %v4927, %v5017
    %v5107 = vadd.f32 %v4928, %v5056
    %v5108 = vadd.f32 %v4929, %v5058
    %v5109 = vadd.f32 %v4930, %v5097
    %v5110 = vadd.f32 %v4931, %v5099
    %v5111 = vmul.f32 %v5103, 0.5
    %v5112 = vmul.f32 %v5104, 0.5
    %v5113 = vtanh.pop %v5111
    %v5114 = vtanh.pop %v5112
    %v5115 = vmul.f32 %v5113, 0.5
    %v5116 = vmul.f32 %v5114, 0.5
    %v5117 = vadd.f32 %v5115, 0.5
    %v5118 = vadd.f32 %v5116, 0.5
    %v5119 = vmul.f32 %v5105, 0.5
    %v5120 = vmul.f32 %v5106, 0.5
    %v5121 = vtanh.pop %v5119
    %v5122 = vtanh.pop %v5120
    %v5123 = vmul.f32 %v5121, 0.5
    %v5124 = vmul.f32 %v5122, 0.5
    %v5125 = vadd.f32 %v5123, 0.5
    %v5126 = vadd.f32 %v5124, 0.5
    %v5127 = vtanh.pop %v5107
    %v5128 = vtanh.pop %v5108
    %v5129 = vmul.f32 %v5109, 0.5
    %v5130 = vmul.f32 %v5110, 0.5
    %v5131 = vtanh.pop %v5129
    %v5132 = vtanh.pop %v5130
    %v5133 = vmul.f32 %v5131, 0.5
    %v5134 = vmul.f32 %v5132, 0.5
    %v5135 = vadd.f32 %v5133, 0.5
    %v5136 = vadd.f32 %v5134, 0.5
    %v5137 = vmul.f32 %v5125, %v4515
    %v5138 = vmul.f32 %v5126, %v4516
    %v5139 = vmul.f32 %v5117, %v5127
    %v5140 = vmul.f32 %v5118, %v5128
    %v5141 = vadd.f32 %v5137, %v5139
    %v5142 = vadd.f32 %v5138, %v5140
    %v5143 = vtanh.pop %v5141
    %v5144 = vtanh.pop %v5142
    %v5145 = vmul.f32 %v5135, %v5143
    %v5146 = vmul.f32 %v5136, %v5144
    %v5147 = vpack.c.bf16 %v5145, %v5145
    %v5148 = vpack.c.bf16 %v5146, %v5146
    %v5151 = vunpack.c.l.b16 %v5147
    %v5152 = vunpack.c.l.b16 %v5148
    %v5153 = vpack.c.b16 %v5152, %v5151
    %5155 = vst [vmem:[#allocation4] sm:$0xff] %v5153
    %v5156 = vld [vmem:[#allocation4] sm:$0xff]
    %v5157 = vld [vmem:[#allocation4 + $0x8] sm:$0xff]
    %v5160 = vunpack.c.l.b16 %v5156
    %v5161 = vunpack.c.h.b16 %v5156
    %v5162 = vunpack.c.l.b16 %v5157
    %v5163 = vunpack.c.h.b16 %v5157
    %v5164 = vpack.c.b16 %v5160, %v5160
    %v5165 = vpack.c.b16 %v5161, %v5161
    %v5166 = vpack.c.b16 %v5162, %v5162
    %v5167 = vpack.c.b16 %v5163, %v5163
    %5172 = vmatprep.subr.bf16.mxu0 %v2158
    %5173 = vmatpush1.bf16.msra.mxu0 %v2157
    %5174 = vmatprep.subr.bf16.mxu0 %v2166
    %5175 = vmatpush1.bf16.msra.mxu0 %v2165
    %5176 = vmatprep.subr.bf16.mxu0 %v2174
    %5177 = vmatpush1.bf16.msra.mxu0 %v2173
    %5178 = vmatprep.subr.bf16.mxu0 %v2182
    %5179 = vmatpush1.bf16.msra.mxu0 %v2181
    %5180 = vmatprep.subr.bf16.mxu0 %v2190
    %5181 = vmatpush1.bf16.msra.mxu0 %v2189
    %5182 = vmatprep.subr.bf16.mxu0 %v2198
    %5183 = vmatpush1.bf16.msra.mxu0 %v2197
    %5184 = vmatprep.subr.bf16.mxu0 %v2206
    %5185 = vmatpush1.bf16.msra.mxu0 %v2205
    %5186 = vmatprep.subr.bf16.mxu0 %v2214
    %5187 = vmatpush1.bf16.msra.mxu0 %v2213
    %5188 = vmatprep.subr.bf16.mxu0 %v2222
    %5189 = vmatpush1.bf16.msra.mxu0 %v2221
    %5190 = vmatprep.subr.bf16.mxu0 %v2230
    %5191 = vmatpush1.bf16.msra.mxu0 %v2229
    %5192 = vmatprep.subr.bf16.mxu0 %v2238
    %5193 = vmatpush1.bf16.msra.mxu0 %v2237
    %5194 = vmatprep.subr.bf16.mxu0 %v2246
    %5195 = vmatpush1.bf16.msra.mxu0 %v2245
    %5196 = vmatprep.subr.bf16.mxu0 %v2254
    %5197 = vmatpush1.bf16.msra.mxu0 %v2253
    %5198 = vmatprep.subr.bf16.mxu0 %v2262
    %5199 = vmatpush1.bf16.msra.mxu0 %v2261
    %5200 = vmatprep.subr.bf16.mxu0 %v2270
    %5201 = vmatpush1.bf16.msra.mxu0 %v2269
    %5202 = vmatprep.subr.bf16.mxu0 %v2278
    %5203 = vmatpush1.bf16.msra.mxu0 %v2277
    %5204 = vmatprep.mubr.bf16.mxu0 %v5165
    %5205 = vmatmul.mubr.bf16.gmra.mrb[0].mxu0 %v5164
    %v5206 = vpop.f32.mrb[0].mxu0
    %v5207 = vadd.f32 %v1338, %v5206
    %v5208 = vpop.f32.mrb[0].mxu0
    %v5209 = vadd.f32 %v1342, %v5208
    %v5210 = vpop.f32.mrb[0].mxu0
    %v5211 = vpop.f32.mrb[0].mxu0
    %5212 = vdwg.mxu0
    %5213 = vmatprep.subr.bf16.mxu0 %v2286
    %5214 = vmatpush1.bf16.msra.mxu0 %v2285
    %5215 = vmatprep.subr.bf16.mxu0 %v2294
    %5216 = vmatpush1.bf16.msra.mxu0 %v2293
    %5217 = vmatprep.subr.bf16.mxu0 %v2302
    %5218 = vmatpush1.bf16.msra.mxu0 %v2301
    %5219 = vmatprep.subr.bf16.mxu0 %v2310
    %5220 = vmatpush1.bf16.msra.mxu0 %v2309
    %5221 = vmatprep.subr.bf16.mxu0 %v2318
    %5222 = vmatpush1.bf16.msra.mxu0 %v2317
    %5223 = vmatprep.subr.bf16.mxu0 %v2326
    %5224 = vmatpush1.bf16.msra.mxu0 %v2325
    %5225 = vmatprep.subr.bf16.mxu0 %v2334
    %5226 = vmatpush1.bf16.msra.mxu0 %v2333
    %5227 = vmatprep.subr.bf16.mxu0 %v2342
    %5228 = vmatpush1.bf16.msra.mxu0 %v2341
    %5229 = vmatprep.subr.bf16.mxu0 %v2350
    %5230 = vmatpush1.bf16.msra.mxu0 %v2349
    %5231 = vmatprep.subr.bf16.mxu0 %v2358
    %5232 = vmatpush1.bf16.msra.mxu0 %v2357
    %5233 = vmatprep.subr.bf16.mxu0 %v2366
    %5234 = vmatpush1.bf16.msra.mxu0 %v2365
    %5235 = vmatprep.subr.bf16.mxu0 %v2374
    %5236 = vmatpush1.bf16.msra.mxu0 %v2373
    %5237 = vmatprep.subr.bf16.mxu0 %v2382
    %5238 = vmatpush1.bf16.msra.mxu0 %v2381
    %5239 = vmatprep.subr.bf16.mxu0 %v2390
    %5240 = vmatpush1.bf16.msra.mxu0 %v2389
    %5241 = vmatprep.subr.bf16.mxu0 %v2398
    %5242 = vmatpush1.bf16.msra.mxu0 %v2397
    %5243 = vmatprep.subr.bf16.mxu0 %v2406
    %5244 = vmatpush1.bf16.msra.mxu0 %v2405
    %5245 = vmatprep.mubr.bf16.mxu0 %v5167
    %5246 = vmatmul.mubr.bf16.gmra.mrb[0].mxu0 %v5166
    %v5247 = vpop.f32.mrb[0].mxu0
    %v5248 = vadd.f32 %v5207, %v5247
    %v5249 = vpop.f32.mrb[0].mxu0
    %v5250 = vadd.f32 %v5209, %v5249
    %v5251 = vpop.f32.mrb[0].mxu0
    %v5252 = vpop.f32.mrb[0].mxu0
    %5253 = vdwg.mxu0
    %5254 = vmatprep.subr.bf16.mxu0 %v2160
    %5255 = vmatpush1.bf16.msra.mxu0 %v2159
    %5256 = vmatprep.subr.bf16.mxu0 %v2168
    %5257 = vmatpush1.bf16.msra.mxu0 %v2167
    %5258 = vmatprep.subr.bf16.mxu0 %v2176
    %5259 = vmatpush1.bf16.msra.mxu0 %v2175
    %5260 = vmatprep.subr.bf16.mxu0 %v2184
    %5261 = vmatpush1.bf16.msra.mxu0 %v2183
    %5262 = vmatprep.subr.bf16.mxu0 %v2192
    %5263 = vmatpush1.bf16.msra.mxu0 %v2191
    %5264 = vmatprep.subr.bf16.mxu0 %v2200
    %5265 = vmatpush1.bf16.msra.mxu0 %v2199
    %5266 = vmatprep.subr.bf16.mxu0 %v2208
    %5267 = vmatpush1.bf16.msra.mxu0 %v2207
    %5268 = vmatprep.subr.bf16.mxu0 %v2216
    %5269 = vmatpush1.bf16.msra.mxu0 %v2215
    %5270 = vmatprep.subr.bf16.mxu0 %v2224
    %5271 = vmatpush1.bf16.msra.mxu0 %v2223
    %5272 = vmatprep.subr.bf16.mxu0 %v2232
    %5273 = vmatpush1.bf16.msra.mxu0 %v2231
    %5274 = vmatprep.subr.bf16.mxu0 %v2240
    %5275 = vmatpush1.bf16.msra.mxu0 %v2239
    %5276 = vmatprep.subr.bf16.mxu0 %v2248
    %5277 = vmatpush1.bf16.msra.mxu0 %v2247
    %5278 = vmatprep.subr.bf16.mxu0 %v2256
    %5279 = vmatpush1.bf16.msra.mxu0 %v2255
    %5280 = vmatprep.subr.bf16.mxu0 %v2264
    %5281 = vmatpush1.bf16.msra.mxu0 %v2263
    %5282 = vmatprep.subr.bf16.mxu0 %v2272
    %5283 = vmatpush1.bf16.msra.mxu0 %v2271
    %5284 = vmatprep.subr.bf16.mxu0 %v2280
    %5285 = vmatpush1.bf16.msra.mxu0 %v2279
    %5286 = vmatprep.mubr.bf16.mxu0 %v5165
    %5287 = vmatmul.mubr.bf16.gmra.mrb[0].mxu0 %v5164
    %v5288 = vpop.f32.mrb[0].mxu0
    %v5289 = vadd.f32 %v1346, %v5288
    %v5290 = vpop.f32.mrb[0].mxu0
    %v5291 = vadd.f32 %v1350, %v5290
    %v5292 = vpop.f32.mrb[0].mxu0
    %v5293 = vpop.f32.mrb[0].mxu0
    %5294 = vdwg.mxu0
    %5295 = vmatprep.subr.bf16.mxu0 %v2288
    %5296 = vmatpush1.bf16.msra.mxu0 %v2287
    %5297 = vmatprep.subr.bf16.mxu0 %v2296
    %5298 = vmatpush1.bf16.msra.mxu0 %v2295
    %5299 = vmatprep.subr.bf16.mxu0 %v2304
    %5300 = vmatpush1.bf16.msra.mxu0 %v2303
    %5301 = vmatprep.subr.bf16.mxu0 %v2312
    %5302 = vmatpush1.bf16.msra.mxu0 %v2311
    %5303 = vmatprep.subr.bf16.mxu0 %v2320
    %5304 = vmatpush1.bf16.msra.mxu0 %v2319
    %5305 = vmatprep.subr.bf16.mxu0 %v2328
    %5306 = vmatpush1.bf16.msra.mxu0 %v2327
    %5307 = vmatprep.subr.bf16.mxu0 %v2336
    %5308 = vmatpush1.bf16.msra.mxu0 %v2335
    %5309 = vmatprep.subr.bf16.mxu0 %v2344
    %5310 = vmatpush1.bf16.msra.mxu0 %v2343
    %5311 = vmatprep.subr.bf16.mxu0 %v2352
    %5312 = vmatpush1.bf16.msra.mxu0 %v2351
    %5313 = vmatprep.subr.bf16.mxu0 %v2360
    %5314 = vmatpush1.bf16.msra.mxu0 %v2359
    %5315 = vmatprep.subr.bf16.mxu0 %v2368
    %5316 = vmatpush1.bf16.msra.mxu0 %v2367
    %5317 = vmatprep.subr.bf16.mxu0 %v2376
    %5318 = vmatpush1.bf16.msra.mxu0 %v2375
    %5319 = vmatprep.subr.bf16.mxu0 %v2384
    %5320 = vmatpush1.bf16.msra.mxu0 %v2383
    %5321 = vmatprep.subr.bf16.mxu0 %v2392
    %5322 = vmatpush1.bf16.msra.mxu0 %v2391
    %5323 = vmatprep.subr.bf16.mxu0 %v2400
    %5324 = vmatpush1.bf16.msra.mxu0 %v2399
    %5325 = vmatprep.subr.bf16.mxu0 %v2408
    %5326 = vmatpush1.bf16.msra.mxu0 %v2407
    %5327 = vmatprep.mubr.bf16.mxu0 %v5167
    %5328 = vmatmul.mubr.bf16.gmra.mrb[0].mxu0 %v5166
    %v5329 = vpop.f32.mrb[0].mxu0
    %v5330 = vadd.f32 %v5289, %v5329
    %v5331 = vpop.f32.mrb[0].mxu0
    %v5332 = vadd.f32 %v5291, %v5331
    %v5333 = vpop.f32.mrb[0].mxu0
    %v5334 = vpop.f32.mrb[0].mxu0
    %5335 = vdwg.mxu0
    %5336 = vmatprep.subr.bf16.mxu0 %v2162
    %5337 = vmatpush1.bf16.msra.mxu0 %v2161
    %5338 = vmatprep.subr.bf16.mxu0 %v2170
    %5339 = vmatpush1.bf16.msra.mxu0 %v2169
    %5340 = vmatprep.subr.bf16.mxu0 %v2178
    %5341 = vmatpush1.bf16.msra.mxu0 %v2177
    %5342 = vmatprep.subr.bf16.mxu0 %v2186
    %5343 = vmatpush1.bf16.msra.mxu0 %v2185
    %5344 = vmatprep.subr.bf16.mxu0 %v2194
    %5345 = vmatpush1.bf16.msra.mxu0 %v2193
    %5346 = vmatprep.subr.bf16.mxu0 %v2202
    %5347 = vmatpush1.bf16.msra.mxu0 %v2201
    %5348 = vmatprep.subr.bf16.mxu0 %v2210
    %5349 = vmatpush1.bf16.msra.mxu0 %v2209
    %5350 = vmatprep.subr.bf16.mxu0 %v2218
    %5351 = vmatpush1.bf16.msra.mxu0 %v2217
    %5352 = vmatprep.subr.bf16.mxu0 %v2226
    %5353 = vmatpush1.bf16.msra.mxu0 %v2225
    %5354 = vmatprep.subr.bf16.mxu0 %v2234
    %5355 = vmatpush1.bf16.msra.mxu0 %v2233
    %5356 = vmatprep.subr.bf16.mxu0 %v2242
    %5357 = vmatpush1.bf16.msra.mxu0 %v2241
    %5358 = vmatprep.subr.bf16.mxu0 %v2250
    %5359 = vmatpush1.bf16.msra.mxu0 %v2249
    %5360 = vmatprep.subr.bf16.mxu0 %v2258
    %5361 = vmatpush1.bf16.msra.mxu0 %v2257
    %5362 = vmatprep.subr.bf16.mxu0 %v2266
    %5363 = vmatpush1.bf16.msra.mxu0 %v2265
    %5364 = vmatprep.subr.bf16.mxu0 %v2274
    %5365 = vmatpush1.bf16.msra.mxu0 %v2273
    %5366 = vmatprep.subr.bf16.mxu0 %v2282
    %5367 = vmatpush1.bf16.msra.mxu0 %v2281
    %5368 = vmatprep.mubr.bf16.mxu0 %v5165
    %5369 = vmatmul.mubr.bf16.gmra.mrb[0].mxu0 %v5164
    %v5370 = vpop.f32.mrb[0].mxu0
    %v5371 = vadd.f32 %v1354, %v5370
    %v5372 = vpop.f32.mrb[0].mxu0
    %v5373 = vadd.f32 %v1358, %v5372
    %v5374 = vpop.f32.mrb[0].mxu0
    %v5375 = vpop.f32.mrb[0].mxu0
    %5376 = vdwg.mxu0
    %5377 = vmatprep.subr.bf16.mxu0 %v2290
    %5378 = vmatpush1.bf16.msra.mxu0 %v2289
    %5379 = vmatprep.subr.bf16.mxu0 %v2298
    %5380 = vmatpush1.bf16.msra.mxu0 %v2297
    %5381 = vmatprep.subr.bf16.mxu0 %v2306
    %5382 = vmatpush1.bf16.msra.mxu0 %v2305
    %5383 = vmatprep.subr.bf16.mxu0 %v2314
    %5384 = vmatpush1.bf16.msra.mxu0 %v2313
    %5385 = vmatprep.subr.bf16.mxu0 %v2322
    %5386 = vmatpush1.bf16.msra.mxu0 %v2321
    %5387 = vmatprep.subr.bf16.mxu0 %v2330
    %5388 = vmatpush1.bf16.msra.mxu0 %v2329
    %5389 = vmatprep.subr.bf16.mxu0 %v2338
    %5390 = vmatpush1.bf16.msra.mxu0 %v2337
    %5391 = vmatprep.subr.bf16.mxu0 %v2346
    %5392 = vmatpush1.bf16.msra.mxu0 %v2345
    %5393 = vmatprep.subr.bf16.mxu0 %v2354
    %5394 = vmatpush1.bf16.msra.mxu0 %v2353
    %5395 = vmatprep.subr.bf16.mxu0 %v2362
    %5396 = vmatpush1.bf16.msra.mxu0 %v2361
    %5397 = vmatprep.subr.bf16.mxu0 %v2370
    %5398 = vmatpush1.bf16.msra.mxu0 %v2369
    %5399 = vmatprep.subr.bf16.mxu0 %v2378
    %5400 = vmatpush1.bf16.msra.mxu0 %v2377
    %5401 = vmatprep.subr.bf16.mxu0 %v2386
    %5402 = vmatpush1.bf16.msra.mxu0 %v2385
    %5403 = vmatprep.subr.bf16.mxu0 %v2394
    %5404 = vmatpush1.bf16.msra.mxu0 %v2393
    %5405 = vmatprep.subr.bf16.mxu0 %v2402
    %5406 = vmatpush1.bf16.msra.mxu0 %v2401
    %5407 = vmatprep.subr.bf16.mxu0 %v2410
    %5408 = vmatpush1.bf16.msra.mxu0 %v2409
    %5409 = vmatprep.mubr.bf16.mxu0 %v5167
    %5410 = vmatmul.mubr.bf16.gmra.mrb[0].mxu0 %v5166
    %v5411 = vpop.f32.mrb[0].mxu0
    %v5412 = vadd.f32 %v5371, %v5411
    %v5413 = vpop.f32.mrb[0].mxu0
    %v5414 = vadd.f32 %v5373, %v5413
    %v5415 = vpop.f32.mrb[0].mxu0
    %v5416 = vpop.f32.mrb[0].mxu0
    %5417 = vdwg.mxu0
    %5418 = vmatprep.subr.bf16.mxu0 %v2164
    %5419 = vmatpush1.bf16.msra.mxu0 %v2163
    %5420 = vmatprep.subr.bf16.mxu0 %v2172
    %5421 = vmatpush1.bf16.msra.mxu0 %v2171
    %5422 = vmatprep.subr.bf16.mxu0 %v2180
    %5423 = vmatpush1.bf16.msra.mxu0 %v2179
    %5424 = vmatprep.subr.bf16.mxu0 %v2188
    %5425 = vmatpush1.bf16.msra.mxu0 %v2187
    %5426 = vmatprep.subr.bf16.mxu0 %v2196
    %5427 = vmatpush1.bf16.msra.mxu0 %v2195
    %5428 = vmatprep.subr.bf16.mxu0 %v2204
    %5429 = vmatpush1.bf16.msra.mxu0 %v2203
    %5430 = vmatprep.subr.bf16.mxu0 %v2212
    %5431 = vmatpush1.bf16.msra.mxu0 %v2211
    %5432 = vmatprep.subr.bf16.mxu0 %v2220
    %5433 = vmatpush1.bf16.msra.mxu0 %v2219
    %5434 = vmatprep.subr.bf16.mxu0 %v2228
    %5435 = vmatpush1.bf16.msra.mxu0 %v2227
    %5436 = vmatprep.subr.bf16.mxu0 %v2236
    %5437 = vmatpush1.bf16.msra.mxu0 %v2235
    %5438 = vmatprep.subr.bf16.mxu0 %v2244
    %5439 = vmatpush1.bf16.msra.mxu0 %v2243
    %5440 = vmatprep.subr.bf16.mxu0 %v2252
    %5441 = vmatpush1.bf16.msra.mxu0 %v2251
    %5442 = vmatprep.subr.bf16.mxu0 %v2260
    %5443 = vmatpush1.bf16.msra.mxu0 %v2259
    %5444 = vmatprep.subr.bf16.mxu0 %v2268
    %5445 = vmatpush1.bf16.msra.mxu0 %v2267
    %5446 = vmatprep.subr.bf16.mxu0 %v2276
    %5447 = vmatpush1.bf16.msra.mxu0 %v2275
    %5448 = vmatprep.subr.bf16.mxu0 %v2284
    %5449 = vmatpush1.bf16.msra.mxu0 %v2283
    %5450 = vmatprep.mubr.bf16.mxu0 %v5165
    %5451 = vmatmul.mubr.bf16.gmra.mrb[0].mxu0 %v5164
    %v5452 = vpop.f32.mrb[0].mxu0
    %v5453 = vadd.f32 %v1362, %v5452
    %v5454 = vpop.f32.mrb[0].mxu0
    %v5455 = vadd.f32 %v1366, %v5454
    %v5456 = vpop.f32.mrb[0].mxu0
    %v5457 = vpop.f32.mrb[0].mxu0
    %5458 = vdwg.mxu0
    %5459 = vmatprep.subr.bf16.mxu0 %v2292
    %5460 = vmatpush1.bf16.msra.mxu0 %v2291
    %5461 = vmatprep.subr.bf16.mxu0 %v2300
    %5462 = vmatpush1.bf16.msra.mxu0 %v2299
    %5463 = vmatprep.subr.bf16.mxu0 %v2308
    %5464 = vmatpush1.bf16.msra.mxu0 %v2307
    %5465 = vmatprep.subr.bf16.mxu0 %v2316
    %5466 = vmatpush1.bf16.msra.mxu0 %v2315
    %5467 = vmatprep.subr.bf16.mxu0 %v2324
    %5468 = vmatpush1.bf16.msra.mxu0 %v2323
    %5469 = vmatprep.subr.bf16.mxu0 %v2332
    %5470 = vmatpush1.bf16.msra.mxu0 %v2331
    %5471 = vmatprep.subr.bf16.mxu0 %v2340
    %5472 = vmatpush1.bf16.msra.mxu0 %v2339
    %5473 = vmatprep.subr.bf16.mxu0 %v2348
    %5474 = vmatpush1.bf16.msra.mxu0 %v2347
    %5475 = vmatprep.subr.bf16.mxu0 %v2356
    %5476 = vmatpush1.bf16.msra.mxu0 %v2355
    %5477 = vmatprep.subr.bf16.mxu0 %v2364
    %5478 = vmatpush1.bf16.msra.mxu0 %v2363
    %5479 = vmatprep.subr.bf16.mxu0 %v2372
    %5480 = vmatpush1.bf16.msra.mxu0 %v2371
    %5481 = vmatprep.subr.bf16.mxu0 %v2380
    %5482 = vmatpush1.bf16.msra.mxu0 %v2379
    %5483 = vmatprep.subr.bf16.mxu0 %v2388
    %5484 = vmatpush1.bf16.msra.mxu0 %v2387
    %5485 = vmatprep.subr.bf16.mxu0 %v2396
    %5486 = vmatpush1.bf16.msra.mxu0 %v2395
    %5487 = vmatprep.subr.bf16.mxu0 %v2404
    %5488 = vmatpush1.bf16.msra.mxu0 %v2403
    %5489 = vmatprep.subr.bf16.mxu0 %v2412
    %5490 = vmatpush1.bf16.msra.mxu0 %v2411
    %5491 = vmatprep.mubr.bf16.mxu0 %v5167
    %5492 = vmatmul.mubr.bf16.gmra.mrb[0].mxu0 %v5166
    %v5493 = vpop.f32.mrb[0].mxu0
    %v5494 = vadd.f32 %v5453, %v5493
    %v5495 = vpop.f32.mrb[0].mxu0
    %v5496 = vadd.f32 %v5455, %v5495
    %v5497 = vpop.f32.mrb[0].mxu0
    %v5498 = vpop.f32.mrb[0].mxu0
    %5499 = vdwg.mxu0
    %v5500 = vmul.f32 %v5248, 0.5
    %v5501 = vmul.f32 %v5250, 0.5
    %v5502 = vtanh.pop %v5500
    %v5503 = vtanh.pop %v5501
    %v5504 = vmul.f32 %v5502, 0.5
    %v5505 = vmul.f32 %v5503, 0.5
    %v5506 = vadd.f32 %v5504, 0.5
    %v5507 = vadd.f32 %v5505, 0.5
    %v5508 = vmul.f32 %v5330, 0.5
    %v5509 = vmul.f32 %v5332, 0.5
    %v5510 = vtanh.pop %v5508
    %v5511 = vtanh.pop %v5509
    %v5512 = vmul.f32 %v5510, 0.5
    %v5513 = vmul.f32 %v5511, 0.5
    %v5514 = vadd.f32 %v5512, 0.5
    %v5515 = vadd.f32 %v5513, 0.5
    %v5516 = vtanh.pop %v5412
    %v5517 = vtanh.pop %v5414
    %v5518 = vmul.f32 %v5494, 0.5
    %v5519 = vmul.f32 %v5496, 0.5
    %v5520 = vtanh.pop %v5518
    %v5521 = vtanh.pop %v5519
    %v5522 = vmul.f32 %v5520, 0.5
    %v5523 = vmul.f32 %v5521, 0.5
    %v5524 = vadd.f32 %v5522, 0.5
    %v5525 = vadd.f32 %v5523, 0.5
    %v5526 = vmul.f32 %v5514, %v4904
    %v5527 = vmul.f32 %v5515, %v4905
    %v5528 = vmul.f32 %v5506, %v5516
    %v5529 = vmul.f32 %v5507, %v5517
    %v5530 = vadd.f32 %v5526, %v5528
    %v5531 = vadd.f32 %v5527, %v5529
    %v5532 = vtanh.pop %v5530
    %v5533 = vtanh.pop %v5531
    %v5534 = vmul.f32 %v5524, %v5532
    %v5535 = vmul.f32 %v5525, %v5533
    %v5536 = vpack.c.bf16 %v5534, %v5534
    %v5537 = vpack.c.bf16 %v5535, %v5535
    %v5540 = vunpack.c.l.b16 %v5536
    %v5541 = vunpack.c.l.b16 %v5537
    %v5542 = vpack.c.b16 %v5541, %v5540
    %5544 = vst [vmem:[#allocation4 + $0x8] sm:$0xff] %v5542
    %s5545 = scalar_lea.vmem [#allocation11], 64
    %5546 = vst [vmem:[%s5545] sm:$0xff] %v5534
    %5547 = vst [vmem:[%s5545 + $0x8] sm:$0xff] %v5535
    %v5548 = vld [vmem:[#allocation4] sm:$0xff]
    %s5549 = scalar_lea.vmem [#allocation5], 320
    %v5550 = vld [vmem:[%s5549] sm:$0xff]
    %v5551 = vld [vmem:[%s5549 + $0x8] sm:$0xff]
    %v5552 = vld [vmem:[%s5549 + $0x10] sm:$0xff]
    %v5553 = vld [vmem:[%s5549 + $0x18] sm:$0xff]
    %v5554 = vld [vmem:[%s5549 + $0x20] sm:$0xff]
    %v5555 = vld [vmem:[%s5549 + $0x28] sm:$0xff]
    %v5556 = vld [vmem:[%s5549 + $0x30] sm:$0xff]
    %v5557 = vld [vmem:[%s5549 + $0x38] sm:$0xff]
    %v5559 = vunpack.c.l.b16 %v5548
    %v5560 = vunpack.c.h.b16 %v5548
    %v5561 = vpack.c.b16 %v5559, %v5559
    %v5562 = vpack.c.b16 %v5560, %v5560
    %5565 = vmatprep.subr.bf16.mxu0 %v860
    %5566 = vmatpush1.bf16.msra.mxu0 %v859
    %5567 = vmatprep.subr.bf16.mxu0 %v868
    %5568 = vmatpush1.bf16.msra.mxu0 %v867
    %5569 = vmatprep.subr.bf16.mxu0 %v876
    %5570 = vmatpush1.bf16.msra.mxu0 %v875
    %5571 = vmatprep.subr.bf16.mxu0 %v884
    %5572 = vmatpush1.bf16.msra.mxu0 %v883
    %5573 = vmatprep.subr.bf16.mxu0 %v892
    %5574 = vmatpush1.bf16.msra.mxu0 %v891
    %5575 = vmatprep.subr.bf16.mxu0 %v900
    %5576 = vmatpush1.bf16.msra.mxu0 %v899
    %5577 = vmatprep.subr.bf16.mxu0 %v908
    %5578 = vmatpush1.bf16.msra.mxu0 %v907
    %5579 = vmatprep.subr.bf16.mxu0 %v916
    %5580 = vmatpush1.bf16.msra.mxu0 %v915
    %5581 = vmatprep.subr.bf16.mxu0 %v924
    %5582 = vmatpush1.bf16.msra.mxu0 %v923
    %5583 = vmatprep.subr.bf16.mxu0 %v932
    %5584 = vmatpush1.bf16.msra.mxu0 %v931
    %5585 = vmatprep.subr.bf16.mxu0 %v940
    %5586 = vmatpush1.bf16.msra.mxu0 %v939
    %5587 = vmatprep.subr.bf16.mxu0 %v948
    %5588 = vmatpush1.bf16.msra.mxu0 %v947
    %5589 = vmatprep.subr.bf16.mxu0 %v956
    %5590 = vmatpush1.bf16.msra.mxu0 %v955
    %5591 = vmatprep.subr.bf16.mxu0 %v964
    %5592 = vmatpush1.bf16.msra.mxu0 %v963
    %5593 = vmatprep.subr.bf16.mxu0 %v972
    %5594 = vmatpush1.bf16.msra.mxu0 %v971
    %5595 = vmatprep.subr.bf16.mxu0 %v980
    %5596 = vmatpush1.bf16.msra.mxu0 %v979
    %5597 = vmatprep.mubr.bf16.mxu0 %v5562
    %5598 = vmatmul.mubr.bf16.gmra.mrb[0].mxu0 %v5561
    %v5599 = vpop.f32.mrb[0].mxu0
    %v5600 = vadd.f32 0.0, %v5599
    %v5601 = vpop.f32.mrb[0].mxu0
    %v5602 = vadd.f32 0.0, %v5601
    %v5603 = vpop.f32.mrb[0].mxu0
    %v5604 = vpop.f32.mrb[0].mxu0
    %5605 = vdwg.mxu0
    %5606 = vmatprep.subr.bf16.mxu0 %v862
    %5607 = vmatpush1.bf16.msra.mxu0 %v861
    %5608 = vmatprep.subr.bf16.mxu0 %v870
    %5609 = vmatpush1.bf16.msra.mxu0 %v869
    %5610 = vmatprep.subr.bf16.mxu0 %v878
    %5611 = vmatpush1.bf16.msra.mxu0 %v877
    %5612 = vmatprep.subr.bf16.mxu0 %v886
    %5613 = vmatpush1.bf16.msra.mxu0 %v885
    %5614 = vmatprep.subr.bf16.mxu0 %v894
    %5615 = vmatpush1.bf16.msra.mxu0 %v893
    %5616 = vmatprep.subr.bf16.mxu0 %v902
    %5617 = vmatpush1.bf16.msra.mxu0 %v901
    %5618 = vmatprep.subr.bf16.mxu0 %v910
    %5619 = vmatpush1.bf16.msra.mxu0 %v909
    %5620 = vmatprep.subr.bf16.mxu0 %v918
    %5621 = vmatpush1.bf16.msra.mxu0 %v917
    %5622 = vmatprep.subr.bf16.mxu0 %v926
    %5623 = vmatpush1.bf16.msra.mxu0 %v925
    %5624 = vmatprep.subr.bf16.mxu0 %v934
    %5625 = vmatpush1.bf16.msra.mxu0 %v933
    %5626 = vmatprep.subr.bf16.mxu0 %v942
    %5627 = vmatpush1.bf16.msra.mxu0 %v941
    %5628 = vmatprep.subr.bf16.mxu0 %v950
    %5629 = vmatpush1.bf16.msra.mxu0 %v949
    %5630 = vmatprep.subr.bf16.mxu0 %v958
    %5631 = vmatpush1.bf16.msra.mxu0 %v957
    %5632 = vmatprep.subr.bf16.mxu0 %v966
    %5633 = vmatpush1.bf16.msra.mxu0 %v965
    %5634 = vmatprep.subr.bf16.mxu0 %v974
    %5635 = vmatpush1.bf16.msra.mxu0 %v973
    %5636 = vmatprep.subr.bf16.mxu0 %v982
    %5637 = vmatpush1.bf16.msra.mxu0 %v981
    %5638 = vmatprep.mubr.bf16.mxu0 %v5562
    %5639 = vmatmul.mubr.bf16.gmra.mrb[0].mxu0 %v5561
    %v5640 = vpop.f32.mrb[0].mxu0
    %v5641 = vadd.f32 0.0, %v5640
    %v5642 = vpop.f32.mrb[0].mxu0
    %v5643 = vadd.f32 0.0, %v5642
    %v5644 = vpop.f32.mrb[0].mxu0
    %v5645 = vpop.f32.mrb[0].mxu0
    %5646 = vdwg.mxu0
    %5647 = vmatprep.subr.bf16.mxu0 %v864
    %5648 = vmatpush1.bf16.msra.mxu0 %v863
    %5649 = vmatprep.subr.bf16.mxu0 %v872
    %5650 = vmatpush1.bf16.msra.mxu0 %v871
    %5651 = vmatprep.subr.bf16.mxu0 %v880
    %5652 = vmatpush1.bf16.msra.mxu0 %v879
    %5653 = vmatprep.subr.bf16.mxu0 %v888
    %5654 = vmatpush1.bf16.msra.mxu0 %v887
    %5655 = vmatprep.subr.bf16.mxu0 %v896
    %5656 = vmatpush1.bf16.msra.mxu0 %v895
    %5657 = vmatprep.subr.bf16.mxu0 %v904
    %5658 = vmatpush1.bf16.msra.mxu0 %v903
    %5659 = vmatprep.subr.bf16.mxu0 %v912
    %5660 = vmatpush1.bf16.msra.mxu0 %v911
    %5661 = vmatprep.subr.bf16.mxu0 %v920
    %5662 = vmatpush1.bf16.msra.mxu0 %v919
    %5663 = vmatprep.subr.bf16.mxu0 %v928
    %5664 = vmatpush1.bf16.msra.mxu0 %v927
    %5665 = vmatprep.subr.bf16.mxu0 %v936
    %5666 = vmatpush1.bf16.msra.mxu0 %v935
    %5667 = vmatprep.subr.bf16.mxu0 %v944
    %5668 = vmatpush1.bf16.msra.mxu0 %v943
    %5669 = vmatprep.subr.bf16.mxu0 %v952
    %5670 = vmatpush1.bf16.msra.mxu0 %v951
    %5671 = vmatprep.subr.bf16.mxu0 %v960
    %5672 = vmatpush1.bf16.msra.mxu0 %v959
    %5673 = vmatprep.subr.bf16.mxu0 %v968
    %5674 = vmatpush1.bf16.msra.mxu0 %v967
    %5675 = vmatprep.subr.bf16.mxu0 %v976
    %5676 = vmatpush1.bf16.msra.mxu0 %v975
    %5677 = vmatprep.subr.bf16.mxu0 %v984
    %5678 = vmatpush1.bf16.msra.mxu0 %v983
    %5679 = vmatprep.mubr.bf16.mxu0 %v5562
    %5680 = vmatmul.mubr.bf16.gmra.mrb[0].mxu0 %v5561
    %v5681 = vpop.f32.mrb[0].mxu0
    %v5682 = vadd.f32 0.0, %v5681
    %v5683 = vpop.f32.mrb[0].mxu0
    %v5684 = vadd.f32 0.0, %v5683
    %v5685 = vpop.f32.mrb[0].mxu0
    %v5686 = vpop.f32.mrb[0].mxu0
    %5687 = vdwg.mxu0
    %5688 = vmatprep.subr.bf16.mxu0 %v866
    %5689 = vmatpush1.bf16.msra.mxu0 %v865
    %5690 = vmatprep.subr.bf16.mxu0 %v874
    %5691 = vmatpush1.bf16.msra.mxu0 %v873
    %5692 = vmatprep.subr.bf16.mxu0 %v882
    %5693 = vmatpush1.bf16.msra.mxu0 %v881
    %5694 = vmatprep.subr.bf16.mxu0 %v890
    %5695 = vmatpush1.bf16.msra.mxu0 %v889
    %5696 = vmatprep.subr.bf16.mxu0 %v898
    %5697 = vmatpush1.bf16.msra.mxu0 %v897
    %5698 = vmatprep.subr.bf16.mxu0 %v906
    %5699 = vmatpush1.bf16.msra.mxu0 %v905
    %5700 = vmatprep.subr.bf16.mxu0 %v914
    %5701 = vmatpush1.bf16.msra.mxu0 %v913
    %5702 = vmatprep.subr.bf16.mxu0 %v922
    %5703 = vmatpush1.bf16.msra.mxu0 %v921
    %5704 = vmatprep.subr.bf16.mxu0 %v930
    %5705 = vmatpush1.bf16.msra.mxu0 %v929
    %5706 = vmatprep.subr.bf16.mxu0 %v938
    %5707 = vmatpush1.bf16.msra.mxu0 %v937
    %5708 = vmatprep.subr.bf16.mxu0 %v946
    %5709 = vmatpush1.bf16.msra.mxu0 %v945
    %5710 = vmatprep.subr.bf16.mxu0 %v954
    %5711 = vmatpush1.bf16.msra.mxu0 %v953
    %5712 = vmatprep.subr.bf16.mxu0 %v962
    %5713 = vmatpush1.bf16.msra.mxu0 %v961
    %5714 = vmatprep.subr.bf16.mxu0 %v970
    %5715 = vmatpush1.bf16.msra.mxu0 %v969
    %5716 = vmatprep.subr.bf16.mxu0 %v978
    %5717 = vmatpush1.bf16.msra.mxu0 %v977
    %5718 = vmatprep.subr.bf16.mxu0 %v986
    %5719 = vmatpush1.bf16.msra.mxu0 %v985
    %5720 = vmatprep.mubr.bf16.mxu0 %v5562
    %5721 = vmatmul.mubr.bf16.gmra.mrb[0].mxu0 %v5561
    %v5722 = vpop.f32.mrb[0].mxu0
    %v5723 = vadd.f32 0.0, %v5722
    %v5724 = vpop.f32.mrb[0].mxu0
    %v5725 = vadd.f32 0.0, %v5724
    %v5726 = vpop.f32.mrb[0].mxu0
    %v5727 = vpop.f32.mrb[0].mxu0
    %5728 = vdwg.mxu0
    %v5729 = vadd.f32 %v5550, %v5600
    %v5730 = vadd.f32 %v5551, %v5602
    %v5731 = vadd.f32 %v5552, %v5641
    %v5732 = vadd.f32 %v5553, %v5643
    %v5733 = vadd.f32 %v5554, %v5682
    %v5734 = vadd.f32 %v5555, %v5684
    %v5735 = vadd.f32 %v5556, %v5723
    %v5736 = vadd.f32 %v5557, %v5725
    %v5737 = vmul.f32 %v5729, 0.5
    %v5738 = vmul.f32 %v5730, 0.5
    %v5739 = vtanh.pop %v5737
    %v5740 = vtanh.pop %v5738
    %v5741 = vmul.f32 %v5739, 0.5
    %v5742 = vmul.f32 %v5740, 0.5
    %v5743 = vadd.f32 %v5741, 0.5
    %v5744 = vadd.f32 %v5742, 0.5
    %v5745 = vmul.f32 %v5731, 0.5
    %v5746 = vmul.f32 %v5732, 0.5
    %v5747 = vtanh.pop %v5745
    %v5748 = vtanh.pop %v5746
    %v5749 = vmul.f32 %v5747, 0.5
    %v5750 = vmul.f32 %v5748, 0.5
    %v5751 = vadd.f32 %v5749, 0.5
    %v5752 = vadd.f32 %v5750, 0.5
    %v5753 = vtanh.pop %v5733
    %v5754 = vtanh.pop %v5734
    %v5755 = vmul.f32 %v5735, 0.5
    %v5756 = vmul.f32 %v5736, 0.5
    %v5757 = vtanh.pop %v5755
    %v5758 = vtanh.pop %v5756
    %v5759 = vmul.f32 %v5757, 0.5
    %v5760 = vmul.f32 %v5758, 0.5
    %v5761 = vadd.f32 %v5759, 0.5
    %v5762 = vadd.f32 %v5760, 0.5
    %v5763 = vmul.f32 %v5751, %v5141
    %v5764 = vmul.f32 %v5752, %v5142
    %v5765 = vmul.f32 %v5743, %v5753
    %v5766 = vmul.f32 %v5744, %v5754
    %v5767 = vadd.f32 %v5763, %v5765
    %v5768 = vadd.f32 %v5764, %v5766
    %v5769 = vtanh.pop %v5767
    %v5770 = vtanh.pop %v5768
    %v5771 = vmul.f32 %v5761, %v5769
    %v5772 = vmul.f32 %v5762, %v5770
    %v5773 = vpack.c.bf16 %v5771, %v5771
    %v5774 = vpack.c.bf16 %v5772, %v5772
    %v5777 = vunpack.c.l.b16 %v5773
    %v5778 = vunpack.c.l.b16 %v5774
    %v5779 = vpack.c.b16 %v5778, %v5777
    %5781 = vst [vmem:[#allocation4] sm:$0xff] %v5779
    %v5782 = vld [vmem:[#allocation4] sm:$0xff]
    %v5783 = vld [vmem:[#allocation4 + $0x8] sm:$0xff]
    %v5786 = vunpack.c.l.b16 %v5782
    %v5787 = vunpack.c.h.b16 %v5782
    %v5788 = vunpack.c.l.b16 %v5783
    %v5789 = vunpack.c.h.b16 %v5783
    %v5790 = vpack.c.b16 %v5786, %v5786
    %v5791 = vpack.c.b16 %v5787, %v5787
    %v5792 = vpack.c.b16 %v5788, %v5788
    %v5793 = vpack.c.b16 %v5789, %v5789
    %5798 = vmatprep.subr.bf16.mxu0 %v2158
    %5799 = vmatpush1.bf16.msra.mxu0 %v2157
    %5800 = vmatprep.subr.bf16.mxu0 %v2166
    %5801 = vmatpush1.bf16.msra.mxu0 %v2165
    %5802 = vmatprep.subr.bf16.mxu0 %v2174
    %5803 = vmatpush1.bf16.msra.mxu0 %v2173
    %5804 = vmatprep.subr.bf16.mxu0 %v2182
    %5805 = vmatpush1.bf16.msra.mxu0 %v2181
    %5806 = vmatprep.subr.bf16.mxu0 %v2190
    %5807 = vmatpush1.bf16.msra.mxu0 %v2189
    %5808 = vmatprep.subr.bf16.mxu0 %v2198
    %5809 = vmatpush1.bf16.msra.mxu0 %v2197
    %5810 = vmatprep.subr.bf16.mxu0 %v2206
    %5811 = vmatpush1.bf16.msra.mxu0 %v2205
    %5812 = vmatprep.subr.bf16.mxu0 %v2214
    %5813 = vmatpush1.bf16.msra.mxu0 %v2213
    %5814 = vmatprep.subr.bf16.mxu0 %v2222
    %5815 = vmatpush1.bf16.msra.mxu0 %v2221
    %5816 = vmatprep.subr.bf16.mxu0 %v2230
    %5817 = vmatpush1.bf16.msra.mxu0 %v2229
    %5818 = vmatprep.subr.bf16.mxu0 %v2238
    %5819 = vmatpush1.bf16.msra.mxu0 %v2237
    %5820 = vmatprep.subr.bf16.mxu0 %v2246
    %5821 = vmatpush1.bf16.msra.mxu0 %v2245
    %5822 = vmatprep.subr.bf16.mxu0 %v2254
    %5823 = vmatpush1.bf16.msra.mxu0 %v2253
    %5824 = vmatprep.subr.bf16.mxu0 %v2262
    %5825 = vmatpush1.bf16.msra.mxu0 %v2261
    %5826 = vmatprep.subr.bf16.mxu0 %v2270
    %5827 = vmatpush1.bf16.msra.mxu0 %v2269
    %5828 = vmatprep.subr.bf16.mxu0 %v2278
    %5829 = vmatpush1.bf16.msra.mxu0 %v2277
    %5830 = vmatprep.mubr.bf16.mxu0 %v5791
    %5831 = vmatmul.mubr.bf16.gmra.mrb[0].mxu0 %v5790
    %v5832 = vpop.f32.mrb[0].mxu0
    %v5833 = vadd.f32 %v1338, %v5832
    %v5834 = vpop.f32.mrb[0].mxu0
    %v5835 = vadd.f32 %v1342, %v5834
    %v5836 = vpop.f32.mrb[0].mxu0
    %v5837 = vpop.f32.mrb[0].mxu0
    %5838 = vdwg.mxu0
    %5839 = vmatprep.subr.bf16.mxu0 %v2286
    %5840 = vmatpush1.bf16.msra.mxu0 %v2285
    %5841 = vmatprep.subr.bf16.mxu0 %v2294
    %5842 = vmatpush1.bf16.msra.mxu0 %v2293
    %5843 = vmatprep.subr.bf16.mxu0 %v2302
    %5844 = vmatpush1.bf16.msra.mxu0 %v2301
    %5845 = vmatprep.subr.bf16.mxu0 %v2310
    %5846 = vmatpush1.bf16.msra.mxu0 %v2309
    %5847 = vmatprep.subr.bf16.mxu0 %v2318
    %5848 = vmatpush1.bf16.msra.mxu0 %v2317
    %5849 = vmatprep.subr.bf16.mxu0 %v2326
    %5850 = vmatpush1.bf16.msra.mxu0 %v2325
    %5851 = vmatprep.subr.bf16.mxu0 %v2334
    %5852 = vmatpush1.bf16.msra.mxu0 %v2333
    %5853 = vmatprep.subr.bf16.mxu0 %v2342
    %5854 = vmatpush1.bf16.msra.mxu0 %v2341
    %5855 = vmatprep.subr.bf16.mxu0 %v2350
    %5856 = vmatpush1.bf16.msra.mxu0 %v2349
    %5857 = vmatprep.subr.bf16.mxu0 %v2358
    %5858 = vmatpush1.bf16.msra.mxu0 %v2357
    %5859 = vmatprep.subr.bf16.mxu0 %v2366
    %5860 = vmatpush1.bf16.msra.mxu0 %v2365
    %5861 = vmatprep.subr.bf16.mxu0 %v2374
    %5862 = vmatpush1.bf16.msra.mxu0 %v2373
    %5863 = vmatprep.subr.bf16.mxu0 %v2382
    %5864 = vmatpush1.bf16.msra.mxu0 %v2381
    %5865 = vmatprep.subr.bf16.mxu0 %v2390
    %5866 = vmatpush1.bf16.msra.mxu0 %v2389
    %5867 = vmatprep.subr.bf16.mxu0 %v2398
    %5868 = vmatpush1.bf16.msra.mxu0 %v2397
    %5869 = vmatprep.subr.bf16.mxu0 %v2406
    %5870 = vmatpush1.bf16.msra.mxu0 %v2405
    %5871 = vmatprep.mubr.bf16.mxu0 %v5793
    %5872 = vmatmul.mubr.bf16.gmra.mrb[0].mxu0 %v5792
    %v5873 = vpop.f32.mrb[0].mxu0
    %v5874 = vadd.f32 %v5833, %v5873
    %v5875 = vpop.f32.mrb[0].mxu0
    %v5876 = vadd.f32 %v5835, %v5875
    %v5877 = vpop.f32.mrb[0].mxu0
    %v5878 = vpop.f32.mrb[0].mxu0
    %5879 = vdwg.mxu0
    %5880 = vmatprep.subr.bf16.mxu0 %v2160
    %5881 = vmatpush1.bf16.msra.mxu0 %v2159
    %5882 = vmatprep.subr.bf16.mxu0 %v2168
    %5883 = vmatpush1.bf16.msra.mxu0 %v2167
    %5884 = vmatprep.subr.bf16.mxu0 %v2176
    %5885 = vmatpush1.bf16.msra.mxu0 %v2175
    %5886 = vmatprep.subr.bf16.mxu0 %v2184
    %5887 = vmatpush1.bf16.msra.mxu0 %v2183
    %5888 = vmatprep.subr.bf16.mxu0 %v2192
    %5889 = vmatpush1.bf16.msra.mxu0 %v2191
    %5890 = vmatprep.subr.bf16.mxu0 %v2200
    %5891 = vmatpush1.bf16.msra.mxu0 %v2199
    %5892 = vmatprep.subr.bf16.mxu0 %v2208
    %5893 = vmatpush1.bf16.msra.mxu0 %v2207
    %5894 = vmatprep.subr.bf16.mxu0 %v2216
    %5895 = vmatpush1.bf16.msra.mxu0 %v2215
    %5896 = vmatprep.subr.bf16.mxu0 %v2224
    %5897 = vmatpush1.bf16.msra.mxu0 %v2223
    %5898 = vmatprep.subr.bf16.mxu0 %v2232
    %5899 = vmatpush1.bf16.msra.mxu0 %v2231
    %5900 = vmatprep.subr.bf16.mxu0 %v2240
    %5901 = vmatpush1.bf16.msra.mxu0 %v2239
    %5902 = vmatprep.subr.bf16.mxu0 %v2248
    %5903 = vmatpush1.bf16.msra.mxu0 %v2247
    %5904 = vmatprep.subr.bf16.mxu0 %v2256
    %5905 = vmatpush1.bf16.msra.mxu0 %v2255
    %5906 = vmatprep.subr.bf16.mxu0 %v2264
    %5907 = vmatpush1.bf16.msra.mxu0 %v2263
    %5908 = vmatprep.subr.bf16.mxu0 %v2272
    %5909 = vmatpush1.bf16.msra.mxu0 %v2271
    %5910 = vmatprep.subr.bf16.mxu0 %v2280
    %5911 = vmatpush1.bf16.msra.mxu0 %v2279
    %5912 = vmatprep.mubr.bf16.mxu0 %v5791
    %5913 = vmatmul.mubr.bf16.gmra.mrb[0].mxu0 %v5790
    %v5914 = vpop.f32.mrb[0].mxu0
    %v5915 = vadd.f32 %v1346, %v5914
    %v5916 = vpop.f32.mrb[0].mxu0
    %v5917 = vadd.f32 %v1350, %v5916
    %v5918 = vpop.f32.mrb[0].mxu0
    %v5919 = vpop.f32.mrb[0].mxu0
    %5920 = vdwg.mxu0
    %5921 = vmatprep.subr.bf16.mxu0 %v2288
    %5922 = vmatpush1.bf16.msra.mxu0 %v2287
    %5923 = vmatprep.subr.bf16.mxu0 %v2296
    %5924 = vmatpush1.bf16.msra.mxu0 %v2295
    %5925 = vmatprep.subr.bf16.mxu0 %v2304
    %5926 = vmatpush1.bf16.msra.mxu0 %v2303
    %5927 = vmatprep.subr.bf16.mxu0 %v2312
    %5928 = vmatpush1.bf16.msra.mxu0 %v2311
    %5929 = vmatprep.subr.bf16.mxu0 %v2320
    %5930 = vmatpush1.bf16.msra.mxu0 %v2319
    %5931 = vmatprep.subr.bf16.mxu0 %v2328
    %5932 = vmatpush1.bf16.msra.mxu0 %v2327
    %5933 = vmatprep.subr.bf16.mxu0 %v2336
    %5934 = vmatpush1.bf16.msra.mxu0 %v2335
    %5935 = vmatprep.subr.bf16.mxu0 %v2344
    %5936 = vmatpush1.bf16.msra.mxu0 %v2343
    %5937 = vmatprep.subr.bf16.mxu0 %v2352
    %5938 = vmatpush1.bf16.msra.mxu0 %v2351
    %5939 = vmatprep.subr.bf16.mxu0 %v2360
    %5940 = vmatpush1.bf16.msra.mxu0 %v2359
    %5941 = vmatprep.subr.bf16.mxu0 %v2368
    %5942 = vmatpush1.bf16.msra.mxu0 %v2367
    %5943 = vmatprep.subr.bf16.mxu0 %v2376
    %5944 = vmatpush1.bf16.msra.mxu0 %v2375
    %5945 = vmatprep.subr.bf16.mxu0 %v2384
    %5946 = vmatpush1.bf16.msra.mxu0 %v2383
    %5947 = vmatprep.subr.bf16.mxu0 %v2392
    %5948 = vmatpush1.bf16.msra.mxu0 %v2391
    %5949 = vmatprep.subr.bf16.mxu0 %v2400
    %5950 = vmatpush1.bf16.msra.mxu0 %v2399
    %5951 = vmatprep.subr.bf16.mxu0 %v2408
    %5952 = vmatpush1.bf16.msra.mxu0 %v2407
    %5953 = vmatprep.mubr.bf16.mxu0 %v5793
    %5954 = vmatmul.mubr.bf16.gmra.mrb[0].mxu0 %v5792
    %v5955 = vpop.f32.mrb[0].mxu0
    %v5956 = vadd.f32 %v5915, %v5955
    %v5957 = vpop.f32.mrb[0].mxu0
    %v5958 = vadd.f32 %v5917, %v5957
    %v5959 = vpop.f32.mrb[0].mxu0
    %v5960 = vpop.f32.mrb[0].mxu0
    %5961 = vdwg.mxu0
    %5962 = vmatprep.subr.bf16.mxu0 %v2162
    %5963 = vmatpush1.bf16.msra.mxu0 %v2161
    %5964 = vmatprep.subr.bf16.mxu0 %v2170
    %5965 = vmatpush1.bf16.msra.mxu0 %v2169
    %5966 = vmatprep.subr.bf16.mxu0 %v2178
    %5967 = vmatpush1.bf16.msra.mxu0 %v2177
    %5968 = vmatprep.subr.bf16.mxu0 %v2186
    %5969 = vmatpush1.bf16.msra.mxu0 %v2185
    %5970 = vmatprep.subr.bf16.mxu0 %v2194
    %5971 = vmatpush1.bf16.msra.mxu0 %v2193
    %5972 = vmatprep.subr.bf16.mxu0 %v2202
    %5973 = vmatpush1.bf16.msra.mxu0 %v2201
    %5974 = vmatprep.subr.bf16.mxu0 %v2210
    %5975 = vmatpush1.bf16.msra.mxu0 %v2209
    %5976 = vmatprep.subr.bf16.mxu0 %v2218
    %5977 = vmatpush1.bf16.msra.mxu0 %v2217
    %5978 = vmatprep.subr.bf16.mxu0 %v2226
    %5979 = vmatpush1.bf16.msra.mxu0 %v2225
    %5980 = vmatprep.subr.bf16.mxu0 %v2234
    %5981 = vmatpush1.bf16.msra.mxu0 %v2233
    %5982 = vmatprep.subr.bf16.mxu0 %v2242
    %5983 = vmatpush1.bf16.msra.mxu0 %v2241
    %5984 = vmatprep.subr.bf16.mxu0 %v2250
    %5985 = vmatpush1.bf16.msra.mxu0 %v2249
    %5986 = vmatprep.subr.bf16.mxu0 %v2258
    %5987 = vmatpush1.bf16.msra.mxu0 %v2257
    %5988 = vmatprep.subr.bf16.mxu0 %v2266
    %5989 = vmatpush1.bf16.msra.mxu0 %v2265
    %5990 = vmatprep.subr.bf16.mxu0 %v2274
    %5991 = vmatpush1.bf16.msra.mxu0 %v2273
    %5992 = vmatprep.subr.bf16.mxu0 %v2282
    %5993 = vmatpush1.bf16.msra.mxu0 %v2281
    %5994 = vmatprep.mubr.bf16.mxu0 %v5791
    %5995 = vmatmul.mubr.bf16.gmra.mrb[0].mxu0 %v5790
    %v5996 = vpop.f32.mrb[0].mxu0
    %v5997 = vadd.f32 %v1354, %v5996
    %v5998 = vpop.f32.mrb[0].mxu0
    %v5999 = vadd.f32 %v1358, %v5998
    %v6000 = vpop.f32.mrb[0].mxu0
    %v6001 = vpop.f32.mrb[0].mxu0
    %6002 = vdwg.mxu0
    %6003 = vmatprep.subr.bf16.mxu0 %v2290
    %6004 = vmatpush1.bf16.msra.mxu0 %v2289
    %6005 = vmatprep.subr.bf16.mxu0 %v2298
    %6006 = vmatpush1.bf16.msra.mxu0 %v2297
    %6007 = vmatprep.subr.bf16.mxu0 %v2306
    %6008 = vmatpush1.bf16.msra.mxu0 %v2305
    %6009 = vmatprep.subr.bf16.mxu0 %v2314
    %6010 = vmatpush1.bf16.msra.mxu0 %v2313
    %6011 = vmatprep.subr.bf16.mxu0 %v2322
    %6012 = vmatpush1.bf16.msra.mxu0 %v2321
    %6013 = vmatprep.subr.bf16.mxu0 %v2330
    %6014 = vmatpush1.bf16.msra.mxu0 %v2329
    %6015 = vmatprep.subr.bf16.mxu0 %v2338
    %6016 = vmatpush1.bf16.msra.mxu0 %v2337
    %6017 = vmatprep.subr.bf16.mxu0 %v2346
    %6018 = vmatpush1.bf16.msra.mxu0 %v2345
    %6019 = vmatprep.subr.bf16.mxu0 %v2354
    %6020 = vmatpush1.bf16.msra.mxu0 %v2353
    %6021 = vmatprep.subr.bf16.mxu0 %v2362
    %6022 = vmatpush1.bf16.msra.mxu0 %v2361
    %6023 = vmatprep.subr.bf16.mxu0 %v2370
    %6024 = vmatpush1.bf16.msra.mxu0 %v2369
    %6025 = vmatprep.subr.bf16.mxu0 %v2378
    %6026 = vmatpush1.bf16.msra.mxu0 %v2377
    %6027 = vmatprep.subr.bf16.mxu0 %v2386
    %6028 = vmatpush1.bf16.msra.mxu0 %v2385
    %6029 = vmatprep.subr.bf16.mxu0 %v2394
    %6030 = vmatpush1.bf16.msra.mxu0 %v2393
    %6031 = vmatprep.subr.bf16.mxu0 %v2402
    %6032 = vmatpush1.bf16.msra.mxu0 %v2401
    %6033 = vmatprep.subr.bf16.mxu0 %v2410
    %6034 = vmatpush1.bf16.msra.mxu0 %v2409
    %6035 = vmatprep.mubr.bf16.mxu0 %v5793
    %6036 = vmatmul.mubr.bf16.gmra.mrb[0].mxu0 %v5792
    %v6037 = vpop.f32.mrb[0].mxu0
    %v6038 = vadd.f32 %v5997, %v6037
    %v6039 = vpop.f32.mrb[0].mxu0
    %v6040 = vadd.f32 %v5999, %v6039
    %v6041 = vpop.f32.mrb[0].mxu0
    %v6042 = vpop.f32.mrb[0].mxu0
    %6043 = vdwg.mxu0
    %6044 = vmatprep.subr.bf16.mxu0 %v2164
    %6045 = vmatpush1.bf16.msra.mxu0 %v2163
    %6046 = vmatprep.subr.bf16.mxu0 %v2172
    %6047 = vmatpush1.bf16.msra.mxu0 %v2171
    %6048 = vmatprep.subr.bf16.mxu0 %v2180
    %6049 = vmatpush1.bf16.msra.mxu0 %v2179
    %6050 = vmatprep.subr.bf16.mxu0 %v2188
    %6051 = vmatpush1.bf16.msra.mxu0 %v2187
    %6052 = vmatprep.subr.bf16.mxu0 %v2196
    %6053 = vmatpush1.bf16.msra.mxu0 %v2195
    %6054 = vmatprep.subr.bf16.mxu0 %v2204
    %6055 = vmatpush1.bf16.msra.mxu0 %v2203
    %6056 = vmatprep.subr.bf16.mxu0 %v2212
    %6057 = vmatpush1.bf16.msra.mxu0 %v2211
    %6058 = vmatprep.subr.bf16.mxu0 %v2220
    %6059 = vmatpush1.bf16.msra.mxu0 %v2219
    %6060 = vmatprep.subr.bf16.mxu0 %v2228
    %6061 = vmatpush1.bf16.msra.mxu0 %v2227
    %6062 = vmatprep.subr.bf16.mxu0 %v2236
    %6063 = vmatpush1.bf16.msra.mxu0 %v2235
    %6064 = vmatprep.subr.bf16.mxu0 %v2244
    %6065 = vmatpush1.bf16.msra.mxu0 %v2243
    %6066 = vmatprep.subr.bf16.mxu0 %v2252
    %6067 = vmatpush1.bf16.msra.mxu0 %v2251
    %6068 = vmatprep.subr.bf16.mxu0 %v2260
    %6069 = vmatpush1.bf16.msra.mxu0 %v2259
    %6070 = vmatprep.subr.bf16.mxu0 %v2268
    %6071 = vmatpush1.bf16.msra.mxu0 %v2267
    %6072 = vmatprep.subr.bf16.mxu0 %v2276
    %6073 = vmatpush1.bf16.msra.mxu0 %v2275
    %6074 = vmatprep.subr.bf16.mxu0 %v2284
    %6075 = vmatpush1.bf16.msra.mxu0 %v2283
    %6076 = vmatprep.mubr.bf16.mxu0 %v5791
    %6077 = vmatmul.mubr.bf16.gmra.mrb[0].mxu0 %v5790
    %v6078 = vpop.f32.mrb[0].mxu0
    %v6079 = vadd.f32 %v1362, %v6078
    %v6080 = vpop.f32.mrb[0].mxu0
    %v6081 = vadd.f32 %v1366, %v6080
    %v6082 = vpop.f32.mrb[0].mxu0
    %v6083 = vpop.f32.mrb[0].mxu0
    %6084 = vdwg.mxu0
    %6085 = vmatprep.subr.bf16.mxu0 %v2292
    %6086 = vmatpush1.bf16.msra.mxu0 %v2291
    %6087 = vmatprep.subr.bf16.mxu0 %v2300
    %6088 = vmatpush1.bf16.msra.mxu0 %v2299
    %6089 = vmatprep.subr.bf16.mxu0 %v2308
    %6090 = vmatpush1.bf16.msra.mxu0 %v2307
    %6091 = vmatprep.subr.bf16.mxu0 %v2316
    %6092 = vmatpush1.bf16.msra.mxu0 %v2315
    %6093 = vmatprep.subr.bf16.mxu0 %v2324
    %6094 = vmatpush1.bf16.msra.mxu0 %v2323
    %6095 = vmatprep.subr.bf16.mxu0 %v2332
    %6096 = vmatpush1.bf16.msra.mxu0 %v2331
    %6097 = vmatprep.subr.bf16.mxu0 %v2340
    %6098 = vmatpush1.bf16.msra.mxu0 %v2339
    %6099 = vmatprep.subr.bf16.mxu0 %v2348
    %6100 = vmatpush1.bf16.msra.mxu0 %v2347
    %6101 = vmatprep.subr.bf16.mxu0 %v2356
    %6102 = vmatpush1.bf16.msra.mxu0 %v2355
    %6103 = vmatprep.subr.bf16.mxu0 %v2364
    %6104 = vmatpush1.bf16.msra.mxu0 %v2363
    %6105 = vmatprep.subr.bf16.mxu0 %v2372
    %6106 = vmatpush1.bf16.msra.mxu0 %v2371
    %6107 = vmatprep.subr.bf16.mxu0 %v2380
    %6108 = vmatpush1.bf16.msra.mxu0 %v2379
    %6109 = vmatprep.subr.bf16.mxu0 %v2388
    %6110 = vmatpush1.bf16.msra.mxu0 %v2387
    %6111 = vmatprep.subr.bf16.mxu0 %v2396
    %6112 = vmatpush1.bf16.msra.mxu0 %v2395
    %6113 = vmatprep.subr.bf16.mxu0 %v2404
    %6114 = vmatpush1.bf16.msra.mxu0 %v2403
    %6115 = vmatprep.subr.bf16.mxu0 %v2412
    %6116 = vmatpush1.bf16.msra.mxu0 %v2411
    %6117 = vmatprep.mubr.bf16.mxu0 %v5793
    %6118 = vmatmul.mubr.bf16.gmra.mrb[0].mxu0 %v5792
    %v6119 = vpop.f32.mrb[0].mxu0
    %v6120 = vadd.f32 %v6079, %v6119
    %v6121 = vpop.f32.mrb[0].mxu0
    %v6122 = vadd.f32 %v6081, %v6121
    %v6123 = vpop.f32.mrb[0].mxu0
    %v6124 = vpop.f32.mrb[0].mxu0
    %6125 = vdwg.mxu0
    %v6126 = vmul.f32 %v5874, 0.5
    %v6127 = vmul.f32 %v5876, 0.5
    %v6128 = vtanh.pop %v6126
    %v6129 = vtanh.pop %v6127
    %v6130 = vmul.f32 %v6128, 0.5
    %v6131 = vmul.f32 %v6129, 0.5
    %v6132 = vadd.f32 %v6130, 0.5
    %v6133 = vadd.f32 %v6131, 0.5
    %v6134 = vmul.f32 %v5956, 0.5
    %v6135 = vmul.f32 %v5958, 0.5
    %v6136 = vtanh.pop %v6134
    %v6137 = vtanh.pop %v6135
    %v6138 = vmul.f32 %v6136, 0.5
    %v6139 = vmul.f32 %v6137, 0.5
    %v6140 = vadd.f32 %v6138, 0.5
    %v6141 = vadd.f32 %v6139, 0.5
    %v6142 = vtanh.pop %v6038
    %v6143 = vtanh.pop %v6040
    %v6144 = vmul.f32 %v6120, 0.5
    %v6145 = vmul.f32 %v6122, 0.5
    %v6146 = vtanh.pop %v6144
    %v6147 = vtanh.pop %v6145
    %v6148 = vmul.f32 %v6146, 0.5
    %v6149 = vmul.f32 %v6147, 0.5
    %v6150 = vadd.f32 %v6148, 0.5
    %v6151 = vadd.f32 %v6149, 0.5
    %v6152 = vmul.f32 %v6140, %v5530
    %v6153 = vmul.f32 %v6141, %v5531
    %v6154 = vmul.f32 %v6132, %v6142
    %v6155 = vmul.f32 %v6133, %v6143
    %v6156 = vadd.f32 %v6152, %v6154
    %v6157 = vadd.f32 %v6153, %v6155
    %v6158 = vtanh.pop %v6156
    %v6159 = vtanh.pop %v6157
    %v6160 = vmul.f32 %v6150, %v6158
    %v6161 = vmul.f32 %v6151, %v6159
    %v6162 = vpack.c.bf16 %v6160, %v6160
    %v6163 = vpack.c.bf16 %v6161, %v6161
    %v6166 = vunpack.c.l.b16 %v6162
    %v6167 = vunpack.c.l.b16 %v6163
    %v6168 = vpack.c.b16 %v6167, %v6166
    %6170 = vst [vmem:[#allocation4 + $0x8] sm:$0xff] %v6168
    %s6171 = scalar_lea.vmem [#allocation11], 80
    %6172 = vst [vmem:[%s6171] sm:$0xff] %v6160
    %6173 = vst [vmem:[%s6171 + $0x8] sm:$0xff] %v6161
    %v6174 = vld [vmem:[#allocation4] sm:$0xff]
    %s6175 = scalar_lea.vmem [#allocation5], 384
    %v6176 = vld [vmem:[%s6175] sm:$0xff]
    %v6177 = vld [vmem:[%s6175 + $0x8] sm:$0xff]
    %v6178 = vld [vmem:[%s6175 + $0x10] sm:$0xff]
    %v6179 = vld [vmem:[%s6175 + $0x18] sm:$0xff]
    %v6180 = vld [vmem:[%s6175 + $0x20] sm:$0xff]
    %v6181 = vld [vmem:[%s6175 + $0x28] sm:$0xff]
    %v6182 = vld [vmem:[%s6175 + $0x30] sm:$0xff]
    %v6183 = vld [vmem:[%s6175 + $0x38] sm:$0xff]
    %v6185 = vunpack.c.l.b16 %v6174
    %v6186 = vunpack.c.h.b16 %v6174
    %v6187 = vpack.c.b16 %v6185, %v6185
    %v6188 = vpack.c.b16 %v6186, %v6186
    %6191 = vmatprep.subr.bf16.mxu0 %v860
    %6192 = vmatpush1.bf16.msra.mxu0 %v859
    %6193 = vmatprep.subr.bf16.mxu0 %v868
    %6194 = vmatpush1.bf16.msra.mxu0 %v867
    %6195 = vmatprep.subr.bf16.mxu0 %v876
    %6196 = vmatpush1.bf16.msra.mxu0 %v875
    %6197 = vmatprep.subr.bf16.mxu0 %v884
    %6198 = vmatpush1.bf16.msra.mxu0 %v883
    %6199 = vmatprep.subr.bf16.mxu0 %v892
    %6200 = vmatpush1.bf16.msra.mxu0 %v891
    %6201 = vmatprep.subr.bf16.mxu0 %v900
    %6202 = vmatpush1.bf16.msra.mxu0 %v899
    %6203 = vmatprep.subr.bf16.mxu0 %v908
    %6204 = vmatpush1.bf16.msra.mxu0 %v907
    %6205 = vmatprep.subr.bf16.mxu0 %v916
    %6206 = vmatpush1.bf16.msra.mxu0 %v915
    %6207 = vmatprep.subr.bf16.mxu0 %v924
    %6208 = vmatpush1.bf16.msra.mxu0 %v923
    %6209 = vmatprep.subr.bf16.mxu0 %v932
    %6210 = vmatpush1.bf16.msra.mxu0 %v931
    %6211 = vmatprep.subr.bf16.mxu0 %v940
    %6212 = vmatpush1.bf16.msra.mxu0 %v939
    %6213 = vmatprep.subr.bf16.mxu0 %v948
    %6214 = vmatpush1.bf16.msra.mxu0 %v947
    %6215 = vmatprep.subr.bf16.mxu0 %v956
    %6216 = vmatpush1.bf16.msra.mxu0 %v955
    %6217 = vmatprep.subr.bf16.mxu0 %v964
    %6218 = vmatpush1.bf16.msra.mxu0 %v963
    %6219 = vmatprep.subr.bf16.mxu0 %v972
    %6220 = vmatpush1.bf16.msra.mxu0 %v971
    %6221 = vmatprep.subr.bf16.mxu0 %v980
    %6222 = vmatpush1.bf16.msra.mxu0 %v979
    %6223 = vmatprep.mubr.bf16.mxu0 %v6188
    %6224 = vmatmul.mubr.bf16.gmra.mrb[0].mxu0 %v6187
    %v6225 = vpop.f32.mrb[0].mxu0
    %v6226 = vadd.f32 0.0, %v6225
    %v6227 = vpop.f32.mrb[0].mxu0
    %v6228 = vadd.f32 0.0, %v6227
    %v6229 = vpop.f32.mrb[0].mxu0
    %v6230 = vpop.f32.mrb[0].mxu0
    %6231 = vdwg.mxu0
    %6232 = vmatprep.subr.bf16.mxu0 %v862
    %6233 = vmatpush1.bf16.msra.mxu0 %v861
    %6234 = vmatprep.subr.bf16.mxu0 %v870
    %6235 = vmatpush1.bf16.msra.mxu0 %v869
    %6236 = vmatprep.subr.bf16.mxu0 %v878
    %6237 = vmatpush1.bf16.msra.mxu0 %v877
    %6238 = vmatprep.subr.bf16.mxu0 %v886
    %6239 = vmatpush1.bf16.msra.mxu0 %v885
    %6240 = vmatprep.subr.bf16.mxu0 %v894
    %6241 = vmatpush1.bf16.msra.mxu0 %v893
    %6242 = vmatprep.subr.bf16.mxu0 %v902
    %6243 = vmatpush1.bf16.msra.mxu0 %v901
    %6244 = vmatprep.subr.bf16.mxu0 %v910
    %6245 = vmatpush1.bf16.msra.mxu0 %v909
    %6246 = vmatprep.subr.bf16.mxu0 %v918
    %6247 = vmatpush1.bf16.msra.mxu0 %v917
    %6248 = vmatprep.subr.bf16.mxu0 %v926
    %6249 = vmatpush1.bf16.msra.mxu0 %v925
    %6250 = vmatprep.subr.bf16.mxu0 %v934
    %6251 = vmatpush1.bf16.msra.mxu0 %v933
    %6252 = vmatprep.subr.bf16.mxu0 %v942
    %6253 = vmatpush1.bf16.msra.mxu0 %v941
    %6254 = vmatprep.subr.bf16.mxu0 %v950
    %6255 = vmatpush1.bf16.msra.mxu0 %v949
    %6256 = vmatprep.subr.bf16.mxu0 %v958
    %6257 = vmatpush1.bf16.msra.mxu0 %v957
    %6258 = vmatprep.subr.bf16.mxu0 %v966
    %6259 = vmatpush1.bf16.msra.mxu0 %v965
    %6260 = vmatprep.subr.bf16.mxu0 %v974
    %6261 = vmatpush1.bf16.msra.mxu0 %v973
    %6262 = vmatprep.subr.bf16.mxu0 %v982
    %6263 = vmatpush1.bf16.msra.mxu0 %v981
    %6264 = vmatprep.mubr.bf16.mxu0 %v6188
    %6265 = vmatmul.mubr.bf16.gmra.mrb[0].mxu0 %v6187
    %v6266 = vpop.f32.mrb[0].mxu0
    %v6267 = vadd.f32 0.0, %v6266
    %v6268 = vpop.f32.mrb[0].mxu0
    %v6269 = vadd.f32 0.0, %v6268
    %v6270 = vpop.f32.mrb[0].mxu0
    %v6271 = vpop.f32.mrb[0].mxu0
    %6272 = vdwg.mxu0
    %6273 = vmatprep.subr.bf16.mxu0 %v864
    %6274 = vmatpush1.bf16.msra.mxu0 %v863
    %6275 = vmatprep.subr.bf16.mxu0 %v872
    %6276 = vmatpush1.bf16.msra.mxu0 %v871
    %6277 = vmatprep.subr.bf16.mxu0 %v880
    %6278 = vmatpush1.bf16.msra.mxu0 %v879
    %6279 = vmatprep.subr.bf16.mxu0 %v888
    %6280 = vmatpush1.bf16.msra.mxu0 %v887
    %6281 = vmatprep.subr.bf16.mxu0 %v896
    %6282 = vmatpush1.bf16.msra.mxu0 %v895
    %6283 = vmatprep.subr.bf16.mxu0 %v904
    %6284 = vmatpush1.bf16.msra.mxu0 %v903
    %6285 = vmatprep.subr.bf16.mxu0 %v912
    %6286 = vmatpush1.bf16.msra.mxu0 %v911
    %6287 = vmatprep.subr.bf16.mxu0 %v920
    %6288 = vmatpush1.bf16.msra.mxu0 %v919
    %6289 = vmatprep.subr.bf16.mxu0 %v928
    %6290 = vmatpush1.bf16.msra.mxu0 %v927
    %6291 = vmatprep.subr.bf16.mxu0 %v936
    %6292 = vmatpush1.bf16.msra.mxu0 %v935
    %6293 = vmatprep.subr.bf16.mxu0 %v944
    %6294 = vmatpush1.bf16.msra.mxu0 %v943
    %6295 = vmatprep.subr.bf16.mxu0 %v952
    %6296 = vmatpush1.bf16.msra.mxu0 %v951
    %6297 = vmatprep.subr.bf16.mxu0 %v960
    %6298 = vmatpush1.bf16.msra.mxu0 %v959
    %6299 = vmatprep.subr.bf16.mxu0 %v968
    %6300 = vmatpush1.bf16.msra.mxu0 %v967
    %6301 = vmatprep.subr.bf16.mxu0 %v976
    %6302 = vmatpush1.bf16.msra.mxu0 %v975
    %6303 = vmatprep.subr.bf16.mxu0 %v984
    %6304 = vmatpush1.bf16.msra.mxu0 %v983
    %6305 = vmatprep.mubr.bf16.mxu0 %v6188
    %6306 = vmatmul.mubr.bf16.gmra.mrb[0].mxu0 %v6187
    %v6307 = vpop.f32.mrb[0].mxu0
    %v6308 = vadd.f32 0.0, %v6307
    %v6309 = vpop.f32.mrb[0].mxu0
    %v6310 = vadd.f32 0.0, %v6309
    %v6311 = vpop.f32.mrb[0].mxu0
    %v6312 = vpop.f32.mrb[0].mxu0
    %6313 = vdwg.mxu0
    %6314 = vmatprep.subr.bf16.mxu0 %v866
    %6315 = vmatpush1.bf16.msra.mxu0 %v865
    %6316 = vmatprep.subr.bf16.mxu0 %v874
    %6317 = vmatpush1.bf16.msra.mxu0 %v873
    %6318 = vmatprep.subr.bf16.mxu0 %v882
    %6319 = vmatpush1.bf16.msra.mxu0 %v881
    %6320 = vmatprep.subr.bf16.mxu0 %v890
    %6321 = vmatpush1.bf16.msra.mxu0 %v889
    %6322 = vmatprep.subr.bf16.mxu0 %v898
    %6323 = vmatpush1.bf16.msra.mxu0 %v897
    %6324 = vmatprep.subr.bf16.mxu0 %v906
    %6325 = vmatpush1.bf16.msra.mxu0 %v905
    %6326 = vmatprep.subr.bf16.mxu0 %v914
    %6327 = vmatpush1.bf16.msra.mxu0 %v913
    %6328 = vmatprep.subr.bf16.mxu0 %v922
    %6329 = vmatpush1.bf16.msra.mxu0 %v921
    %6330 = vmatprep.subr.bf16.mxu0 %v930
    %6331 = vmatpush1.bf16.msra.mxu0 %v929
    %6332 = vmatprep.subr.bf16.mxu0 %v938
    %6333 = vmatpush1.bf16.msra.mxu0 %v937
    %6334 = vmatprep.subr.bf16.mxu0 %v946
    %6335 = vmatpush1.bf16.msra.mxu0 %v945
    %6336 = vmatprep.subr.bf16.mxu0 %v954
    %6337 = vmatpush1.bf16.msra.mxu0 %v953
    %6338 = vmatprep.subr.bf16.mxu0 %v962
    %6339 = vmatpush1.bf16.msra.mxu0 %v961
    %6340 = vmatprep.subr.bf16.mxu0 %v970
    %6341 = vmatpush1.bf16.msra.mxu0 %v969
    %6342 = vmatprep.subr.bf16.mxu0 %v978
    %6343 = vmatpush1.bf16.msra.mxu0 %v977
    %6344 = vmatprep.subr.bf16.mxu0 %v986
    %6345 = vmatpush1.bf16.msra.mxu0 %v985
    %6346 = vmatprep.mubr.bf16.mxu0 %v6188
    %6347 = vmatmul.mubr.bf16.gmra.mrb[0].mxu0 %v6187
    %v6348 = vpop.f32.mrb[0].mxu0
    %v6349 = vadd.f32 0.0, %v6348
    %v6350 = vpop.f32.mrb[0].mxu0
    %v6351 = vadd.f32 0.0, %v6350
    %v6352 = vpop.f32.mrb[0].mxu0
    %v6353 = vpop.f32.mrb[0].mxu0
    %6354 = vdwg.mxu0
    %v6355 = vadd.f32 %v6176, %v6226
    %v6356 = vadd.f32 %v6177, %v6228
    %v6357 = vadd.f32 %v6178, %v6267
    %v6358 = vadd.f32 %v6179, %v6269
    %v6359 = vadd.f32 %v6180, %v6308
    %v6360 = vadd.f32 %v6181, %v6310
    %v6361 = vadd.f32 %v6182, %v6349
    %v6362 = vadd.f32 %v6183, %v6351
    %v6363 = vmul.f32 %v6355, 0.5
    %v6364 = vmul.f32 %v6356, 0.5
    %v6365 = vtanh.pop %v6363
    %v6366 = vtanh.pop %v6364
    %v6367 = vmul.f32 %v6365, 0.5
    %v6368 = vmul.f32 %v6366, 0.5
    %v6369 = vadd.f32 %v6367, 0.5
    %v6370 = vadd.f32 %v6368, 0.5
    %v6371 = vmul.f32 %v6357, 0.5
    %v6372 = vmul.f32 %v6358, 0.5
    %v6373 = vtanh.pop %v6371
    %v6374 = vtanh.pop %v6372
    %v6375 = vmul.f32 %v6373, 0.5
    %v6376 = vmul.f32 %v6374, 0.5
    %v6377 = vadd.f32 %v6375, 0.5
    %v6378 = vadd.f32 %v6376, 0.5
    %v6379 = vtanh.pop %v6359
    %v6380 = vtanh.pop %v6360
    %v6381 = vmul.f32 %v6361, 0.5
    %v6382 = vmul.f32 %v6362, 0.5
    %v6383 = vtanh.pop %v6381
    %v6384 = vtanh.pop %v6382
    %v6385 = vmul.f32 %v6383, 0.5
    %v6386 = vmul.f32 %v6384, 0.5
    %v6387 = vadd.f32 %v6385, 0.5
    %v6388 = vadd.f32 %v6386, 0.5
    %v6389 = vmul.f32 %v6377, %v5767
    %v6390 = vmul.f32 %v6378, %v5768
    %v6391 = vmul.f32 %v6369, %v6379
    %v6392 = vmul.f32 %v6370, %v6380
    %v6393 = vadd.f32 %v6389, %v6391
    %v6394 = vadd.f32 %v6390, %v6392
    %v6395 = vtanh.pop %v6393
    %v6396 = vtanh.pop %v6394
    %v6397 = vmul.f32 %v6387, %v6395
    %v6398 = vmul.f32 %v6388, %v6396
    %v6399 = vpack.c.bf16 %v6397, %v6397
    %v6400 = vpack.c.bf16 %v6398, %v6398
    %v6403 = vunpack.c.l.b16 %v6399
    %v6404 = vunpack.c.l.b16 %v6400
    %v6405 = vpack.c.b16 %v6404, %v6403
    %6407 = vst [vmem:[#allocation4] sm:$0xff] %v6405
    %v6408 = vld [vmem:[#allocation4] sm:$0xff]
    %v6409 = vld [vmem:[#allocation4 + $0x8] sm:$0xff]
    %v6412 = vunpack.c.l.b16 %v6408
    %v6413 = vunpack.c.h.b16 %v6408
    %v6414 = vunpack.c.l.b16 %v6409
    %v6415 = vunpack.c.h.b16 %v6409
    %v6416 = vpack.c.b16 %v6412, %v6412
    %v6417 = vpack.c.b16 %v6413, %v6413
    %v6418 = vpack.c.b16 %v6414, %v6414
    %v6419 = vpack.c.b16 %v6415, %v6415
    %6424 = vmatprep.subr.bf16.mxu0 %v2158
    %6425 = vmatpush1.bf16.msra.mxu0 %v2157
    %6426 = vmatprep.subr.bf16.mxu0 %v2166
    %6427 = vmatpush1.bf16.msra.mxu0 %v2165
    %6428 = vmatprep.subr.bf16.mxu0 %v2174
    %6429 = vmatpush1.bf16.msra.mxu0 %v2173
    %6430 = vmatprep.subr.bf16.mxu0 %v2182
    %6431 = vmatpush1.bf16.msra.mxu0 %v2181
    %6432 = vmatprep.subr.bf16.mxu0 %v2190
    %6433 = vmatpush1.bf16.msra.mxu0 %v2189
    %6434 = vmatprep.subr.bf16.mxu0 %v2198
    %6435 = vmatpush1.bf16.msra.mxu0 %v2197
    %6436 = vmatprep.subr.bf16.mxu0 %v2206
    %6437 = vmatpush1.bf16.msra.mxu0 %v2205
    %6438 = vmatprep.subr.bf16.mxu0 %v2214
    %6439 = vmatpush1.bf16.msra.mxu0 %v2213
    %6440 = vmatprep.subr.bf16.mxu0 %v2222
    %6441 = vmatpush1.bf16.msra.mxu0 %v2221
    %6442 = vmatprep.subr.bf16.mxu0 %v2230
    %6443 = vmatpush1.bf16.msra.mxu0 %v2229
    %6444 = vmatprep.subr.bf16.mxu0 %v2238
    %6445 = vmatpush1.bf16.msra.mxu0 %v2237
    %6446 = vmatprep.subr.bf16.mxu0 %v2246
    %6447 = vmatpush1.bf16.msra.mxu0 %v2245
    %6448 = vmatprep.subr.bf16.mxu0 %v2254
    %6449 = vmatpush1.bf16.msra.mxu0 %v2253
    %6450 = vmatprep.subr.bf16.mxu0 %v2262
    %6451 = vmatpush1.bf16.msra.mxu0 %v2261
    %6452 = vmatprep.subr.bf16.mxu0 %v2270
    %6453 = vmatpush1.bf16.msra.mxu0 %v2269
    %6454 = vmatprep.subr.bf16.mxu0 %v2278
    %6455 = vmatpush1.bf16.msra.mxu0 %v2277
    %6456 = vmatprep.mubr.bf16.mxu0 %v6417
    %6457 = vmatmul.mubr.bf16.gmra.mrb[0].mxu0 %v6416
    %v6458 = vpop.f32.mrb[0].mxu0
    %v6459 = vadd.f32 %v1338, %v6458
    %v6460 = vpop.f32.mrb[0].mxu0
    %v6461 = vadd.f32 %v1342, %v6460
    %v6462 = vpop.f32.mrb[0].mxu0
    %v6463 = vpop.f32.mrb[0].mxu0
    %6464 = vdwg.mxu0
    %6465 = vmatprep.subr.bf16.mxu0 %v2286
    %6466 = vmatpush1.bf16.msra.mxu0 %v2285
    %6467 = vmatprep.subr.bf16.mxu0 %v2294
    %6468 = vmatpush1.bf16.msra.mxu0 %v2293
    %6469 = vmatprep.subr.bf16.mxu0 %v2302
    %6470 = vmatpush1.bf16.msra.mxu0 %v2301
    %6471 = vmatprep.subr.bf16.mxu0 %v2310
    %6472 = vmatpush1.bf16.msra.mxu0 %v2309
    %6473 = vmatprep.subr.bf16.mxu0 %v2318
    %6474 = vmatpush1.bf16.msra.mxu0 %v2317
    %6475 = vmatprep.subr.bf16.mxu0 %v2326
    %6476 = vmatpush1.bf16.msra.mxu0 %v2325
    %6477 = vmatprep.subr.bf16.mxu0 %v2334
    %6478 = vmatpush1.bf16.msra.mxu0 %v2333
    %6479 = vmatprep.subr.bf16.mxu0 %v2342
    %6480 = vmatpush1.bf16.msra.mxu0 %v2341
    %6481 = vmatprep.subr.bf16.mxu0 %v2350
    %6482 = vmatpush1.bf16.msra.mxu0 %v2349
    %6483 = vmatprep.subr.bf16.mxu0 %v2358
    %6484 = vmatpush1.bf16.msra.mxu0 %v2357
    %6485 = vmatprep.subr.bf16.mxu0 %v2366
    %6486 = vmatpush1.bf16.msra.mxu0 %v2365
    %6487 = vmatprep.subr.bf16.mxu0 %v2374
    %6488 = vmatpush1.bf16.msra.mxu0 %v2373
    %6489 = vmatprep.subr.bf16.mxu0 %v2382
    %6490 = vmatpush1.bf16.msra.mxu0 %v2381
    %6491 = vmatprep.subr.bf16.mxu0 %v2390
    %6492 = vmatpush1.bf16.msra.mxu0 %v2389
    %6493 = vmatprep.subr.bf16.mxu0 %v2398
    %6494 = vmatpush1.bf16.msra.mxu0 %v2397
    %6495 = vmatprep.subr.bf16.mxu0 %v2406
    %6496 = vmatpush1.bf16.msra.mxu0 %v2405
    %6497 = vmatprep.mubr.bf16.mxu0 %v6419
    %6498 = vmatmul.mubr.bf16.gmra.mrb[0].mxu0 %v6418
    %v6499 = vpop.f32.mrb[0].mxu0
    %v6500 = vadd.f32 %v6459, %v6499
    %v6501 = vpop.f32.mrb[0].mxu0
    %v6502 = vadd.f32 %v6461, %v6501
    %v6503 = vpop.f32.mrb[0].mxu0
    %v6504 = vpop.f32.mrb[0].mxu0
    %6505 = vdwg.mxu0
    %6506 = vmatprep.subr.bf16.mxu0 %v2160
    %6507 = vmatpush1.bf16.msra.mxu0 %v2159
    %6508 = vmatprep.subr.bf16.mxu0 %v2168
    %6509 = vmatpush1.bf16.msra.mxu0 %v2167
    %6510 = vmatprep.subr.bf16.mxu0 %v2176
    %6511 = vmatpush1.bf16.msra.mxu0 %v2175
    %6512 = vmatprep.subr.bf16.mxu0 %v2184
    %6513 = vmatpush1.bf16.msra.mxu0 %v2183
    %6514 = vmatprep.subr.bf16.mxu0 %v2192
    %6515 = vmatpush1.bf16.msra.mxu0 %v2191
    %6516 = vmatprep.subr.bf16.mxu0 %v2200
    %6517 = vmatpush1.bf16.msra.mxu0 %v2199
    %6518 = vmatprep.subr.bf16.mxu0 %v2208
    %6519 = vmatpush1.bf16.msra.mxu0 %v2207
    %6520 = vmatprep.subr.bf16.mxu0 %v2216
    %6521 = vmatpush1.bf16.msra.mxu0 %v2215
    %6522 = vmatprep.subr.bf16.mxu0 %v2224
    %6523 = vmatpush1.bf16.msra.mxu0 %v2223
    %6524 = vmatprep.subr.bf16.mxu0 %v2232
    %6525 = vmatpush1.bf16.msra.mxu0 %v2231
    %6526 = vmatprep.subr.bf16.mxu0 %v2240
    %6527 = vmatpush1.bf16.msra.mxu0 %v2239
    %6528 = vmatprep.subr.bf16.mxu0 %v2248
    %6529 = vmatpush1.bf16.msra.mxu0 %v2247
    %6530 = vmatprep.subr.bf16.mxu0 %v2256
    %6531 = vmatpush1.bf16.msra.mxu0 %v2255
    %6532 = vmatprep.subr.bf16.mxu0 %v2264
    %6533 = vmatpush1.bf16.msra.mxu0 %v2263
    %6534 = vmatprep.subr.bf16.mxu0 %v2272
    %6535 = vmatpush1.bf16.msra.mxu0 %v2271
    %6536 = vmatprep.subr.bf16.mxu0 %v2280
    %6537 = vmatpush1.bf16.msra.mxu0 %v2279
    %6538 = vmatprep.mubr.bf16.mxu0 %v6417
    %6539 = vmatmul.mubr.bf16.gmra.mrb[0].mxu0 %v6416
    %v6540 = vpop.f32.mrb[0].mxu0
    %v6541 = vadd.f32 %v1346, %v6540
    %v6542 = vpop.f32.mrb[0].mxu0
    %v6543 = vadd.f32 %v1350, %v6542
    %v6544 = vpop.f32.mrb[0].mxu0
    %v6545 = vpop.f32.mrb[0].mxu0
    %6546 = vdwg.mxu0
    %6547 = vmatprep.subr.bf16.mxu0 %v2288
    %6548 = vmatpush1.bf16.msra.mxu0 %v2287
    %6549 = vmatprep.subr.bf16.mxu0 %v2296
    %6550 = vmatpush1.bf16.msra.mxu0 %v2295
    %6551 = vmatprep.subr.bf16.mxu0 %v2304
    %6552 = vmatpush1.bf16.msra.mxu0 %v2303
    %6553 = vmatprep.subr.bf16.mxu0 %v2312
    %6554 = vmatpush1.bf16.msra.mxu0 %v2311
    %6555 = vmatprep.subr.bf16.mxu0 %v2320
    %6556 = vmatpush1.bf16.msra.mxu0 %v2319
    %6557 = vmatprep.subr.bf16.mxu0 %v2328
    %6558 = vmatpush1.bf16.msra.mxu0 %v2327
    %6559 = vmatprep.subr.bf16.mxu0 %v2336
    %6560 = vmatpush1.bf16.msra.mxu0 %v2335
    %6561 = vmatprep.subr.bf16.mxu0 %v2344
    %6562 = vmatpush1.bf16.msra.mxu0 %v2343
    %6563 = vmatprep.subr.bf16.mxu0 %v2352
    %6564 = vmatpush1.bf16.msra.mxu0 %v2351
    %6565 = vmatprep.subr.bf16.mxu0 %v2360
    %6566 = vmatpush1.bf16.msra.mxu0 %v2359
    %6567 = vmatprep.subr.bf16.mxu0 %v2368
    %6568 = vmatpush1.bf16.msra.mxu0 %v2367
    %6569 = vmatprep.subr.bf16.mxu0 %v2376
    %6570 = vmatpush1.bf16.msra.mxu0 %v2375
    %6571 = vmatprep.subr.bf16.mxu0 %v2384
    %6572 = vmatpush1.bf16.msra.mxu0 %v2383
    %6573 = vmatprep.subr.bf16.mxu0 %v2392
    %6574 = vmatpush1.bf16.msra.mxu0 %v2391
    %6575 = vmatprep.subr.bf16.mxu0 %v2400
    %6576 = vmatpush1.bf16.msra.mxu0 %v2399
    %6577 = vmatprep.subr.bf16.mxu0 %v2408
    %6578 = vmatpush1.bf16.msra.mxu0 %v2407
    %6579 = vmatprep.mubr.bf16.mxu0 %v6419
    %6580 = vmatmul.mubr.bf16.gmra.mrb[0].mxu0 %v6418
    %v6581 = vpop.f32.mrb[0].mxu0
    %v6582 = vadd.f32 %v6541, %v6581
    %v6583 = vpop.f32.mrb[0].mxu0
    %v6584 = vadd.f32 %v6543, %v6583
    %v6585 = vpop.f32.mrb[0].mxu0
    %v6586 = vpop.f32.mrb[0].mxu0
    %6587 = vdwg.mxu0
    %6588 = vmatprep.subr.bf16.mxu0 %v2162
    %6589 = vmatpush1.bf16.msra.mxu0 %v2161
    %6590 = vmatprep.subr.bf16.mxu0 %v2170
    %6591 = vmatpush1.bf16.msra.mxu0 %v2169
    %6592 = vmatprep.subr.bf16.mxu0 %v2178
    %6593 = vmatpush1.bf16.msra.mxu0 %v2177
    %6594 = vmatprep.subr.bf16.mxu0 %v2186
    %6595 = vmatpush1.bf16.msra.mxu0 %v2185
    %6596 = vmatprep.subr.bf16.mxu0 %v2194
    %6597 = vmatpush1.bf16.msra.mxu0 %v2193
    %6598 = vmatprep.subr.bf16.mxu0 %v2202
    %6599 = vmatpush1.bf16.msra.mxu0 %v2201
    %6600 = vmatprep.subr.bf16.mxu0 %v2210
    %6601 = vmatpush1.bf16.msra.mxu0 %v2209
    %6602 = vmatprep.subr.bf16.mxu0 %v2218
    %6603 = vmatpush1.bf16.msra.mxu0 %v2217
    %6604 = vmatprep.subr.bf16.mxu0 %v2226
    %6605 = vmatpush1.bf16.msra.mxu0 %v2225
    %6606 = vmatprep.subr.bf16.mxu0 %v2234
    %6607 = vmatpush1.bf16.msra.mxu0 %v2233
    %6608 = vmatprep.subr.bf16.mxu0 %v2242
    %6609 = vmatpush1.bf16.msra.mxu0 %v2241
    %6610 = vmatprep.subr.bf16.mxu0 %v2250
    %6611 = vmatpush1.bf16.msra.mxu0 %v2249
    %6612 = vmatprep.subr.bf16.mxu0 %v2258
    %6613 = vmatpush1.bf16.msra.mxu0 %v2257
    %6614 = vmatprep.subr.bf16.mxu0 %v2266
    %6615 = vmatpush1.bf16.msra.mxu0 %v2265
    %6616 = vmatprep.subr.bf16.mxu0 %v2274
    %6617 = vmatpush1.bf16.msra.mxu0 %v2273
    %6618 = vmatprep.subr.bf16.mxu0 %v2282
    %6619 = vmatpush1.bf16.msra.mxu0 %v2281
    %6620 = vmatprep.mubr.bf16.mxu0 %v6417
    %6621 = vmatmul.mubr.bf16.gmra.mrb[0].mxu0 %v6416
    %v6622 = vpop.f32.mrb[0].mxu0
    %v6623 = vadd.f32 %v1354, %v6622
    %v6624 = vpop.f32.mrb[0].mxu0
    %v6625 = vadd.f32 %v1358, %v6624
    %v6626 = vpop.f32.mrb[0].mxu0
    %v6627 = vpop.f32.mrb[0].mxu0
    %6628 = vdwg.mxu0
    %6629 = vmatprep.subr.bf16.mxu0 %v2290
    %6630 = vmatpush1.bf16.msra.mxu0 %v2289
    %6631 = vmatprep.subr.bf16.mxu0 %v2298
    %6632 = vmatpush1.bf16.msra.mxu0 %v2297
    %6633 = vmatprep.subr.bf16.mxu0 %v2306
    %6634 = vmatpush1.bf16.msra.mxu0 %v2305
    %6635 = vmatprep.subr.bf16.mxu0 %v2314
    %6636 = vmatpush1.bf16.msra.mxu0 %v2313
    %6637 = vmatprep.subr.bf16.mxu0 %v2322
    %6638 = vmatpush1.bf16.msra.mxu0 %v2321
    %6639 = vmatprep.subr.bf16.mxu0 %v2330
    %6640 = vmatpush1.bf16.msra.mxu0 %v2329
    %6641 = vmatprep.subr.bf16.mxu0 %v2338
    %6642 = vmatpush1.bf16.msra.mxu0 %v2337
    %6643 = vmatprep.subr.bf16.mxu0 %v2346
    %6644 = vmatpush1.bf16.msra.mxu0 %v2345
    %6645 = vmatprep.subr.bf16.mxu0 %v2354
    %6646 = vmatpush1.bf16.msra.mxu0 %v2353
    %6647 = vmatprep.subr.bf16.mxu0 %v2362
    %6648 = vmatpush1.bf16.msra.mxu0 %v2361
    %6649 = vmatprep.subr.bf16.mxu0 %v2370
    %6650 = vmatpush1.bf16.msra.mxu0 %v2369
    %6651 = vmatprep.subr.bf16.mxu0 %v2378
    %6652 = vmatpush1.bf16.msra.mxu0 %v2377
    %6653 = vmatprep.subr.bf16.mxu0 %v2386
    %6654 = vmatpush1.bf16.msra.mxu0 %v2385
    %6655 = vmatprep.subr.bf16.mxu0 %v2394
    %6656 = vmatpush1.bf16.msra.mxu0 %v2393
    %6657 = vmatprep.subr.bf16.mxu0 %v2402
    %6658 = vmatpush1.bf16.msra.mxu0 %v2401
    %6659 = vmatprep.subr.bf16.mxu0 %v2410
    %6660 = vmatpush1.bf16.msra.mxu0 %v2409
    %6661 = vmatprep.mubr.bf16.mxu0 %v6419
    %6662 = vmatmul.mubr.bf16.gmra.mrb[0].mxu0 %v6418
    %v6663 = vpop.f32.mrb[0].mxu0
    %v6664 = vadd.f32 %v6623, %v6663
    %v6665 = vpop.f32.mrb[0].mxu0
    %v6666 = vadd.f32 %v6625, %v6665
    %v6667 = vpop.f32.mrb[0].mxu0
    %v6668 = vpop.f32.mrb[0].mxu0
    %6669 = vdwg.mxu0
    %6670 = vmatprep.subr.bf16.mxu0 %v2164
    %6671 = vmatpush1.bf16.msra.mxu0 %v2163
    %6672 = vmatprep.subr.bf16.mxu0 %v2172
    %6673 = vmatpush1.bf16.msra.mxu0 %v2171
    %6674 = vmatprep.subr.bf16.mxu0 %v2180
    %6675 = vmatpush1.bf16.msra.mxu0 %v2179
    %6676 = vmatprep.subr.bf16.mxu0 %v2188
    %6677 = vmatpush1.bf16.msra.mxu0 %v2187
    %6678 = vmatprep.subr.bf16.mxu0 %v2196
    %6679 = vmatpush1.bf16.msra.mxu0 %v2195
    %6680 = vmatprep.subr.bf16.mxu0 %v2204
    %6681 = vmatpush1.bf16.msra.mxu0 %v2203
    %6682 = vmatprep.subr.bf16.mxu0 %v2212
    %6683 = vmatpush1.bf16.msra.mxu0 %v2211
    %6684 = vmatprep.subr.bf16.mxu0 %v2220
    %6685 = vmatpush1.bf16.msra.mxu0 %v2219
    %6686 = vmatprep.subr.bf16.mxu0 %v2228
    %6687 = vmatpush1.bf16.msra.mxu0 %v2227
    %6688 = vmatprep.subr.bf16.mxu0 %v2236
    %6689 = vmatpush1.bf16.msra.mxu0 %v2235
    %6690 = vmatprep.subr.bf16.mxu0 %v2244
    %6691 = vmatpush1.bf16.msra.mxu0 %v2243
    %6692 = vmatprep.subr.bf16.mxu0 %v2252
    %6693 = vmatpush1.bf16.msra.mxu0 %v2251
    %6694 = vmatprep.subr.bf16.mxu0 %v2260
    %6695 = vmatpush1.bf16.msra.mxu0 %v2259
    %6696 = vmatprep.subr.bf16.mxu0 %v2268
    %6697 = vmatpush1.bf16.msra.mxu0 %v2267
    %6698 = vmatprep.subr.bf16.mxu0 %v2276
    %6699 = vmatpush1.bf16.msra.mxu0 %v2275
    %6700 = vmatprep.subr.bf16.mxu0 %v2284
    %6701 = vmatpush1.bf16.msra.mxu0 %v2283
    %6702 = vmatprep.mubr.bf16.mxu0 %v6417
    %6703 = vmatmul.mubr.bf16.gmra.mrb[0].mxu0 %v6416
    %v6704 = vpop.f32.mrb[0].mxu0
    %v6705 = vadd.f32 %v1362, %v6704
    %v6706 = vpop.f32.mrb[0].mxu0
    %v6707 = vadd.f32 %v1366, %v6706
    %v6708 = vpop.f32.mrb[0].mxu0
    %v6709 = vpop.f32.mrb[0].mxu0
    %6710 = vdwg.mxu0
    %6711 = vmatprep.subr.bf16.mxu0 %v2292
    %6712 = vmatpush1.bf16.msra.mxu0 %v2291
    %6713 = vmatprep.subr.bf16.mxu0 %v2300
    %6714 = vmatpush1.bf16.msra.mxu0 %v2299
    %6715 = vmatprep.subr.bf16.mxu0 %v2308
    %6716 = vmatpush1.bf16.msra.mxu0 %v2307
    %6717 = vmatprep.subr.bf16.mxu0 %v2316
    %6718 = vmatpush1.bf16.msra.mxu0 %v2315
    %6719 = vmatprep.subr.bf16.mxu0 %v2324
    %6720 = vmatpush1.bf16.msra.mxu0 %v2323
    %6721 = vmatprep.subr.bf16.mxu0 %v2332
    %6722 = vmatpush1.bf16.msra.mxu0 %v2331
    %6723 = vmatprep.subr.bf16.mxu0 %v2340
    %6724 = vmatpush1.bf16.msra.mxu0 %v2339
    %6725 = vmatprep.subr.bf16.mxu0 %v2348
    %6726 = vmatpush1.bf16.msra.mxu0 %v2347
    %6727 = vmatprep.subr.bf16.mxu0 %v2356
    %6728 = vmatpush1.bf16.msra.mxu0 %v2355
    %6729 = vmatprep.subr.bf16.mxu0 %v2364
    %6730 = vmatpush1.bf16.msra.mxu0 %v2363
    %6731 = vmatprep.subr.bf16.mxu0 %v2372
    %6732 = vmatpush1.bf16.msra.mxu0 %v2371
    %6733 = vmatprep.subr.bf16.mxu0 %v2380
    %6734 = vmatpush1.bf16.msra.mxu0 %v2379
    %6735 = vmatprep.subr.bf16.mxu0 %v2388
    %6736 = vmatpush1.bf16.msra.mxu0 %v2387
    %6737 = vmatprep.subr.bf16.mxu0 %v2396
    %6738 = vmatpush1.bf16.msra.mxu0 %v2395
    %6739 = vmatprep.subr.bf16.mxu0 %v2404
    %6740 = vmatpush1.bf16.msra.mxu0 %v2403
    %6741 = vmatprep.subr.bf16.mxu0 %v2412
    %6742 = vmatpush1.bf16.msra.mxu0 %v2411
    %6743 = vmatprep.mubr.bf16.mxu0 %v6419
    %6744 = vmatmul.mubr.bf16.gmra.mrb[0].mxu0 %v6418
    %v6745 = vpop.f32.mrb[0].mxu0
    %v6746 = vadd.f32 %v6705, %v6745
    %v6747 = vpop.f32.mrb[0].mxu0
    %v6748 = vadd.f32 %v6707, %v6747
    %v6749 = vpop.f32.mrb[0].mxu0
    %v6750 = vpop.f32.mrb[0].mxu0
    %6751 = vdwg.mxu0
    %v6752 = vmul.f32 %v6500, 0.5
    %v6753 = vmul.f32 %v6502, 0.5
    %v6754 = vtanh.pop %v6752
    %v6755 = vtanh.pop %v6753
    %v6756 = vmul.f32 %v6754, 0.5
    %v6757 = vmul.f32 %v6755, 0.5
    %v6758 = vadd.f32 %v6756, 0.5
    %v6759 = vadd.f32 %v6757, 0.5
    %v6760 = vmul.f32 %v6582, 0.5
    %v6761 = vmul.f32 %v6584, 0.5
    %v6762 = vtanh.pop %v6760
    %v6763 = vtanh.pop %v6761
    %v6764 = vmul.f32 %v6762, 0.5
    %v6765 = vmul.f32 %v6763, 0.5
    %v6766 = vadd.f32 %v6764, 0.5
    %v6767 = vadd.f32 %v6765, 0.5
    %v6768 = vtanh.pop %v6664
    %v6769 = vtanh.pop %v6666
    %v6770 = vmul.f32 %v6746, 0.5
    %v6771 = vmul.f32 %v6748, 0.5
    %v6772 = vtanh.pop %v6770
    %v6773 = vtanh.pop %v6771
    %v6774 = vmul.f32 %v6772, 0.5
    %v6775 = vmul.f32 %v6773, 0.5
    %v6776 = vadd.f32 %v6774, 0.5
    %v6777 = vadd.f32 %v6775, 0.5
    %v6778 = vmul.f32 %v6766, %v6156
    %v6779 = vmul.f32 %v6767, %v6157
    %v6780 = vmul.f32 %v6758, %v6768
    %v6781 = vmul.f32 %v6759, %v6769
    %v6782 = vadd.f32 %v6778, %v6780
    %v6783 = vadd.f32 %v6779, %v6781
    %v6784 = vtanh.pop %v6782
    %v6785 = vtanh.pop %v6783
    %v6786 = vmul.f32 %v6776, %v6784
    %v6787 = vmul.f32 %v6777, %v6785
    %v6788 = vpack.c.bf16 %v6786, %v6786
    %v6789 = vpack.c.bf16 %v6787, %v6787
    %v6792 = vunpack.c.l.b16 %v6788
    %v6793 = vunpack.c.l.b16 %v6789
    %v6794 = vpack.c.b16 %v6793, %v6792
    %6796 = vst [vmem:[#allocation4 + $0x8] sm:$0xff] %v6794
    %s6797 = scalar_lea.vmem [#allocation11], 96
    %6798 = vst [vmem:[%s6797] sm:$0xff] %v6786
    %6799 = vst [vmem:[%s6797 + $0x8] sm:$0xff] %v6787
    %v6800 = vld [vmem:[#allocation4] sm:$0xff]
    %s6801 = scalar_lea.vmem [#allocation5], 448
    %v6802 = vld [vmem:[%s6801] sm:$0xff]
    %v6803 = vld [vmem:[%s6801 + $0x8] sm:$0xff]
    %v6804 = vld [vmem:[%s6801 + $0x10] sm:$0xff]
    %v6805 = vld [vmem:[%s6801 + $0x18] sm:$0xff]
    %v6806 = vld [vmem:[%s6801 + $0x20] sm:$0xff]
    %v6807 = vld [vmem:[%s6801 + $0x28] sm:$0xff]
    %v6808 = vld [vmem:[%s6801 + $0x30] sm:$0xff]
    %v6809 = vld [vmem:[%s6801 + $0x38] sm:$0xff]
    %v6811 = vunpack.c.l.b16 %v6800
    %v6812 = vunpack.c.h.b16 %v6800
    %v6813 = vpack.c.b16 %v6811, %v6811
    %v6814 = vpack.c.b16 %v6812, %v6812
    %6817 = vmatprep.subr.bf16.mxu0 %v860
    %6818 = vmatpush1.bf16.msra.mxu0 %v859
    %6819 = vmatprep.subr.bf16.mxu0 %v868
    %6820 = vmatpush1.bf16.msra.mxu0 %v867
    %6821 = vmatprep.subr.bf16.mxu0 %v876
    %6822 = vmatpush1.bf16.msra.mxu0 %v875
    %6823 = vmatprep.subr.bf16.mxu0 %v884
    %6824 = vmatpush1.bf16.msra.mxu0 %v883
    %6825 = vmatprep.subr.bf16.mxu0 %v892
    %6826 = vmatpush1.bf16.msra.mxu0 %v891
    %6827 = vmatprep.subr.bf16.mxu0 %v900
    %6828 = vmatpush1.bf16.msra.mxu0 %v899
    %6829 = vmatprep.subr.bf16.mxu0 %v908
    %6830 = vmatpush1.bf16.msra.mxu0 %v907
    %6831 = vmatprep.subr.bf16.mxu0 %v916
    %6832 = vmatpush1.bf16.msra.mxu0 %v915
    %6833 = vmatprep.subr.bf16.mxu0 %v924
    %6834 = vmatpush1.bf16.msra.mxu0 %v923
    %6835 = vmatprep.subr.bf16.mxu0 %v932
    %6836 = vmatpush1.bf16.msra.mxu0 %v931
    %6837 = vmatprep.subr.bf16.mxu0 %v940
    %6838 = vmatpush1.bf16.msra.mxu0 %v939
    %6839 = vmatprep.subr.bf16.mxu0 %v948
    %6840 = vmatpush1.bf16.msra.mxu0 %v947
    %6841 = vmatprep.subr.bf16.mxu0 %v956
    %6842 = vmatpush1.bf16.msra.mxu0 %v955
    %6843 = vmatprep.subr.bf16.mxu0 %v964
    %6844 = vmatpush1.bf16.msra.mxu0 %v963
    %6845 = vmatprep.subr.bf16.mxu0 %v972
    %6846 = vmatpush1.bf16.msra.mxu0 %v971
    %6847 = vmatprep.subr.bf16.mxu0 %v980
    %6848 = vmatpush1.bf16.msra.mxu0 %v979
    %6849 = vmatprep.mubr.bf16.mxu0 %v6814
    %6850 = vmatmul.mubr.bf16.gmra.mrb[0].mxu0 %v6813
    %v6851 = vpop.f32.mrb[0].mxu0
    %v6852 = vadd.f32 0.0, %v6851
    %v6853 = vpop.f32.mrb[0].mxu0
    %v6854 = vadd.f32 0.0, %v6853
    %v6855 = vpop.f32.mrb[0].mxu0
    %v6856 = vpop.f32.mrb[0].mxu0
    %6857 = vdwg.mxu0
    %6858 = vmatprep.subr.bf16.mxu0 %v862
    %6859 = vmatpush1.bf16.msra.mxu0 %v861
    %6860 = vmatprep.subr.bf16.mxu0 %v870
    %6861 = vmatpush1.bf16.msra.mxu0 %v869
    %6862 = vmatprep.subr.bf16.mxu0 %v878
    %6863 = vmatpush1.bf16.msra.mxu0 %v877
    %6864 = vmatprep.subr.bf16.mxu0 %v886
    %6865 = vmatpush1.bf16.msra.mxu0 %v885
    %6866 = vmatprep.subr.bf16.mxu0 %v894
    %6867 = vmatpush1.bf16.msra.mxu0 %v893
    %6868 = vmatprep.subr.bf16.mxu0 %v902
    %6869 = vmatpush1.bf16.msra.mxu0 %v901
    %6870 = vmatprep.subr.bf16.mxu0 %v910
    %6871 = vmatpush1.bf16.msra.mxu0 %v909
    %6872 = vmatprep.subr.bf16.mxu0 %v918
    %6873 = vmatpush1.bf16.msra.mxu0 %v917
    %6874 = vmatprep.subr.bf16.mxu0 %v926
    %6875 = vmatpush1.bf16.msra.mxu0 %v925
    %6876 = vmatprep.subr.bf16.mxu0 %v934
    %6877 = vmatpush1.bf16.msra.mxu0 %v933
    %6878 = vmatprep.subr.bf16.mxu0 %v942
    %6879 = vmatpush1.bf16.msra.mxu0 %v941
    %6880 = vmatprep.subr.bf16.mxu0 %v950
    %6881 = vmatpush1.bf16.msra.mxu0 %v949
    %6882 = vmatprep.subr.bf16.mxu0 %v958
    %6883 = vmatpush1.bf16.msra.mxu0 %v957
    %6884 = vmatprep.subr.bf16.mxu0 %v966
    %6885 = vmatpush1.bf16.msra.mxu0 %v965
    %6886 = vmatprep.subr.bf16.mxu0 %v974
    %6887 = vmatpush1.bf16.msra.mxu0 %v973
    %6888 = vmatprep.subr.bf16.mxu0 %v982
    %6889 = vmatpush1.bf16.msra.mxu0 %v981
    %6890 = vmatprep.mubr.bf16.mxu0 %v6814
    %6891 = vmatmul.mubr.bf16.gmra.mrb[0].mxu0 %v6813
    %v6892 = vpop.f32.mrb[0].mxu0
    %v6893 = vadd.f32 0.0, %v6892
    %v6894 = vpop.f32.mrb[0].mxu0
    %v6895 = vadd.f32 0.0, %v6894
    %v6896 = vpop.f32.mrb[0].mxu0
    %v6897 = vpop.f32.mrb[0].mxu0
    %6898 = vdwg.mxu0
    %6899 = vmatprep.subr.bf16.mxu0 %v864
    %6900 = vmatpush1.bf16.msra.mxu0 %v863
    %6901 = vmatprep.subr.bf16.mxu0 %v872
    %6902 = vmatpush1.bf16.msra.mxu0 %v871
    %6903 = vmatprep.subr.bf16.mxu0 %v880
    %6904 = vmatpush1.bf16.msra.mxu0 %v879
    %6905 = vmatprep.subr.bf16.mxu0 %v888
    %6906 = vmatpush1.bf16.msra.mxu0 %v887
    %6907 = vmatprep.subr.bf16.mxu0 %v896
    %6908 = vmatpush1.bf16.msra.mxu0 %v895
    %6909 = vmatprep.subr.bf16.mxu0 %v904
    %6910 = vmatpush1.bf16.msra.mxu0 %v903
    %6911 = vmatprep.subr.bf16.mxu0 %v912
    %6912 = vmatpush1.bf16.msra.mxu0 %v911
    %6913 = vmatprep.subr.bf16.mxu0 %v920
    %6914 = vmatpush1.bf16.msra.mxu0 %v919
    %6915 = vmatprep.subr.bf16.mxu0 %v928
    %6916 = vmatpush1.bf16.msra.mxu0 %v927
    %6917 = vmatprep.subr.bf16.mxu0 %v936
    %6918 = vmatpush1.bf16.msra.mxu0 %v935
    %6919 = vmatprep.subr.bf16.mxu0 %v944
    %6920 = vmatpush1.bf16.msra.mxu0 %v943
    %6921 = vmatprep.subr.bf16.mxu0 %v952
    %6922 = vmatpush1.bf16.msra.mxu0 %v951
    %6923 = vmatprep.subr.bf16.mxu0 %v960
    %6924 = vmatpush1.bf16.msra.mxu0 %v959
    %6925 = vmatprep.subr.bf16.mxu0 %v968
    %6926 = vmatpush1.bf16.msra.mxu0 %v967
    %6927 = vmatprep.subr.bf16.mxu0 %v976
    %6928 = vmatpush1.bf16.msra.mxu0 %v975
    %6929 = vmatprep.subr.bf16.mxu0 %v984
    %6930 = vmatpush1.bf16.msra.mxu0 %v983
    %6931 = vmatprep.mubr.bf16.mxu0 %v6814
    %6932 = vmatmul.mubr.bf16.gmra.mrb[0].mxu0 %v6813
    %v6933 = vpop.f32.mrb[0].mxu0
    %v6934 = vadd.f32 0.0, %v6933
    %v6935 = vpop.f32.mrb[0].mxu0
    %v6936 = vadd.f32 0.0, %v6935
    %v6937 = vpop.f32.mrb[0].mxu0
    %v6938 = vpop.f32.mrb[0].mxu0
    %6939 = vdwg.mxu0
    %6940 = vmatprep.subr.bf16.mxu0 %v866
    %6941 = vmatpush1.bf16.msra.mxu0 %v865
    %6942 = vmatprep.subr.bf16.mxu0 %v874
    %6943 = vmatpush1.bf16.msra.mxu0 %v873
    %6944 = vmatprep.subr.bf16.mxu0 %v882
    %6945 = vmatpush1.bf16.msra.mxu0 %v881
    %6946 = vmatprep.subr.bf16.mxu0 %v890
    %6947 = vmatpush1.bf16.msra.mxu0 %v889
    %6948 = vmatprep.subr.bf16.mxu0 %v898
    %6949 = vmatpush1.bf16.msra.mxu0 %v897
    %6950 = vmatprep.subr.bf16.mxu0 %v906
    %6951 = vmatpush1.bf16.msra.mxu0 %v905
    %6952 = vmatprep.subr.bf16.mxu0 %v914
    %6953 = vmatpush1.bf16.msra.mxu0 %v913
    %6954 = vmatprep.subr.bf16.mxu0 %v922
    %6955 = vmatpush1.bf16.msra.mxu0 %v921
    %6956 = vmatprep.subr.bf16.mxu0 %v930
    %6957 = vmatpush1.bf16.msra.mxu0 %v929
    %6958 = vmatprep.subr.bf16.mxu0 %v938
    %6959 = vmatpush1.bf16.msra.mxu0 %v937
    %6960 = vmatprep.subr.bf16.mxu0 %v946
    %6961 = vmatpush1.bf16.msra.mxu0 %v945
    %6962 = vmatprep.subr.bf16.mxu0 %v954
    %6963 = vmatpush1.bf16.msra.mxu0 %v953
    %6964 = vmatprep.subr.bf16.mxu0 %v962
    %6965 = vmatpush1.bf16.msra.mxu0 %v961
    %6966 = vmatprep.subr.bf16.mxu0 %v970
    %6967 = vmatpush1.bf16.msra.mxu0 %v969
    %6968 = vmatprep.subr.bf16.mxu0 %v978
    %6969 = vmatpush1.bf16.msra.mxu0 %v977
    %6970 = vmatprep.subr.bf16.mxu0 %v986
    %6971 = vmatpush1.bf16.msra.mxu0 %v985
    %6972 = vmatprep.mubr.bf16.mxu0 %v6814
    %6973 = vmatmul.mubr.bf16.gmra.mrb[0].mxu0 %v6813
    %v6974 = vpop.f32.mrb[0].mxu0
    %v6975 = vadd.f32 0.0, %v6974
    %v6976 = vpop.f32.mrb[0].mxu0
    %v6977 = vadd.f32 0.0, %v6976
    %v6978 = vpop.f32.mrb[0].mxu0
    %v6979 = vpop.f32.mrb[0].mxu0
    %6980 = vdwg.mxu0
    %v6981 = vadd.f32 %v6802, %v6852
    %v6982 = vadd.f32 %v6803, %v6854
    %v6983 = vadd.f32 %v6804, %v6893
    %v6984 = vadd.f32 %v6805, %v6895
    %v6985 = vadd.f32 %v6806, %v6934
    %v6986 = vadd.f32 %v6807, %v6936
    %v6987 = vadd.f32 %v6808, %v6975
    %v6988 = vadd.f32 %v6809, %v6977
    %v6989 = vmul.f32 %v6981, 0.5
    %v6990 = vmul.f32 %v6982, 0.5
    %v6991 = vtanh.pop %v6989
    %v6992 = vtanh.pop %v6990
    %v6993 = vmul.f32 %v6991, 0.5
    %v6994 = vmul.f32 %v6992, 0.5
    %v6995 = vadd.f32 %v6993, 0.5
    %v6996 = vadd.f32 %v6994, 0.5
    %v6997 = vmul.f32 %v6983, 0.5
    %v6998 = vmul.f32 %v6984, 0.5
    %v6999 = vtanh.pop %v6997
    %v7000 = vtanh.pop %v6998
    %v7001 = vmul.f32 %v6999, 0.5
    %v7002 = vmul.f32 %v7000, 0.5
    %v7003 = vadd.f32 %v7001, 0.5
    %v7004 = vadd.f32 %v7002, 0.5
    %v7005 = vtanh.pop %v6985
    %v7006 = vtanh.pop %v6986
    %v7007 = vmul.f32 %v6987, 0.5
    %v7008 = vmul.f32 %v6988, 0.5
    %v7009 = vtanh.pop %v7007
    %v7010 = vtanh.pop %v7008
    %v7011 = vmul.f32 %v7009, 0.5
    %v7012 = vmul.f32 %v7010, 0.5
    %v7013 = vadd.f32 %v7011, 0.5
    %v7014 = vadd.f32 %v7012, 0.5
    %v7015 = vmul.f32 %v7003, %v6393
    %v7016 = vmul.f32 %v7004, %v6394
    %v7017 = vmul.f32 %v6995, %v7005
    %v7018 = vmul.f32 %v6996, %v7006
    %v7019 = vadd.f32 %v7015, %v7017
    %v7020 = vadd.f32 %v7016, %v7018
    %v7021 = vtanh.pop %v7019
    %v7022 = vtanh.pop %v7020
    %v7023 = vmul.f32 %v7013, %v7021
    %v7024 = vmul.f32 %v7014, %v7022
    %v7025 = vpack.c.bf16 %v7023, %v7023
    %v7026 = vpack.c.bf16 %v7024, %v7024
    %v7029 = vunpack.c.l.b16 %v7025
    %v7030 = vunpack.c.l.b16 %v7026
    %v7031 = vpack.c.b16 %v7030, %v7029
    %7033 = vst [vmem:[#allocation4] sm:$0xff] %v7031
    %v7034 = vld [vmem:[#allocation4] sm:$0xff]
    %v7035 = vld [vmem:[#allocation4 + $0x8] sm:$0xff]
    %v7038 = vunpack.c.l.b16 %v7034
    %v7039 = vunpack.c.h.b16 %v7034
    %v7040 = vunpack.c.l.b16 %v7035
    %v7041 = vunpack.c.h.b16 %v7035
    %v7042 = vpack.c.b16 %v7038, %v7038
    %v7043 = vpack.c.b16 %v7039, %v7039
    %v7044 = vpack.c.b16 %v7040, %v7040
    %v7045 = vpack.c.b16 %v7041, %v7041
    %7050 = vmatprep.subr.bf16.mxu0 %v2158
    %7051 = vmatpush1.bf16.msra.mxu0 %v2157
    %7052 = vmatprep.subr.bf16.mxu0 %v2166
    %7053 = vmatpush1.bf16.msra.mxu0 %v2165
    %7054 = vmatprep.subr.bf16.mxu0 %v2174
    %7055 = vmatpush1.bf16.msra.mxu0 %v2173
    %7056 = vmatprep.subr.bf16.mxu0 %v2182
    %7057 = vmatpush1.bf16.msra.mxu0 %v2181
    %7058 = vmatprep.subr.bf16.mxu0 %v2190
    %7059 = vmatpush1.bf16.msra.mxu0 %v2189
    %7060 = vmatprep.subr.bf16.mxu0 %v2198
    %7061 = vmatpush1.bf16.msra.mxu0 %v2197
    %7062 = vmatprep.subr.bf16.mxu0 %v2206
    %7063 = vmatpush1.bf16.msra.mxu0 %v2205
    %7064 = vmatprep.subr.bf16.mxu0 %v2214
    %7065 = vmatpush1.bf16.msra.mxu0 %v2213
    %7066 = vmatprep.subr.bf16.mxu0 %v2222
    %7067 = vmatpush1.bf16.msra.mxu0 %v2221
    %7068 = vmatprep.subr.bf16.mxu0 %v2230
    %7069 = vmatpush1.bf16.msra.mxu0 %v2229
    %7070 = vmatprep.subr.bf16.mxu0 %v2238
    %7071 = vmatpush1.bf16.msra.mxu0 %v2237
    %7072 = vmatprep.subr.bf16.mxu0 %v2246
    %7073 = vmatpush1.bf16.msra.mxu0 %v2245
    %7074 = vmatprep.subr.bf16.mxu0 %v2254
    %7075 = vmatpush1.bf16.msra.mxu0 %v2253
    %7076 = vmatprep.subr.bf16.mxu0 %v2262
    %7077 = vmatpush1.bf16.msra.mxu0 %v2261
    %7078 = vmatprep.subr.bf16.mxu0 %v2270
    %7079 = vmatpush1.bf16.msra.mxu0 %v2269
    %7080 = vmatprep.subr.bf16.mxu0 %v2278
    %7081 = vmatpush1.bf16.msra.mxu0 %v2277
    %7082 = vmatprep.mubr.bf16.mxu0 %v7043
    %7083 = vmatmul.mubr.bf16.gmra.mrb[0].mxu0 %v7042
    %v7084 = vpop.f32.mrb[0].mxu0
    %v7085 = vadd.f32 %v1338, %v7084
    %v7086 = vpop.f32.mrb[0].mxu0
    %v7087 = vadd.f32 %v1342, %v7086
    %v7088 = vpop.f32.mrb[0].mxu0
    %v7089 = vpop.f32.mrb[0].mxu0
    %7090 = vdwg.mxu0
    %7091 = vmatprep.subr.bf16.mxu0 %v2286
    %7092 = vmatpush1.bf16.msra.mxu0 %v2285
    %7093 = vmatprep.subr.bf16.mxu0 %v2294
    %7094 = vmatpush1.bf16.msra.mxu0 %v2293
    %7095 = vmatprep.subr.bf16.mxu0 %v2302
    %7096 = vmatpush1.bf16.msra.mxu0 %v2301
    %7097 = vmatprep.subr.bf16.mxu0 %v2310
    %7098 = vmatpush1.bf16.msra.mxu0 %v2309
    %7099 = vmatprep.subr.bf16.mxu0 %v2318
    %7100 = vmatpush1.bf16.msra.mxu0 %v2317
    %7101 = vmatprep.subr.bf16.mxu0 %v2326
    %7102 = vmatpush1.bf16.msra.mxu0 %v2325
    %7103 = vmatprep.subr.bf16.mxu0 %v2334
    %7104 = vmatpush1.bf16.msra.mxu0 %v2333
    %7105 = vmatprep.subr.bf16.mxu0 %v2342
    %7106 = vmatpush1.bf16.msra.mxu0 %v2341
    %7107 = vmatprep.subr.bf16.mxu0 %v2350
    %7108 = vmatpush1.bf16.msra.mxu0 %v2349
    %7109 = vmatprep.subr.bf16.mxu0 %v2358
    %7110 = vmatpush1.bf16.msra.mxu0 %v2357
    %7111 = vmatprep.subr.bf16.mxu0 %v2366
    %7112 = vmatpush1.bf16.msra.mxu0 %v2365
    %7113 = vmatprep.subr.bf16.mxu0 %v2374
    %7114 = vmatpush1.bf16.msra.mxu0 %v2373
    %7115 = vmatprep.subr.bf16.mxu0 %v2382
    %7116 = vmatpush1.bf16.msra.mxu0 %v2381
    %7117 = vmatprep.subr.bf16.mxu0 %v2390
    %7118 = vmatpush1.bf16.msra.mxu0 %v2389
    %7119 = vmatprep.subr.bf16.mxu0 %v2398
    %7120 = vmatpush1.bf16.msra.mxu0 %v2397
    %7121 = vmatprep.subr.bf16.mxu0 %v2406
    %7122 = vmatpush1.bf16.msra.mxu0 %v2405
    %7123 = vmatprep.mubr.bf16.mxu0 %v7045
    %7124 = vmatmul.mubr.bf16.gmra.mrb[0].mxu0 %v7044
    %v7125 = vpop.f32.mrb[0].mxu0
    %v7126 = vadd.f32 %v7085, %v7125
    %v7127 = vpop.f32.mrb[0].mxu0
    %v7128 = vadd.f32 %v7087, %v7127
    %v7129 = vpop.f32.mrb[0].mxu0
    %v7130 = vpop.f32.mrb[0].mxu0
    %7131 = vdwg.mxu0
    %7132 = vmatprep.subr.bf16.mxu0 %v2160
    %7133 = vmatpush1.bf16.msra.mxu0 %v2159
    %7134 = vmatprep.subr.bf16.mxu0 %v2168
    %7135 = vmatpush1.bf16.msra.mxu0 %v2167
    %7136 = vmatprep.subr.bf16.mxu0 %v2176
    %7137 = vmatpush1.bf16.msra.mxu0 %v2175
    %7138 = vmatprep.subr.bf16.mxu0 %v2184
    %7139 = vmatpush1.bf16.msra.mxu0 %v2183
    %7140 = vmatprep.subr.bf16.mxu0 %v2192
    %7141 = vmatpush1.bf16.msra.mxu0 %v2191
    %7142 = vmatprep.subr.bf16.mxu0 %v2200
    %7143 = vmatpush1.bf16.msra.mxu0 %v2199
    %7144 = vmatprep.subr.bf16.mxu0 %v2208
    %7145 = vmatpush1.bf16.msra.mxu0 %v2207
    %7146 = vmatprep.subr.bf16.mxu0 %v2216
    %7147 = vmatpush1.bf16.msra.mxu0 %v2215
    %7148 = vmatprep.subr.bf16.mxu0 %v2224
    %7149 = vmatpush1.bf16.msra.mxu0 %v2223
    %7150 = vmatprep.subr.bf16.mxu0 %v2232
    %7151 = vmatpush1.bf16.msra.mxu0 %v2231
    %7152 = vmatprep.subr.bf16.mxu0 %v2240
    %7153 = vmatpush1.bf16.msra.mxu0 %v2239
    %7154 = vmatprep.subr.bf16.mxu0 %v2248
    %7155 = vmatpush1.bf16.msra.mxu0 %v2247
    %7156 = vmatprep.subr.bf16.mxu0 %v2256
    %7157 = vmatpush1.bf16.msra.mxu0 %v2255
    %7158 = vmatprep.subr.bf16.mxu0 %v2264
    %7159 = vmatpush1.bf16.msra.mxu0 %v2263
    %7160 = vmatprep.subr.bf16.mxu0 %v2272
    %7161 = vmatpush1.bf16.msra.mxu0 %v2271
    %7162 = vmatprep.subr.bf16.mxu0 %v2280
    %7163 = vmatpush1.bf16.msra.mxu0 %v2279
    %7164 = vmatprep.mubr.bf16.mxu0 %v7043
    %7165 = vmatmul.mubr.bf16.gmra.mrb[0].mxu0 %v7042
    %v7166 = vpop.f32.mrb[0].mxu0
    %v7167 = vadd.f32 %v1346, %v7166
    %v7168 = vpop.f32.mrb[0].mxu0
    %v7169 = vadd.f32 %v1350, %v7168
    %v7170 = vpop.f32.mrb[0].mxu0
    %v7171 = vpop.f32.mrb[0].mxu0
    %7172 = vdwg.mxu0
    %7173 = vmatprep.subr.bf16.mxu0 %v2288
    %7174 = vmatpush1.bf16.msra.mxu0 %v2287
    %7175 = vmatprep.subr.bf16.mxu0 %v2296
    %7176 = vmatpush1.bf16.msra.mxu0 %v2295
    %7177 = vmatprep.subr.bf16.mxu0 %v2304
    %7178 = vmatpush1.bf16.msra.mxu0 %v2303
    %7179 = vmatprep.subr.bf16.mxu0 %v2312
    %7180 = vmatpush1.bf16.msra.mxu0 %v2311
    %7181 = vmatprep.subr.bf16.mxu0 %v2320
    %7182 = vmatpush1.bf16.msra.mxu0 %v2319
    %7183 = vmatprep.subr.bf16.mxu0 %v2328
    %7184 = vmatpush1.bf16.msra.mxu0 %v2327
    %7185 = vmatprep.subr.bf16.mxu0 %v2336
    %7186 = vmatpush1.bf16.msra.mxu0 %v2335
    %7187 = vmatprep.subr.bf16.mxu0 %v2344
    %7188 = vmatpush1.bf16.msra.mxu0 %v2343
    %7189 = vmatprep.subr.bf16.mxu0 %v2352
    %7190 = vmatpush1.bf16.msra.mxu0 %v2351
    %7191 = vmatprep.subr.bf16.mxu0 %v2360
    %7192 = vmatpush1.bf16.msra.mxu0 %v2359
    %7193 = vmatprep.subr.bf16.mxu0 %v2368
    %7194 = vmatpush1.bf16.msra.mxu0 %v2367
    %7195 = vmatprep.subr.bf16.mxu0 %v2376
    %7196 = vmatpush1.bf16.msra.mxu0 %v2375
    %7197 = vmatprep.subr.bf16.mxu0 %v2384
    %7198 = vmatpush1.bf16.msra.mxu0 %v2383
    %7199 = vmatprep.subr.bf16.mxu0 %v2392
    %7200 = vmatpush1.bf16.msra.mxu0 %v2391
    %7201 = vmatprep.subr.bf16.mxu0 %v2400
    %7202 = vmatpush1.bf16.msra.mxu0 %v2399
    %7203 = vmatprep.subr.bf16.mxu0 %v2408
    %7204 = vmatpush1.bf16.msra.mxu0 %v2407
    %7205 = vmatprep.mubr.bf16.mxu0 %v7045
    %7206 = vmatmul.mubr.bf16.gmra.mrb[0].mxu0 %v7044
    %v7207 = vpop.f32.mrb[0].mxu0
    %v7208 = vadd.f32 %v7167, %v7207
    %v7209 = vpop.f32.mrb[0].mxu0
    %v7210 = vadd.f32 %v7169, %v7209
    %v7211 = vpop.f32.mrb[0].mxu0
    %v7212 = vpop.f32.mrb[0].mxu0
    %7213 = vdwg.mxu0
    %7214 = vmatprep.subr.bf16.mxu0 %v2162
    %7215 = vmatpush1.bf16.msra.mxu0 %v2161
    %7216 = vmatprep.subr.bf16.mxu0 %v2170
    %7217 = vmatpush1.bf16.msra.mxu0 %v2169
    %7218 = vmatprep.subr.bf16.mxu0 %v2178
    %7219 = vmatpush1.bf16.msra.mxu0 %v2177
    %7220 = vmatprep.subr.bf16.mxu0 %v2186
    %7221 = vmatpush1.bf16.msra.mxu0 %v2185
    %7222 = vmatprep.subr.bf16.mxu0 %v2194
    %7223 = vmatpush1.bf16.msra.mxu0 %v2193
    %7224 = vmatprep.subr.bf16.mxu0 %v2202
    %7225 = vmatpush1.bf16.msra.mxu0 %v2201
    %7226 = vmatprep.subr.bf16.mxu0 %v2210
    %7227 = vmatpush1.bf16.msra.mxu0 %v2209
    %7228 = vmatprep.subr.bf16.mxu0 %v2218
    %7229 = vmatpush1.bf16.msra.mxu0 %v2217
    %7230 = vmatprep.subr.bf16.mxu0 %v2226
    %7231 = vmatpush1.bf16.msra.mxu0 %v2225
    %7232 = vmatprep.subr.bf16.mxu0 %v2234
    %7233 = vmatpush1.bf16.msra.mxu0 %v2233
    %7234 = vmatprep.subr.bf16.mxu0 %v2242
    %7235 = vmatpush1.bf16.msra.mxu0 %v2241
    %7236 = vmatprep.subr.bf16.mxu0 %v2250
    %7237 = vmatpush1.bf16.msra.mxu0 %v2249
    %7238 = vmatprep.subr.bf16.mxu0 %v2258
    %7239 = vmatpush1.bf16.msra.mxu0 %v2257
    %7240 = vmatprep.subr.bf16.mxu0 %v2266
    %7241 = vmatpush1.bf16.msra.mxu0 %v2265
    %7242 = vmatprep.subr.bf16.mxu0 %v2274
    %7243 = vmatpush1.bf16.msra.mxu0 %v2273
    %7244 = vmatprep.subr.bf16.mxu0 %v2282
    %7245 = vmatpush1.bf16.msra.mxu0 %v2281
    %7246 = vmatprep.mubr.bf16.mxu0 %v7043
    %7247 = vmatmul.mubr.bf16.gmra.mrb[0].mxu0 %v7042
    %v7248 = vpop.f32.mrb[0].mxu0
    %v7249 = vadd.f32 %v1354, %v7248
    %v7250 = vpop.f32.mrb[0].mxu0
    %v7251 = vadd.f32 %v1358, %v7250
    %v7252 = vpop.f32.mrb[0].mxu0
    %v7253 = vpop.f32.mrb[0].mxu0
    %7254 = vdwg.mxu0
    %7255 = vmatprep.subr.bf16.mxu0 %v2290
    %7256 = vmatpush1.bf16.msra.mxu0 %v2289
    %7257 = vmatprep.subr.bf16.mxu0 %v2298
    %7258 = vmatpush1.bf16.msra.mxu0 %v2297
    %7259 = vmatprep.subr.bf16.mxu0 %v2306
    %7260 = vmatpush1.bf16.msra.mxu0 %v2305
    %7261 = vmatprep.subr.bf16.mxu0 %v2314
    %7262 = vmatpush1.bf16.msra.mxu0 %v2313
    %7263 = vmatprep.subr.bf16.mxu0 %v2322
    %7264 = vmatpush1.bf16.msra.mxu0 %v2321
    %7265 = vmatprep.subr.bf16.mxu0 %v2330
    %7266 = vmatpush1.bf16.msra.mxu0 %v2329
    %7267 = vmatprep.subr.bf16.mxu0 %v2338
    %7268 = vmatpush1.bf16.msra.mxu0 %v2337
    %7269 = vmatprep.subr.bf16.mxu0 %v2346
    %7270 = vmatpush1.bf16.msra.mxu0 %v2345
    %7271 = vmatprep.subr.bf16.mxu0 %v2354
    %7272 = vmatpush1.bf16.msra.mxu0 %v2353
    %7273 = vmatprep.subr.bf16.mxu0 %v2362
    %7274 = vmatpush1.bf16.msra.mxu0 %v2361
    %7275 = vmatprep.subr.bf16.mxu0 %v2370
    %7276 = vmatpush1.bf16.msra.mxu0 %v2369
    %7277 = vmatprep.subr.bf16.mxu0 %v2378
    %7278 = vmatpush1.bf16.msra.mxu0 %v2377
    %7279 = vmatprep.subr.bf16.mxu0 %v2386
    %7280 = vmatpush1.bf16.msra.mxu0 %v2385
    %7281 = vmatprep.subr.bf16.mxu0 %v2394
    %7282 = vmatpush1.bf16.msra.mxu0 %v2393
    %7283 = vmatprep.subr.bf16.mxu0 %v2402
    %7284 = vmatpush1.bf16.msra.mxu0 %v2401
    %7285 = vmatprep.subr.bf16.mxu0 %v2410
    %7286 = vmatpush1.bf16.msra.mxu0 %v2409
    %7287 = vmatprep.mubr.bf16.mxu0 %v7045
    %7288 = vmatmul.mubr.bf16.gmra.mrb[0].mxu0 %v7044
    %v7289 = vpop.f32.mrb[0].mxu0
    %v7290 = vadd.f32 %v7249, %v7289
    %v7291 = vpop.f32.mrb[0].mxu0
    %v7292 = vadd.f32 %v7251, %v7291
    %v7293 = vpop.f32.mrb[0].mxu0
    %v7294 = vpop.f32.mrb[0].mxu0
    %7295 = vdwg.mxu0
    %7296 = vmatprep.subr.bf16.mxu0 %v2164
    %7297 = vmatpush1.bf16.msra.mxu0 %v2163
    %7298 = vmatprep.subr.bf16.mxu0 %v2172
    %7299 = vmatpush1.bf16.msra.mxu0 %v2171
    %7300 = vmatprep.subr.bf16.mxu0 %v2180
    %7301 = vmatpush1.bf16.msra.mxu0 %v2179
    %7302 = vmatprep.subr.bf16.mxu0 %v2188
    %7303 = vmatpush1.bf16.msra.mxu0 %v2187
    %7304 = vmatprep.subr.bf16.mxu0 %v2196
    %7305 = vmatpush1.bf16.msra.mxu0 %v2195
    %7306 = vmatprep.subr.bf16.mxu0 %v2204
    %7307 = vmatpush1.bf16.msra.mxu0 %v2203
    %7308 = vmatprep.subr.bf16.mxu0 %v2212
    %7309 = vmatpush1.bf16.msra.mxu0 %v2211
    %7310 = vmatprep.subr.bf16.mxu0 %v2220
    %7311 = vmatpush1.bf16.msra.mxu0 %v2219
    %7312 = vmatprep.subr.bf16.mxu0 %v2228
    %7313 = vmatpush1.bf16.msra.mxu0 %v2227
    %7314 = vmatprep.subr.bf16.mxu0 %v2236
    %7315 = vmatpush1.bf16.msra.mxu0 %v2235
    %7316 = vmatprep.subr.bf16.mxu0 %v2244
    %7317 = vmatpush1.bf16.msra.mxu0 %v2243
    %7318 = vmatprep.subr.bf16.mxu0 %v2252
    %7319 = vmatpush1.bf16.msra.mxu0 %v2251
    %7320 = vmatprep.subr.bf16.mxu0 %v2260
    %7321 = vmatpush1.bf16.msra.mxu0 %v2259
    %7322 = vmatprep.subr.bf16.mxu0 %v2268
    %7323 = vmatpush1.bf16.msra.mxu0 %v2267
    %7324 = vmatprep.subr.bf16.mxu0 %v2276
    %7325 = vmatpush1.bf16.msra.mxu0 %v2275
    %7326 = vmatprep.subr.bf16.mxu0 %v2284
    %7327 = vmatpush1.bf16.msra.mxu0 %v2283
    %7328 = vmatprep.mubr.bf16.mxu0 %v7043
    %7329 = vmatmul.mubr.bf16.gmra.mrb[0].mxu0 %v7042
    %v7330 = vpop.f32.mrb[0].mxu0
    %v7331 = vadd.f32 %v1362, %v7330
    %v7332 = vpop.f32.mrb[0].mxu0
    %v7333 = vadd.f32 %v1366, %v7332
    %v7334 = vpop.f32.mrb[0].mxu0
    %v7335 = vpop.f32.mrb[0].mxu0
    %7336 = vdwg.mxu0
    %7337 = vmatprep.subr.bf16.mxu0 %v2292
    %7338 = vmatpush1.bf16.msra.mxu0 %v2291
    %7339 = vmatprep.subr.bf16.mxu0 %v2300
    %7340 = vmatpush1.bf16.msra.mxu0 %v2299
    %7341 = vmatprep.subr.bf16.mxu0 %v2308
    %7342 = vmatpush1.bf16.msra.mxu0 %v2307
    %7343 = vmatprep.subr.bf16.mxu0 %v2316
    %7344 = vmatpush1.bf16.msra.mxu0 %v2315
    %7345 = vmatprep.subr.bf16.mxu0 %v2324
    %7346 = vmatpush1.bf16.msra.mxu0 %v2323
    %7347 = vmatprep.subr.bf16.mxu0 %v2332
    %7348 = vmatpush1.bf16.msra.mxu0 %v2331
    %7349 = vmatprep.subr.bf16.mxu0 %v2340
    %7350 = vmatpush1.bf16.msra.mxu0 %v2339
    %7351 = vmatprep.subr.bf16.mxu0 %v2348
    %7352 = vmatpush1.bf16.msra.mxu0 %v2347
    %7353 = vmatprep.subr.bf16.mxu0 %v2356
    %7354 = vmatpush1.bf16.msra.mxu0 %v2355
    %7355 = vmatprep.subr.bf16.mxu0 %v2364
    %7356 = vmatpush1.bf16.msra.mxu0 %v2363
    %7357 = vmatprep.subr.bf16.mxu0 %v2372
    %7358 = vmatpush1.bf16.msra.mxu0 %v2371
    %7359 = vmatprep.subr.bf16.mxu0 %v2380
    %7360 = vmatpush1.bf16.msra.mxu0 %v2379
    %7361 = vmatprep.subr.bf16.mxu0 %v2388
    %7362 = vmatpush1.bf16.msra.mxu0 %v2387
    %7363 = vmatprep.subr.bf16.mxu0 %v2396
    %7364 = vmatpush1.bf16.msra.mxu0 %v2395
    %7365 = vmatprep.subr.bf16.mxu0 %v2404
    %7366 = vmatpush1.bf16.msra.mxu0 %v2403
    %7367 = vmatprep.subr.bf16.mxu0 %v2412
    %7368 = vmatpush1.bf16.msra.mxu0 %v2411
    %7369 = vmatprep.mubr.bf16.mxu0 %v7045
    %7370 = vmatmul.mubr.bf16.gmra.mrb[0].mxu0 %v7044
    %v7371 = vpop.f32.mrb[0].mxu0
    %v7372 = vadd.f32 %v7331, %v7371
    %v7373 = vpop.f32.mrb[0].mxu0
    %v7374 = vadd.f32 %v7333, %v7373
    %v7375 = vpop.f32.mrb[0].mxu0
    %v7376 = vpop.f32.mrb[0].mxu0
    %7377 = vdwg.mxu0
    %v7378 = vmul.f32 %v7126, 0.5
    %v7379 = vmul.f32 %v7128, 0.5
    %v7380 = vtanh.pop %v7378
    %v7381 = vtanh.pop %v7379
    %v7382 = vmul.f32 %v7380, 0.5
    %v7383 = vmul.f32 %v7381, 0.5
    %v7384 = vadd.f32 %v7382, 0.5
    %v7385 = vadd.f32 %v7383, 0.5
    %v7386 = vmul.f32 %v7208, 0.5
    %v7387 = vmul.f32 %v7210, 0.5
    %v7388 = vtanh.pop %v7386
    %v7389 = vtanh.pop %v7387
    %v7390 = vmul.f32 %v7388, 0.5
    %v7391 = vmul.f32 %v7389, 0.5
    %v7392 = vadd.f32 %v7390, 0.5
    %v7393 = vadd.f32 %v7391, 0.5
    %v7394 = vtanh.pop %v7290
    %v7395 = vtanh.pop %v7292
    %v7396 = vmul.f32 %v7372, 0.5
    %v7397 = vmul.f32 %v7374, 0.5
    %v7398 = vtanh.pop %v7396
    %v7399 = vtanh.pop %v7397
    %v7400 = vmul.f32 %v7398, 0.5
    %v7401 = vmul.f32 %v7399, 0.5
    %v7402 = vadd.f32 %v7400, 0.5
    %v7403 = vadd.f32 %v7401, 0.5
    %v7404 = vmul.f32 %v7392, %v6782
    %v7405 = vmul.f32 %v7393, %v6783
    %v7406 = vmul.f32 %v7384, %v7394
    %v7407 = vmul.f32 %v7385, %v7395
    %v7408 = vadd.f32 %v7404, %v7406
    %v7409 = vadd.f32 %v7405, %v7407
    %v7410 = vtanh.pop %v7408
    %v7411 = vtanh.pop %v7409
    %v7412 = vmul.f32 %v7402, %v7410
    %v7413 = vmul.f32 %v7403, %v7411
    %v7414 = vpack.c.bf16 %v7412, %v7412
    %v7415 = vpack.c.bf16 %v7413, %v7413
    %v7418 = vunpack.c.l.b16 %v7414
    %v7419 = vunpack.c.l.b16 %v7415
    %v7420 = vpack.c.b16 %v7419, %v7418
    %7422 = vst [vmem:[#allocation4 + $0x8] sm:$0xff] %v7420
    %s7423 = scalar_lea.vmem [#allocation11], 112
    %7424 = vst [vmem:[%s7423] sm:$0xff] %v7412
    %7425 = vst [vmem:[%s7423 + $0x8] sm:$0xff] %v7413
    %7426 = vst [vmem:[#allocation2] sm:$0xff] %v7019
    %7427 = vst [vmem:[#allocation2 + $0x8] sm:$0xff] %v7020
    %7428 = vst [vmem:[#allocation3] sm:$0xff] %v7408
    %7429 = vst [vmem:[#allocation3 + $0x8] sm:$0xff] %v7409
    // Predicated region
    $region34: #{tpu_custom_call.1} parent=1 // pred_check
      _
    $region35: #{tpu_custom_call.1} parent=1 // pred_check_branch
      %7431 = sbr.rel (0) target = $region37
    $region36: #{tpu_custom_call.1} parent=1 // pred_region
      %s7433 = ssub.s32 2048, 2048
      %7434 = vsyncadd [#allocation7], %s7433
      %s7435 = sshll.u32 [#allocation11], 4
      %s7436 = int_to_ptr.vmem [resolvable:$true] %s7435
      %7441 = dma.vmem_to_hbm [thread:$0]  %s7436, 2048, %s4, [#allocation7], 256, 256, 16
    $region37: #{tpu_custom_call.1} parent=1 // pred_fallthru
      _
    // Predicated region
    $region38: #{tpu_custom_call.1} parent=1 // pred_check
      _
    $region39: #{tpu_custom_call.1} parent=1 // pred_check_branch
      %7443 = sbr.rel (0) target = $region41
    $region40: #{tpu_custom_call.1} parent=1 // pred_region
      %7444 = dma.done [#allocation7], 2048
    $region41: #{tpu_custom_call.1} parent=1 // pred_fallthru
      _
    %7445 = vsyncpa [#allocation6], 1
    %7446 = vsyncpa [#allocation9], 1
    %7447 = vsyncpa [#allocation7], 1

</llo_original>
